<compile_context>
chip_gen: v7x
topology: tpu7x:2x2x1
jax: 0.10.0
libtpu: 0.0.40
codegen_flags: <defaults>
</compile_context>

<pallas_src>
import jax
import jax.numpy as jnp
from jax.experimental import pallas as pl
from jax.experimental.pallas import tpu as pltpu

BN_EPS = 1e-5
_EPILOGUE_CHUNK = 256   # rows per epilogue chunk (bounds live vreg footprint)


# --------------------------------------------------------------------------- #
# Kernels
# --------------------------------------------------------------------------- #
def _conv_tile(x_ref, w_ref, acc_ref):
    """3x3 / pad=1 conv at ORIGINAL resolution with phase-packed weights.

    x_ref   : (1, H+2, W+2, Cin)  padded input sample (resident across row-blocks)
    w_ref   : (9, Cin, C4p)       phase-packed weights, input dtype
    acc_ref : (TH*W, C4p) f32     VMEM accumulator (overwritten)

    9 MXU dots of K=Cin accumulated in VMEM -- no im2col patches scratch, hence no
    lane-misaligned masked stores when Cin % 128 != 0.
    """
    W = x_ref.shape[2] - 2
    Cin = x_ref.shape[3]
    TH = acc_ref.shape[0] // W
    row0 = pl.program_id(1) * TH

    for tap in range(9):
        rr, cc = divmod(tap, 3)
        slab = x_ref[0, pl.ds(row0 + rr, TH), cc:cc + W, :].reshape(TH * W, Cin)
        part = jnp.dot(slab, w_ref[tap], preferred_element_type=jnp.float32)
        if tap == 0:
            acc_ref[...] = part
        else:
            acc_ref[...] = acc_ref[...] + part


def _stats_kernel(x_ref, w_ref, ssum_ref, ssq_ref, acc_ref):
    """Pass 1: accumulate per-sample BN partial sums across the row-block axis."""
    _conv_tile(x_ref, w_ref, acc_ref)

    @pl.when(pl.program_id(1) == 0)
    def _():
        ssum_ref[...] = jnp.zeros_like(ssum_ref)
        ssq_ref[...] = jnp.zeros_like(ssq_ref)

    m, c4p = acc_ref.shape
    psum = jnp.zeros((1, c4p), jnp.float32)
    psq = jnp.zeros((1, c4p), jnp.float32)
    for i in range(0, m, _EPILOGUE_CHUNK):
        sz = min(_EPILOGUE_CHUNK, m - i)
        a = acc_ref[i:i + sz, :]
        psum = psum + jnp.sum(a, axis=0, keepdims=True)
        psq = psq + jnp.sum(a * a, axis=0, keepdims=True)
    ssum_ref[...] = ssum_ref[...] + psum.reshape(ssum_ref.shape)
    ssq_ref[...] = ssq_ref[...] + psq.reshape(ssq_ref.shape)


def _apply_kernel(x_ref, w_ref, scale_ref, shift_ref, o_ref, acc_ref):
    """Pass 2: recompute the (cheap) conv, apply the folded BN affine + ReLU."""
    _conv_tile(x_ref, w_ref, acc_ref)
    scale = scale_ref[...]          # (1, C4p) f32
    shift = shift_ref[...]
    m = acc_ref.shape[0]
    for i in range(0, m, _EPILOGUE_CHUNK):
        sz = min(_EPILOGUE_CHUNK, m - i)
        y = jnp.maximum(acc_ref[i:i + sz, :] * scale + shift, 0.0)
        o_ref[0, i:i + sz, :] = y.astype(o_ref.dtype)


# --------------------------------------------------------------------------- #
# Wrapper helpers
# --------------------------------------------------------------------------- #
def _phase_packed_weights(w_oihw, c4p, dtype):
    """Fold Upsample(x2, nearest) into the 3x3 conv weights.

    Returns (9, Cin, c4p) in `dtype`: a 3x3/pad=1 conv of the ORIGINAL-resolution
    input yields, at pixel (i, j), the 4 upsampled outputs (2i+py, 2j+px) packed
    along the output-channel axis as (py, px, co); channels >= 4*Cout are zero pad.
    """
    Cout, Cin = w_oihw.shape[0], w_oihw.shape[1]
    w_hwio = jnp.transpose(w_oihw, (2, 3, 1, 0)).astype(jnp.float32)   # (3,3,Cin,Cout)
    w_packed = jnp.zeros((3, 3, Cin, 2, 2, Cout), jnp.float32)
    for py in range(2):
        for px in range(2):
            for dy in range(3):
                for dx in range(3):
                    rr = (py + dy + 1) // 2     # effective row tap on original grid
                    cc = (px + dx + 1) // 2     # effective col tap on original grid
                    w_packed = w_packed.at[rr, cc, :, py, px, :].add(w_hwio[dy, dx])
    w_packed = w_packed.reshape(9, Cin, 4 * Cout)
    pad = c4p - 4 * Cout
    if pad:
        w_packed = jnp.pad(w_packed, ((0, 0), (0, 0), (0, pad)))
    return w_packed.astype(dtype)


def _pick_row_block(H, W, target_rows=1024):
    """Largest divisor th of H with (th*W) % 8 == 0 (or th == H, full-dim rule) and
    th*W <= target_rows; if no legal tile fits the target, the smallest legal one."""
    legal = [t for t in range(1, H + 1)
             if H % t == 0 and ((t * W) % 8 == 0 or t == H)]
    fitting = [t for t in legal if t * W <= target_rows]
    return max(fitting) if fitting else min(legal)


def _vmem_limit_bytes(H, W, Cin, c4p, th, in_bytes, out_bytes):
    m = th * W
    need = ((H + 2) * (W + 2) * Cin * in_bytes * 2     # resident padded sample, 2 bufs
            + 9 * Cin * c4p * in_bytes * 2             # weights (block index constant)
            + m * c4p * 4                              # f32 accumulator scratch
            + m * c4p * out_bytes * 2                  # pass-2 output tile, 2 bufs
            + 6 * c4p * 4)                             # stats / scale / shift blocks
    return int(min(max(need * 3 // 2 + (4 << 20), 32 << 20), 100 << 20))


# --------------------------------------------------------------------------- #
# Wrapper
# --------------------------------------------------------------------------- #
def up_conv_forward(x_nchw, w_oihw, bias, gamma, beta):
    """up_conv forward: x (N, Cin, H, W) -> (N, Cout, 2H, 2W)."""
    N, Cin, H, W = x_nchw.shape
    Cout = w_oihw.shape[0]
    H2, W2 = 2 * H, 2 * W
    C4 = 4 * Cout
    C4p = ((C4 + 127) // 128) * 128            # lane-dense output minor dim

    # ---- layout glue on SMALL tensors only (no upsampled tensor anywhere) ----
    x = jnp.transpose(x_nchw, (0, 2, 3, 1))                  # NCHW -> NHWC
    xp = jnp.pad(x, ((0, 0), (1, 1), (1, 1), (0, 0)))        # pad=1 @ original res
    w_packed = _phase_packed_weights(w_oihw, C4p, x.dtype)   # (9, Cin, C4p)

    th = _pick_row_block(H, W)
    nh = H // th
    m = th * W

    vmem_limit = _vmem_limit_bytes(H, W, Cin, C4p, th,
                                   x.dtype.itemsize, x.dtype.itemsize)

    x_spec = pl.BlockSpec((1, H + 2, W + 2, Cin), lambda n, h: (n, 0, 0, 0))
    w_spec = pl.BlockSpec((9, Cin, C4p), lambda n, h: (0, 0, 0))
    acc_scratch = pltpu.VMEM((m, C4p), jnp.float32)

    # ---- pass 1: global (train-mode) BN statistics of the conv output ----
    ssum, ssq = pl.pallas_call(
        _stats_kernel,
        out_shape=(jax.ShapeDtypeStruct((N, 1, C4p), jnp.float32),
                   jax.ShapeDtypeStruct((N, 1, C4p), jnp.float32)),
        grid_spec=pltpu.PrefetchScalarGridSpec(
            num_scalar_prefetch=0,
            grid=(N, nh),
            in_specs=[x_spec, w_spec],
            out_specs=(pl.BlockSpec((1, 1, C4p), lambda n, h: (n, 0, 0)),
                       pl.BlockSpec((1, 1, C4p), lambda n, h: (n, 0, 0))),
            scratch_shapes=[acc_scratch]),
        compiler_params=pltpu.CompilerParams(
            dimension_semantics=("parallel", "arbitrary"),
            vmem_limit_bytes=vmem_limit),
    )(xp, w_packed)

    # Fold partial sums (over samples, row-blocks, 4 phase groups) into per-channel
    # scale/shift.  y = conv + bias; BN uses biased batch variance (train mode).
    # NOTE: var = E[z^2] - E[z]^2 in f32 -- fine for O(1) activations; switch to
    # shifted sums if conv outputs can have |mean| >> std.
    cnt = jnp.float32(N * H2 * W2)
    s = jnp.sum(ssum, axis=(0, 1))[:C4].reshape(4, Cout).sum(axis=0)
    q = jnp.sum(ssq, axis=(0, 1))[:C4].reshape(4, Cout).sum(axis=0)
    bias32 = bias.astype(jnp.float32)
    mean_z = s / cnt                               # mean of conv (without bias)
    var = q / cnt - mean_z * mean_z                # biased variance (bias-invariant)
    mean_y = mean_z + bias32                       # mean of conv + bias
    scale = gamma.astype(jnp.float32) * jax.lax.rsqrt(var + BN_EPS)
    shift = beta.astype(jnp.float32) + (bias32 - mean_y) * scale
    pad = C4p - C4
    scale4 = jnp.pad(jnp.tile(scale, 4), (0, pad))[None, :]   # (1, C4p), phase-packed
    shift4 = jnp.pad(jnp.tile(shift, 4), (0, pad))[None, :]

    # ---- pass 2: recompute conv, apply folded BN affine + ReLU ----
    out_flat = pl.pallas_call(
        _apply_kernel,
        out_shape=jax.ShapeDtypeStruct((N, H * W, C4p), x.dtype),
        grid_spec=pltpu.PrefetchScalarGridSpec(
            num_scalar_prefetch=0,
            grid=(N, nh),
            in_specs=[x_spec, w_spec,
                      pl.BlockSpec((1, C4p), lambda n, h: (0, 0)),
                      pl.BlockSpec((1, C4p), lambda n, h: (0, 0))],
            out_specs=pl.BlockSpec((1, m, C4p), lambda n, h: (n, h, 0)),
            scratch_shapes=[acc_scratch]),
        compiler_params=pltpu.CompilerParams(
            dimension_semantics=("parallel", "parallel"),
            vmem_limit_bytes=vmem_limit),
    )(xp, w_packed, scale4, shift4)

    # Drop channel padding, un-pack the 4 phases, restore NCHW (one fused XLA copy).
    out = out_flat[:, :, :C4].reshape(N, H, W, 2, 2, Cout)    # (n, i, j, py, px, co)
    out = jnp.transpose(out, (0, 5, 1, 3, 2, 4))              # (n, co, i, py, j, px)
    return out.reshape(N, Cout, H2, W2)


# --------------------------------------------------------------------------- #
# Reference + self-check
# --------------------------------------------------------------------------- #
def _reference(x_nchw, w_oihw, bias, gamma, beta):
    """Plain-JAX reference mirroring the PyTorch module (train-mode BN)."""
    x = jnp.repeat(jnp.repeat(x_nchw, 2, axis=2), 2, axis=3)
    y = jax.lax.conv_general_dilated(
        x.astype(jnp.float32), w_oihw.astype(jnp.float32),
        window_strides=(1, 1), padding=((1, 1), (1, 1)),
        dimension_numbers=("NCHW", "OIHW", "NCHW"),
        precision=jax.lax.Precision.HIGHEST)
    y = y + bias.reshape(1, -1, 1, 1)
    mean = jnp.mean(y, axis=(0, 2, 3), keepdims=True)
    var = jnp.mean((y - mean) ** 2, axis=(0, 2, 3), keepdims=True)
    y = (y - mean) * jax.lax.rsqrt(var + BN_EPS)
    y = y * gamma.reshape(1, -1, 1, 1) + beta.reshape(1, -1, 1, 1)
    return jnp.maximum(y, 0.0)


if __name__ == "__main__":
    # Small shapes consistent with the module: batch=2, ch_in=4, ch_out=8, 16x16.
    N, CH_IN, CH_OUT, H, W = 2, 4, 8, 16, 16

    key = jax.random.PRNGKey(0)
    kx, kw, kb = jax.random.split(key, 3)

    x = jax.random.normal(kx, (N, CH_IN, H, W), dtype=jnp.float32)

    # Deterministic parameter init (synthetic; kaiming-uniform-like scale).
    fan_in = CH_IN * 3 * 3
    bound = 1.0 / jnp.sqrt(fan_in)
    w = jax.random.uniform(kw, (CH_OUT, CH_IN, 3, 3), jnp.float32, -bound, bound)
    b = jax.random.uniform(kb, (CH_OUT,), jnp.float32, -bound, bound)
    gamma = jnp.ones((CH_OUT,), jnp.float32)   # BN default init
    beta = jnp.zeros((CH_OUT,), jnp.float32)

    fwd = jax.jit(up_conv_forward)
    out = jax.block_until_ready(fwd(x, w, b, gamma, beta))

    assert out.shape == (N, CH_OUT, 2 * H, 2 * W), out.shape

    ref = jax.block_until_ready(_reference(x, w, b, gamma, beta))
    assert jnp.allclose(out, ref, rtol=1e-3, atol=1e-3), \
        float(jnp.max(jnp.abs(out - ref)))

    print("KERNEL_OK")
</pallas_src>

<mosaic_0001>
module attributes {stable_mosaic.version = 11 : i64} {
  func.func @_stats_kernel(%arg0: i32, %arg1: i32, %arg2: memref<1x18x18x4xf32, #tpu.memory_space<vmem>>, %arg3: memref<9x4x128xf32, #tpu.memory_space<vmem>>, %arg4: memref<1x1x128xf32, #tpu.memory_space<vmem>>, %arg5: memref<1x1x128xf32, #tpu.memory_space<vmem>>, %arg6: memref<256x128xf32, #tpu.memory_space<vmem>>) attributes {dimension_semantics = [#tpu.dimension_semantics<parallel>, #tpu.dimension_semantics<arbitrary>], iteration_bounds = array<i64: 2, 1>, scalar_prefetch = 0 : i64, scratch_operands = 1 : i64, tpu.core_type = #tpu.core_type<tc>, window_params = [{transform_indices = @transform_0, window_bounds = array<i64: 1, 18, 18, 4>}, {pipeline_mode = #tpu.pipeline_mode<synchronous>, transform_indices = @transform_1, window_bounds = array<i64: 9, 4, 128>}, {transform_indices = @transform_2, window_bounds = array<i64: 1, 1, 128>}, {transform_indices = @transform_3, window_bounds = array<i64: 1, 1, 128>}]} {
    %c16_i32 = arith.constant 16 : i32
    %0 = arith.muli %arg1, %c16_i32 : i32
    %c0_i32 = arith.constant 0 : i32
    %1 = arith.addi %0, %c0_i32 : i32
    %c0 = arith.constant 0 : index
    %2 = arith.index_cast %1 : i32 to index
    %c0_0 = arith.constant 0 : index
    %c0_1 = arith.constant 0 : index
    %3 = vector.load %arg2[%c0, %2, %c0_0, %c0_1] : memref<1x18x18x4xf32, #tpu.memory_space<vmem>>, vector<1x16x16x4xf32>
    %4 = vector.shape_cast %3 : vector<1x16x16x4xf32> to vector<16x16x4xf32>
    %5 = vector.shape_cast %4 : vector<16x16x4xf32> to vector<256x4xf32>
    %c0_2 = arith.constant 0 : index
    %c0_3 = arith.constant 0 : index
    %c0_4 = arith.constant 0 : index
    %6 = vector.load %arg3[%c0_2, %c0_3, %c0_4] : memref<9x4x128xf32, #tpu.memory_space<vmem>>, vector<1x4x128xf32>
    %7 = vector.shape_cast %6 : vector<1x4x128xf32> to vector<4x128xf32>
    %cst = arith.constant dense<0.000000e+00> : vector<256x128xf32>
    %8 = tpu.matmul %5, %7, %cst {dimension_numbers = #tpu.dot_dimension_numbers<[1], [0], [0], [1], [0, 0, 1, 1], [], []>} : vector<256x4xf32>, vector<4x128xf32>, vector<256x128xf32> -> vector<256x128xf32>
    %c0_5 = arith.constant 0 : index
    %c0_6 = arith.constant 0 : index
    %9 = vector.load %arg6[%c0_5, %c0_6] : memref<256x128xf32, #tpu.memory_space<vmem>>, vector<256x128xf32>
    tpu.vector_store %arg6[%c0_5, %c0_6], %8 {strides = array<i32>} : memref<256x128xf32, #tpu.memory_space<vmem>>, vector<256x128xf32>,
    %c0_i32_7 = arith.constant 0 : i32
    %10 = arith.addi %0, %c0_i32_7 : i32
    %c0_8 = arith.constant 0 : index
    %11 = arith.index_cast %10 : i32 to index
    %c1 = arith.constant 1 : index
    %c0_9 = arith.constant 0 : index
    %12 = vector.load %arg2[%c0_8, %11, %c1, %c0_9] : memref<1x18x18x4xf32, #tpu.memory_space<vmem>>, vector<1x16x16x4xf32>
    %13 = vector.shape_cast %12 : vector<1x16x16x4xf32> to vector<16x16x4xf32>
    %14 = vector.shape_cast %13 : vector<16x16x4xf32> to vector<256x4xf32>
    %c1_10 = arith.constant 1 : index
    %c0_11 = arith.constant 0 : index
    %c0_12 = arith.constant 0 : index
    %15 = vector.load %arg3[%c1_10, %c0_11, %c0_12] : memref<9x4x128xf32, #tpu.memory_space<vmem>>, vector<1x4x128xf32>
    %16 = vector.shape_cast %15 : vector<1x4x128xf32> to vector<4x128xf32>
    %cst_13 = arith.constant dense<0.000000e+00> : vector<256x128xf32>
    %17 = tpu.matmul %14, %16, %cst_13 {dimension_numbers = #tpu.dot_dimension_numbers<[1], [0], [0], [1], [0, 0, 1, 1], [], []>} : vector<256x4xf32>, vector<4x128xf32>, vector<256x128xf32> -> vector<256x128xf32>
    %c0_14 = arith.constant 0 : index
    %c0_15 = arith.constant 0 : index
    %18 = vector.load %arg6[%c0_14, %c0_15] : memref<256x128xf32, #tpu.memory_space<vmem>>, vector<256x128xf32>
    %19 = arith.addf %18, %17 : vector<256x128xf32>
    %c0_16 = arith.constant 0 : index
    %c0_17 = arith.constant 0 : index
    %20 = vector.load %arg6[%c0_16, %c0_17] : memref<256x128xf32, #tpu.memory_space<vmem>>, vector<256x128xf32>
    tpu.vector_store %arg6[%c0_16, %c0_17], %19 {strides = array<i32>} : memref<256x128xf32, #tpu.memory_space<vmem>>, vector<256x128xf32>,
    %c0_i32_18 = arith.constant 0 : i32
    %21 = arith.addi %0, %c0_i32_18 : i32
    %c0_19 = arith.constant 0 : index
    %22 = arith.index_cast %21 : i32 to index
    %c2 = arith.constant 2 : index
    %c0_20 = arith.constant 0 : index
    %23 = vector.load %arg2[%c0_19, %22, %c2, %c0_20] : memref<1x18x18x4xf32, #tpu.memory_space<vmem>>, vector<1x16x16x4xf32>
    %24 = vector.shape_cast %23 : vector<1x16x16x4xf32> to vector<16x16x4xf32>
    %25 = vector.shape_cast %24 : vector<16x16x4xf32> to vector<256x4xf32>
    %c2_21 = arith.constant 2 : index
    %c0_22 = arith.constant 0 : index
    %c0_23 = arith.constant 0 : index
    %26 = vector.load %arg3[%c2_21, %c0_22, %c0_23] : memref<9x4x128xf32, #tpu.memory_space<vmem>>, vector<1x4x128xf32>
    %27 = vector.shape_cast %26 : vector<1x4x128xf32> to vector<4x128xf32>
    %cst_24 = arith.constant dense<0.000000e+00> : vector<256x128xf32>
    %28 = tpu.matmul %25, %27, %cst_24 {dimension_numbers = #tpu.dot_dimension_numbers<[1], [0], [0], [1], [0, 0, 1, 1], [], []>} : vector<256x4xf32>, vector<4x128xf32>, vector<256x128xf32> -> vector<256x128xf32>
    %c0_25 = arith.constant 0 : index
    %c0_26 = arith.constant 0 : index
    %29 = vector.load %arg6[%c0_25, %c0_26] : memref<256x128xf32, #tpu.memory_space<vmem>>, vector<256x128xf32>
    %30 = arith.addf %29, %28 : vector<256x128xf32>
    %c0_27 = arith.constant 0 : index
    %c0_28 = arith.constant 0 : index
    %31 = vector.load %arg6[%c0_27, %c0_28] : memref<256x128xf32, #tpu.memory_space<vmem>>, vector<256x128xf32>
    tpu.vector_store %arg6[%c0_27, %c0_28], %30 {strides = array<i32>} : memref<256x128xf32, #tpu.memory_space<vmem>>, vector<256x128xf32>,
    %c1_i32 = arith.constant 1 : i32
    %32 = arith.addi %0, %c1_i32 : i32
    %c0_29 = arith.constant 0 : index
    %33 = arith.index_cast %32 : i32 to index
    %c0_30 = arith.constant 0 : index
    %c0_31 = arith.constant 0 : index
    %34 = vector.load %arg2[%c0_29, %33, %c0_30, %c0_31] : memref<1x18x18x4xf32, #tpu.memory_space<vmem>>, vector<1x16x16x4xf32>
    %35 = vector.shape_cast %34 : vector<1x16x16x4xf32> to vector<16x16x4xf32>
    %36 = vector.shape_cast %35 : vector<16x16x4xf32> to vector<256x4xf32>
    %c3 = arith.constant 3 : index
    %c0_32 = arith.constant 0 : index
    %c0_33 = arith.constant 0 : index
    %37 = vector.load %arg3[%c3, %c0_32, %c0_33] : memref<9x4x128xf32, #tpu.memory_space<vmem>>, vector<1x4x128xf32>
    %38 = vector.shape_cast %37 : vector<1x4x128xf32> to vector<4x128xf32>
    %cst_34 = arith.constant dense<0.000000e+00> : vector<256x128xf32>
    %39 = tpu.matmul %36, %38, %cst_34 {dimension_numbers = #tpu.dot_dimension_numbers<[1], [0], [0], [1], [0, 0, 1, 1], [], []>} : vector<256x4xf32>, vector<4x128xf32>, vector<256x128xf32> -> vector<256x128xf32>
    %c0_35 = arith.constant 0 : index
    %c0_36 = arith.constant 0 : index
    %40 = vector.load %arg6[%c0_35, %c0_36] : memref<256x128xf32, #tpu.memory_space<vmem>>, vector<256x128xf32>
    %41 = arith.addf %40, %39 : vector<256x128xf32>
    %c0_37 = arith.constant 0 : index
    %c0_38 = arith.constant 0 : index
    %42 = vector.load %arg6[%c0_37, %c0_38] : memref<256x128xf32, #tpu.memory_space<vmem>>, vector<256x128xf32>
    tpu.vector_store %arg6[%c0_37, %c0_38], %41 {strides = array<i32>} : memref<256x128xf32, #tpu.memory_space<vmem>>, vector<256x128xf32>,
    %c1_i32_39 = arith.constant 1 : i32
    %43 = arith.addi %0, %c1_i32_39 : i32
    %c0_40 = arith.constant 0 : index
    %44 = arith.index_cast %43 : i32 to index
    %c1_41 = arith.constant 1 : index
    %c0_42 = arith.constant 0 : index
    %45 = vector.load %arg2[%c0_40, %44, %c1_41, %c0_42] : memref<1x18x18x4xf32, #tpu.memory_space<vmem>>, vector<1x16x16x4xf32>
    %46 = vector.shape_cast %45 : vector<1x16x16x4xf32> to vector<16x16x4xf32>
    %47 = vector.shape_cast %46 : vector<16x16x4xf32> to vector<256x4xf32>
    %c4 = arith.constant 4 : index
    %c0_43 = arith.constant 0 : index
    %c0_44 = arith.constant 0 : index
    %48 = vector.load %arg3[%c4, %c0_43, %c0_44] : memref<9x4x128xf32, #tpu.memory_space<vmem>>, vector<1x4x128xf32>
    %49 = vector.shape_cast %48 : vector<1x4x128xf32> to vector<4x128xf32>
    %cst_45 = arith.constant dense<0.000000e+00> : vector<256x128xf32>
    %50 = tpu.matmul %47, %49, %cst_45 {dimension_numbers = #tpu.dot_dimension_numbers<[1], [0], [0], [1], [0, 0, 1, 1], [], []>} : vector<256x4xf32>, vector<4x128xf32>, vector<256x128xf32> -> vector<256x128xf32>
    %c0_46 = arith.constant 0 : index
    %c0_47 = arith.constant 0 : index
    %51 = vector.load %arg6[%c0_46, %c0_47] : memref<256x128xf32, #tpu.memory_space<vmem>>, vector<256x128xf32>
    %52 = arith.addf %51, %50 : vector<256x128xf32>
    %c0_48 = arith.constant 0 : index
    %c0_49 = arith.constant 0 : index
    %53 = vector.load %arg6[%c0_48, %c0_49] : memref<256x128xf32, #tpu.memory_space<vmem>>, vector<256x128xf32>
    tpu.vector_store %arg6[%c0_48, %c0_49], %52 {strides = array<i32>} : memref<256x128xf32, #tpu.memory_space<vmem>>, vector<256x128xf32>,
    %c1_i32_50 = arith.constant 1 : i32
    %54 = arith.addi %0, %c1_i32_50 : i32
    %c0_51 = arith.constant 0 : index
    %55 = arith.index_cast %54 : i32 to index
    %c2_52 = arith.constant 2 : index
    %c0_53 = arith.constant 0 : index
    %56 = vector.load %arg2[%c0_51, %55, %c2_52, %c0_53] : memref<1x18x18x4xf32, #tpu.memory_space<vmem>>, vector<1x16x16x4xf32>
    %57 = vector.shape_cast %56 : vector<1x16x16x4xf32> to vector<16x16x4xf32>
    %58 = vector.shape_cast %57 : vector<16x16x4xf32> to vector<256x4xf32>
    %c5 = arith.constant 5 : index
    %c0_54 = arith.constant 0 : index
    %c0_55 = arith.constant 0 : index
    %59 = vector.load %arg3[%c5, %c0_54, %c0_55] : memref<9x4x128xf32, #tpu.memory_space<vmem>>, vector<1x4x128xf32>
    %60 = vector.shape_cast %59 : vector<1x4x128xf32> to vector<4x128xf32>
    %cst_56 = arith.constant dense<0.000000e+00> : vector<256x128xf32>
    %61 = tpu.matmul %58, %60, %cst_56 {dimension_numbers = #tpu.dot_dimension_numbers<[1], [0], [0], [1], [0, 0, 1, 1], [], []>} : vector<256x4xf32>, vector<4x128xf32>, vector<256x128xf32> -> vector<256x128xf32>
    %c0_57 = arith.constant 0 : index
    %c0_58 = arith.constant 0 : index
    %62 = vector.load %arg6[%c0_57, %c0_58] : memref<256x128xf32, #tpu.memory_space<vmem>>, vector<256x128xf32>
    %63 = arith.addf %62, %61 : vector<256x128xf32>
    %c0_59 = arith.constant 0 : index
    %c0_60 = arith.constant 0 : index
    %64 = vector.load %arg6[%c0_59, %c0_60] : memref<256x128xf32, #tpu.memory_space<vmem>>, vector<256x128xf32>
    tpu.vector_store %arg6[%c0_59, %c0_60], %63 {strides = array<i32>} : memref<256x128xf32, #tpu.memory_space<vmem>>, vector<256x128xf32>,
    %c2_i32 = arith.constant 2 : i32
    %65 = arith.addi %0, %c2_i32 : i32
    %c0_61 = arith.constant 0 : index
    %66 = arith.index_cast %65 : i32 to index
    %c0_62 = arith.constant 0 : index
    %c0_63 = arith.constant 0 : index
    %67 = vector.load %arg2[%c0_61, %66, %c0_62, %c0_63] : memref<1x18x18x4xf32, #tpu.memory_space<vmem>>, vector<1x16x16x4xf32>
    %68 = vector.shape_cast %67 : vector<1x16x16x4xf32> to vector<16x16x4xf32>
    %69 = vector.shape_cast %68 : vector<16x16x4xf32> to vector<256x4xf32>
    %c6 = arith.constant 6 : index
    %c0_64 = arith.constant 0 : index
    %c0_65 = arith.constant 0 : index
    %70 = vector.load %arg3[%c6, %c0_64, %c0_65] : memref<9x4x128xf32, #tpu.memory_space<vmem>>, vector<1x4x128xf32>
    %71 = vector.shape_cast %70 : vector<1x4x128xf32> to vector<4x128xf32>
    %cst_66 = arith.constant dense<0.000000e+00> : vector<256x128xf32>
    %72 = tpu.matmul %69, %71, %cst_66 {dimension_numbers = #tpu.dot_dimension_numbers<[1], [0], [0], [1], [0, 0, 1, 1], [], []>} : vector<256x4xf32>, vector<4x128xf32>, vector<256x128xf32> -> vector<256x128xf32>
    %c0_67 = arith.constant 0 : index
    %c0_68 = arith.constant 0 : index
    %73 = vector.load %arg6[%c0_67, %c0_68] : memref<256x128xf32, #tpu.memory_space<vmem>>, vector<256x128xf32>
    %74 = arith.addf %73, %72 : vector<256x128xf32>
    %c0_69 = arith.constant 0 : index
    %c0_70 = arith.constant 0 : index
    %75 = vector.load %arg6[%c0_69, %c0_70] : memref<256x128xf32, #tpu.memory_space<vmem>>, vector<256x128xf32>
    tpu.vector_store %arg6[%c0_69, %c0_70], %74 {strides = array<i32>} : memref<256x128xf32, #tpu.memory_space<vmem>>, vector<256x128xf32>,
    %c2_i32_71 = arith.constant 2 : i32
    %76 = arith.addi %0, %c2_i32_71 : i32
    %c0_72 = arith.constant 0 : index
    %77 = arith.index_cast %76 : i32 to index
    %c1_73 = arith.constant 1 : index
    %c0_74 = arith.constant 0 : index
    %78 = vector.load %arg2[%c0_72, %77, %c1_73, %c0_74] : memref<1x18x18x4xf32, #tpu.memory_space<vmem>>, vector<1x16x16x4xf32>
    %79 = vector.shape_cast %78 : vector<1x16x16x4xf32> to vector<16x16x4xf32>
    %80 = vector.shape_cast %79 : vector<16x16x4xf32> to vector<256x4xf32>
    %c7 = arith.constant 7 : index
    %c0_75 = arith.constant 0 : index
    %c0_76 = arith.constant 0 : index
    %81 = vector.load %arg3[%c7, %c0_75, %c0_76] : memref<9x4x128xf32, #tpu.memory_space<vmem>>, vector<1x4x128xf32>
    %82 = vector.shape_cast %81 : vector<1x4x128xf32> to vector<4x128xf32>
    %cst_77 = arith.constant dense<0.000000e+00> : vector<256x128xf32>
    %83 = tpu.matmul %80, %82, %cst_77 {dimension_numbers = #tpu.dot_dimension_numbers<[1], [0], [0], [1], [0, 0, 1, 1], [], []>} : vector<256x4xf32>, vector<4x128xf32>, vector<256x128xf32> -> vector<256x128xf32>
    %c0_78 = arith.constant 0 : index
    %c0_79 = arith.constant 0 : index
    %84 = vector.load %arg6[%c0_78, %c0_79] : memref<256x128xf32, #tpu.memory_space<vmem>>, vector<256x128xf32>
    %85 = arith.addf %84, %83 : vector<256x128xf32>
    %c0_80 = arith.constant 0 : index
    %c0_81 = arith.constant 0 : index
    %86 = vector.load %arg6[%c0_80, %c0_81] : memref<256x128xf32, #tpu.memory_space<vmem>>, vector<256x128xf32>
    tpu.vector_store %arg6[%c0_80, %c0_81], %85 {strides = array<i32>} : memref<256x128xf32, #tpu.memory_space<vmem>>, vector<256x128xf32>,
    %c2_i32_82 = arith.constant 2 : i32
    %87 = arith.addi %0, %c2_i32_82 : i32
    %c0_83 = arith.constant 0 : index
    %88 = arith.index_cast %87 : i32 to index
    %c2_84 = arith.constant 2 : index
    %c0_85 = arith.constant 0 : index
    %89 = vector.load %arg2[%c0_83, %88, %c2_84, %c0_85] : memref<1x18x18x4xf32, #tpu.memory_space<vmem>>, vector<1x16x16x4xf32>
    %90 = vector.shape_cast %89 : vector<1x16x16x4xf32> to vector<16x16x4xf32>
    %91 = vector.shape_cast %90 : vector<16x16x4xf32> to vector<256x4xf32>
    %c8 = arith.constant 8 : index
    %c0_86 = arith.constant 0 : index
    %c0_87 = arith.constant 0 : index
    %92 = vector.load %arg3[%c8, %c0_86, %c0_87] : memref<9x4x128xf32, #tpu.memory_space<vmem>>, vector<1x4x128xf32>
    %93 = vector.shape_cast %92 : vector<1x4x128xf32> to vector<4x128xf32>
    %cst_88 = arith.constant dense<0.000000e+00> : vector<256x128xf32>
    %94 = tpu.matmul %91, %93, %cst_88 {dimension_numbers = #tpu.dot_dimension_numbers<[1], [0], [0], [1], [0, 0, 1, 1], [], []>} : vector<256x4xf32>, vector<4x128xf32>, vector<256x128xf32> -> vector<256x128xf32>
    %c0_89 = arith.constant 0 : index
    %c0_90 = arith.constant 0 : index
    %95 = vector.load %arg6[%c0_89, %c0_90] : memref<256x128xf32, #tpu.memory_space<vmem>>, vector<256x128xf32>
    %96 = arith.addf %95, %94 : vector<256x128xf32>
    %c0_91 = arith.constant 0 : index
    %c0_92 = arith.constant 0 : index
    %97 = vector.load %arg6[%c0_91, %c0_92] : memref<256x128xf32, #tpu.memory_space<vmem>>, vector<256x128xf32>
    tpu.vector_store %arg6[%c0_91, %c0_92], %96 {strides = array<i32>} : memref<256x128xf32, #tpu.memory_space<vmem>>, vector<256x128xf32>,
    %c0_i32_93 = arith.constant 0 : i32
    %98 = arith.cmpi eq, %arg1, %c0_i32_93 : i32
    %99 = arith.extui %98 : i1 to i32
    %c0_i32_94 = arith.constant 0 : i32
    %100 = arith.cmpi ne, %99, %c0_i32_94 : i32
    scf.if %100 {
      %cst_113 = arith.constant 0.000000e+00 : f32
      %119 = vector.broadcast %cst_113 : f32 to vector<1x1x128xf32>
      %c0_114 = arith.constant 0 : index
      %c0_115 = arith.constant 0 : index
      %c0_116 = arith.constant 0 : index
      %120 = vector.load %arg4[%c0_114, %c0_115, %c0_116] : memref<1x1x128xf32, #tpu.memory_space<vmem>>, vector<1x1x128xf32>
      tpu.vector_store %arg4[%c0_114, %c0_115, %c0_116], %119 {strides = array<i32>} : memref<1x1x128xf32, #tpu.memory_space<vmem>>, vector<1x1x128xf32>,
      %cst_117 = arith.constant 0.000000e+00 : f32
      %121 = vector.broadcast %cst_117 : f32 to vector<1x1x128xf32>
      %c0_118 = arith.constant 0 : index
      %c0_119 = arith.constant 0 : index
      %c0_120 = arith.constant 0 : index
      %122 = vector.load %arg5[%c0_118, %c0_119, %c0_120] : memref<1x1x128xf32, #tpu.memory_space<vmem>>, vector<1x1x128xf32>
      tpu.vector_store %arg5[%c0_118, %c0_119, %c0_120], %121 {strides = array<i32>} : memref<1x1x128xf32, #tpu.memory_space<vmem>>, vector<1x1x128xf32>,
    } else {
    }
    %cst_95 = arith.constant 0.000000e+00 : f32
    %101 = vector.broadcast %cst_95 : f32 to vector<1x128xf32>
    %cst_96 = arith.constant 0.000000e+00 : f32
    %102 = vector.broadcast %cst_96 : f32 to vector<1x128xf32>
    %c0_97 = arith.constant 0 : index
    %c0_98 = arith.constant 0 : index
    %103 = vector.load %arg6[%c0_97, %c0_98] : memref<256x128xf32, #tpu.memory_space<vmem>>, vector<256x128xf32>
    %cst_99 = arith.constant dense<0.000000e+00> : vector<128xf32>
    %104 = vector.multi_reduction <add>, %103, %cst_99 [0] : vector<256x128xf32> to vector<128xf32>
    %105 = vector.shape_cast %104 : vector<128xf32> to vector<1x128xf32>
    %106 = arith.addf %101, %105 : vector<1x128xf32>
    %107 = arith.mulf %103, %103 : vector<256x128xf32>
    %cst_100 = arith.constant dense<0.000000e+00> : vector<128xf32>
    %108 = vector.multi_reduction <add>, %107, %cst_100 [0] : vector<256x128xf32> to vector<128xf32>
    %109 = vector.shape_cast %108 : vector<128xf32> to vector<1x128xf32>
    %110 = arith.addf %102, %109 : vector<1x128xf32>
    %c0_101 = arith.constant 0 : index
    %c0_102 = arith.constant 0 : index
    %c0_103 = arith.constant 0 : index
    %111 = vector.load %arg4[%c0_101, %c0_102, %c0_103] : memref<1x1x128xf32, #tpu.memory_space<vmem>>, vector<1x1x128xf32>
    %112 = vector.shape_cast %106 : vector<1x128xf32> to vector<1x1x128xf32>
    %113 = arith.addf %111, %112 : vector<1x1x128xf32>
    %c0_104 = arith.constant 0 : index
    %c0_105 = arith.constant 0 : index
    %c0_106 = arith.constant 0 : index
    %114 = vector.load %arg4[%c0_104, %c0_105, %c0_106] : memref<1x1x128xf32, #tpu.memory_space<vmem>>, vector<1x1x128xf32>
    tpu.vector_store %arg4[%c0_104, %c0_105, %c0_106], %113 {strides = array<i32>} : memref<1x1x128xf32, #tpu.memory_space<vmem>>, vector<1x1x128xf32>,
    %c0_107 = arith.constant 0 : index
    %c0_108 = arith.constant 0 : index
    %c0_109 = arith.constant 0 : index
    %115 = vector.load %arg5[%c0_107, %c0_108, %c0_109] : memref<1x1x128xf32, #tpu.memory_space<vmem>>, vector<1x1x128xf32>
    %116 = vector.shape_cast %110 : vector<1x128xf32> to vector<1x1x128xf32>
    %117 = arith.addf %115, %116 : vector<1x1x128xf32>
    %c0_110 = arith.constant 0 : index
    %c0_111 = arith.constant 0 : index
    %c0_112 = arith.constant 0 : index
    %118 = vector.load %arg5[%c0_110, %c0_111, %c0_112] : memref<1x1x128xf32, #tpu.memory_space<vmem>>, vector<1x1x128xf32>
    tpu.vector_store %arg5[%c0_110, %c0_111, %c0_112], %117 {strides = array<i32>} : memref<1x1x128xf32, #tpu.memory_space<vmem>>, vector<1x1x128xf32>,
    return
  }
  func.func @transform_0(%arg0: i32, %arg1: i32) -> (i32, i32, i32, i32) {
    %c0_i32 = arith.constant 0 : i32
    %c0_i32_0 = arith.constant 0 : i32
    %c0_i32_1 = arith.constant 0 : i32
    %c0_i32_2 = arith.constant 0 : i32
    return %arg0, %c0_i32, %c0_i32_0, %c0_i32_1 : i32, i32, i32, i32
  }
  func.func @transform_1(%arg0: i32, %arg1: i32) -> (i32, i32, i32) {
    %c0_i32 = arith.constant 0 : i32
    %c0_i32_0 = arith.constant 0 : i32
    %c0_i32_1 = arith.constant 0 : i32
    %c0_i32_2 = arith.constant 0 : i32
    return %c0_i32, %c0_i32_0, %c0_i32_1 : i32, i32, i32
  }
  func.func @transform_2(%arg0: i32, %arg1: i32) -> (i32, i32, i32) {
    %c0_i32 = arith.constant 0 : i32
    %c0_i32_0 = arith.constant 0 : i32
    %c0_i32_1 = arith.constant 0 : i32
    return %arg0, %c0_i32, %c0_i32_0 : i32, i32, i32
  }
  func.func @transform_3(%arg0: i32, %arg1: i32) -> (i32, i32, i32) {
    %c0_i32 = arith.constant 0 : i32
    %c0_i32_0 = arith.constant 0 : i32
    %c0_i32_1 = arith.constant 0 : i32
    return %arg0, %c0_i32, %c0_i32_0 : i32, i32, i32
  }
}

module attributes {stable_mosaic.version = 11 : i64} {
  func.func @_apply_kernel(%arg0: i32, %arg1: i32, %arg2: memref<1x18x18x4xf32, #tpu.memory_space<vmem>>, %arg3: memref<9x4x128xf32, #tpu.memory_space<vmem>>, %arg4: memref<1x128xf32, #tpu.memory_space<vmem>>, %arg5: memref<1x128xf32, #tpu.memory_space<vmem>>, %arg6: memref<1x256x128xf32, #tpu.memory_space<vmem>>, %arg7: memref<256x128xf32, #tpu.memory_space<vmem>>) attributes {dimension_semantics = [#tpu.dimension_semantics<parallel>, #tpu.dimension_semantics<parallel>], iteration_bounds = array<i64: 2, 1>, scalar_prefetch = 0 : i64, scratch_operands = 1 : i64, tpu.core_type = #tpu.core_type<tc>, window_params = [{transform_indices = @transform_0, window_bounds = array<i64: 1, 18, 18, 4>}, {pipeline_mode = #tpu.pipeline_mode<synchronous>, transform_indices = @transform_1, window_bounds = array<i64: 9, 4, 128>}, {pipeline_mode = #tpu.pipeline_mode<synchronous>, transform_indices = @transform_2, window_bounds = array<i64: 1, 128>}, {pipeline_mode = #tpu.pipeline_mode<synchronous>, transform_indices = @transform_3, window_bounds = array<i64: 1, 128>}, {transform_indices = @transform_4, window_bounds = array<i64: 1, 256, 128>}]} {
    %c16_i32 = arith.constant 16 : i32
    %0 = arith.muli %arg1, %c16_i32 : i32
    %c0_i32 = arith.constant 0 : i32
    %1 = arith.addi %0, %c0_i32 : i32
    %c0 = arith.constant 0 : index
    %2 = arith.index_cast %1 : i32 to index
    %c0_0 = arith.constant 0 : index
    %c0_1 = arith.constant 0 : index
    %3 = vector.load %arg2[%c0, %2, %c0_0, %c0_1] : memref<1x18x18x4xf32, #tpu.memory_space<vmem>>, vector<1x16x16x4xf32>
    %4 = vector.shape_cast %3 : vector<1x16x16x4xf32> to vector<16x16x4xf32>
    %5 = vector.shape_cast %4 : vector<16x16x4xf32> to vector<256x4xf32>
    %c0_2 = arith.constant 0 : index
    %c0_3 = arith.constant 0 : index
    %c0_4 = arith.constant 0 : index
    %6 = vector.load %arg3[%c0_2, %c0_3, %c0_4] : memref<9x4x128xf32, #tpu.memory_space<vmem>>, vector<1x4x128xf32>
    %7 = vector.shape_cast %6 : vector<1x4x128xf32> to vector<4x128xf32>
    %cst = arith.constant dense<0.000000e+00> : vector<256x128xf32>
    %8 = tpu.matmul %5, %7, %cst {dimension_numbers = #tpu.dot_dimension_numbers<[1], [0], [0], [1], [0, 0, 1, 1], [], []>} : vector<256x4xf32>, vector<4x128xf32>, vector<256x128xf32> -> vector<256x128xf32>
    %c0_5 = arith.constant 0 : index
    %c0_6 = arith.constant 0 : index
    %9 = vector.load %arg7[%c0_5, %c0_6] : memref<256x128xf32, #tpu.memory_space<vmem>>, vector<256x128xf32>
    tpu.vector_store %arg7[%c0_5, %c0_6], %8 {strides = array<i32>} : memref<256x128xf32, #tpu.memory_space<vmem>>, vector<256x128xf32>,
    %c0_i32_7 = arith.constant 0 : i32
    %10 = arith.addi %0, %c0_i32_7 : i32
    %c0_8 = arith.constant 0 : index
    %11 = arith.index_cast %10 : i32 to index
    %c1 = arith.constant 1 : index
    %c0_9 = arith.constant 0 : index
    %12 = vector.load %arg2[%c0_8, %11, %c1, %c0_9] : memref<1x18x18x4xf32, #tpu.memory_space<vmem>>, vector<1x16x16x4xf32>
    %13 = vector.shape_cast %12 : vector<1x16x16x4xf32> to vector<16x16x4xf32>
    %14 = vector.shape_cast %13 : vector<16x16x4xf32> to vector<256x4xf32>
    %c1_10 = arith.constant 1 : index
    %c0_11 = arith.constant 0 : index
    %c0_12 = arith.constant 0 : index
    %15 = vector.load %arg3[%c1_10, %c0_11, %c0_12] : memref<9x4x128xf32, #tpu.memory_space<vmem>>, vector<1x4x128xf32>
    %16 = vector.shape_cast %15 : vector<1x4x128xf32> to vector<4x128xf32>
    %cst_13 = arith.constant dense<0.000000e+00> : vector<256x128xf32>
    %17 = tpu.matmul %14, %16, %cst_13 {dimension_numbers = #tpu.dot_dimension_numbers<[1], [0], [0], [1], [0, 0, 1, 1], [], []>} : vector<256x4xf32>, vector<4x128xf32>, vector<256x128xf32> -> vector<256x128xf32>
    %c0_14 = arith.constant 0 : index
    %c0_15 = arith.constant 0 : index
    %18 = vector.load %arg7[%c0_14, %c0_15] : memref<256x128xf32, #tpu.memory_space<vmem>>, vector<256x128xf32>
    %19 = arith.addf %18, %17 : vector<256x128xf32>
    %c0_16 = arith.constant 0 : index
    %c0_17 = arith.constant 0 : index
    %20 = vector.load %arg7[%c0_16, %c0_17] : memref<256x128xf32, #tpu.memory_space<vmem>>, vector<256x128xf32>
    tpu.vector_store %arg7[%c0_16, %c0_17], %19 {strides = array<i32>} : memref<256x128xf32, #tpu.memory_space<vmem>>, vector<256x128xf32>,
    %c0_i32_18 = arith.constant 0 : i32
    %21 = arith.addi %0, %c0_i32_18 : i32
    %c0_19 = arith.constant 0 : index
    %22 = arith.index_cast %21 : i32 to index
    %c2 = arith.constant 2 : index
    %c0_20 = arith.constant 0 : index
    %23 = vector.load %arg2[%c0_19, %22, %c2, %c0_20] : memref<1x18x18x4xf32, #tpu.memory_space<vmem>>, vector<1x16x16x4xf32>
    %24 = vector.shape_cast %23 : vector<1x16x16x4xf32> to vector<16x16x4xf32>
    %25 = vector.shape_cast %24 : vector<16x16x4xf32> to vector<256x4xf32>
    %c2_21 = arith.constant 2 : index
    %c0_22 = arith.constant 0 : index
    %c0_23 = arith.constant 0 : index
    %26 = vector.load %arg3[%c2_21, %c0_22, %c0_23] : memref<9x4x128xf32, #tpu.memory_space<vmem>>, vector<1x4x128xf32>
    %27 = vector.shape_cast %26 : vector<1x4x128xf32> to vector<4x128xf32>
    %cst_24 = arith.constant dense<0.000000e+00> : vector<256x128xf32>
    %28 = tpu.matmul %25, %27, %cst_24 {dimension_numbers = #tpu.dot_dimension_numbers<[1], [0], [0], [1], [0, 0, 1, 1], [], []>} : vector<256x4xf32>, vector<4x128xf32>, vector<256x128xf32> -> vector<256x128xf32>
    %c0_25 = arith.constant 0 : index
    %c0_26 = arith.constant 0 : index
    %29 = vector.load %arg7[%c0_25, %c0_26] : memref<256x128xf32, #tpu.memory_space<vmem>>, vector<256x128xf32>
    %30 = arith.addf %29, %28 : vector<256x128xf32>
    %c0_27 = arith.constant 0 : index
    %c0_28 = arith.constant 0 : index
    %31 = vector.load %arg7[%c0_27, %c0_28] : memref<256x128xf32, #tpu.memory_space<vmem>>, vector<256x128xf32>
    tpu.vector_store %arg7[%c0_27, %c0_28], %30 {strides = array<i32>} : memref<256x128xf32, #tpu.memory_space<vmem>>, vector<256x128xf32>,
    %c1_i32 = arith.constant 1 : i32
    %32 = arith.addi %0, %c1_i32 : i32
    %c0_29 = arith.constant 0 : index
    %33 = arith.index_cast %32 : i32 to index
    %c0_30 = arith.constant 0 : index
    %c0_31 = arith.constant 0 : index
    %34 = vector.load %arg2[%c0_29, %33, %c0_30, %c0_31] : memref<1x18x18x4xf32, #tpu.memory_space<vmem>>, vector<1x16x16x4xf32>
    %35 = vector.shape_cast %34 : vector<1x16x16x4xf32> to vector<16x16x4xf32>
    %36 = vector.shape_cast %35 : vector<16x16x4xf32> to vector<256x4xf32>
    %c3 = arith.constant 3 : index
    %c0_32 = arith.constant 0 : index
    %c0_33 = arith.constant 0 : index
    %37 = vector.load %arg3[%c3, %c0_32, %c0_33] : memref<9x4x128xf32, #tpu.memory_space<vmem>>, vector<1x4x128xf32>
    %38 = vector.shape_cast %37 : vector<1x4x128xf32> to vector<4x128xf32>
    %cst_34 = arith.constant dense<0.000000e+00> : vector<256x128xf32>
    %39 = tpu.matmul %36, %38, %cst_34 {dimension_numbers = #tpu.dot_dimension_numbers<[1], [0], [0], [1], [0, 0, 1, 1], [], []>} : vector<256x4xf32>, vector<4x128xf32>, vector<256x128xf32> -> vector<256x128xf32>
    %c0_35 = arith.constant 0 : index
    %c0_36 = arith.constant 0 : index
    %40 = vector.load %arg7[%c0_35, %c0_36] : memref<256x128xf32, #tpu.memory_space<vmem>>, vector<256x128xf32>
    %41 = arith.addf %40, %39 : vector<256x128xf32>
    %c0_37 = arith.constant 0 : index
    %c0_38 = arith.constant 0 : index
    %42 = vector.load %arg7[%c0_37, %c0_38] : memref<256x128xf32, #tpu.memory_space<vmem>>, vector<256x128xf32>
    tpu.vector_store %arg7[%c0_37, %c0_38], %41 {strides = array<i32>} : memref<256x128xf32, #tpu.memory_space<vmem>>, vector<256x128xf32>,
    %c1_i32_39 = arith.constant 1 : i32
    %43 = arith.addi %0, %c1_i32_39 : i32
    %c0_40 = arith.constant 0 : index
    %44 = arith.index_cast %43 : i32 to index
    %c1_41 = arith.constant 1 : index
    %c0_42 = arith.constant 0 : index
    %45 = vector.load %arg2[%c0_40, %44, %c1_41, %c0_42] : memref<1x18x18x4xf32, #tpu.memory_space<vmem>>, vector<1x16x16x4xf32>
    %46 = vector.shape_cast %45 : vector<1x16x16x4xf32> to vector<16x16x4xf32>
    %47 = vector.shape_cast %46 : vector<16x16x4xf32> to vector<256x4xf32>
    %c4 = arith.constant 4 : index
    %c0_43 = arith.constant 0 : index
    %c0_44 = arith.constant 0 : index
    %48 = vector.load %arg3[%c4, %c0_43, %c0_44] : memref<9x4x128xf32, #tpu.memory_space<vmem>>, vector<1x4x128xf32>
    %49 = vector.shape_cast %48 : vector<1x4x128xf32> to vector<4x128xf32>
    %cst_45 = arith.constant dense<0.000000e+00> : vector<256x128xf32>
    %50 = tpu.matmul %47, %49, %cst_45 {dimension_numbers = #tpu.dot_dimension_numbers<[1], [0], [0], [1], [0, 0, 1, 1], [], []>} : vector<256x4xf32>, vector<4x128xf32>, vector<256x128xf32> -> vector<256x128xf32>
    %c0_46 = arith.constant 0 : index
    %c0_47 = arith.constant 0 : index
    %51 = vector.load %arg7[%c0_46, %c0_47] : memref<256x128xf32, #tpu.memory_space<vmem>>, vector<256x128xf32>
    %52 = arith.addf %51, %50 : vector<256x128xf32>
    %c0_48 = arith.constant 0 : index
    %c0_49 = arith.constant 0 : index
    %53 = vector.load %arg7[%c0_48, %c0_49] : memref<256x128xf32, #tpu.memory_space<vmem>>, vector<256x128xf32>
    tpu.vector_store %arg7[%c0_48, %c0_49], %52 {strides = array<i32>} : memref<256x128xf32, #tpu.memory_space<vmem>>, vector<256x128xf32>,
    %c1_i32_50 = arith.constant 1 : i32
    %54 = arith.addi %0, %c1_i32_50 : i32
    %c0_51 = arith.constant 0 : index
    %55 = arith.index_cast %54 : i32 to index
    %c2_52 = arith.constant 2 : index
    %c0_53 = arith.constant 0 : index
    %56 = vector.load %arg2[%c0_51, %55, %c2_52, %c0_53] : memref<1x18x18x4xf32, #tpu.memory_space<vmem>>, vector<1x16x16x4xf32>
    %57 = vector.shape_cast %56 : vector<1x16x16x4xf32> to vector<16x16x4xf32>
    %58 = vector.shape_cast %57 : vector<16x16x4xf32> to vector<256x4xf32>
    %c5 = arith.constant 5 : index
    %c0_54 = arith.constant 0 : index
    %c0_55 = arith.constant 0 : index
    %59 = vector.load %arg3[%c5, %c0_54, %c0_55] : memref<9x4x128xf32, #tpu.memory_space<vmem>>, vector<1x4x128xf32>
    %60 = vector.shape_cast %59 : vector<1x4x128xf32> to vector<4x128xf32>
    %cst_56 = arith.constant dense<0.000000e+00> : vector<256x128xf32>
    %61 = tpu.matmul %58, %60, %cst_56 {dimension_numbers = #tpu.dot_dimension_numbers<[1], [0], [0], [1], [0, 0, 1, 1], [], []>} : vector<256x4xf32>, vector<4x128xf32>, vector<256x128xf32> -> vector<256x128xf32>
    %c0_57 = arith.constant 0 : index
    %c0_58 = arith.constant 0 : index
    %62 = vector.load %arg7[%c0_57, %c0_58] : memref<256x128xf32, #tpu.memory_space<vmem>>, vector<256x128xf32>
    %63 = arith.addf %62, %61 : vector<256x128xf32>
    %c0_59 = arith.constant 0 : index
    %c0_60 = arith.constant 0 : index
    %64 = vector.load %arg7[%c0_59, %c0_60] : memref<256x128xf32, #tpu.memory_space<vmem>>, vector<256x128xf32>
    tpu.vector_store %arg7[%c0_59, %c0_60], %63 {strides = array<i32>} : memref<256x128xf32, #tpu.memory_space<vmem>>, vector<256x128xf32>,
    %c2_i32 = arith.constant 2 : i32
    %65 = arith.addi %0, %c2_i32 : i32
    %c0_61 = arith.constant 0 : index
    %66 = arith.index_cast %65 : i32 to index
    %c0_62 = arith.constant 0 : index
    %c0_63 = arith.constant 0 : index
    %67 = vector.load %arg2[%c0_61, %66, %c0_62, %c0_63] : memref<1x18x18x4xf32, #tpu.memory_space<vmem>>, vector<1x16x16x4xf32>
    %68 = vector.shape_cast %67 : vector<1x16x16x4xf32> to vector<16x16x4xf32>
    %69 = vector.shape_cast %68 : vector<16x16x4xf32> to vector<256x4xf32>
    %c6 = arith.constant 6 : index
    %c0_64 = arith.constant 0 : index
    %c0_65 = arith.constant 0 : index
    %70 = vector.load %arg3[%c6, %c0_64, %c0_65] : memref<9x4x128xf32, #tpu.memory_space<vmem>>, vector<1x4x128xf32>
    %71 = vector.shape_cast %70 : vector<1x4x128xf32> to vector<4x128xf32>
    %cst_66 = arith.constant dense<0.000000e+00> : vector<256x128xf32>
    %72 = tpu.matmul %69, %71, %cst_66 {dimension_numbers = #tpu.dot_dimension_numbers<[1], [0], [0], [1], [0, 0, 1, 1], [], []>} : vector<256x4xf32>, vector<4x128xf32>, vector<256x128xf32> -> vector<256x128xf32>
    %c0_67 = arith.constant 0 : index
    %c0_68 = arith.constant 0 : index
    %73 = vector.load %arg7[%c0_67, %c0_68] : memref<256x128xf32, #tpu.memory_space<vmem>>, vector<256x128xf32>
    %74 = arith.addf %73, %72 : vector<256x128xf32>
    %c0_69 = arith.constant 0 : index
    %c0_70 = arith.constant 0 : index
    %75 = vector.load %arg7[%c0_69, %c0_70] : memref<256x128xf32, #tpu.memory_space<vmem>>, vector<256x128xf32>
    tpu.vector_store %arg7[%c0_69, %c0_70], %74 {strides = array<i32>} : memref<256x128xf32, #tpu.memory_space<vmem>>, vector<256x128xf32>,
    %c2_i32_71 = arith.constant 2 : i32
    %76 = arith.addi %0, %c2_i32_71 : i32
    %c0_72 = arith.constant 0 : index
    %77 = arith.index_cast %76 : i32 to index
    %c1_73 = arith.constant 1 : index
    %c0_74 = arith.constant 0 : index
    %78 = vector.load %arg2[%c0_72, %77, %c1_73, %c0_74] : memref<1x18x18x4xf32, #tpu.memory_space<vmem>>, vector<1x16x16x4xf32>
    %79 = vector.shape_cast %78 : vector<1x16x16x4xf32> to vector<16x16x4xf32>
    %80 = vector.shape_cast %79 : vector<16x16x4xf32> to vector<256x4xf32>
    %c7 = arith.constant 7 : index
    %c0_75 = arith.constant 0 : index
    %c0_76 = arith.constant 0 : index
    %81 = vector.load %arg3[%c7, %c0_75, %c0_76] : memref<9x4x128xf32, #tpu.memory_space<vmem>>, vector<1x4x128xf32>
    %82 = vector.shape_cast %81 : vector<1x4x128xf32> to vector<4x128xf32>
    %cst_77 = arith.constant dense<0.000000e+00> : vector<256x128xf32>
    %83 = tpu.matmul %80, %82, %cst_77 {dimension_numbers = #tpu.dot_dimension_numbers<[1], [0], [0], [1], [0, 0, 1, 1], [], []>} : vector<256x4xf32>, vector<4x128xf32>, vector<256x128xf32> -> vector<256x128xf32>
    %c0_78 = arith.constant 0 : index
    %c0_79 = arith.constant 0 : index
    %84 = vector.load %arg7[%c0_78, %c0_79] : memref<256x128xf32, #tpu.memory_space<vmem>>, vector<256x128xf32>
    %85 = arith.addf %84, %83 : vector<256x128xf32>
    %c0_80 = arith.constant 0 : index
    %c0_81 = arith.constant 0 : index
    %86 = vector.load %arg7[%c0_80, %c0_81] : memref<256x128xf32, #tpu.memory_space<vmem>>, vector<256x128xf32>
    tpu.vector_store %arg7[%c0_80, %c0_81], %85 {strides = array<i32>} : memref<256x128xf32, #tpu.memory_space<vmem>>, vector<256x128xf32>,
    %c2_i32_82 = arith.constant 2 : i32
    %87 = arith.addi %0, %c2_i32_82 : i32
    %c0_83 = arith.constant 0 : index
    %88 = arith.index_cast %87 : i32 to index
    %c2_84 = arith.constant 2 : index
    %c0_85 = arith.constant 0 : index
    %89 = vector.load %arg2[%c0_83, %88, %c2_84, %c0_85] : memref<1x18x18x4xf32, #tpu.memory_space<vmem>>, vector<1x16x16x4xf32>
    %90 = vector.shape_cast %89 : vector<1x16x16x4xf32> to vector<16x16x4xf32>
    %91 = vector.shape_cast %90 : vector<16x16x4xf32> to vector<256x4xf32>
    %c8 = arith.constant 8 : index
    %c0_86 = arith.constant 0 : index
    %c0_87 = arith.constant 0 : index
    %92 = vector.load %arg3[%c8, %c0_86, %c0_87] : memref<9x4x128xf32, #tpu.memory_space<vmem>>, vector<1x4x128xf32>
    %93 = vector.shape_cast %92 : vector<1x4x128xf32> to vector<4x128xf32>
    %cst_88 = arith.constant dense<0.000000e+00> : vector<256x128xf32>
    %94 = tpu.matmul %91, %93, %cst_88 {dimension_numbers = #tpu.dot_dimension_numbers<[1], [0], [0], [1], [0, 0, 1, 1], [], []>} : vector<256x4xf32>, vector<4x128xf32>, vector<256x128xf32> -> vector<256x128xf32>
    %c0_89 = arith.constant 0 : index
    %c0_90 = arith.constant 0 : index
    %95 = vector.load %arg7[%c0_89, %c0_90] : memref<256x128xf32, #tpu.memory_space<vmem>>, vector<256x128xf32>
    %96 = arith.addf %95, %94 : vector<256x128xf32>
    %c0_91 = arith.constant 0 : index
    %c0_92 = arith.constant 0 : index
    %97 = vector.load %arg7[%c0_91, %c0_92] : memref<256x128xf32, #tpu.memory_space<vmem>>, vector<256x128xf32>
    tpu.vector_store %arg7[%c0_91, %c0_92], %96 {strides = array<i32>} : memref<256x128xf32, #tpu.memory_space<vmem>>, vector<256x128xf32>,
    %c0_93 = arith.constant 0 : index
    %c0_94 = arith.constant 0 : index
    %98 = vector.load %arg4[%c0_93, %c0_94] : memref<1x128xf32, #tpu.memory_space<vmem>>, vector<1x128xf32>
    %c0_95 = arith.constant 0 : index
    %c0_96 = arith.constant 0 : index
    %99 = vector.load %arg5[%c0_95, %c0_96] : memref<1x128xf32, #tpu.memory_space<vmem>>, vector<1x128xf32>
    %c0_97 = arith.constant 0 : index
    %c0_98 = arith.constant 0 : index
    %100 = vector.load %arg7[%c0_97, %c0_98] : memref<256x128xf32, #tpu.memory_space<vmem>>, vector<256x128xf32>
    %101 = vector.broadcast %98 : vector<1x128xf32> to vector<256x128xf32>
    %102 = arith.mulf %100, %101 : vector<256x128xf32>
    %103 = vector.broadcast %99 : vector<1x128xf32> to vector<256x128xf32>
    %104 = arith.addf %102, %103 : vector<256x128xf32>
    %cst_99 = arith.constant 0.000000e+00 : f32
    %105 = vector.broadcast %cst_99 : f32 to vector<256x128xf32>
    %106 = arith.maximumf %104, %105 : vector<256x128xf32>
    %c0_100 = arith.constant 0 : index
    %c0_101 = arith.constant 0 : index
    %c0_102 = arith.constant 0 : index
    %107 = vector.load %arg6[%c0_100, %c0_101, %c0_102] : memref<1x256x128xf32, #tpu.memory_space<vmem>>, vector<1x256x128xf32>
    %108 = vector.shape_cast %107 : vector<1x256x128xf32> to vector<256x128xf32>
    %109 = vector.shape_cast %106 : vector<256x128xf32> to vector<1x256x128xf32>
    tpu.vector_store %arg6[%c0_100, %c0_101, %c0_102], %109 {strides = array<i32>} : memref<1x256x128xf32, #tpu.memory_space<vmem>>, vector<1x256x128xf32>,
    return
  }
  func.func @transform_0(%arg0: i32, %arg1: i32) -> (i32, i32, i32, i32) {
    %c0_i32 = arith.constant 0 : i32
    %c0_i32_0 = arith.constant 0 : i32
    %c0_i32_1 = arith.constant 0 : i32
    %c0_i32_2 = arith.constant 0 : i32
    return %arg0, %c0_i32, %c0_i32_0, %c0_i32_1 : i32, i32, i32, i32
  }
  func.func @transform_1(%arg0: i32, %arg1: i32) -> (i32, i32, i32) {
    %c0_i32 = arith.constant 0 : i32
    %c0_i32_0 = arith.constant 0 : i32
    %c0_i32_1 = arith.constant 0 : i32
    %c0_i32_2 = arith.constant 0 : i32
    return %c0_i32, %c0_i32_0, %c0_i32_1 : i32, i32, i32
  }
  func.func @transform_2(%arg0: i32, %arg1: i32) -> (i32, i32) {
    %c0_i32 = arith.constant 0 : i32
    %c0_i32_0 = arith.constant 0 : i32
    %c0_i32_1 = arith.constant 0 : i32
    return %c0_i32, %c0_i32_0 : i32, i32
  }
  func.func @transform_3(%arg0: i32, %arg1: i32) -> (i32, i32) {
    %c0_i32 = arith.constant 0 : i32
    %c0_i32_0 = arith.constant 0 : i32
    %c0_i32_1 = arith.constant 0 : i32
    return %c0_i32, %c0_i32_0 : i32, i32
  }
  func.func @transform_4(%arg0: i32, %arg1: i32) -> (i32, i32, i32) {
    %c0_i32 = arith.constant 0 : i32
    %c0_i32_0 = arith.constant 0 : i32
    return %arg0, %arg1, %c0_i32 : i32, i32, i32
  }
}

</mosaic_0001>

<llo_original>
// kernel: tile.18
$region0: #{tile.18}
  #allocation0 [shape = 's32[1]{0}', space=sflag, size = 0x4, scoped, tag = 'scoped memory for tile.18']
  %s0 = inlined_call_operand.vmem [shape: f32[8], index: 0, kind: input, shape index: {}]
  %s1 = inlined_call_operand.vmem [shape: f32[4,8], index: 1, kind: output, shape index: {}]
  // Predicated region
  $region2: #{tile.18} parent=0 // pred_check
    _
  $region3: #{tile.18} parent=0 // pred_check_branch
    %3 = sbr.rel (0) target = $region5
  $region4: #{tile.18} parent=0 // pred_region
    _
  $region5: #{tile.18} parent=0 // pred_fallthru
    _
  %v4 = vld [vmem:[%s0] ss:$0 sm:$0xff]
  %5 = vst [vmem:[%s1] sm:$0xf] %v4

// kernel: tile.19
$region0: #{tile.19}
  %s0 = inlined_call_operand.vmem [shape: f32[4,8], index: 0, kind: input, shape index: {}]
  %s1 = inlined_call_operand.vmem [shape: f32[32], index: 1, kind: output, shape index: {}]
  $region1: #{tile.19} parent=0
    #allocation0 [shape = 'u8[4096]{0}', space=vmem, size = 0x1000, scoped, tag = 'scoped mem for output reshape']
    #allocation1 [shape = 'u8[4096]{0}', space=vmem, size = 0x1000, scoped, tag = 'scoped mem for input reshape']
    %s3 = sshllo.u32 0, 4
    %v4 = vld [vmem:[%s0] sm:%s3]
    %5 = vst [vmem:[#allocation1] sm:%s3] %v4
    %v6 = vld [vmem:[#allocation1] sm:$0x1]
    %vm7 = vcmask 64512
    %8 = vst.msk [vmem:[#allocation0] sm:$0x1] %vm7, %v6
    %s9 = scalar_lea.vmem [#allocation1], 3
    %v10 = vld [vmem:[%s9] sm:$0x1]
    %11 = vrot.lane.b32.xlu0 %v10, 24
    %v12 = vpop.permute.xlu0 %11
    %vm13 = vcmask 261312
    %14 = vst.msk [vmem:[#allocation0] sm:$0x1] %vm13, %v12
    %s15 = scalar_lea.vmem [#allocation1], 2
    %v16 = vld [vmem:[%s15] sm:$0x1]
    %17 = vrot.lane.b32.xlu0 %v16, 16
    %v18 = vpop.permute.xlu0 %17
    %vm19 = vcmask 195712
    %20 = vst.msk [vmem:[#allocation0] sm:$0x1] %vm19, %v18
    %s21 = scalar_lea.vmem [#allocation1], 1
    %v22 = vld [vmem:[%s21] sm:$0x1]
    %23 = vrot.lane.b32.xlu0 %v22, 8
    %v24 = vpop.permute.xlu0 %23
    %vm25 = vcmask 130112
    %26 = vst.msk [vmem:[#allocation0] sm:$0x1] %vm25, %v24
    %s28 = sshllo.u32 0, 1
    %v30 = vld [vmem:[#allocation0] sm:%s28]
    %s31 = sshllo.u32 0, 1
    %32 = vst [vmem:[%s1] sm:%s31] %v30

// kernel: up_conv_forward.2
$region0: #{up_conv_forward.2}
  #allocation0 [shape = 'u32[]', space=smem, size = 0x4, offset = 0x4, fixed_abs, tag = 'smem constant byte address 0x4 - core index']
  #allocation1 [shape = 'u32[144,128]{1,0:T(1,128)}', space=vmem, size = 0x12000, scoped, tag = 'internal scratch']
  #allocation2 [shape = 'f32[256,128]{1,0:T(8,128)}', space=vmem, size = 0x20000, scoped, tag = 'scratch operand']
  %s0 = inlined_call_operand.vmem [shape: f32[2,18,18,4], index: 0, kind: input, shape index: {}]
  %s1 = inlined_call_operand.vmem [shape: f32[9,4,128], index: 1, kind: input, shape index: {}]
  %s2 = inlined_call_operand.vmem [shape: f32[2,1,128], index: 2, kind: output, shape index: {0}]
  %s3 = inlined_call_operand.vmem [shape: f32[2,1,128], index: 3, kind: output, shape index: {1}]
  %4 = xla_tuple %s2, %s3
  %s5 = sld [smem:[#allocation0]]
  $region53: #{up_conv_forward.2} parent=0
    _
  %s7 = ssub.s32 1, %s5
  %s8 = scalar_select 0, %s7, %s5
  loop: start=0, step=1, limit=4
  $region2: #{up_conv_forward.2} parent=0 // loop_pre_header
    _
  $region3: #{up_conv_forward.2} parent=0 // loop_header
    %s10 = sphi 0, %s14
    %p11 = scmp.ge.s32.totalorder %s10, 4
    %s17 = sphi 0, %s29
    %s18 = sphi 0, %s25
    %s19 = sphi 0, %s17
    %s20 = sphi 0, %s18
    %s21 = sphi 0, %s19
    %s22 = sphi 0, %s20
    %s32 = sphi 0, %s34
    %s35 = sphi 0, %s32
    %s36 = sphi 0, %s35
    %s52 = sphi 0, %s36
    %s56 = sphi 0, %s56
    %s58 = sphi 0, %s56
    %s59 = sphi 0, %s58
    %s73 = sphi 0, %s59
    %s79 = sphi 0, %s81
    %s82 = sphi 0, %s79
    %s83 = sphi 0, %s82
    %s99 = sphi 0, %s83
    %s105 = sphi 0, %s107
    %s108 = sphi 0, %s105
    %s109 = sphi 0, %s108
    %s125 = sphi 0, %s109
  $region4: #{up_conv_forward.2} parent=0 // loop_header_branch
    %13 = sbr.rel (%p11) target = $region8
  $region5: #{up_conv_forward.2} parent=0 // loop_body
    %s15 = ssub.s32 %s10, 1
    %s16 = ssub.s32 %s10, 2
    %s23 = sadd.s32 1, %s18
    %p24 = scmp.ge.s32.totalorder %s23, 1
    %s25 = scalar_select %p24, 0, %s23
    %s26 = sadd.s32 1, %s17
    %s27 = scalar_select %p24, %s26, %s17
    %p28 = scmp.ge.s32.totalorder %s27, 2
    %s29 = scalar_select %p28, 0, %s27
    %s30 = ssub.s32 %s17, %s29
    %p31 = scmp.eq.s32.totalorder %s30, 0
    %s33 = sadd.s32 %s32, 1
    %s34 = scalar_select %p31, %s32, %s33
    %p37 = pneg %p31
    %p38 = scmp.eq.s32.totalorder %s10, 1
    %p39 = por %p37, %p38
    %p40 = scmp.ne.s32.totalorder %s32, %s35
    %p41 = scmp.eq.s32.totalorder %s10, 0
    %p42 = por %p40, %p41
    %p43 = scmp.ne.s32.totalorder %s32, %s35
    %p44 = scmp.eq.s32.totalorder %s15, 1
    %p45 = por %p43, %p44
    %p46 = scmp.ne.s32.totalorder %s35, %s36
    %p47 = scmp.eq.s32.totalorder %s15, 0
    %p48 = por %p46, %p47
    %p49 = scmp.ne.s32.totalorder %s35, %s36
    %p50 = scmp.eq.s32.totalorder %s16, 1
    %p51 = por %p49, %p50
    %p53 = scmp.ne.s32.totalorder %s36, %s52
    %p54 = scmp.eq.s32.totalorder %s16, 0
    %p55 = por %p53, %p54
    %s57 = sadd.s32 %s56, 1
    %p60 = scmp.eq.s32.totalorder %s10, 1
    %p61 = scmp.ne.s32.totalorder %s56, %s58
    %p62 = scmp.eq.s32.totalorder %s10, 0
    %p63 = por %p61, %p62
    %p64 = scmp.ne.s32.totalorder %s56, %s58
    %p65 = scmp.eq.s32.totalorder %s15, 1
    %p66 = por %p64, %p65
    %p67 = scmp.ne.s32.totalorder %s58, %s59
    %p68 = scmp.eq.s32.totalorder %s15, 0
    %p69 = por %p67, %p68
    %p70 = scmp.ne.s32.totalorder %s58, %s59
    %p71 = scmp.eq.s32.totalorder %s16, 1
    %p72 = por %p70, %p71
    %p74 = scmp.ne.s32.totalorder %s59, %s73
    %p75 = scmp.eq.s32.totalorder %s16, 0
    %p76 = por %p74, %p75
    %s77 = ssub.s32 %s17, %s29
    %p78 = scmp.eq.s32.totalorder %s77, 0
    %s80 = sadd.s32 %s79, 1
    %s81 = scalar_select %p78, %s79, %s80
    %p84 = pneg %p78
    %p85 = scmp.eq.s32.totalorder %s10, 1
    %p86 = por %p84, %p85
    %p87 = scmp.ne.s32.totalorder %s79, %s82
    %p88 = scmp.eq.s32.totalorder %s10, 0
    %p89 = por %p87, %p88
    %p90 = scmp.ne.s32.totalorder %s79, %s82
    %p91 = scmp.eq.s32.totalorder %s15, 1
    %p92 = por %p90, %p91
    %p93 = scmp.ne.s32.totalorder %s82, %s83
    %p94 = scmp.eq.s32.totalorder %s15, 0
    %p95 = por %p93, %p94
    %p96 = scmp.ne.s32.totalorder %s82, %s83
    %p97 = scmp.eq.s32.totalorder %s16, 1
    %p98 = por %p96, %p97
    %p100 = scmp.ne.s32.totalorder %s83, %s99
    %p101 = scmp.eq.s32.totalorder %s16, 0
    %p102 = por %p100, %p101
    %s103 = ssub.s32 %s17, %s29
    %p104 = scmp.eq.s32.totalorder %s103, 0
    %s106 = sadd.s32 %s105, 1
    %s107 = scalar_select %p104, %s105, %s106
    %p110 = pneg %p104
    %p111 = scmp.eq.s32.totalorder %s10, 1
    %p112 = por %p110, %p111
    %p113 = scmp.ne.s32.totalorder %s105, %s108
    %p114 = scmp.eq.s32.totalorder %s10, 0
    %p115 = por %p113, %p114
    %p116 = scmp.ne.s32.totalorder %s105, %s108
    %p117 = scmp.eq.s32.totalorder %s15, 1
    %p118 = por %p116, %p117
    %p119 = scmp.ne.s32.totalorder %s108, %s109
    %p120 = scmp.eq.s32.totalorder %s15, 0
    %p121 = por %p119, %p120
    %p122 = scmp.ne.s32.totalorder %s108, %s109
    %p123 = scmp.eq.s32.totalorder %s16, 1
    %p124 = por %p122, %p123
    %p126 = scmp.ne.s32.totalorder %s109, %s125
    %p127 = scmp.eq.s32.totalorder %s16, 0
    %p128 = por %p126, %p127
    %p129 = scmp.le.s32.totalorder 1, %s10
    %p130 = scmp.lt.s32.totalorder %s10, 3
    %p131 = pnand %p129, %p130
    %p132 = pneg %p131
    // Predicated region
    $region9: #{up_conv_forward.2} parent=5 // pred_check
      _
    $region10: #{up_conv_forward.2} parent=5 // pred_check_branch
      %134 = sbr.rel (%p131) target = $region12
    $region11: #{up_conv_forward.2} parent=5 // pred_region
      %s135 = ssub.s32 %s10, 1
      // Predicated region
      $region13: #{up_conv_forward.2} parent=11 // pred_check
        %p136 = pneg %p69
      $region14: #{up_conv_forward.2} parent=11 // pred_check_branch
        %138 = sbr.rel (%p136) target = $region16
      $region15: #{up_conv_forward.2} parent=11 // pred_region
        _
      $region16: #{up_conv_forward.2} parent=11 // pred_fallthru
        _
    $region12: #{up_conv_forward.2} parent=5 // pred_fallthru
      _
    %p139 = scmp.lt.s32.totalorder %s10, 2
    // Predicated region
    $region17: #{up_conv_forward.2} parent=5 // pred_check
      %p140 = pneg %p139
    $region18: #{up_conv_forward.2} parent=5 // pred_check_branch
      %142 = sbr.rel (%p140) target = $region20
    $region19: #{up_conv_forward.2} parent=5 // pred_region
      // Predicated region
      $region21: #{up_conv_forward.2} parent=19 // pred_check
        %p143 = pneg %p42
      $region22: #{up_conv_forward.2} parent=19 // pred_check_branch
        %145 = sbr.rel (%p143) target = $region24
      $region23: #{up_conv_forward.2} parent=19 // pred_region
        %p146 = scmp.lt.s32.totalorder %s17, 1
        %s147 = scalar_select %p146, %s17, 1
        %s148 = smul.addr %s147, 54
        %s149 = smul.addr %s148, 8
        %s150 = scalar_lea.vmem %s0, %s149
      $region24: #{up_conv_forward.2} parent=19 // pred_fallthru
        _
    $region20: #{up_conv_forward.2} parent=5 // pred_fallthru
      _
    %p151 = scmp.le.s32.totalorder 1, %s10
    %p152 = scmp.lt.s32.totalorder %s10, 3
    %p153 = pnand %p151, %p152
    %p154 = pneg %p153
    // Predicated region
    $region25: #{up_conv_forward.2} parent=5 // pred_check
      _
    $region26: #{up_conv_forward.2} parent=5 // pred_check_branch
      %156 = sbr.rel (%p153) target = $region28
    $region27: #{up_conv_forward.2} parent=5 // pred_region
      %s157 = ssub.s32 %s10, 1
      %p158 = scmp.lt.s32.totalorder %s19, 1
      %s159 = scalar_select %p158, %s19, 1
      %s160 = smul.addr %s159, 54
      %s161 = smul.addr %s160, 8
      %s162 = scalar_lea.vmem %s0, %s161
      %p163 = pneg %p48
      %p164 = pneg %p45
      %p165 = pneg %p69
      %p166 = pneg %p66
      %p167 = pneg %p95
      %p168 = pneg %p92
      %p169 = scmp.lt.s32.totalorder %s19, 1
      %s170 = scalar_select %p169, %s19, 1
      %s171 = scalar_lea.vmem %s2, %s170
      %p172 = pneg %p121
      %p173 = pneg %p118
      %p174 = scmp.lt.s32.totalorder %s19, 1
      %s175 = scalar_select %p174, %s19, 1
      %s176 = scalar_lea.vmem %s3, %s175
      %p177 = scmp.lt.s32.totalorder %s19, 1
      %s178 = scalar_select %p177, %s19, 1
      %s179 = smul.addr %s178, 54
      %s180 = smul.addr %s179, 8
      %s181 = scalar_lea.vmem %s0, %s180
      %p182 = scmp.lt.s32.totalorder %s19, 1
      %s183 = scalar_select %p182, %s19, 1
      %s184 = scalar_lea.vmem %s2, %s183
      %p185 = scmp.lt.s32.totalorder %s19, 1
      %s186 = scalar_select %p185, %s19, 1
      %s187 = scalar_lea.vmem %s3, %s186
      %s188 = smul.u32 %s20, 16
      %s189 = smul.u32 %s188, 24
      %s190 = scalar_lea.vmem %s181, %s189
      %v191 = vld [vmem:[%s190] sm:$0xff]
      %v192 = vld [vmem:[%s190 + $0x8] sm:$0xff]
      %v193 = vld [vmem:[%s190 + $0x18] sm:$0xff]
      %v194 = vld [vmem:[%s190 + $0x20] sm:$0xff]
      %v195 = vld [vmem:[%s190 + $0x30] sm:$0xff]
      %v196 = vld [vmem:[%s190 + $0x38] sm:$0xff]
      %v197 = vld [vmem:[%s190 + $0x48] sm:$0xff]
      %v198 = vld [vmem:[%s190 + $0x50] sm:$0xff]
      %v199 = vld [vmem:[%s190 + $0x60] sm:$0xff]
      %v200 = vld [vmem:[%s190 + $0x68] sm:$0xff]
      %v201 = vld [vmem:[%s190 + $0x78] sm:$0xff]
      %v202 = vld [vmem:[%s190 + $0x80] sm:$0xff]
      %v203 = vld [vmem:[%s190 + $0x90] sm:$0xff]
      %v204 = vld [vmem:[%s190 + $0x98] sm:$0xff]
      %v205 = vld [vmem:[%s190 + $0xa8] sm:$0xff]
      %v206 = vld [vmem:[%s190 + $0xb0] sm:$0xff]
      %v207 = vld [vmem:[%s190 + $0xc0] sm:$0xff]
      %v208 = vld [vmem:[%s190 + $0xc8] sm:$0xff]
      %v209 = vld [vmem:[%s190 + $0xd8] sm:$0xff]
      %v210 = vld [vmem:[%s190 + $0xe0] sm:$0xff]
      %v211 = vld [vmem:[%s190 + $0xf0] sm:$0xff]
      %v212 = vld [vmem:[%s190 + $0xf8] sm:$0xff]
      %v213 = vld [vmem:[%s190 + $0x108] sm:$0xff]
      %v214 = vld [vmem:[%s190 + $0x110] sm:$0xff]
      %v215 = vld [vmem:[%s190 + $0x120] sm:$0xff]
      %v216 = vld [vmem:[%s190 + $0x128] sm:$0xff]
      %v217 = vld [vmem:[%s190 + $0x138] sm:$0xff]
      %v218 = vld [vmem:[%s190 + $0x140] sm:$0xff]
      %v219 = vld [vmem:[%s190 + $0x150] sm:$0xff]
      %v220 = vld [vmem:[%s190 + $0x158] sm:$0xff]
      %v221 = vld [vmem:[%s190 + $0x168] sm:$0xff]
      %v222 = vld [vmem:[%s190 + $0x170] sm:$0xff]
      %v223 = vld [vmem:[%s1] sm:$0xf]
      %vm224 = vcmask 31744
      %v226 = vsel %vm224, %v191, 0
      %v229 = vsel %vm224, %v192, 0
      %v232 = vsel %vm224, %v193, 0
      %v235 = vsel %vm224, %v194, 0
      %v238 = vsel %vm224, %v195, 0
      %v241 = vsel %vm224, %v196, 0
      %v244 = vsel %vm224, %v197, 0
      %v247 = vsel %vm224, %v198, 0
      %v250 = vsel %vm224, %v199, 0
      %v253 = vsel %vm224, %v200, 0
      %v256 = vsel %vm224, %v201, 0
      %v259 = vsel %vm224, %v202, 0
      %v262 = vsel %vm224, %v203, 0
      %v265 = vsel %vm224, %v204, 0
      %v268 = vsel %vm224, %v205, 0
      %v271 = vsel %vm224, %v206, 0
      %v274 = vsel %vm224, %v207, 0
      %v277 = vsel %vm224, %v208, 0
      %v280 = vsel %vm224, %v209, 0
      %v283 = vsel %vm224, %v210, 0
      %v286 = vsel %vm224, %v211, 0
      %v289 = vsel %vm224, %v212, 0
      %v292 = vsel %vm224, %v213, 0
      %v295 = vsel %vm224, %v214, 0
      %v298 = vsel %vm224, %v215, 0
      %v301 = vsel %vm224, %v216, 0
      %v304 = vsel %vm224, %v217, 0
      %v307 = vsel %vm224, %v218, 0
      %v310 = vsel %vm224, %v219, 0
      %v313 = vsel %vm224, %v220, 0
      %v316 = vsel %vm224, %v221, 0
      %v319 = vsel %vm224, %v222, 0
      %vm321 = vcmask 1043456
      %v323 = vsel %vm321, %v223, 0
      %325 = vmatprep.subr.mxu0 0.0
      %326 = vmatpush1.msra.mxu0 %v323
      %327 = vmatprep.subr.mxu0 0.0
      %328 = vmatpush1.msra.mxu0 0.0
      %329 = vmatprep.subr.mxu0 0.0
      %330 = vmatpush1.msra.mxu0 0.0
      %331 = vmatprep.subr.mxu0 0.0
      %332 = vmatpush1.msra.mxu0 0.0
      %333 = vmatprep.subr.mxu0 0.0
      %334 = vmatpush1.msra.mxu0 0.0
      %335 = vmatprep.subr.mxu0 0.0
      %336 = vmatpush1.msra.mxu0 0.0
      %337 = vmatprep.subr.mxu0 0.0
      %338 = vmatpush1.msra.mxu0 0.0
      %339 = vmatprep.subr.mxu0 0.0
      %340 = vmatpush1.msra.mxu0 0.0
      %341 = vmatprep.subr.mxu0 0.0
      %342 = vmatpush1.msra.mxu0 0.0
      %343 = vmatprep.subr.mxu0 0.0
      %344 = vmatpush1.msra.mxu0 0.0
      %345 = vmatprep.subr.mxu0 0.0
      %346 = vmatpush1.msra.mxu0 0.0
      %347 = vmatprep.subr.mxu0 0.0
      %348 = vmatpush1.msra.mxu0 0.0
      %349 = vmatprep.subr.mxu0 0.0
      %350 = vmatpush1.msra.mxu0 0.0
      %351 = vmatprep.subr.mxu0 0.0
      %352 = vmatpush1.msra.mxu0 0.0
      %353 = vmatprep.subr.mxu0 0.0
      %354 = vmatpush1.msra.mxu0 0.0
      %355 = vmatprep.subr.mxu0 0.0
      %356 = vmatpush1.msra.mxu0 0.0
      %357 = vmatprep.subr.mxu0 0.0
      %358 = vmatpush1.msra.mxu0 0.0
      %359 = vmatprep.subr.mxu0 0.0
      %360 = vmatpush1.msra.mxu0 0.0
      %361 = vmatprep.subr.mxu0 0.0
      %362 = vmatpush1.msra.mxu0 0.0
      %363 = vmatprep.subr.mxu0 0.0
      %364 = vmatpush1.msra.mxu0 0.0
      %365 = vmatprep.subr.mxu0 0.0
      %366 = vmatpush1.msra.mxu0 0.0
      %367 = vmatprep.subr.mxu0 0.0
      %368 = vmatpush1.msra.mxu0 0.0
      %369 = vmatprep.subr.mxu0 0.0
      %370 = vmatpush1.msra.mxu0 0.0
      %371 = vmatprep.subr.mxu0 0.0
      %372 = vmatpush1.msra.mxu0 0.0
      %373 = vmatprep.subr.mxu0 0.0
      %374 = vmatpush1.msra.mxu0 0.0
      %375 = vmatprep.subr.mxu0 0.0
      %376 = vmatpush1.msra.mxu0 0.0
      %377 = vmatprep.subr.mxu0 0.0
      %378 = vmatpush1.msra.mxu0 0.0
      %379 = vmatprep.subr.mxu0 0.0
      %380 = vmatpush1.msra.mxu0 0.0
      %381 = vmatprep.subr.mxu0 0.0
      %382 = vmatpush1.msra.mxu0 0.0
      %383 = vmatprep.subr.mxu0 0.0
      %384 = vmatpush1.msra.mxu0 0.0
      %385 = vmatprep.subr.mxu0 0.0
      %386 = vmatpush1.msra.mxu0 0.0
      %387 = vmatprep.subr.mxu0 0.0
      %388 = vmatpush1.msra.mxu0 0.0
      %389 = vmatprep.mubr.f32.mxu0 0.0
      %390 = vmatmul.mubr.f32.gmra.mrb[0].mxu0 %v226
      %v391 = vpop.f32.mrb[0].mxu0
      %v392 = vadd.f32 0.0, %v391
      %v393 = vpop.f32.mrb[0].mxu0
      %394 = vmatprep.mubr.f32.mxu0 0.0
      %395 = vmatmul.mubr.f32.gmra.mrb[0].mxu0 %v229
      %v396 = vpop.f32.mrb[0].mxu0
      %v397 = vadd.f32 0.0, %v396
      %v398 = vpop.f32.mrb[0].mxu0
      %399 = vmatprep.mubr.f32.mxu0 0.0
      %400 = vmatmul.mubr.f32.gmra.mrb[0].mxu0 %v232
      %v401 = vpop.f32.mrb[0].mxu0
      %v402 = vadd.f32 0.0, %v401
      %v403 = vpop.f32.mrb[0].mxu0
      %404 = vmatprep.mubr.f32.mxu0 0.0
      %405 = vmatmul.mubr.f32.gmra.mrb[0].mxu0 %v235
      %v406 = vpop.f32.mrb[0].mxu0
      %v407 = vadd.f32 0.0, %v406
      %v408 = vpop.f32.mrb[0].mxu0
      %409 = vmatprep.mubr.f32.mxu0 0.0
      %410 = vmatmul.mubr.f32.gmra.mrb[0].mxu0 %v238
      %v411 = vpop.f32.mrb[0].mxu0
      %v412 = vadd.f32 0.0, %v411
      %v413 = vpop.f32.mrb[0].mxu0
      %414 = vmatprep.mubr.f32.mxu0 0.0
      %415 = vmatmul.mubr.f32.gmra.mrb[0].mxu0 %v241
      %v416 = vpop.f32.mrb[0].mxu0
      %v417 = vadd.f32 0.0, %v416
      %v418 = vpop.f32.mrb[0].mxu0
      %419 = vmatprep.mubr.f32.mxu0 0.0
      %420 = vmatmul.mubr.f32.gmra.mrb[0].mxu0 %v244
      %v421 = vpop.f32.mrb[0].mxu0
      %v422 = vadd.f32 0.0, %v421
      %v423 = vpop.f32.mrb[0].mxu0
      %424 = vmatprep.mubr.f32.mxu0 0.0
      %425 = vmatmul.mubr.f32.gmra.mrb[0].mxu0 %v247
      %v426 = vpop.f32.mrb[0].mxu0
      %v427 = vadd.f32 0.0, %v426
      %v428 = vpop.f32.mrb[0].mxu0
      %429 = vmatprep.mubr.f32.mxu0 0.0
      %430 = vmatmul.mubr.f32.gmra.mrb[0].mxu0 %v250
      %v431 = vpop.f32.mrb[0].mxu0
      %v432 = vadd.f32 0.0, %v431
      %v433 = vpop.f32.mrb[0].mxu0
      %434 = vmatprep.mubr.f32.mxu0 0.0
      %435 = vmatmul.mubr.f32.gmra.mrb[0].mxu0 %v253
      %v436 = vpop.f32.mrb[0].mxu0
      %v437 = vadd.f32 0.0, %v436
      %v438 = vpop.f32.mrb[0].mxu0
      %439 = vmatprep.mubr.f32.mxu0 0.0
      %440 = vmatmul.mubr.f32.gmra.mrb[0].mxu0 %v256
      %v441 = vpop.f32.mrb[0].mxu0
      %v442 = vadd.f32 0.0, %v441
      %v443 = vpop.f32.mrb[0].mxu0
      %444 = vmatprep.mubr.f32.mxu0 0.0
      %445 = vmatmul.mubr.f32.gmra.mrb[0].mxu0 %v259
      %v446 = vpop.f32.mrb[0].mxu0
      %v447 = vadd.f32 0.0, %v446
      %v448 = vpop.f32.mrb[0].mxu0
      %449 = vmatprep.mubr.f32.mxu0 0.0
      %450 = vmatmul.mubr.f32.gmra.mrb[0].mxu0 %v262
      %v451 = vpop.f32.mrb[0].mxu0
      %v452 = vadd.f32 0.0, %v451
      %v453 = vpop.f32.mrb[0].mxu0
      %454 = vmatprep.mubr.f32.mxu0 0.0
      %455 = vmatmul.mubr.f32.gmra.mrb[0].mxu0 %v265
      %v456 = vpop.f32.mrb[0].mxu0
      %v457 = vadd.f32 0.0, %v456
      %v458 = vpop.f32.mrb[0].mxu0
      %459 = vmatprep.mubr.f32.mxu0 0.0
      %460 = vmatmul.mubr.f32.gmra.mrb[0].mxu0 %v268
      %v461 = vpop.f32.mrb[0].mxu0
      %v462 = vadd.f32 0.0, %v461
      %v463 = vpop.f32.mrb[0].mxu0
      %464 = vmatprep.mubr.f32.mxu0 0.0
      %465 = vmatmul.mubr.f32.gmra.mrb[0].mxu0 %v271
      %v466 = vpop.f32.mrb[0].mxu0
      %v467 = vadd.f32 0.0, %v466
      %v468 = vpop.f32.mrb[0].mxu0
      %469 = vmatprep.mubr.f32.mxu0 0.0
      %470 = vmatmul.mubr.f32.gmra.mrb[0].mxu0 %v274
      %v471 = vpop.f32.mrb[0].mxu0
      %v472 = vadd.f32 0.0, %v471
      %v473 = vpop.f32.mrb[0].mxu0
      %474 = vmatprep.mubr.f32.mxu0 0.0
      %475 = vmatmul.mubr.f32.gmra.mrb[0].mxu0 %v277
      %v476 = vpop.f32.mrb[0].mxu0
      %v477 = vadd.f32 0.0, %v476
      %v478 = vpop.f32.mrb[0].mxu0
      %479 = vmatprep.mubr.f32.mxu0 0.0
      %480 = vmatmul.mubr.f32.gmra.mrb[0].mxu0 %v280
      %v481 = vpop.f32.mrb[0].mxu0
      %v482 = vadd.f32 0.0, %v481
      %v483 = vpop.f32.mrb[0].mxu0
      %484 = vmatprep.mubr.f32.mxu0 0.0
      %485 = vmatmul.mubr.f32.gmra.mrb[0].mxu0 %v283
      %v486 = vpop.f32.mrb[0].mxu0
      %v487 = vadd.f32 0.0, %v486
      %v488 = vpop.f32.mrb[0].mxu0
      %489 = vmatprep.mubr.f32.mxu0 0.0
      %490 = vmatmul.mubr.f32.gmra.mrb[0].mxu0 %v286
      %v491 = vpop.f32.mrb[0].mxu0
      %v492 = vadd.f32 0.0, %v491
      %v493 = vpop.f32.mrb[0].mxu0
      %494 = vmatprep.mubr.f32.mxu0 0.0
      %495 = vmatmul.mubr.f32.gmra.mrb[0].mxu0 %v289
      %v496 = vpop.f32.mrb[0].mxu0
      %v497 = vadd.f32 0.0, %v496
      %v498 = vpop.f32.mrb[0].mxu0
      %499 = vmatprep.mubr.f32.mxu0 0.0
      %500 = vmatmul.mubr.f32.gmra.mrb[0].mxu0 %v292
      %v501 = vpop.f32.mrb[0].mxu0
      %v502 = vadd.f32 0.0, %v501
      %v503 = vpop.f32.mrb[0].mxu0
      %504 = vmatprep.mubr.f32.mxu0 0.0
      %505 = vmatmul.mubr.f32.gmra.mrb[0].mxu0 %v295
      %v506 = vpop.f32.mrb[0].mxu0
      %v507 = vadd.f32 0.0, %v506
      %v508 = vpop.f32.mrb[0].mxu0
      %509 = vmatprep.mubr.f32.mxu0 0.0
      %510 = vmatmul.mubr.f32.gmra.mrb[0].mxu0 %v298
      %v511 = vpop.f32.mrb[0].mxu0
      %v512 = vadd.f32 0.0, %v511
      %v513 = vpop.f32.mrb[0].mxu0
      %514 = vmatprep.mubr.f32.mxu0 0.0
      %515 = vmatmul.mubr.f32.gmra.mrb[0].mxu0 %v301
      %v516 = vpop.f32.mrb[0].mxu0
      %v517 = vadd.f32 0.0, %v516
      %v518 = vpop.f32.mrb[0].mxu0
      %519 = vmatprep.mubr.f32.mxu0 0.0
      %520 = vmatmul.mubr.f32.gmra.mrb[0].mxu0 %v304
      %v521 = vpop.f32.mrb[0].mxu0
      %v522 = vadd.f32 0.0, %v521
      %v523 = vpop.f32.mrb[0].mxu0
      %524 = vmatprep.mubr.f32.mxu0 0.0
      %525 = vmatmul.mubr.f32.gmra.mrb[0].mxu0 %v307
      %v526 = vpop.f32.mrb[0].mxu0
      %v527 = vadd.f32 0.0, %v526
      %v528 = vpop.f32.mrb[0].mxu0
      %529 = vmatprep.mubr.f32.mxu0 0.0
      %530 = vmatmul.mubr.f32.gmra.mrb[0].mxu0 %v310
      %v531 = vpop.f32.mrb[0].mxu0
      %v532 = vadd.f32 0.0, %v531
      %v533 = vpop.f32.mrb[0].mxu0
      %534 = vmatprep.mubr.f32.mxu0 0.0
      %535 = vmatmul.mubr.f32.gmra.mrb[0].mxu0 %v313
      %v536 = vpop.f32.mrb[0].mxu0
      %v537 = vadd.f32 0.0, %v536
      %v538 = vpop.f32.mrb[0].mxu0
      %539 = vmatprep.mubr.f32.mxu0 0.0
      %540 = vmatmul.mubr.f32.gmra.mrb[0].mxu0 %v316
      %v541 = vpop.f32.mrb[0].mxu0
      %v542 = vadd.f32 0.0, %v541
      %v543 = vpop.f32.mrb[0].mxu0
      %544 = vmatprep.mubr.f32.mxu0 0.0
      %545 = vmatmul.mubr.f32.gmra.mrb[0].mxu0 %v319
      %v546 = vpop.f32.mrb[0].mxu0
      %v547 = vadd.f32 0.0, %v546
      %v548 = vpop.f32.mrb[0].mxu0
      %549 = vdwg.mxu0
      %550 = vst [vmem:[#allocation2] sm:$0xff] %v392
      %551 = vst [vmem:[#allocation2 + $0x8] sm:$0xff] %v397
      %552 = vst [vmem:[#allocation2 + $0x10] sm:$0xff] %v402
      %553 = vst [vmem:[#allocation2 + $0x18] sm:$0xff] %v407
      %554 = vst [vmem:[#allocation2 + $0x20] sm:$0xff] %v412
      %555 = vst [vmem:[#allocation2 + $0x28] sm:$0xff] %v417
      %556 = vst [vmem:[#allocation2 + $0x30] sm:$0xff] %v422
      %557 = vst [vmem:[#allocation2 + $0x38] sm:$0xff] %v427
      %558 = vst [vmem:[#allocation2 + $0x40] sm:$0xff] %v432
      %559 = vst [vmem:[#allocation2 + $0x48] sm:$0xff] %v437
      %560 = vst [vmem:[#allocation2 + $0x50] sm:$0xff] %v442
      %561 = vst [vmem:[#allocation2 + $0x58] sm:$0xff] %v447
      %562 = vst [vmem:[#allocation2 + $0x60] sm:$0xff] %v452
      %563 = vst [vmem:[#allocation2 + $0x68] sm:$0xff] %v457
      %564 = vst [vmem:[#allocation2 + $0x70] sm:$0xff] %v462
      %565 = vst [vmem:[#allocation2 + $0x78] sm:$0xff] %v467
      %566 = vst [vmem:[#allocation2 + $0x80] sm:$0xff] %v472
      %567 = vst [vmem:[#allocation2 + $0x88] sm:$0xff] %v477
      %568 = vst [vmem:[#allocation2 + $0x90] sm:$0xff] %v482
      %569 = vst [vmem:[#allocation2 + $0x98] sm:$0xff] %v487
      %570 = vst [vmem:[#allocation2 + $0xa0] sm:$0xff] %v492
      %571 = vst [vmem:[#allocation2 + $0xa8] sm:$0xff] %v497
      %572 = vst [vmem:[#allocation2 + $0xb0] sm:$0xff] %v502
      %573 = vst [vmem:[#allocation2 + $0xb8] sm:$0xff] %v507
      %574 = vst [vmem:[#allocation2 + $0xc0] sm:$0xff] %v512
      %575 = vst [vmem:[#allocation2 + $0xc8] sm:$0xff] %v517
      %576 = vst [vmem:[#allocation2 + $0xd0] sm:$0xff] %v522
      %577 = vst [vmem:[#allocation2 + $0xd8] sm:$0xff] %v527
      %578 = vst [vmem:[#allocation2 + $0xe0] sm:$0xff] %v532
      %579 = vst [vmem:[#allocation2 + $0xe8] sm:$0xff] %v537
      %580 = vst [vmem:[#allocation2 + $0xf0] sm:$0xff] %v542
      %581 = vst [vmem:[#allocation2 + $0xf8] sm:$0xff] %v547
      %v582 = vld [vmem:[%s190 + $0x1] sm:$0xff]
      %v583 = vld [vmem:[%s190 + $0x9] sm:$0xff]
      %v584 = vld [vmem:[%s190 + $0x19] sm:$0xff]
      %v585 = vld [vmem:[%s190 + $0x21] sm:$0xff]
      %v586 = vld [vmem:[%s190 + $0x31] sm:$0xff]
      %v587 = vld [vmem:[%s190 + $0x39] sm:$0xff]
      %v588 = vld [vmem:[%s190 + $0x49] sm:$0xff]
      %v589 = vld [vmem:[%s190 + $0x51] sm:$0xff]
      %v590 = vld [vmem:[%s190 + $0x61] sm:$0xff]
      %v591 = vld [vmem:[%s190 + $0x69] sm:$0xff]
      %v592 = vld [vmem:[%s190 + $0x79] sm:$0xff]
      %v593 = vld [vmem:[%s190 + $0x81] sm:$0xff]
      %v594 = vld [vmem:[%s190 + $0x91] sm:$0xff]
      %v595 = vld [vmem:[%s190 + $0x99] sm:$0xff]
      %v596 = vld [vmem:[%s190 + $0xa9] sm:$0xff]
      %v597 = vld [vmem:[%s190 + $0xb1] sm:$0xff]
      %v598 = vld [vmem:[%s190 + $0xc1] sm:$0xff]
      %v599 = vld [vmem:[%s190 + $0xc9] sm:$0xff]
      %v600 = vld [vmem:[%s190 + $0xd9] sm:$0xff]
      %v601 = vld [vmem:[%s190 + $0xe1] sm:$0xff]
      %v602 = vld [vmem:[%s190 + $0xf1] sm:$0xff]
      %v603 = vld [vmem:[%s190 + $0xf9] sm:$0xff]
      %v604 = vld [vmem:[%s190 + $0x109] sm:$0xff]
      %v605 = vld [vmem:[%s190 + $0x111] sm:$0xff]
      %v606 = vld [vmem:[%s190 + $0x121] sm:$0xff]
      %v607 = vld [vmem:[%s190 + $0x129] sm:$0xff]
      %v608 = vld [vmem:[%s190 + $0x139] sm:$0xff]
      %v609 = vld [vmem:[%s190 + $0x141] sm:$0xff]
      %v610 = vld [vmem:[%s190 + $0x151] sm:$0xff]
      %v611 = vld [vmem:[%s190 + $0x159] sm:$0xff]
      %v612 = vld [vmem:[%s190 + $0x169] sm:$0xff]
      %v613 = vld [vmem:[%s190 + $0x171] sm:$0xff]
      %s614 = scalar_lea.vmem %s1, 4
      %v615 = vld [vmem:[%s614] sm:$0xf]
      %v617 = vsel %vm224, %v582, 0
      %v620 = vsel %vm224, %v583, 0
      %v623 = vsel %vm224, %v584, 0
      %v626 = vsel %vm224, %v585, 0
      %v629 = vsel %vm224, %v586, 0
      %v632 = vsel %vm224, %v587, 0
      %v635 = vsel %vm224, %v588, 0
      %v638 = vsel %vm224, %v589, 0
      %v641 = vsel %vm224, %v590, 0
      %v644 = vsel %vm224, %v591, 0
      %v647 = vsel %vm224, %v592, 0
      %v650 = vsel %vm224, %v593, 0
      %v653 = vsel %vm224, %v594, 0
      %v656 = vsel %vm224, %v595, 0
      %v659 = vsel %vm224, %v596, 0
      %v662 = vsel %vm224, %v597, 0
      %v665 = vsel %vm224, %v598, 0
      %v668 = vsel %vm224, %v599, 0
      %v671 = vsel %vm224, %v600, 0
      %v674 = vsel %vm224, %v601, 0
      %v677 = vsel %vm224, %v602, 0
      %v680 = vsel %vm224, %v603, 0
      %v683 = vsel %vm224, %v604, 0
      %v686 = vsel %vm224, %v605, 0
      %v689 = vsel %vm224, %v606, 0
      %v692 = vsel %vm224, %v607, 0
      %v695 = vsel %vm224, %v608, 0
      %v698 = vsel %vm224, %v609, 0
      %v701 = vsel %vm224, %v610, 0
      %v704 = vsel %vm224, %v611, 0
      %v707 = vsel %vm224, %v612, 0
      %v710 = vsel %vm224, %v613, 0
      %v713 = vsel %vm321, %v615, 0
      %715 = vmatprep.subr.mxu0 0.0
      %716 = vmatpush1.msra.mxu0 %v713
      %717 = vmatprep.subr.mxu0 0.0
      %718 = vmatpush1.msra.mxu0 0.0
      %719 = vmatprep.subr.mxu0 0.0
      %720 = vmatpush1.msra.mxu0 0.0
      %721 = vmatprep.subr.mxu0 0.0
      %722 = vmatpush1.msra.mxu0 0.0
      %723 = vmatprep.subr.mxu0 0.0
      %724 = vmatpush1.msra.mxu0 0.0
      %725 = vmatprep.subr.mxu0 0.0
      %726 = vmatpush1.msra.mxu0 0.0
      %727 = vmatprep.subr.mxu0 0.0
      %728 = vmatpush1.msra.mxu0 0.0
      %729 = vmatprep.subr.mxu0 0.0
      %730 = vmatpush1.msra.mxu0 0.0
      %731 = vmatprep.subr.mxu0 0.0
      %732 = vmatpush1.msra.mxu0 0.0
      %733 = vmatprep.subr.mxu0 0.0
      %734 = vmatpush1.msra.mxu0 0.0
      %735 = vmatprep.subr.mxu0 0.0
      %736 = vmatpush1.msra.mxu0 0.0
      %737 = vmatprep.subr.mxu0 0.0
      %738 = vmatpush1.msra.mxu0 0.0
      %739 = vmatprep.subr.mxu0 0.0
      %740 = vmatpush1.msra.mxu0 0.0
      %741 = vmatprep.subr.mxu0 0.0
      %742 = vmatpush1.msra.mxu0 0.0
      %743 = vmatprep.subr.mxu0 0.0
      %744 = vmatpush1.msra.mxu0 0.0
      %745 = vmatprep.subr.mxu0 0.0
      %746 = vmatpush1.msra.mxu0 0.0
      %747 = vmatprep.subr.mxu0 0.0
      %748 = vmatpush1.msra.mxu0 0.0
      %749 = vmatprep.subr.mxu0 0.0
      %750 = vmatpush1.msra.mxu0 0.0
      %751 = vmatprep.subr.mxu0 0.0
      %752 = vmatpush1.msra.mxu0 0.0
      %753 = vmatprep.subr.mxu0 0.0
      %754 = vmatpush1.msra.mxu0 0.0
      %755 = vmatprep.subr.mxu0 0.0
      %756 = vmatpush1.msra.mxu0 0.0
      %757 = vmatprep.subr.mxu0 0.0
      %758 = vmatpush1.msra.mxu0 0.0
      %759 = vmatprep.subr.mxu0 0.0
      %760 = vmatpush1.msra.mxu0 0.0
      %761 = vmatprep.subr.mxu0 0.0
      %762 = vmatpush1.msra.mxu0 0.0
      %763 = vmatprep.subr.mxu0 0.0
      %764 = vmatpush1.msra.mxu0 0.0
      %765 = vmatprep.subr.mxu0 0.0
      %766 = vmatpush1.msra.mxu0 0.0
      %767 = vmatprep.subr.mxu0 0.0
      %768 = vmatpush1.msra.mxu0 0.0
      %769 = vmatprep.subr.mxu0 0.0
      %770 = vmatpush1.msra.mxu0 0.0
      %771 = vmatprep.subr.mxu0 0.0
      %772 = vmatpush1.msra.mxu0 0.0
      %773 = vmatprep.subr.mxu0 0.0
      %774 = vmatpush1.msra.mxu0 0.0
      %775 = vmatprep.subr.mxu0 0.0
      %776 = vmatpush1.msra.mxu0 0.0
      %777 = vmatprep.subr.mxu0 0.0
      %778 = vmatpush1.msra.mxu0 0.0
      %779 = vmatprep.mubr.f32.mxu0 0.0
      %780 = vmatmul.mubr.f32.gmra.mrb[0].mxu0 %v617
      %v781 = vpop.f32.mrb[0].mxu0
      %v782 = vadd.f32 0.0, %v781
      %v783 = vpop.f32.mrb[0].mxu0
      %784 = vmatprep.mubr.f32.mxu0 0.0
      %785 = vmatmul.mubr.f32.gmra.mrb[0].mxu0 %v620
      %v786 = vpop.f32.mrb[0].mxu0
      %v787 = vadd.f32 0.0, %v786
      %v788 = vpop.f32.mrb[0].mxu0
      %789 = vmatprep.mubr.f32.mxu0 0.0
      %790 = vmatmul.mubr.f32.gmra.mrb[0].mxu0 %v623
      %v791 = vpop.f32.mrb[0].mxu0
      %v792 = vadd.f32 0.0, %v791
      %v793 = vpop.f32.mrb[0].mxu0
      %794 = vmatprep.mubr.f32.mxu0 0.0
      %795 = vmatmul.mubr.f32.gmra.mrb[0].mxu0 %v626
      %v796 = vpop.f32.mrb[0].mxu0
      %v797 = vadd.f32 0.0, %v796
      %v798 = vpop.f32.mrb[0].mxu0
      %799 = vmatprep.mubr.f32.mxu0 0.0
      %800 = vmatmul.mubr.f32.gmra.mrb[0].mxu0 %v629
      %v801 = vpop.f32.mrb[0].mxu0
      %v802 = vadd.f32 0.0, %v801
      %v803 = vpop.f32.mrb[0].mxu0
      %804 = vmatprep.mubr.f32.mxu0 0.0
      %805 = vmatmul.mubr.f32.gmra.mrb[0].mxu0 %v632
      %v806 = vpop.f32.mrb[0].mxu0
      %v807 = vadd.f32 0.0, %v806
      %v808 = vpop.f32.mrb[0].mxu0
      %809 = vmatprep.mubr.f32.mxu0 0.0
      %810 = vmatmul.mubr.f32.gmra.mrb[0].mxu0 %v635
      %v811 = vpop.f32.mrb[0].mxu0
      %v812 = vadd.f32 0.0, %v811
      %v813 = vpop.f32.mrb[0].mxu0
      %814 = vmatprep.mubr.f32.mxu0 0.0
      %815 = vmatmul.mubr.f32.gmra.mrb[0].mxu0 %v638
      %v816 = vpop.f32.mrb[0].mxu0
      %v817 = vadd.f32 0.0, %v816
      %v818 = vpop.f32.mrb[0].mxu0
      %819 = vmatprep.mubr.f32.mxu0 0.0
      %820 = vmatmul.mubr.f32.gmra.mrb[0].mxu0 %v641
      %v821 = vpop.f32.mrb[0].mxu0
      %v822 = vadd.f32 0.0, %v821
      %v823 = vpop.f32.mrb[0].mxu0
      %824 = vmatprep.mubr.f32.mxu0 0.0
      %825 = vmatmul.mubr.f32.gmra.mrb[0].mxu0 %v644
      %v826 = vpop.f32.mrb[0].mxu0
      %v827 = vadd.f32 0.0, %v826
      %v828 = vpop.f32.mrb[0].mxu0
      %829 = vmatprep.mubr.f32.mxu0 0.0
      %830 = vmatmul.mubr.f32.gmra.mrb[0].mxu0 %v647
      %v831 = vpop.f32.mrb[0].mxu0
      %v832 = vadd.f32 0.0, %v831
      %v833 = vpop.f32.mrb[0].mxu0
      %834 = vmatprep.mubr.f32.mxu0 0.0
      %835 = vmatmul.mubr.f32.gmra.mrb[0].mxu0 %v650
      %v836 = vpop.f32.mrb[0].mxu0
      %v837 = vadd.f32 0.0, %v836
      %v838 = vpop.f32.mrb[0].mxu0
      %839 = vmatprep.mubr.f32.mxu0 0.0
      %840 = vmatmul.mubr.f32.gmra.mrb[0].mxu0 %v653
      %v841 = vpop.f32.mrb[0].mxu0
      %v842 = vadd.f32 0.0, %v841
      %v843 = vpop.f32.mrb[0].mxu0
      %844 = vmatprep.mubr.f32.mxu0 0.0
      %845 = vmatmul.mubr.f32.gmra.mrb[0].mxu0 %v656
      %v846 = vpop.f32.mrb[0].mxu0
      %v847 = vadd.f32 0.0, %v846
      %v848 = vpop.f32.mrb[0].mxu0
      %849 = vmatprep.mubr.f32.mxu0 0.0
      %850 = vmatmul.mubr.f32.gmra.mrb[0].mxu0 %v659
      %v851 = vpop.f32.mrb[0].mxu0
      %v852 = vadd.f32 0.0, %v851
      %v853 = vpop.f32.mrb[0].mxu0
      %854 = vmatprep.mubr.f32.mxu0 0.0
      %855 = vmatmul.mubr.f32.gmra.mrb[0].mxu0 %v662
      %v856 = vpop.f32.mrb[0].mxu0
      %v857 = vadd.f32 0.0, %v856
      %v858 = vpop.f32.mrb[0].mxu0
      %859 = vmatprep.mubr.f32.mxu0 0.0
      %860 = vmatmul.mubr.f32.gmra.mrb[0].mxu0 %v665
      %v861 = vpop.f32.mrb[0].mxu0
      %v862 = vadd.f32 0.0, %v861
      %v863 = vpop.f32.mrb[0].mxu0
      %864 = vmatprep.mubr.f32.mxu0 0.0
      %865 = vmatmul.mubr.f32.gmra.mrb[0].mxu0 %v668
      %v866 = vpop.f32.mrb[0].mxu0
      %v867 = vadd.f32 0.0, %v866
      %v868 = vpop.f32.mrb[0].mxu0
      %869 = vmatprep.mubr.f32.mxu0 0.0
      %870 = vmatmul.mubr.f32.gmra.mrb[0].mxu0 %v671
      %v871 = vpop.f32.mrb[0].mxu0
      %v872 = vadd.f32 0.0, %v871
      %v873 = vpop.f32.mrb[0].mxu0
      %874 = vmatprep.mubr.f32.mxu0 0.0
      %875 = vmatmul.mubr.f32.gmra.mrb[0].mxu0 %v674
      %v876 = vpop.f32.mrb[0].mxu0
      %v877 = vadd.f32 0.0, %v876
      %v878 = vpop.f32.mrb[0].mxu0
      %879 = vmatprep.mubr.f32.mxu0 0.0
      %880 = vmatmul.mubr.f32.gmra.mrb[0].mxu0 %v677
      %v881 = vpop.f32.mrb[0].mxu0
      %v882 = vadd.f32 0.0, %v881
      %v883 = vpop.f32.mrb[0].mxu0
      %884 = vmatprep.mubr.f32.mxu0 0.0
      %885 = vmatmul.mubr.f32.gmra.mrb[0].mxu0 %v680
      %v886 = vpop.f32.mrb[0].mxu0
      %v887 = vadd.f32 0.0, %v886
      %v888 = vpop.f32.mrb[0].mxu0
      %889 = vmatprep.mubr.f32.mxu0 0.0
      %890 = vmatmul.mubr.f32.gmra.mrb[0].mxu0 %v683
      %v891 = vpop.f32.mrb[0].mxu0
      %v892 = vadd.f32 0.0, %v891
      %v893 = vpop.f32.mrb[0].mxu0
      %894 = vmatprep.mubr.f32.mxu0 0.0
      %895 = vmatmul.mubr.f32.gmra.mrb[0].mxu0 %v686
      %v896 = vpop.f32.mrb[0].mxu0
      %v897 = vadd.f32 0.0, %v896
      %v898 = vpop.f32.mrb[0].mxu0
      %899 = vmatprep.mubr.f32.mxu0 0.0
      %900 = vmatmul.mubr.f32.gmra.mrb[0].mxu0 %v689
      %v901 = vpop.f32.mrb[0].mxu0
      %v902 = vadd.f32 0.0, %v901
      %v903 = vpop.f32.mrb[0].mxu0
      %904 = vmatprep.mubr.f32.mxu0 0.0
      %905 = vmatmul.mubr.f32.gmra.mrb[0].mxu0 %v692
      %v906 = vpop.f32.mrb[0].mxu0
      %v907 = vadd.f32 0.0, %v906
      %v908 = vpop.f32.mrb[0].mxu0
      %909 = vmatprep.mubr.f32.mxu0 0.0
      %910 = vmatmul.mubr.f32.gmra.mrb[0].mxu0 %v695
      %v911 = vpop.f32.mrb[0].mxu0
      %v912 = vadd.f32 0.0, %v911
      %v913 = vpop.f32.mrb[0].mxu0
      %914 = vmatprep.mubr.f32.mxu0 0.0
      %915 = vmatmul.mubr.f32.gmra.mrb[0].mxu0 %v698
      %v916 = vpop.f32.mrb[0].mxu0
      %v917 = vadd.f32 0.0, %v916
      %v918 = vpop.f32.mrb[0].mxu0
      %919 = vmatprep.mubr.f32.mxu0 0.0
      %920 = vmatmul.mubr.f32.gmra.mrb[0].mxu0 %v701
      %v921 = vpop.f32.mrb[0].mxu0
      %v922 = vadd.f32 0.0, %v921
      %v923 = vpop.f32.mrb[0].mxu0
      %924 = vmatprep.mubr.f32.mxu0 0.0
      %925 = vmatmul.mubr.f32.gmra.mrb[0].mxu0 %v704
      %v926 = vpop.f32.mrb[0].mxu0
      %v927 = vadd.f32 0.0, %v926
      %v928 = vpop.f32.mrb[0].mxu0
      %929 = vmatprep.mubr.f32.mxu0 0.0
      %930 = vmatmul.mubr.f32.gmra.mrb[0].mxu0 %v707
      %v931 = vpop.f32.mrb[0].mxu0
      %v932 = vadd.f32 0.0, %v931
      %v933 = vpop.f32.mrb[0].mxu0
      %934 = vmatprep.mubr.f32.mxu0 0.0
      %935 = vmatmul.mubr.f32.gmra.mrb[0].mxu0 %v710
      %v936 = vpop.f32.mrb[0].mxu0
      %v937 = vadd.f32 0.0, %v936
      %v938 = vpop.f32.mrb[0].mxu0
      %939 = vdwg.mxu0
      %v940 = vld [vmem:[#allocation2] sm:$0xff]
      %v941 = vld [vmem:[#allocation2 + $0x8] sm:$0xff]
      %v942 = vld [vmem:[#allocation2 + $0x10] sm:$0xff]
      %v943 = vld [vmem:[#allocation2 + $0x18] sm:$0xff]
      %v944 = vld [vmem:[#allocation2 + $0x20] sm:$0xff]
      %v945 = vld [vmem:[#allocation2 + $0x28] sm:$0xff]
      %v946 = vld [vmem:[#allocation2 + $0x30] sm:$0xff]
      %v947 = vld [vmem:[#allocation2 + $0x38] sm:$0xff]
      %v948 = vld [vmem:[#allocation2 + $0x40] sm:$0xff]
      %v949 = vld [vmem:[#allocation2 + $0x48] sm:$0xff]
      %v950 = vld [vmem:[#allocation2 + $0x50] sm:$0xff]
      %v951 = vld [vmem:[#allocation2 + $0x58] sm:$0xff]
      %v952 = vld [vmem:[#allocation2 + $0x60] sm:$0xff]
      %v953 = vld [vmem:[#allocation2 + $0x68] sm:$0xff]
      %v954 = vld [vmem:[#allocation2 + $0x70] sm:$0xff]
      %v955 = vld [vmem:[#allocation2 + $0x78] sm:$0xff]
      %v956 = vld [vmem:[#allocation2 + $0x80] sm:$0xff]
      %v957 = vld [vmem:[#allocation2 + $0x88] sm:$0xff]
      %v958 = vld [vmem:[#allocation2 + $0x90] sm:$0xff]
      %v959 = vld [vmem:[#allocation2 + $0x98] sm:$0xff]
      %v960 = vld [vmem:[#allocation2 + $0xa0] sm:$0xff]
      %v961 = vld [vmem:[#allocation2 + $0xa8] sm:$0xff]
      %v962 = vld [vmem:[#allocation2 + $0xb0] sm:$0xff]
      %v963 = vld [vmem:[#allocation2 + $0xb8] sm:$0xff]
      %v964 = vld [vmem:[#allocation2 + $0xc0] sm:$0xff]
      %v965 = vld [vmem:[#allocation2 + $0xc8] sm:$0xff]
      %v966 = vld [vmem:[#allocation2 + $0xd0] sm:$0xff]
      %v967 = vld [vmem:[#allocation2 + $0xd8] sm:$0xff]
      %v968 = vld [vmem:[#allocation2 + $0xe0] sm:$0xff]
      %v969 = vld [vmem:[#allocation2 + $0xe8] sm:$0xff]
      %v970 = vld [vmem:[#allocation2 + $0xf0] sm:$0xff]
      %v971 = vld [vmem:[#allocation2 + $0xf8] sm:$0xff]
      %v972 = vadd.f32 %v940, %v782
      %v973 = vadd.f32 %v941, %v787
      %v974 = vadd.f32 %v942, %v792
      %v975 = vadd.f32 %v943, %v797
      %v976 = vadd.f32 %v944, %v802
      %v977 = vadd.f32 %v945, %v807
      %v978 = vadd.f32 %v946, %v812
      %v979 = vadd.f32 %v947, %v817
      %v980 = vadd.f32 %v948, %v822
      %v981 = vadd.f32 %v949, %v827
      %v982 = vadd.f32 %v950, %v832
      %v983 = vadd.f32 %v951, %v837
      %v984 = vadd.f32 %v952, %v842
      %v985 = vadd.f32 %v953, %v847
      %v986 = vadd.f32 %v954, %v852
      %v987 = vadd.f32 %v955, %v857
      %v988 = vadd.f32 %v956, %v862
      %v989 = vadd.f32 %v957, %v867
      %v990 = vadd.f32 %v958, %v872
      %v991 = vadd.f32 %v959, %v877
      %v992 = vadd.f32 %v960, %v882
      %v993 = vadd.f32 %v961, %v887
      %v994 = vadd.f32 %v962, %v892
      %v995 = vadd.f32 %v963, %v897
      %v996 = vadd.f32 %v964, %v902
      %v997 = vadd.f32 %v965, %v907
      %v998 = vadd.f32 %v966, %v912
      %v999 = vadd.f32 %v967, %v917
      %v1000 = vadd.f32 %v968, %v922
      %v1001 = vadd.f32 %v969, %v927
      %v1002 = vadd.f32 %v970, %v932
      %v1003 = vadd.f32 %v971, %v937
      %1004 = vst [vmem:[#allocation2] sm:$0xff] %v972
      %1005 = vst [vmem:[#allocation2 + $0x8] sm:$0xff] %v973
      %1006 = vst [vmem:[#allocation2 + $0x10] sm:$0xff] %v974
      %1007 = vst [vmem:[#allocation2 + $0x18] sm:$0xff] %v975
      %1008 = vst [vmem:[#allocation2 + $0x20] sm:$0xff] %v976
      %1009 = vst [vmem:[#allocation2 + $0x28] sm:$0xff] %v977
      %1010 = vst [vmem:[#allocation2 + $0x30] sm:$0xff] %v978
      %1011 = vst [vmem:[#allocation2 + $0x38] sm:$0xff] %v979
      %1012 = vst [vmem:[#allocation2 + $0x40] sm:$0xff] %v980
      %1013 = vst [vmem:[#allocation2 + $0x48] sm:$0xff] %v981
      %1014 = vst [vmem:[#allocation2 + $0x50] sm:$0xff] %v982
      %1015 = vst [vmem:[#allocation2 + $0x58] sm:$0xff] %v983
      %1016 = vst [vmem:[#allocation2 + $0x60] sm:$0xff] %v984
      %1017 = vst [vmem:[#allocation2 + $0x68] sm:$0xff] %v985
      %1018 = vst [vmem:[#allocation2 + $0x70] sm:$0xff] %v986
      %1019 = vst [vmem:[#allocation2 + $0x78] sm:$0xff] %v987
      %1020 = vst [vmem:[#allocation2 + $0x80] sm:$0xff] %v988
      %1021 = vst [vmem:[#allocation2 + $0x88] sm:$0xff] %v989
      %1022 = vst [vmem:[#allocation2 + $0x90] sm:$0xff] %v990
      %1023 = vst [vmem:[#allocation2 + $0x98] sm:$0xff] %v991
      %1024 = vst [vmem:[#allocation2 + $0xa0] sm:$0xff] %v992
      %1025 = vst [vmem:[#allocation2 + $0xa8] sm:$0xff] %v993
      %1026 = vst [vmem:[#allocation2 + $0xb0] sm:$0xff] %v994
      %1027 = vst [vmem:[#allocation2 + $0xb8] sm:$0xff] %v995
      %1028 = vst [vmem:[#allocation2 + $0xc0] sm:$0xff] %v996
      %1029 = vst [vmem:[#allocation2 + $0xc8] sm:$0xff] %v997
      %1030 = vst [vmem:[#allocation2 + $0xd0] sm:$0xff] %v998
      %1031 = vst [vmem:[#allocation2 + $0xd8] sm:$0xff] %v999
      %1032 = vst [vmem:[#allocation2 + $0xe0] sm:$0xff] %v1000
      %1033 = vst [vmem:[#allocation2 + $0xe8] sm:$0xff] %v1001
      %1034 = vst [vmem:[#allocation2 + $0xf0] sm:$0xff] %v1002
      %1035 = vst [vmem:[#allocation2 + $0xf8] sm:$0xff] %v1003
      %v1036 = vld [vmem:[%s190 + $0x2] sm:$0xff]
      %v1037 = vld [vmem:[%s190 + $0xa] sm:$0xff]
      %v1038 = vld [vmem:[%s190 + $0x1a] sm:$0xff]
      %v1039 = vld [vmem:[%s190 + $0x22] sm:$0xff]
      %v1040 = vld [vmem:[%s190 + $0x32] sm:$0xff]
      %v1041 = vld [vmem:[%s190 + $0x3a] sm:$0xff]
      %v1042 = vld [vmem:[%s190 + $0x4a] sm:$0xff]
      %v1043 = vld [vmem:[%s190 + $0x52] sm:$0xff]
      %v1044 = vld [vmem:[%s190 + $0x62] sm:$0xff]
      %v1045 = vld [vmem:[%s190 + $0x6a] sm:$0xff]
      %v1046 = vld [vmem:[%s190 + $0x7a] sm:$0xff]
      %v1047 = vld [vmem:[%s190 + $0x82] sm:$0xff]
      %v1048 = vld [vmem:[%s190 + $0x92] sm:$0xff]
      %v1049 = vld [vmem:[%s190 + $0x9a] sm:$0xff]
      %v1050 = vld [vmem:[%s190 + $0xaa] sm:$0xff]
      %v1051 = vld [vmem:[%s190 + $0xb2] sm:$0xff]
      %v1052 = vld [vmem:[%s190 + $0xc2] sm:$0xff]
      %v1053 = vld [vmem:[%s190 + $0xca] sm:$0xff]
      %v1054 = vld [vmem:[%s190 + $0xda] sm:$0xff]
      %v1055 = vld [vmem:[%s190 + $0xe2] sm:$0xff]
      %v1056 = vld [vmem:[%s190 + $0xf2] sm:$0xff]
      %v1057 = vld [vmem:[%s190 + $0xfa] sm:$0xff]
      %v1058 = vld [vmem:[%s190 + $0x10a] sm:$0xff]
      %v1059 = vld [vmem:[%s190 + $0x112] sm:$0xff]
      %v1060 = vld [vmem:[%s190 + $0x122] sm:$0xff]
      %v1061 = vld [vmem:[%s190 + $0x12a] sm:$0xff]
      %v1062 = vld [vmem:[%s190 + $0x13a] sm:$0xff]
      %v1063 = vld [vmem:[%s190 + $0x142] sm:$0xff]
      %v1064 = vld [vmem:[%s190 + $0x152] sm:$0xff]
      %v1065 = vld [vmem:[%s190 + $0x15a] sm:$0xff]
      %v1066 = vld [vmem:[%s190 + $0x16a] sm:$0xff]
      %v1067 = vld [vmem:[%s190 + $0x172] sm:$0xff]
      %s1068 = scalar_lea.vmem %s1, 8
      %v1069 = vld [vmem:[%s1068] sm:$0xf]
      %v1071 = vsel %vm224, %v1036, 0
      %v1074 = vsel %vm224, %v1037, 0
      %v1077 = vsel %vm224, %v1038, 0
      %v1080 = vsel %vm224, %v1039, 0
      %v1083 = vsel %vm224, %v1040, 0
      %v1086 = vsel %vm224, %v1041, 0
      %v1089 = vsel %vm224, %v1042, 0
      %v1092 = vsel %vm224, %v1043, 0
      %v1095 = vsel %vm224, %v1044, 0
      %v1098 = vsel %vm224, %v1045, 0
      %v1101 = vsel %vm224, %v1046, 0
      %v1104 = vsel %vm224, %v1047, 0
      %v1107 = vsel %vm224, %v1048, 0
      %v1110 = vsel %vm224, %v1049, 0
      %v1113 = vsel %vm224, %v1050, 0
      %v1116 = vsel %vm224, %v1051, 0
      %v1119 = vsel %vm224, %v1052, 0
      %v1122 = vsel %vm224, %v1053, 0
      %v1125 = vsel %vm224, %v1054, 0
      %v1128 = vsel %vm224, %v1055, 0
      %v1131 = vsel %vm224, %v1056, 0
      %v1134 = vsel %vm224, %v1057, 0
      %v1137 = vsel %vm224, %v1058, 0
      %v1140 = vsel %vm224, %v1059, 0
      %v1143 = vsel %vm224, %v1060, 0
      %v1146 = vsel %vm224, %v1061, 0
      %v1149 = vsel %vm224, %v1062, 0
      %v1152 = vsel %vm224, %v1063, 0
      %v1155 = vsel %vm224, %v1064, 0
      %v1158 = vsel %vm224, %v1065, 0
      %v1161 = vsel %vm224, %v1066, 0
      %v1164 = vsel %vm224, %v1067, 0
      %v1167 = vsel %vm321, %v1069, 0
      %1169 = vmatprep.subr.mxu0 0.0
      %1170 = vmatpush1.msra.mxu0 %v1167
      %1171 = vmatprep.subr.mxu0 0.0
      %1172 = vmatpush1.msra.mxu0 0.0
      %1173 = vmatprep.subr.mxu0 0.0
      %1174 = vmatpush1.msra.mxu0 0.0
      %1175 = vmatprep.subr.mxu0 0.0
      %1176 = vmatpush1.msra.mxu0 0.0
      %1177 = vmatprep.subr.mxu0 0.0
      %1178 = vmatpush1.msra.mxu0 0.0
      %1179 = vmatprep.subr.mxu0 0.0
      %1180 = vmatpush1.msra.mxu0 0.0
      %1181 = vmatprep.subr.mxu0 0.0
      %1182 = vmatpush1.msra.mxu0 0.0
      %1183 = vmatprep.subr.mxu0 0.0
      %1184 = vmatpush1.msra.mxu0 0.0
      %1185 = vmatprep.subr.mxu0 0.0
      %1186 = vmatpush1.msra.mxu0 0.0
      %1187 = vmatprep.subr.mxu0 0.0
      %1188 = vmatpush1.msra.mxu0 0.0
      %1189 = vmatprep.subr.mxu0 0.0
      %1190 = vmatpush1.msra.mxu0 0.0
      %1191 = vmatprep.subr.mxu0 0.0
      %1192 = vmatpush1.msra.mxu0 0.0
      %1193 = vmatprep.subr.mxu0 0.0
      %1194 = vmatpush1.msra.mxu0 0.0
      %1195 = vmatprep.subr.mxu0 0.0
      %1196 = vmatpush1.msra.mxu0 0.0
      %1197 = vmatprep.subr.mxu0 0.0
      %1198 = vmatpush1.msra.mxu0 0.0
      %1199 = vmatprep.subr.mxu0 0.0
      %1200 = vmatpush1.msra.mxu0 0.0
      %1201 = vmatprep.subr.mxu0 0.0
      %1202 = vmatpush1.msra.mxu0 0.0
      %1203 = vmatprep.subr.mxu0 0.0
      %1204 = vmatpush1.msra.mxu0 0.0
      %1205 = vmatprep.subr.mxu0 0.0
      %1206 = vmatpush1.msra.mxu0 0.0
      %1207 = vmatprep.subr.mxu0 0.0
      %1208 = vmatpush1.msra.mxu0 0.0
      %1209 = vmatprep.subr.mxu0 0.0
      %1210 = vmatpush1.msra.mxu0 0.0
      %1211 = vmatprep.subr.mxu0 0.0
      %1212 = vmatpush1.msra.mxu0 0.0
      %1213 = vmatprep.subr.mxu0 0.0
      %1214 = vmatpush1.msra.mxu0 0.0
      %1215 = vmatprep.subr.mxu0 0.0
      %1216 = vmatpush1.msra.mxu0 0.0
      %1217 = vmatprep.subr.mxu0 0.0
      %1218 = vmatpush1.msra.mxu0 0.0
      %1219 = vmatprep.subr.mxu0 0.0
      %1220 = vmatpush1.msra.mxu0 0.0
      %1221 = vmatprep.subr.mxu0 0.0
      %1222 = vmatpush1.msra.mxu0 0.0
      %1223 = vmatprep.subr.mxu0 0.0
      %1224 = vmatpush1.msra.mxu0 0.0
      %1225 = vmatprep.subr.mxu0 0.0
      %1226 = vmatpush1.msra.mxu0 0.0
      %1227 = vmatprep.subr.mxu0 0.0
      %1228 = vmatpush1.msra.mxu0 0.0
      %1229 = vmatprep.subr.mxu0 0.0
      %1230 = vmatpush1.msra.mxu0 0.0
      %1231 = vmatprep.subr.mxu0 0.0
      %1232 = vmatpush1.msra.mxu0 0.0
      %1233 = vmatprep.mubr.f32.mxu0 0.0
      %1234 = vmatmul.mubr.f32.gmra.mrb[0].mxu0 %v1071
      %v1235 = vpop.f32.mrb[0].mxu0
      %v1236 = vadd.f32 0.0, %v1235
      %v1237 = vpop.f32.mrb[0].mxu0
      %1238 = vmatprep.mubr.f32.mxu0 0.0
      %1239 = vmatmul.mubr.f32.gmra.mrb[0].mxu0 %v1074
      %v1240 = vpop.f32.mrb[0].mxu0
      %v1241 = vadd.f32 0.0, %v1240
      %v1242 = vpop.f32.mrb[0].mxu0
      %1243 = vmatprep.mubr.f32.mxu0 0.0
      %1244 = vmatmul.mubr.f32.gmra.mrb[0].mxu0 %v1077
      %v1245 = vpop.f32.mrb[0].mxu0
      %v1246 = vadd.f32 0.0, %v1245
      %v1247 = vpop.f32.mrb[0].mxu0
      %1248 = vmatprep.mubr.f32.mxu0 0.0
      %1249 = vmatmul.mubr.f32.gmra.mrb[0].mxu0 %v1080
      %v1250 = vpop.f32.mrb[0].mxu0
      %v1251 = vadd.f32 0.0, %v1250
      %v1252 = vpop.f32.mrb[0].mxu0
      %1253 = vmatprep.mubr.f32.mxu0 0.0
      %1254 = vmatmul.mubr.f32.gmra.mrb[0].mxu0 %v1083
      %v1255 = vpop.f32.mrb[0].mxu0
      %v1256 = vadd.f32 0.0, %v1255
      %v1257 = vpop.f32.mrb[0].mxu0
      %1258 = vmatprep.mubr.f32.mxu0 0.0
      %1259 = vmatmul.mubr.f32.gmra.mrb[0].mxu0 %v1086
      %v1260 = vpop.f32.mrb[0].mxu0
      %v1261 = vadd.f32 0.0, %v1260
      %v1262 = vpop.f32.mrb[0].mxu0
      %1263 = vmatprep.mubr.f32.mxu0 0.0
      %1264 = vmatmul.mubr.f32.gmra.mrb[0].mxu0 %v1089
      %v1265 = vpop.f32.mrb[0].mxu0
      %v1266 = vadd.f32 0.0, %v1265
      %v1267 = vpop.f32.mrb[0].mxu0
      %1268 = vmatprep.mubr.f32.mxu0 0.0
      %1269 = vmatmul.mubr.f32.gmra.mrb[0].mxu0 %v1092
      %v1270 = vpop.f32.mrb[0].mxu0
      %v1271 = vadd.f32 0.0, %v1270
      %v1272 = vpop.f32.mrb[0].mxu0
      %1273 = vmatprep.mubr.f32.mxu0 0.0
      %1274 = vmatmul.mubr.f32.gmra.mrb[0].mxu0 %v1095
      %v1275 = vpop.f32.mrb[0].mxu0
      %v1276 = vadd.f32 0.0, %v1275
      %v1277 = vpop.f32.mrb[0].mxu0
      %1278 = vmatprep.mubr.f32.mxu0 0.0
      %1279 = vmatmul.mubr.f32.gmra.mrb[0].mxu0 %v1098
      %v1280 = vpop.f32.mrb[0].mxu0
      %v1281 = vadd.f32 0.0, %v1280
      %v1282 = vpop.f32.mrb[0].mxu0
      %1283 = vmatprep.mubr.f32.mxu0 0.0
      %1284 = vmatmul.mubr.f32.gmra.mrb[0].mxu0 %v1101
      %v1285 = vpop.f32.mrb[0].mxu0
      %v1286 = vadd.f32 0.0, %v1285
      %v1287 = vpop.f32.mrb[0].mxu0
      %1288 = vmatprep.mubr.f32.mxu0 0.0
      %1289 = vmatmul.mubr.f32.gmra.mrb[0].mxu0 %v1104
      %v1290 = vpop.f32.mrb[0].mxu0
      %v1291 = vadd.f32 0.0, %v1290
      %v1292 = vpop.f32.mrb[0].mxu0
      %1293 = vmatprep.mubr.f32.mxu0 0.0
      %1294 = vmatmul.mubr.f32.gmra.mrb[0].mxu0 %v1107
      %v1295 = vpop.f32.mrb[0].mxu0
      %v1296 = vadd.f32 0.0, %v1295
      %v1297 = vpop.f32.mrb[0].mxu0
      %1298 = vmatprep.mubr.f32.mxu0 0.0
      %1299 = vmatmul.mubr.f32.gmra.mrb[0].mxu0 %v1110
      %v1300 = vpop.f32.mrb[0].mxu0
      %v1301 = vadd.f32 0.0, %v1300
      %v1302 = vpop.f32.mrb[0].mxu0
      %1303 = vmatprep.mubr.f32.mxu0 0.0
      %1304 = vmatmul.mubr.f32.gmra.mrb[0].mxu0 %v1113
      %v1305 = vpop.f32.mrb[0].mxu0
      %v1306 = vadd.f32 0.0, %v1305
      %v1307 = vpop.f32.mrb[0].mxu0
      %1308 = vmatprep.mubr.f32.mxu0 0.0
      %1309 = vmatmul.mubr.f32.gmra.mrb[0].mxu0 %v1116
      %v1310 = vpop.f32.mrb[0].mxu0
      %v1311 = vadd.f32 0.0, %v1310
      %v1312 = vpop.f32.mrb[0].mxu0
      %1313 = vmatprep.mubr.f32.mxu0 0.0
      %1314 = vmatmul.mubr.f32.gmra.mrb[0].mxu0 %v1119
      %v1315 = vpop.f32.mrb[0].mxu0
      %v1316 = vadd.f32 0.0, %v1315
      %v1317 = vpop.f32.mrb[0].mxu0
      %1318 = vmatprep.mubr.f32.mxu0 0.0
      %1319 = vmatmul.mubr.f32.gmra.mrb[0].mxu0 %v1122
      %v1320 = vpop.f32.mrb[0].mxu0
      %v1321 = vadd.f32 0.0, %v1320
      %v1322 = vpop.f32.mrb[0].mxu0
      %1323 = vmatprep.mubr.f32.mxu0 0.0
      %1324 = vmatmul.mubr.f32.gmra.mrb[0].mxu0 %v1125
      %v1325 = vpop.f32.mrb[0].mxu0
      %v1326 = vadd.f32 0.0, %v1325
      %v1327 = vpop.f32.mrb[0].mxu0
      %1328 = vmatprep.mubr.f32.mxu0 0.0
      %1329 = vmatmul.mubr.f32.gmra.mrb[0].mxu0 %v1128
      %v1330 = vpop.f32.mrb[0].mxu0
      %v1331 = vadd.f32 0.0, %v1330
      %v1332 = vpop.f32.mrb[0].mxu0
      %1333 = vmatprep.mubr.f32.mxu0 0.0
      %1334 = vmatmul.mubr.f32.gmra.mrb[0].mxu0 %v1131
      %v1335 = vpop.f32.mrb[0].mxu0
      %v1336 = vadd.f32 0.0, %v1335
      %v1337 = vpop.f32.mrb[0].mxu0
      %1338 = vmatprep.mubr.f32.mxu0 0.0
      %1339 = vmatmul.mubr.f32.gmra.mrb[0].mxu0 %v1134
      %v1340 = vpop.f32.mrb[0].mxu0
      %v1341 = vadd.f32 0.0, %v1340
      %v1342 = vpop.f32.mrb[0].mxu0
      %1343 = vmatprep.mubr.f32.mxu0 0.0
      %1344 = vmatmul.mubr.f32.gmra.mrb[0].mxu0 %v1137
      %v1345 = vpop.f32.mrb[0].mxu0
      %v1346 = vadd.f32 0.0, %v1345
      %v1347 = vpop.f32.mrb[0].mxu0
      %1348 = vmatprep.mubr.f32.mxu0 0.0
      %1349 = vmatmul.mubr.f32.gmra.mrb[0].mxu0 %v1140
      %v1350 = vpop.f32.mrb[0].mxu0
      %v1351 = vadd.f32 0.0, %v1350
      %v1352 = vpop.f32.mrb[0].mxu0
      %1353 = vmatprep.mubr.f32.mxu0 0.0
      %1354 = vmatmul.mubr.f32.gmra.mrb[0].mxu0 %v1143
      %v1355 = vpop.f32.mrb[0].mxu0
      %v1356 = vadd.f32 0.0, %v1355
      %v1357 = vpop.f32.mrb[0].mxu0
      %1358 = vmatprep.mubr.f32.mxu0 0.0
      %1359 = vmatmul.mubr.f32.gmra.mrb[0].mxu0 %v1146
      %v1360 = vpop.f32.mrb[0].mxu0
      %v1361 = vadd.f32 0.0, %v1360
      %v1362 = vpop.f32.mrb[0].mxu0
      %1363 = vmatprep.mubr.f32.mxu0 0.0
      %1364 = vmatmul.mubr.f32.gmra.mrb[0].mxu0 %v1149
      %v1365 = vpop.f32.mrb[0].mxu0
      %v1366 = vadd.f32 0.0, %v1365
      %v1367 = vpop.f32.mrb[0].mxu0
      %1368 = vmatprep.mubr.f32.mxu0 0.0
      %1369 = vmatmul.mubr.f32.gmra.mrb[0].mxu0 %v1152
      %v1370 = vpop.f32.mrb[0].mxu0
      %v1371 = vadd.f32 0.0, %v1370
      %v1372 = vpop.f32.mrb[0].mxu0
      %1373 = vmatprep.mubr.f32.mxu0 0.0
      %1374 = vmatmul.mubr.f32.gmra.mrb[0].mxu0 %v1155
      %v1375 = vpop.f32.mrb[0].mxu0
      %v1376 = vadd.f32 0.0, %v1375
      %v1377 = vpop.f32.mrb[0].mxu0
      %1378 = vmatprep.mubr.f32.mxu0 0.0
      %1379 = vmatmul.mubr.f32.gmra.mrb[0].mxu0 %v1158
      %v1380 = vpop.f32.mrb[0].mxu0
      %v1381 = vadd.f32 0.0, %v1380
      %v1382 = vpop.f32.mrb[0].mxu0
      %1383 = vmatprep.mubr.f32.mxu0 0.0
      %1384 = vmatmul.mubr.f32.gmra.mrb[0].mxu0 %v1161
      %v1385 = vpop.f32.mrb[0].mxu0
      %v1386 = vadd.f32 0.0, %v1385
      %v1387 = vpop.f32.mrb[0].mxu0
      %1388 = vmatprep.mubr.f32.mxu0 0.0
      %1389 = vmatmul.mubr.f32.gmra.mrb[0].mxu0 %v1164
      %v1390 = vpop.f32.mrb[0].mxu0
      %v1391 = vadd.f32 0.0, %v1390
      %v1392 = vpop.f32.mrb[0].mxu0
      %1393 = vdwg.mxu0
      %v1394 = vld [vmem:[#allocation2] sm:$0xff]
      %v1395 = vld [vmem:[#allocation2 + $0x8] sm:$0xff]
      %v1396 = vld [vmem:[#allocation2 + $0x10] sm:$0xff]
      %v1397 = vld [vmem:[#allocation2 + $0x18] sm:$0xff]
      %v1398 = vld [vmem:[#allocation2 + $0x20] sm:$0xff]
      %v1399 = vld [vmem:[#allocation2 + $0x28] sm:$0xff]
      %v1400 = vld [vmem:[#allocation2 + $0x30] sm:$0xff]
      %v1401 = vld [vmem:[#allocation2 + $0x38] sm:$0xff]
      %v1402 = vld [vmem:[#allocation2 + $0x40] sm:$0xff]
      %v1403 = vld [vmem:[#allocation2 + $0x48] sm:$0xff]
      %v1404 = vld [vmem:[#allocation2 + $0x50] sm:$0xff]
      %v1405 = vld [vmem:[#allocation2 + $0x58] sm:$0xff]
      %v1406 = vld [vmem:[#allocation2 + $0x60] sm:$0xff]
      %v1407 = vld [vmem:[#allocation2 + $0x68] sm:$0xff]
      %v1408 = vld [vmem:[#allocation2 + $0x70] sm:$0xff]
      %v1409 = vld [vmem:[#allocation2 + $0x78] sm:$0xff]
      %v1410 = vld [vmem:[#allocation2 + $0x80] sm:$0xff]
      %v1411 = vld [vmem:[#allocation2 + $0x88] sm:$0xff]
      %v1412 = vld [vmem:[#allocation2 + $0x90] sm:$0xff]
      %v1413 = vld [vmem:[#allocation2 + $0x98] sm:$0xff]
      %v1414 = vld [vmem:[#allocation2 + $0xa0] sm:$0xff]
      %v1415 = vld [vmem:[#allocation2 + $0xa8] sm:$0xff]
      %v1416 = vld [vmem:[#allocation2 + $0xb0] sm:$0xff]
      %v1417 = vld [vmem:[#allocation2 + $0xb8] sm:$0xff]
      %v1418 = vld [vmem:[#allocation2 + $0xc0] sm:$0xff]
      %v1419 = vld [vmem:[#allocation2 + $0xc8] sm:$0xff]
      %v1420 = vld [vmem:[#allocation2 + $0xd0] sm:$0xff]
      %v1421 = vld [vmem:[#allocation2 + $0xd8] sm:$0xff]
      %v1422 = vld [vmem:[#allocation2 + $0xe0] sm:$0xff]
      %v1423 = vld [vmem:[#allocation2 + $0xe8] sm:$0xff]
      %v1424 = vld [vmem:[#allocation2 + $0xf0] sm:$0xff]
      %v1425 = vld [vmem:[#allocation2 + $0xf8] sm:$0xff]
      %v1426 = vadd.f32 %v1394, %v1236
      %v1427 = vadd.f32 %v1395, %v1241
      %v1428 = vadd.f32 %v1396, %v1246
      %v1429 = vadd.f32 %v1397, %v1251
      %v1430 = vadd.f32 %v1398, %v1256
      %v1431 = vadd.f32 %v1399, %v1261
      %v1432 = vadd.f32 %v1400, %v1266
      %v1433 = vadd.f32 %v1401, %v1271
      %v1434 = vadd.f32 %v1402, %v1276
      %v1435 = vadd.f32 %v1403, %v1281
      %v1436 = vadd.f32 %v1404, %v1286
      %v1437 = vadd.f32 %v1405, %v1291
      %v1438 = vadd.f32 %v1406, %v1296
      %v1439 = vadd.f32 %v1407, %v1301
      %v1440 = vadd.f32 %v1408, %v1306
      %v1441 = vadd.f32 %v1409, %v1311
      %v1442 = vadd.f32 %v1410, %v1316
      %v1443 = vadd.f32 %v1411, %v1321
      %v1444 = vadd.f32 %v1412, %v1326
      %v1445 = vadd.f32 %v1413, %v1331
      %v1446 = vadd.f32 %v1414, %v1336
      %v1447 = vadd.f32 %v1415, %v1341
      %v1448 = vadd.f32 %v1416, %v1346
      %v1449 = vadd.f32 %v1417, %v1351
      %v1450 = vadd.f32 %v1418, %v1356
      %v1451 = vadd.f32 %v1419, %v1361
      %v1452 = vadd.f32 %v1420, %v1366
      %v1453 = vadd.f32 %v1421, %v1371
      %v1454 = vadd.f32 %v1422, %v1376
      %v1455 = vadd.f32 %v1423, %v1381
      %v1456 = vadd.f32 %v1424, %v1386
      %v1457 = vadd.f32 %v1425, %v1391
      %1458 = vst [vmem:[#allocation2] sm:$0xff] %v1426
      %1459 = vst [vmem:[#allocation2 + $0x8] sm:$0xff] %v1427
      %1460 = vst [vmem:[#allocation2 + $0x10] sm:$0xff] %v1428
      %1461 = vst [vmem:[#allocation2 + $0x18] sm:$0xff] %v1429
      %1462 = vst [vmem:[#allocation2 + $0x20] sm:$0xff] %v1430
      %1463 = vst [vmem:[#allocation2 + $0x28] sm:$0xff] %v1431
      %1464 = vst [vmem:[#allocation2 + $0x30] sm:$0xff] %v1432
      %1465 = vst [vmem:[#allocation2 + $0x38] sm:$0xff] %v1433
      %1466 = vst [vmem:[#allocation2 + $0x40] sm:$0xff] %v1434
      %1467 = vst [vmem:[#allocation2 + $0x48] sm:$0xff] %v1435
      %1468 = vst [vmem:[#allocation2 + $0x50] sm:$0xff] %v1436
      %1469 = vst [vmem:[#allocation2 + $0x58] sm:$0xff] %v1437
      %1470 = vst [vmem:[#allocation2 + $0x60] sm:$0xff] %v1438
      %1471 = vst [vmem:[#allocation2 + $0x68] sm:$0xff] %v1439
      %1472 = vst [vmem:[#allocation2 + $0x70] sm:$0xff] %v1440
      %1473 = vst [vmem:[#allocation2 + $0x78] sm:$0xff] %v1441
      %1474 = vst [vmem:[#allocation2 + $0x80] sm:$0xff] %v1442
      %1475 = vst [vmem:[#allocation2 + $0x88] sm:$0xff] %v1443
      %1476 = vst [vmem:[#allocation2 + $0x90] sm:$0xff] %v1444
      %1477 = vst [vmem:[#allocation2 + $0x98] sm:$0xff] %v1445
      %1478 = vst [vmem:[#allocation2 + $0xa0] sm:$0xff] %v1446
      %1479 = vst [vmem:[#allocation2 + $0xa8] sm:$0xff] %v1447
      %1480 = vst [vmem:[#allocation2 + $0xb0] sm:$0xff] %v1448
      %1481 = vst [vmem:[#allocation2 + $0xb8] sm:$0xff] %v1449
      %1482 = vst [vmem:[#allocation2 + $0xc0] sm:$0xff] %v1450
      %1483 = vst [vmem:[#allocation2 + $0xc8] sm:$0xff] %v1451
      %1484 = vst [vmem:[#allocation2 + $0xd0] sm:$0xff] %v1452
      %1485 = vst [vmem:[#allocation2 + $0xd8] sm:$0xff] %v1453
      %1486 = vst [vmem:[#allocation2 + $0xe0] sm:$0xff] %v1454
      %1487 = vst [vmem:[#allocation2 + $0xe8] sm:$0xff] %v1455
      %1488 = vst [vmem:[#allocation2 + $0xf0] sm:$0xff] %v1456
      %1489 = vst [vmem:[#allocation2 + $0xf8] sm:$0xff] %v1457
      %s1490 = sadd.s32 %s188, 1
      %s1491 = smul.u32 %s1490, 24
      %s1492 = scalar_lea.vmem %s181, %s1491
      %v1493 = vld [vmem:[%s1492] sm:$0xff]
      %v1494 = vld [vmem:[%s1492 + $0x8] sm:$0xff]
      %v1495 = vld [vmem:[%s1492 + $0x18] sm:$0xff]
      %v1496 = vld [vmem:[%s1492 + $0x20] sm:$0xff]
      %v1497 = vld [vmem:[%s1492 + $0x30] sm:$0xff]
      %v1498 = vld [vmem:[%s1492 + $0x38] sm:$0xff]
      %v1499 = vld [vmem:[%s1492 + $0x48] sm:$0xff]
      %v1500 = vld [vmem:[%s1492 + $0x50] sm:$0xff]
      %v1501 = vld [vmem:[%s1492 + $0x60] sm:$0xff]
      %v1502 = vld [vmem:[%s1492 + $0x68] sm:$0xff]
      %v1503 = vld [vmem:[%s1492 + $0x78] sm:$0xff]
      %v1504 = vld [vmem:[%s1492 + $0x80] sm:$0xff]
      %v1505 = vld [vmem:[%s1492 + $0x90] sm:$0xff]
      %v1506 = vld [vmem:[%s1492 + $0x98] sm:$0xff]
      %v1507 = vld [vmem:[%s1492 + $0xa8] sm:$0xff]
      %v1508 = vld [vmem:[%s1492 + $0xb0] sm:$0xff]
      %v1509 = vld [vmem:[%s1492 + $0xc0] sm:$0xff]
      %v1510 = vld [vmem:[%s1492 + $0xc8] sm:$0xff]
      %v1511 = vld [vmem:[%s1492 + $0xd8] sm:$0xff]
      %v1512 = vld [vmem:[%s1492 + $0xe0] sm:$0xff]
      %v1513 = vld [vmem:[%s1492 + $0xf0] sm:$0xff]
      %v1514 = vld [vmem:[%s1492 + $0xf8] sm:$0xff]
      %v1515 = vld [vmem:[%s1492 + $0x108] sm:$0xff]
      %v1516 = vld [vmem:[%s1492 + $0x110] sm:$0xff]
      %v1517 = vld [vmem:[%s1492 + $0x120] sm:$0xff]
      %v1518 = vld [vmem:[%s1492 + $0x128] sm:$0xff]
      %v1519 = vld [vmem:[%s1492 + $0x138] sm:$0xff]
      %v1520 = vld [vmem:[%s1492 + $0x140] sm:$0xff]
      %v1521 = vld [vmem:[%s1492 + $0x150] sm:$0xff]
      %v1522 = vld [vmem:[%s1492 + $0x158] sm:$0xff]
      %v1523 = vld [vmem:[%s1492 + $0x168] sm:$0xff]
      %v1524 = vld [vmem:[%s1492 + $0x170] sm:$0xff]
      %s1525 = scalar_lea.vmem %s1, 12
      %v1526 = vld [vmem:[%s1525] sm:$0xf]
      %v1528 = vsel %vm224, %v1493, 0
      %v1531 = vsel %vm224, %v1494, 0
      %v1534 = vsel %vm224, %v1495, 0
      %v1537 = vsel %vm224, %v1496, 0
      %v1540 = vsel %vm224, %v1497, 0
      %v1543 = vsel %vm224, %v1498, 0
      %v1546 = vsel %vm224, %v1499, 0
      %v1549 = vsel %vm224, %v1500, 0
      %v1552 = vsel %vm224, %v1501, 0
      %v1555 = vsel %vm224, %v1502, 0
      %v1558 = vsel %vm224, %v1503, 0
      %v1561 = vsel %vm224, %v1504, 0
      %v1564 = vsel %vm224, %v1505, 0
      %v1567 = vsel %vm224, %v1506, 0
      %v1570 = vsel %vm224, %v1507, 0
      %v1573 = vsel %vm224, %v1508, 0
      %v1576 = vsel %vm224, %v1509, 0
      %v1579 = vsel %vm224, %v1510, 0
      %v1582 = vsel %vm224, %v1511, 0
      %v1585 = vsel %vm224, %v1512, 0
      %v1588 = vsel %vm224, %v1513, 0
      %v1591 = vsel %vm224, %v1514, 0
      %v1594 = vsel %vm224, %v1515, 0
      %v1597 = vsel %vm224, %v1516, 0
      %v1600 = vsel %vm224, %v1517, 0
      %v1603 = vsel %vm224, %v1518, 0
      %v1606 = vsel %vm224, %v1519, 0
      %v1609 = vsel %vm224, %v1520, 0
      %v1612 = vsel %vm224, %v1521, 0
      %v1615 = vsel %vm224, %v1522, 0
      %v1618 = vsel %vm224, %v1523, 0
      %v1621 = vsel %vm224, %v1524, 0
      %v1624 = vsel %vm321, %v1526, 0
      %1626 = vmatprep.subr.mxu0 0.0
      %1627 = vmatpush1.msra.mxu0 %v1624
      %1628 = vmatprep.subr.mxu0 0.0
      %1629 = vmatpush1.msra.mxu0 0.0
      %1630 = vmatprep.subr.mxu0 0.0
      %1631 = vmatpush1.msra.mxu0 0.0
      %1632 = vmatprep.subr.mxu0 0.0
      %1633 = vmatpush1.msra.mxu0 0.0
      %1634 = vmatprep.subr.mxu0 0.0
      %1635 = vmatpush1.msra.mxu0 0.0
      %1636 = vmatprep.subr.mxu0 0.0
      %1637 = vmatpush1.msra.mxu0 0.0
      %1638 = vmatprep.subr.mxu0 0.0
      %1639 = vmatpush1.msra.mxu0 0.0
      %1640 = vmatprep.subr.mxu0 0.0
      %1641 = vmatpush1.msra.mxu0 0.0
      %1642 = vmatprep.subr.mxu0 0.0
      %1643 = vmatpush1.msra.mxu0 0.0
      %1644 = vmatprep.subr.mxu0 0.0
      %1645 = vmatpush1.msra.mxu0 0.0
      %1646 = vmatprep.subr.mxu0 0.0
      %1647 = vmatpush1.msra.mxu0 0.0
      %1648 = vmatprep.subr.mxu0 0.0
      %1649 = vmatpush1.msra.mxu0 0.0
      %1650 = vmatprep.subr.mxu0 0.0
      %1651 = vmatpush1.msra.mxu0 0.0
      %1652 = vmatprep.subr.mxu0 0.0
      %1653 = vmatpush1.msra.mxu0 0.0
      %1654 = vmatprep.subr.mxu0 0.0
      %1655 = vmatpush1.msra.mxu0 0.0
      %1656 = vmatprep.subr.mxu0 0.0
      %1657 = vmatpush1.msra.mxu0 0.0
      %1658 = vmatprep.subr.mxu0 0.0
      %1659 = vmatpush1.msra.mxu0 0.0
      %1660 = vmatprep.subr.mxu0 0.0
      %1661 = vmatpush1.msra.mxu0 0.0
      %1662 = vmatprep.subr.mxu0 0.0
      %1663 = vmatpush1.msra.mxu0 0.0
      %1664 = vmatprep.subr.mxu0 0.0
      %1665 = vmatpush1.msra.mxu0 0.0
      %1666 = vmatprep.subr.mxu0 0.0
      %1667 = vmatpush1.msra.mxu0 0.0
      %1668 = vmatprep.subr.mxu0 0.0
      %1669 = vmatpush1.msra.mxu0 0.0
      %1670 = vmatprep.subr.mxu0 0.0
      %1671 = vmatpush1.msra.mxu0 0.0
      %1672 = vmatprep.subr.mxu0 0.0
      %1673 = vmatpush1.msra.mxu0 0.0
      %1674 = vmatprep.subr.mxu0 0.0
      %1675 = vmatpush1.msra.mxu0 0.0
      %1676 = vmatprep.subr.mxu0 0.0
      %1677 = vmatpush1.msra.mxu0 0.0
      %1678 = vmatprep.subr.mxu0 0.0
      %1679 = vmatpush1.msra.mxu0 0.0
      %1680 = vmatprep.subr.mxu0 0.0
      %1681 = vmatpush1.msra.mxu0 0.0
      %1682 = vmatprep.subr.mxu0 0.0
      %1683 = vmatpush1.msra.mxu0 0.0
      %1684 = vmatprep.subr.mxu0 0.0
      %1685 = vmatpush1.msra.mxu0 0.0
      %1686 = vmatprep.subr.mxu0 0.0
      %1687 = vmatpush1.msra.mxu0 0.0
      %1688 = vmatprep.subr.mxu0 0.0
      %1689 = vmatpush1.msra.mxu0 0.0
      %1690 = vmatprep.mubr.f32.mxu0 0.0
      %1691 = vmatmul.mubr.f32.gmra.mrb[0].mxu0 %v1528
      %v1692 = vpop.f32.mrb[0].mxu0
      %v1693 = vadd.f32 0.0, %v1692
      %v1694 = vpop.f32.mrb[0].mxu0
      %1695 = vmatprep.mubr.f32.mxu0 0.0
      %1696 = vmatmul.mubr.f32.gmra.mrb[0].mxu0 %v1531
      %v1697 = vpop.f32.mrb[0].mxu0
      %v1698 = vadd.f32 0.0, %v1697
      %v1699 = vpop.f32.mrb[0].mxu0
      %1700 = vmatprep.mubr.f32.mxu0 0.0
      %1701 = vmatmul.mubr.f32.gmra.mrb[0].mxu0 %v1534
      %v1702 = vpop.f32.mrb[0].mxu0
      %v1703 = vadd.f32 0.0, %v1702
      %v1704 = vpop.f32.mrb[0].mxu0
      %1705 = vmatprep.mubr.f32.mxu0 0.0
      %1706 = vmatmul.mubr.f32.gmra.mrb[0].mxu0 %v1537
      %v1707 = vpop.f32.mrb[0].mxu0
      %v1708 = vadd.f32 0.0, %v1707
      %v1709 = vpop.f32.mrb[0].mxu0
      %1710 = vmatprep.mubr.f32.mxu0 0.0
      %1711 = vmatmul.mubr.f32.gmra.mrb[0].mxu0 %v1540
      %v1712 = vpop.f32.mrb[0].mxu0
      %v1713 = vadd.f32 0.0, %v1712
      %v1714 = vpop.f32.mrb[0].mxu0
      %1715 = vmatprep.mubr.f32.mxu0 0.0
      %1716 = vmatmul.mubr.f32.gmra.mrb[0].mxu0 %v1543
      %v1717 = vpop.f32.mrb[0].mxu0
      %v1718 = vadd.f32 0.0, %v1717
      %v1719 = vpop.f32.mrb[0].mxu0
      %1720 = vmatprep.mubr.f32.mxu0 0.0
      %1721 = vmatmul.mubr.f32.gmra.mrb[0].mxu0 %v1546
      %v1722 = vpop.f32.mrb[0].mxu0
      %v1723 = vadd.f32 0.0, %v1722
      %v1724 = vpop.f32.mrb[0].mxu0
      %1725 = vmatprep.mubr.f32.mxu0 0.0
      %1726 = vmatmul.mubr.f32.gmra.mrb[0].mxu0 %v1549
      %v1727 = vpop.f32.mrb[0].mxu0
      %v1728 = vadd.f32 0.0, %v1727
      %v1729 = vpop.f32.mrb[0].mxu0
      %1730 = vmatprep.mubr.f32.mxu0 0.0
      %1731 = vmatmul.mubr.f32.gmra.mrb[0].mxu0 %v1552
      %v1732 = vpop.f32.mrb[0].mxu0
      %v1733 = vadd.f32 0.0, %v1732
      %v1734 = vpop.f32.mrb[0].mxu0
      %1735 = vmatprep.mubr.f32.mxu0 0.0
      %1736 = vmatmul.mubr.f32.gmra.mrb[0].mxu0 %v1555
      %v1737 = vpop.f32.mrb[0].mxu0
      %v1738 = vadd.f32 0.0, %v1737
      %v1739 = vpop.f32.mrb[0].mxu0
      %1740 = vmatprep.mubr.f32.mxu0 0.0
      %1741 = vmatmul.mubr.f32.gmra.mrb[0].mxu0 %v1558
      %v1742 = vpop.f32.mrb[0].mxu0
      %v1743 = vadd.f32 0.0, %v1742
      %v1744 = vpop.f32.mrb[0].mxu0
      %1745 = vmatprep.mubr.f32.mxu0 0.0
      %1746 = vmatmul.mubr.f32.gmra.mrb[0].mxu0 %v1561
      %v1747 = vpop.f32.mrb[0].mxu0
      %v1748 = vadd.f32 0.0, %v1747
      %v1749 = vpop.f32.mrb[0].mxu0
      %1750 = vmatprep.mubr.f32.mxu0 0.0
      %1751 = vmatmul.mubr.f32.gmra.mrb[0].mxu0 %v1564
      %v1752 = vpop.f32.mrb[0].mxu0
      %v1753 = vadd.f32 0.0, %v1752
      %v1754 = vpop.f32.mrb[0].mxu0
      %1755 = vmatprep.mubr.f32.mxu0 0.0
      %1756 = vmatmul.mubr.f32.gmra.mrb[0].mxu0 %v1567
      %v1757 = vpop.f32.mrb[0].mxu0
      %v1758 = vadd.f32 0.0, %v1757
      %v1759 = vpop.f32.mrb[0].mxu0
      %1760 = vmatprep.mubr.f32.mxu0 0.0
      %1761 = vmatmul.mubr.f32.gmra.mrb[0].mxu0 %v1570
      %v1762 = vpop.f32.mrb[0].mxu0
      %v1763 = vadd.f32 0.0, %v1762
      %v1764 = vpop.f32.mrb[0].mxu0
      %1765 = vmatprep.mubr.f32.mxu0 0.0
      %1766 = vmatmul.mubr.f32.gmra.mrb[0].mxu0 %v1573
      %v1767 = vpop.f32.mrb[0].mxu0
      %v1768 = vadd.f32 0.0, %v1767
      %v1769 = vpop.f32.mrb[0].mxu0
      %1770 = vmatprep.mubr.f32.mxu0 0.0
      %1771 = vmatmul.mubr.f32.gmra.mrb[0].mxu0 %v1576
      %v1772 = vpop.f32.mrb[0].mxu0
      %v1773 = vadd.f32 0.0, %v1772
      %v1774 = vpop.f32.mrb[0].mxu0
      %1775 = vmatprep.mubr.f32.mxu0 0.0
      %1776 = vmatmul.mubr.f32.gmra.mrb[0].mxu0 %v1579
      %v1777 = vpop.f32.mrb[0].mxu0
      %v1778 = vadd.f32 0.0, %v1777
      %v1779 = vpop.f32.mrb[0].mxu0
      %1780 = vmatprep.mubr.f32.mxu0 0.0
      %1781 = vmatmul.mubr.f32.gmra.mrb[0].mxu0 %v1582
      %v1782 = vpop.f32.mrb[0].mxu0
      %v1783 = vadd.f32 0.0, %v1782
      %v1784 = vpop.f32.mrb[0].mxu0
      %1785 = vmatprep.mubr.f32.mxu0 0.0
      %1786 = vmatmul.mubr.f32.gmra.mrb[0].mxu0 %v1585
      %v1787 = vpop.f32.mrb[0].mxu0
      %v1788 = vadd.f32 0.0, %v1787
      %v1789 = vpop.f32.mrb[0].mxu0
      %1790 = vmatprep.mubr.f32.mxu0 0.0
      %1791 = vmatmul.mubr.f32.gmra.mrb[0].mxu0 %v1588
      %v1792 = vpop.f32.mrb[0].mxu0
      %v1793 = vadd.f32 0.0, %v1792
      %v1794 = vpop.f32.mrb[0].mxu0
      %1795 = vmatprep.mubr.f32.mxu0 0.0
      %1796 = vmatmul.mubr.f32.gmra.mrb[0].mxu0 %v1591
      %v1797 = vpop.f32.mrb[0].mxu0
      %v1798 = vadd.f32 0.0, %v1797
      %v1799 = vpop.f32.mrb[0].mxu0
      %1800 = vmatprep.mubr.f32.mxu0 0.0
      %1801 = vmatmul.mubr.f32.gmra.mrb[0].mxu0 %v1594
      %v1802 = vpop.f32.mrb[0].mxu0
      %v1803 = vadd.f32 0.0, %v1802
      %v1804 = vpop.f32.mrb[0].mxu0
      %1805 = vmatprep.mubr.f32.mxu0 0.0
      %1806 = vmatmul.mubr.f32.gmra.mrb[0].mxu0 %v1597
      %v1807 = vpop.f32.mrb[0].mxu0
      %v1808 = vadd.f32 0.0, %v1807
      %v1809 = vpop.f32.mrb[0].mxu0
      %1810 = vmatprep.mubr.f32.mxu0 0.0
      %1811 = vmatmul.mubr.f32.gmra.mrb[0].mxu0 %v1600
      %v1812 = vpop.f32.mrb[0].mxu0
      %v1813 = vadd.f32 0.0, %v1812
      %v1814 = vpop.f32.mrb[0].mxu0
      %1815 = vmatprep.mubr.f32.mxu0 0.0
      %1816 = vmatmul.mubr.f32.gmra.mrb[0].mxu0 %v1603
      %v1817 = vpop.f32.mrb[0].mxu0
      %v1818 = vadd.f32 0.0, %v1817
      %v1819 = vpop.f32.mrb[0].mxu0
      %1820 = vmatprep.mubr.f32.mxu0 0.0
      %1821 = vmatmul.mubr.f32.gmra.mrb[0].mxu0 %v1606
      %v1822 = vpop.f32.mrb[0].mxu0
      %v1823 = vadd.f32 0.0, %v1822
      %v1824 = vpop.f32.mrb[0].mxu0
      %1825 = vmatprep.mubr.f32.mxu0 0.0
      %1826 = vmatmul.mubr.f32.gmra.mrb[0].mxu0 %v1609
      %v1827 = vpop.f32.mrb[0].mxu0
      %v1828 = vadd.f32 0.0, %v1827
      %v1829 = vpop.f32.mrb[0].mxu0
      %1830 = vmatprep.mubr.f32.mxu0 0.0
      %1831 = vmatmul.mubr.f32.gmra.mrb[0].mxu0 %v1612
      %v1832 = vpop.f32.mrb[0].mxu0
      %v1833 = vadd.f32 0.0, %v1832
      %v1834 = vpop.f32.mrb[0].mxu0
      %1835 = vmatprep.mubr.f32.mxu0 0.0
      %1836 = vmatmul.mubr.f32.gmra.mrb[0].mxu0 %v1615
      %v1837 = vpop.f32.mrb[0].mxu0
      %v1838 = vadd.f32 0.0, %v1837
      %v1839 = vpop.f32.mrb[0].mxu0
      %1840 = vmatprep.mubr.f32.mxu0 0.0
      %1841 = vmatmul.mubr.f32.gmra.mrb[0].mxu0 %v1618
      %v1842 = vpop.f32.mrb[0].mxu0
      %v1843 = vadd.f32 0.0, %v1842
      %v1844 = vpop.f32.mrb[0].mxu0
      %1845 = vmatprep.mubr.f32.mxu0 0.0
      %1846 = vmatmul.mubr.f32.gmra.mrb[0].mxu0 %v1621
      %v1847 = vpop.f32.mrb[0].mxu0
      %v1848 = vadd.f32 0.0, %v1847
      %v1849 = vpop.f32.mrb[0].mxu0
      %1850 = vdwg.mxu0
      %v1851 = vld [vmem:[#allocation2] sm:$0xff]
      %v1852 = vld [vmem:[#allocation2 + $0x8] sm:$0xff]
      %v1853 = vld [vmem:[#allocation2 + $0x10] sm:$0xff]
      %v1854 = vld [vmem:[#allocation2 + $0x18] sm:$0xff]
      %v1855 = vld [vmem:[#allocation2 + $0x20] sm:$0xff]
      %v1856 = vld [vmem:[#allocation2 + $0x28] sm:$0xff]
      %v1857 = vld [vmem:[#allocation2 + $0x30] sm:$0xff]
      %v1858 = vld [vmem:[#allocation2 + $0x38] sm:$0xff]
      %v1859 = vld [vmem:[#allocation2 + $0x40] sm:$0xff]
      %v1860 = vld [vmem:[#allocation2 + $0x48] sm:$0xff]
      %v1861 = vld [vmem:[#allocation2 + $0x50] sm:$0xff]
      %v1862 = vld [vmem:[#allocation2 + $0x58] sm:$0xff]
      %v1863 = vld [vmem:[#allocation2 + $0x60] sm:$0xff]
      %v1864 = vld [vmem:[#allocation2 + $0x68] sm:$0xff]
      %v1865 = vld [vmem:[#allocation2 + $0x70] sm:$0xff]
      %v1866 = vld [vmem:[#allocation2 + $0x78] sm:$0xff]
      %v1867 = vld [vmem:[#allocation2 + $0x80] sm:$0xff]
      %v1868 = vld [vmem:[#allocation2 + $0x88] sm:$0xff]
      %v1869 = vld [vmem:[#allocation2 + $0x90] sm:$0xff]
      %v1870 = vld [vmem:[#allocation2 + $0x98] sm:$0xff]
      %v1871 = vld [vmem:[#allocation2 + $0xa0] sm:$0xff]
      %v1872 = vld [vmem:[#allocation2 + $0xa8] sm:$0xff]
      %v1873 = vld [vmem:[#allocation2 + $0xb0] sm:$0xff]
      %v1874 = vld [vmem:[#allocation2 + $0xb8] sm:$0xff]
      %v1875 = vld [vmem:[#allocation2 + $0xc0] sm:$0xff]
      %v1876 = vld [vmem:[#allocation2 + $0xc8] sm:$0xff]
      %v1877 = vld [vmem:[#allocation2 + $0xd0] sm:$0xff]
      %v1878 = vld [vmem:[#allocation2 + $0xd8] sm:$0xff]
      %v1879 = vld [vmem:[#allocation2 + $0xe0] sm:$0xff]
      %v1880 = vld [vmem:[#allocation2 + $0xe8] sm:$0xff]
      %v1881 = vld [vmem:[#allocation2 + $0xf0] sm:$0xff]
      %v1882 = vld [vmem:[#allocation2 + $0xf8] sm:$0xff]
      %v1883 = vadd.f32 %v1851, %v1693
      %v1884 = vadd.f32 %v1852, %v1698
      %v1885 = vadd.f32 %v1853, %v1703
      %v1886 = vadd.f32 %v1854, %v1708
      %v1887 = vadd.f32 %v1855, %v1713
      %v1888 = vadd.f32 %v1856, %v1718
      %v1889 = vadd.f32 %v1857, %v1723
      %v1890 = vadd.f32 %v1858, %v1728
      %v1891 = vadd.f32 %v1859, %v1733
      %v1892 = vadd.f32 %v1860, %v1738
      %v1893 = vadd.f32 %v1861, %v1743
      %v1894 = vadd.f32 %v1862, %v1748
      %v1895 = vadd.f32 %v1863, %v1753
      %v1896 = vadd.f32 %v1864, %v1758
      %v1897 = vadd.f32 %v1865, %v1763
      %v1898 = vadd.f32 %v1866, %v1768
      %v1899 = vadd.f32 %v1867, %v1773
      %v1900 = vadd.f32 %v1868, %v1778
      %v1901 = vadd.f32 %v1869, %v1783
      %v1902 = vadd.f32 %v1870, %v1788
      %v1903 = vadd.f32 %v1871, %v1793
      %v1904 = vadd.f32 %v1872, %v1798
      %v1905 = vadd.f32 %v1873, %v1803
      %v1906 = vadd.f32 %v1874, %v1808
      %v1907 = vadd.f32 %v1875, %v1813
      %v1908 = vadd.f32 %v1876, %v1818
      %v1909 = vadd.f32 %v1877, %v1823
      %v1910 = vadd.f32 %v1878, %v1828
      %v1911 = vadd.f32 %v1879, %v1833
      %v1912 = vadd.f32 %v1880, %v1838
      %v1913 = vadd.f32 %v1881, %v1843
      %v1914 = vadd.f32 %v1882, %v1848
      %1915 = vst [vmem:[#allocation2] sm:$0xff] %v1883
      %1916 = vst [vmem:[#allocation2 + $0x8] sm:$0xff] %v1884
      %1917 = vst [vmem:[#allocation2 + $0x10] sm:$0xff] %v1885
      %1918 = vst [vmem:[#allocation2 + $0x18] sm:$0xff] %v1886
      %1919 = vst [vmem:[#allocation2 + $0x20] sm:$0xff] %v1887
      %1920 = vst [vmem:[#allocation2 + $0x28] sm:$0xff] %v1888
      %1921 = vst [vmem:[#allocation2 + $0x30] sm:$0xff] %v1889
      %1922 = vst [vmem:[#allocation2 + $0x38] sm:$0xff] %v1890
      %1923 = vst [vmem:[#allocation2 + $0x40] sm:$0xff] %v1891
      %1924 = vst [vmem:[#allocation2 + $0x48] sm:$0xff] %v1892
      %1925 = vst [vmem:[#allocation2 + $0x50] sm:$0xff] %v1893
      %1926 = vst [vmem:[#allocation2 + $0x58] sm:$0xff] %v1894
      %1927 = vst [vmem:[#allocation2 + $0x60] sm:$0xff] %v1895
      %1928 = vst [vmem:[#allocation2 + $0x68] sm:$0xff] %v1896
      %1929 = vst [vmem:[#allocation2 + $0x70] sm:$0xff] %v1897
      %1930 = vst [vmem:[#allocation2 + $0x78] sm:$0xff] %v1898
      %1931 = vst [vmem:[#allocation2 + $0x80] sm:$0xff] %v1899
      %1932 = vst [vmem:[#allocation2 + $0x88] sm:$0xff] %v1900
      %1933 = vst [vmem:[#allocation2 + $0x90] sm:$0xff] %v1901
      %1934 = vst [vmem:[#allocation2 + $0x98] sm:$0xff] %v1902
      %1935 = vst [vmem:[#allocation2 + $0xa0] sm:$0xff] %v1903
      %1936 = vst [vmem:[#allocation2 + $0xa8] sm:$0xff] %v1904
      %1937 = vst [vmem:[#allocation2 + $0xb0] sm:$0xff] %v1905
      %1938 = vst [vmem:[#allocation2 + $0xb8] sm:$0xff] %v1906
      %1939 = vst [vmem:[#allocation2 + $0xc0] sm:$0xff] %v1907
      %1940 = vst [vmem:[#allocation2 + $0xc8] sm:$0xff] %v1908
      %1941 = vst [vmem:[#allocation2 + $0xd0] sm:$0xff] %v1909
      %1942 = vst [vmem:[#allocation2 + $0xd8] sm:$0xff] %v1910
      %1943 = vst [vmem:[#allocation2 + $0xe0] sm:$0xff] %v1911
      %1944 = vst [vmem:[#allocation2 + $0xe8] sm:$0xff] %v1912
      %1945 = vst [vmem:[#allocation2 + $0xf0] sm:$0xff] %v1913
      %1946 = vst [vmem:[#allocation2 + $0xf8] sm:$0xff] %v1914
      %v1947 = vld [vmem:[%s1492 + $0x1] sm:$0xff]
      %v1948 = vld [vmem:[%s1492 + $0x9] sm:$0xff]
      %v1949 = vld [vmem:[%s1492 + $0x19] sm:$0xff]
      %v1950 = vld [vmem:[%s1492 + $0x21] sm:$0xff]
      %v1951 = vld [vmem:[%s1492 + $0x31] sm:$0xff]
      %v1952 = vld [vmem:[%s1492 + $0x39] sm:$0xff]
      %v1953 = vld [vmem:[%s1492 + $0x49] sm:$0xff]
      %v1954 = vld [vmem:[%s1492 + $0x51] sm:$0xff]
      %v1955 = vld [vmem:[%s1492 + $0x61] sm:$0xff]
      %v1956 = vld [vmem:[%s1492 + $0x69] sm:$0xff]
      %v1957 = vld [vmem:[%s1492 + $0x79] sm:$0xff]
      %v1958 = vld [vmem:[%s1492 + $0x81] sm:$0xff]
      %v1959 = vld [vmem:[%s1492 + $0x91] sm:$0xff]
      %v1960 = vld [vmem:[%s1492 + $0x99] sm:$0xff]
      %v1961 = vld [vmem:[%s1492 + $0xa9] sm:$0xff]
      %v1962 = vld [vmem:[%s1492 + $0xb1] sm:$0xff]
      %v1963 = vld [vmem:[%s1492 + $0xc1] sm:$0xff]
      %v1964 = vld [vmem:[%s1492 + $0xc9] sm:$0xff]
      %v1965 = vld [vmem:[%s1492 + $0xd9] sm:$0xff]
      %v1966 = vld [vmem:[%s1492 + $0xe1] sm:$0xff]
      %v1967 = vld [vmem:[%s1492 + $0xf1] sm:$0xff]
      %v1968 = vld [vmem:[%s1492 + $0xf9] sm:$0xff]
      %v1969 = vld [vmem:[%s1492 + $0x109] sm:$0xff]
      %v1970 = vld [vmem:[%s1492 + $0x111] sm:$0xff]
      %v1971 = vld [vmem:[%s1492 + $0x121] sm:$0xff]
      %v1972 = vld [vmem:[%s1492 + $0x129] sm:$0xff]
      %v1973 = vld [vmem:[%s1492 + $0x139] sm:$0xff]
      %v1974 = vld [vmem:[%s1492 + $0x141] sm:$0xff]
      %v1975 = vld [vmem:[%s1492 + $0x151] sm:$0xff]
      %v1976 = vld [vmem:[%s1492 + $0x159] sm:$0xff]
      %v1977 = vld [vmem:[%s1492 + $0x169] sm:$0xff]
      %v1978 = vld [vmem:[%s1492 + $0x171] sm:$0xff]
      %s1979 = scalar_lea.vmem %s1, 16
      %v1980 = vld [vmem:[%s1979] sm:$0xf]
      %v1982 = vsel %vm224, %v1947, 0
      %v1985 = vsel %vm224, %v1948, 0
      %v1988 = vsel %vm224, %v1949, 0
      %v1991 = vsel %vm224, %v1950, 0
      %v1994 = vsel %vm224, %v1951, 0
      %v1997 = vsel %vm224, %v1952, 0
      %v2000 = vsel %vm224, %v1953, 0
      %v2003 = vsel %vm224, %v1954, 0
      %v2006 = vsel %vm224, %v1955, 0
      %v2009 = vsel %vm224, %v1956, 0
      %v2012 = vsel %vm224, %v1957, 0
      %v2015 = vsel %vm224, %v1958, 0
      %v2018 = vsel %vm224, %v1959, 0
      %v2021 = vsel %vm224, %v1960, 0
      %v2024 = vsel %vm224, %v1961, 0
      %v2027 = vsel %vm224, %v1962, 0
      %v2030 = vsel %vm224, %v1963, 0
      %v2033 = vsel %vm224, %v1964, 0
      %v2036 = vsel %vm224, %v1965, 0
      %v2039 = vsel %vm224, %v1966, 0
      %v2042 = vsel %vm224, %v1967, 0
      %v2045 = vsel %vm224, %v1968, 0
      %v2048 = vsel %vm224, %v1969, 0
      %v2051 = vsel %vm224, %v1970, 0
      %v2054 = vsel %vm224, %v1971, 0
      %v2057 = vsel %vm224, %v1972, 0
      %v2060 = vsel %vm224, %v1973, 0
      %v2063 = vsel %vm224, %v1974, 0
      %v2066 = vsel %vm224, %v1975, 0
      %v2069 = vsel %vm224, %v1976, 0
      %v2072 = vsel %vm224, %v1977, 0
      %v2075 = vsel %vm224, %v1978, 0
      %v2078 = vsel %vm321, %v1980, 0
      %2080 = vmatprep.subr.mxu0 0.0
      %2081 = vmatpush1.msra.mxu0 %v2078
      %2082 = vmatprep.subr.mxu0 0.0
      %2083 = vmatpush1.msra.mxu0 0.0
      %2084 = vmatprep.subr.mxu0 0.0
      %2085 = vmatpush1.msra.mxu0 0.0
      %2086 = vmatprep.subr.mxu0 0.0
      %2087 = vmatpush1.msra.mxu0 0.0
      %2088 = vmatprep.subr.mxu0 0.0
      %2089 = vmatpush1.msra.mxu0 0.0
      %2090 = vmatprep.subr.mxu0 0.0
      %2091 = vmatpush1.msra.mxu0 0.0
      %2092 = vmatprep.subr.mxu0 0.0
      %2093 = vmatpush1.msra.mxu0 0.0
      %2094 = vmatprep.subr.mxu0 0.0
      %2095 = vmatpush1.msra.mxu0 0.0
      %2096 = vmatprep.subr.mxu0 0.0
      %2097 = vmatpush1.msra.mxu0 0.0
      %2098 = vmatprep.subr.mxu0 0.0
      %2099 = vmatpush1.msra.mxu0 0.0
      %2100 = vmatprep.subr.mxu0 0.0
      %2101 = vmatpush1.msra.mxu0 0.0
      %2102 = vmatprep.subr.mxu0 0.0
      %2103 = vmatpush1.msra.mxu0 0.0
      %2104 = vmatprep.subr.mxu0 0.0
      %2105 = vmatpush1.msra.mxu0 0.0
      %2106 = vmatprep.subr.mxu0 0.0
      %2107 = vmatpush1.msra.mxu0 0.0
      %2108 = vmatprep.subr.mxu0 0.0
      %2109 = vmatpush1.msra.mxu0 0.0
      %2110 = vmatprep.subr.mxu0 0.0
      %2111 = vmatpush1.msra.mxu0 0.0
      %2112 = vmatprep.subr.mxu0 0.0
      %2113 = vmatpush1.msra.mxu0 0.0
      %2114 = vmatprep.subr.mxu0 0.0
      %2115 = vmatpush1.msra.mxu0 0.0
      %2116 = vmatprep.subr.mxu0 0.0
      %2117 = vmatpush1.msra.mxu0 0.0
      %2118 = vmatprep.subr.mxu0 0.0
      %2119 = vmatpush1.msra.mxu0 0.0
      %2120 = vmatprep.subr.mxu0 0.0
      %2121 = vmatpush1.msra.mxu0 0.0
      %2122 = vmatprep.subr.mxu0 0.0
      %2123 = vmatpush1.msra.mxu0 0.0
      %2124 = vmatprep.subr.mxu0 0.0
      %2125 = vmatpush1.msra.mxu0 0.0
      %2126 = vmatprep.subr.mxu0 0.0
      %2127 = vmatpush1.msra.mxu0 0.0
      %2128 = vmatprep.subr.mxu0 0.0
      %2129 = vmatpush1.msra.mxu0 0.0
      %2130 = vmatprep.subr.mxu0 0.0
      %2131 = vmatpush1.msra.mxu0 0.0
      %2132 = vmatprep.subr.mxu0 0.0
      %2133 = vmatpush1.msra.mxu0 0.0
      %2134 = vmatprep.subr.mxu0 0.0
      %2135 = vmatpush1.msra.mxu0 0.0
      %2136 = vmatprep.subr.mxu0 0.0
      %2137 = vmatpush1.msra.mxu0 0.0
      %2138 = vmatprep.subr.mxu0 0.0
      %2139 = vmatpush1.msra.mxu0 0.0
      %2140 = vmatprep.subr.mxu0 0.0
      %2141 = vmatpush1.msra.mxu0 0.0
      %2142 = vmatprep.subr.mxu0 0.0
      %2143 = vmatpush1.msra.mxu0 0.0
      %2144 = vmatprep.mubr.f32.mxu0 0.0
      %2145 = vmatmul.mubr.f32.gmra.mrb[0].mxu0 %v1982
      %v2146 = vpop.f32.mrb[0].mxu0
      %v2147 = vadd.f32 0.0, %v2146
      %v2148 = vpop.f32.mrb[0].mxu0
      %2149 = vmatprep.mubr.f32.mxu0 0.0
      %2150 = vmatmul.mubr.f32.gmra.mrb[0].mxu0 %v1985
      %v2151 = vpop.f32.mrb[0].mxu0
      %v2152 = vadd.f32 0.0, %v2151
      %v2153 = vpop.f32.mrb[0].mxu0
      %2154 = vmatprep.mubr.f32.mxu0 0.0
      %2155 = vmatmul.mubr.f32.gmra.mrb[0].mxu0 %v1988
      %v2156 = vpop.f32.mrb[0].mxu0
      %v2157 = vadd.f32 0.0, %v2156
      %v2158 = vpop.f32.mrb[0].mxu0
      %2159 = vmatprep.mubr.f32.mxu0 0.0
      %2160 = vmatmul.mubr.f32.gmra.mrb[0].mxu0 %v1991
      %v2161 = vpop.f32.mrb[0].mxu0
      %v2162 = vadd.f32 0.0, %v2161
      %v2163 = vpop.f32.mrb[0].mxu0
      %2164 = vmatprep.mubr.f32.mxu0 0.0
      %2165 = vmatmul.mubr.f32.gmra.mrb[0].mxu0 %v1994
      %v2166 = vpop.f32.mrb[0].mxu0
      %v2167 = vadd.f32 0.0, %v2166
      %v2168 = vpop.f32.mrb[0].mxu0
      %2169 = vmatprep.mubr.f32.mxu0 0.0
      %2170 = vmatmul.mubr.f32.gmra.mrb[0].mxu0 %v1997
      %v2171 = vpop.f32.mrb[0].mxu0
      %v2172 = vadd.f32 0.0, %v2171
      %v2173 = vpop.f32.mrb[0].mxu0
      %2174 = vmatprep.mubr.f32.mxu0 0.0
      %2175 = vmatmul.mubr.f32.gmra.mrb[0].mxu0 %v2000
      %v2176 = vpop.f32.mrb[0].mxu0
      %v2177 = vadd.f32 0.0, %v2176
      %v2178 = vpop.f32.mrb[0].mxu0
      %2179 = vmatprep.mubr.f32.mxu0 0.0
      %2180 = vmatmul.mubr.f32.gmra.mrb[0].mxu0 %v2003
      %v2181 = vpop.f32.mrb[0].mxu0
      %v2182 = vadd.f32 0.0, %v2181
      %v2183 = vpop.f32.mrb[0].mxu0
      %2184 = vmatprep.mubr.f32.mxu0 0.0
      %2185 = vmatmul.mubr.f32.gmra.mrb[0].mxu0 %v2006
      %v2186 = vpop.f32.mrb[0].mxu0
      %v2187 = vadd.f32 0.0, %v2186
      %v2188 = vpop.f32.mrb[0].mxu0
      %2189 = vmatprep.mubr.f32.mxu0 0.0
      %2190 = vmatmul.mubr.f32.gmra.mrb[0].mxu0 %v2009
      %v2191 = vpop.f32.mrb[0].mxu0
      %v2192 = vadd.f32 0.0, %v2191
      %v2193 = vpop.f32.mrb[0].mxu0
      %2194 = vmatprep.mubr.f32.mxu0 0.0
      %2195 = vmatmul.mubr.f32.gmra.mrb[0].mxu0 %v2012
      %v2196 = vpop.f32.mrb[0].mxu0
      %v2197 = vadd.f32 0.0, %v2196
      %v2198 = vpop.f32.mrb[0].mxu0
      %2199 = vmatprep.mubr.f32.mxu0 0.0
      %2200 = vmatmul.mubr.f32.gmra.mrb[0].mxu0 %v2015
      %v2201 = vpop.f32.mrb[0].mxu0
      %v2202 = vadd.f32 0.0, %v2201
      %v2203 = vpop.f32.mrb[0].mxu0
      %2204 = vmatprep.mubr.f32.mxu0 0.0
      %2205 = vmatmul.mubr.f32.gmra.mrb[0].mxu0 %v2018
      %v2206 = vpop.f32.mrb[0].mxu0
      %v2207 = vadd.f32 0.0, %v2206
      %v2208 = vpop.f32.mrb[0].mxu0
      %2209 = vmatprep.mubr.f32.mxu0 0.0
      %2210 = vmatmul.mubr.f32.gmra.mrb[0].mxu0 %v2021
      %v2211 = vpop.f32.mrb[0].mxu0
      %v2212 = vadd.f32 0.0, %v2211
      %v2213 = vpop.f32.mrb[0].mxu0
      %2214 = vmatprep.mubr.f32.mxu0 0.0
      %2215 = vmatmul.mubr.f32.gmra.mrb[0].mxu0 %v2024
      %v2216 = vpop.f32.mrb[0].mxu0
      %v2217 = vadd.f32 0.0, %v2216
      %v2218 = vpop.f32.mrb[0].mxu0
      %2219 = vmatprep.mubr.f32.mxu0 0.0
      %2220 = vmatmul.mubr.f32.gmra.mrb[0].mxu0 %v2027
      %v2221 = vpop.f32.mrb[0].mxu0
      %v2222 = vadd.f32 0.0, %v2221
      %v2223 = vpop.f32.mrb[0].mxu0
      %2224 = vmatprep.mubr.f32.mxu0 0.0
      %2225 = vmatmul.mubr.f32.gmra.mrb[0].mxu0 %v2030
      %v2226 = vpop.f32.mrb[0].mxu0
      %v2227 = vadd.f32 0.0, %v2226
      %v2228 = vpop.f32.mrb[0].mxu0
      %2229 = vmatprep.mubr.f32.mxu0 0.0
      %2230 = vmatmul.mubr.f32.gmra.mrb[0].mxu0 %v2033
      %v2231 = vpop.f32.mrb[0].mxu0
      %v2232 = vadd.f32 0.0, %v2231
      %v2233 = vpop.f32.mrb[0].mxu0
      %2234 = vmatprep.mubr.f32.mxu0 0.0
      %2235 = vmatmul.mubr.f32.gmra.mrb[0].mxu0 %v2036
      %v2236 = vpop.f32.mrb[0].mxu0
      %v2237 = vadd.f32 0.0, %v2236
      %v2238 = vpop.f32.mrb[0].mxu0
      %2239 = vmatprep.mubr.f32.mxu0 0.0
      %2240 = vmatmul.mubr.f32.gmra.mrb[0].mxu0 %v2039
      %v2241 = vpop.f32.mrb[0].mxu0
      %v2242 = vadd.f32 0.0, %v2241
      %v2243 = vpop.f32.mrb[0].mxu0
      %2244 = vmatprep.mubr.f32.mxu0 0.0
      %2245 = vmatmul.mubr.f32.gmra.mrb[0].mxu0 %v2042
      %v2246 = vpop.f32.mrb[0].mxu0
      %v2247 = vadd.f32 0.0, %v2246
      %v2248 = vpop.f32.mrb[0].mxu0
      %2249 = vmatprep.mubr.f32.mxu0 0.0
      %2250 = vmatmul.mubr.f32.gmra.mrb[0].mxu0 %v2045
      %v2251 = vpop.f32.mrb[0].mxu0
      %v2252 = vadd.f32 0.0, %v2251
      %v2253 = vpop.f32.mrb[0].mxu0
      %2254 = vmatprep.mubr.f32.mxu0 0.0
      %2255 = vmatmul.mubr.f32.gmra.mrb[0].mxu0 %v2048
      %v2256 = vpop.f32.mrb[0].mxu0
      %v2257 = vadd.f32 0.0, %v2256
      %v2258 = vpop.f32.mrb[0].mxu0
      %2259 = vmatprep.mubr.f32.mxu0 0.0
      %2260 = vmatmul.mubr.f32.gmra.mrb[0].mxu0 %v2051
      %v2261 = vpop.f32.mrb[0].mxu0
      %v2262 = vadd.f32 0.0, %v2261
      %v2263 = vpop.f32.mrb[0].mxu0
      %2264 = vmatprep.mubr.f32.mxu0 0.0
      %2265 = vmatmul.mubr.f32.gmra.mrb[0].mxu0 %v2054
      %v2266 = vpop.f32.mrb[0].mxu0
      %v2267 = vadd.f32 0.0, %v2266
      %v2268 = vpop.f32.mrb[0].mxu0
      %2269 = vmatprep.mubr.f32.mxu0 0.0
      %2270 = vmatmul.mubr.f32.gmra.mrb[0].mxu0 %v2057
      %v2271 = vpop.f32.mrb[0].mxu0
      %v2272 = vadd.f32 0.0, %v2271
      %v2273 = vpop.f32.mrb[0].mxu0
      %2274 = vmatprep.mubr.f32.mxu0 0.0
      %2275 = vmatmul.mubr.f32.gmra.mrb[0].mxu0 %v2060
      %v2276 = vpop.f32.mrb[0].mxu0
      %v2277 = vadd.f32 0.0, %v2276
      %v2278 = vpop.f32.mrb[0].mxu0
      %2279 = vmatprep.mubr.f32.mxu0 0.0
      %2280 = vmatmul.mubr.f32.gmra.mrb[0].mxu0 %v2063
      %v2281 = vpop.f32.mrb[0].mxu0
      %v2282 = vadd.f32 0.0, %v2281
      %v2283 = vpop.f32.mrb[0].mxu0
      %2284 = vmatprep.mubr.f32.mxu0 0.0
      %2285 = vmatmul.mubr.f32.gmra.mrb[0].mxu0 %v2066
      %v2286 = vpop.f32.mrb[0].mxu0
      %v2287 = vadd.f32 0.0, %v2286
      %v2288 = vpop.f32.mrb[0].mxu0
      %2289 = vmatprep.mubr.f32.mxu0 0.0
      %2290 = vmatmul.mubr.f32.gmra.mrb[0].mxu0 %v2069
      %v2291 = vpop.f32.mrb[0].mxu0
      %v2292 = vadd.f32 0.0, %v2291
      %v2293 = vpop.f32.mrb[0].mxu0
      %2294 = vmatprep.mubr.f32.mxu0 0.0
      %2295 = vmatmul.mubr.f32.gmra.mrb[0].mxu0 %v2072
      %v2296 = vpop.f32.mrb[0].mxu0
      %v2297 = vadd.f32 0.0, %v2296
      %v2298 = vpop.f32.mrb[0].mxu0
      %2299 = vmatprep.mubr.f32.mxu0 0.0
      %2300 = vmatmul.mubr.f32.gmra.mrb[0].mxu0 %v2075
      %v2301 = vpop.f32.mrb[0].mxu0
      %v2302 = vadd.f32 0.0, %v2301
      %v2303 = vpop.f32.mrb[0].mxu0
      %2304 = vdwg.mxu0
      %v2305 = vld [vmem:[#allocation2] sm:$0xff]
      %v2306 = vld [vmem:[#allocation2 + $0x8] sm:$0xff]
      %v2307 = vld [vmem:[#allocation2 + $0x10] sm:$0xff]
      %v2308 = vld [vmem:[#allocation2 + $0x18] sm:$0xff]
      %v2309 = vld [vmem:[#allocation2 + $0x20] sm:$0xff]
      %v2310 = vld [vmem:[#allocation2 + $0x28] sm:$0xff]
      %v2311 = vld [vmem:[#allocation2 + $0x30] sm:$0xff]
      %v2312 = vld [vmem:[#allocation2 + $0x38] sm:$0xff]
      %v2313 = vld [vmem:[#allocation2 + $0x40] sm:$0xff]
      %v2314 = vld [vmem:[#allocation2 + $0x48] sm:$0xff]
      %v2315 = vld [vmem:[#allocation2 + $0x50] sm:$0xff]
      %v2316 = vld [vmem:[#allocation2 + $0x58] sm:$0xff]
      %v2317 = vld [vmem:[#allocation2 + $0x60] sm:$0xff]
      %v2318 = vld [vmem:[#allocation2 + $0x68] sm:$0xff]
      %v2319 = vld [vmem:[#allocation2 + $0x70] sm:$0xff]
      %v2320 = vld [vmem:[#allocation2 + $0x78] sm:$0xff]
      %v2321 = vld [vmem:[#allocation2 + $0x80] sm:$0xff]
      %v2322 = vld [vmem:[#allocation2 + $0x88] sm:$0xff]
      %v2323 = vld [vmem:[#allocation2 + $0x90] sm:$0xff]
      %v2324 = vld [vmem:[#allocation2 + $0x98] sm:$0xff]
      %v2325 = vld [vmem:[#allocation2 + $0xa0] sm:$0xff]
      %v2326 = vld [vmem:[#allocation2 + $0xa8] sm:$0xff]
      %v2327 = vld [vmem:[#allocation2 + $0xb0] sm:$0xff]
      %v2328 = vld [vmem:[#allocation2 + $0xb8] sm:$0xff]
      %v2329 = vld [vmem:[#allocation2 + $0xc0] sm:$0xff]
      %v2330 = vld [vmem:[#allocation2 + $0xc8] sm:$0xff]
      %v2331 = vld [vmem:[#allocation2 + $0xd0] sm:$0xff]
      %v2332 = vld [vmem:[#allocation2 + $0xd8] sm:$0xff]
      %v2333 = vld [vmem:[#allocation2 + $0xe0] sm:$0xff]
      %v2334 = vld [vmem:[#allocation2 + $0xe8] sm:$0xff]
      %v2335 = vld [vmem:[#allocation2 + $0xf0] sm:$0xff]
      %v2336 = vld [vmem:[#allocation2 + $0xf8] sm:$0xff]
      %v2337 = vadd.f32 %v2305, %v2147
      %v2338 = vadd.f32 %v2306, %v2152
      %v2339 = vadd.f32 %v2307, %v2157
      %v2340 = vadd.f32 %v2308, %v2162
      %v2341 = vadd.f32 %v2309, %v2167
      %v2342 = vadd.f32 %v2310, %v2172
      %v2343 = vadd.f32 %v2311, %v2177
      %v2344 = vadd.f32 %v2312, %v2182
      %v2345 = vadd.f32 %v2313, %v2187
      %v2346 = vadd.f32 %v2314, %v2192
      %v2347 = vadd.f32 %v2315, %v2197
      %v2348 = vadd.f32 %v2316, %v2202
      %v2349 = vadd.f32 %v2317, %v2207
      %v2350 = vadd.f32 %v2318, %v2212
      %v2351 = vadd.f32 %v2319, %v2217
      %v2352 = vadd.f32 %v2320, %v2222
      %v2353 = vadd.f32 %v2321, %v2227
      %v2354 = vadd.f32 %v2322, %v2232
      %v2355 = vadd.f32 %v2323, %v2237
      %v2356 = vadd.f32 %v2324, %v2242
      %v2357 = vadd.f32 %v2325, %v2247
      %v2358 = vadd.f32 %v2326, %v2252
      %v2359 = vadd.f32 %v2327, %v2257
      %v2360 = vadd.f32 %v2328, %v2262
      %v2361 = vadd.f32 %v2329, %v2267
      %v2362 = vadd.f32 %v2330, %v2272
      %v2363 = vadd.f32 %v2331, %v2277
      %v2364 = vadd.f32 %v2332, %v2282
      %v2365 = vadd.f32 %v2333, %v2287
      %v2366 = vadd.f32 %v2334, %v2292
      %v2367 = vadd.f32 %v2335, %v2297
      %v2368 = vadd.f32 %v2336, %v2302
      %2369 = vst [vmem:[#allocation2] sm:$0xff] %v2337
      %2370 = vst [vmem:[#allocation2 + $0x8] sm:$0xff] %v2338
      %2371 = vst [vmem:[#allocation2 + $0x10] sm:$0xff] %v2339
      %2372 = vst [vmem:[#allocation2 + $0x18] sm:$0xff] %v2340
      %2373 = vst [vmem:[#allocation2 + $0x20] sm:$0xff] %v2341
      %2374 = vst [vmem:[#allocation2 + $0x28] sm:$0xff] %v2342
      %2375 = vst [vmem:[#allocation2 + $0x30] sm:$0xff] %v2343
      %2376 = vst [vmem:[#allocation2 + $0x38] sm:$0xff] %v2344
      %2377 = vst [vmem:[#allocation2 + $0x40] sm:$0xff] %v2345
      %2378 = vst [vmem:[#allocation2 + $0x48] sm:$0xff] %v2346
      %2379 = vst [vmem:[#allocation2 + $0x50] sm:$0xff] %v2347
      %2380 = vst [vmem:[#allocation2 + $0x58] sm:$0xff] %v2348
      %2381 = vst [vmem:[#allocation2 + $0x60] sm:$0xff] %v2349
      %2382 = vst [vmem:[#allocation2 + $0x68] sm:$0xff] %v2350
      %2383 = vst [vmem:[#allocation2 + $0x70] sm:$0xff] %v2351
      %2384 = vst [vmem:[#allocation2 + $0x78] sm:$0xff] %v2352
      %2385 = vst [vmem:[#allocation2 + $0x80] sm:$0xff] %v2353
      %2386 = vst [vmem:[#allocation2 + $0x88] sm:$0xff] %v2354
      %2387 = vst [vmem:[#allocation2 + $0x90] sm:$0xff] %v2355
      %2388 = vst [vmem:[#allocation2 + $0x98] sm:$0xff] %v2356
      %2389 = vst [vmem:[#allocation2 + $0xa0] sm:$0xff] %v2357
      %2390 = vst [vmem:[#allocation2 + $0xa8] sm:$0xff] %v2358
      %2391 = vst [vmem:[#allocation2 + $0xb0] sm:$0xff] %v2359
      %2392 = vst [vmem:[#allocation2 + $0xb8] sm:$0xff] %v2360
      %2393 = vst [vmem:[#allocation2 + $0xc0] sm:$0xff] %v2361
      %2394 = vst [vmem:[#allocation2 + $0xc8] sm:$0xff] %v2362
      %2395 = vst [vmem:[#allocation2 + $0xd0] sm:$0xff] %v2363
      %2396 = vst [vmem:[#allocation2 + $0xd8] sm:$0xff] %v2364
      %2397 = vst [vmem:[#allocation2 + $0xe0] sm:$0xff] %v2365
      %2398 = vst [vmem:[#allocation2 + $0xe8] sm:$0xff] %v2366
      %2399 = vst [vmem:[#allocation2 + $0xf0] sm:$0xff] %v2367
      %2400 = vst [vmem:[#allocation2 + $0xf8] sm:$0xff] %v2368
      %v2401 = vld [vmem:[%s1492 + $0x2] sm:$0xff]
      %v2402 = vld [vmem:[%s1492 + $0xa] sm:$0xff]
      %v2403 = vld [vmem:[%s1492 + $0x1a] sm:$0xff]
      %v2404 = vld [vmem:[%s1492 + $0x22] sm:$0xff]
      %v2405 = vld [vmem:[%s1492 + $0x32] sm:$0xff]
      %v2406 = vld [vmem:[%s1492 + $0x3a] sm:$0xff]
      %v2407 = vld [vmem:[%s1492 + $0x4a] sm:$0xff]
      %v2408 = vld [vmem:[%s1492 + $0x52] sm:$0xff]
      %v2409 = vld [vmem:[%s1492 + $0x62] sm:$0xff]
      %v2410 = vld [vmem:[%s1492 + $0x6a] sm:$0xff]
      %v2411 = vld [vmem:[%s1492 + $0x7a] sm:$0xff]
      %v2412 = vld [vmem:[%s1492 + $0x82] sm:$0xff]
      %v2413 = vld [vmem:[%s1492 + $0x92] sm:$0xff]
      %v2414 = vld [vmem:[%s1492 + $0x9a] sm:$0xff]
      %v2415 = vld [vmem:[%s1492 + $0xaa] sm:$0xff]
      %v2416 = vld [vmem:[%s1492 + $0xb2] sm:$0xff]
      %v2417 = vld [vmem:[%s1492 + $0xc2] sm:$0xff]
      %v2418 = vld [vmem:[%s1492 + $0xca] sm:$0xff]
      %v2419 = vld [vmem:[%s1492 + $0xda] sm:$0xff]
      %v2420 = vld [vmem:[%s1492 + $0xe2] sm:$0xff]
      %v2421 = vld [vmem:[%s1492 + $0xf2] sm:$0xff]
      %v2422 = vld [vmem:[%s1492 + $0xfa] sm:$0xff]
      %v2423 = vld [vmem:[%s1492 + $0x10a] sm:$0xff]
      %v2424 = vld [vmem:[%s1492 + $0x112] sm:$0xff]
      %v2425 = vld [vmem:[%s1492 + $0x122] sm:$0xff]
      %v2426 = vld [vmem:[%s1492 + $0x12a] sm:$0xff]
      %v2427 = vld [vmem:[%s1492 + $0x13a] sm:$0xff]
      %v2428 = vld [vmem:[%s1492 + $0x142] sm:$0xff]
      %v2429 = vld [vmem:[%s1492 + $0x152] sm:$0xff]
      %v2430 = vld [vmem:[%s1492 + $0x15a] sm:$0xff]
      %v2431 = vld [vmem:[%s1492 + $0x16a] sm:$0xff]
      %v2432 = vld [vmem:[%s1492 + $0x172] sm:$0xff]
      %s2433 = scalar_lea.vmem %s1, 20
      %v2434 = vld [vmem:[%s2433] sm:$0xf]
      %v2436 = vsel %vm224, %v2401, 0
      %v2439 = vsel %vm224, %v2402, 0
      %v2442 = vsel %vm224, %v2403, 0
      %v2445 = vsel %vm224, %v2404, 0
      %v2448 = vsel %vm224, %v2405, 0
      %v2451 = vsel %vm224, %v2406, 0
      %v2454 = vsel %vm224, %v2407, 0
      %v2457 = vsel %vm224, %v2408, 0
      %v2460 = vsel %vm224, %v2409, 0
      %v2463 = vsel %vm224, %v2410, 0
      %v2466 = vsel %vm224, %v2411, 0
      %v2469 = vsel %vm224, %v2412, 0
      %v2472 = vsel %vm224, %v2413, 0
      %v2475 = vsel %vm224, %v2414, 0
      %v2478 = vsel %vm224, %v2415, 0
      %v2481 = vsel %vm224, %v2416, 0
      %v2484 = vsel %vm224, %v2417, 0
      %v2487 = vsel %vm224, %v2418, 0
      %v2490 = vsel %vm224, %v2419, 0
      %v2493 = vsel %vm224, %v2420, 0
      %v2496 = vsel %vm224, %v2421, 0
      %v2499 = vsel %vm224, %v2422, 0
      %v2502 = vsel %vm224, %v2423, 0
      %v2505 = vsel %vm224, %v2424, 0
      %v2508 = vsel %vm224, %v2425, 0
      %v2511 = vsel %vm224, %v2426, 0
      %v2514 = vsel %vm224, %v2427, 0
      %v2517 = vsel %vm224, %v2428, 0
      %v2520 = vsel %vm224, %v2429, 0
      %v2523 = vsel %vm224, %v2430, 0
      %v2526 = vsel %vm224, %v2431, 0
      %v2529 = vsel %vm224, %v2432, 0
      %v2532 = vsel %vm321, %v2434, 0
      %2534 = vmatprep.subr.mxu0 0.0
      %2535 = vmatpush1.msra.mxu0 %v2532
      %2536 = vmatprep.subr.mxu0 0.0
      %2537 = vmatpush1.msra.mxu0 0.0
      %2538 = vmatprep.subr.mxu0 0.0
      %2539 = vmatpush1.msra.mxu0 0.0
      %2540 = vmatprep.subr.mxu0 0.0
      %2541 = vmatpush1.msra.mxu0 0.0
      %2542 = vmatprep.subr.mxu0 0.0
      %2543 = vmatpush1.msra.mxu0 0.0
      %2544 = vmatprep.subr.mxu0 0.0
      %2545 = vmatpush1.msra.mxu0 0.0
      %2546 = vmatprep.subr.mxu0 0.0
      %2547 = vmatpush1.msra.mxu0 0.0
      %2548 = vmatprep.subr.mxu0 0.0
      %2549 = vmatpush1.msra.mxu0 0.0
      %2550 = vmatprep.subr.mxu0 0.0
      %2551 = vmatpush1.msra.mxu0 0.0
      %2552 = vmatprep.subr.mxu0 0.0
      %2553 = vmatpush1.msra.mxu0 0.0
      %2554 = vmatprep.subr.mxu0 0.0
      %2555 = vmatpush1.msra.mxu0 0.0
      %2556 = vmatprep.subr.mxu0 0.0
      %2557 = vmatpush1.msra.mxu0 0.0
      %2558 = vmatprep.subr.mxu0 0.0
      %2559 = vmatpush1.msra.mxu0 0.0
      %2560 = vmatprep.subr.mxu0 0.0
      %2561 = vmatpush1.msra.mxu0 0.0
      %2562 = vmatprep.subr.mxu0 0.0
      %2563 = vmatpush1.msra.mxu0 0.0
      %2564 = vmatprep.subr.mxu0 0.0
      %2565 = vmatpush1.msra.mxu0 0.0
      %2566 = vmatprep.subr.mxu0 0.0
      %2567 = vmatpush1.msra.mxu0 0.0
      %2568 = vmatprep.subr.mxu0 0.0
      %2569 = vmatpush1.msra.mxu0 0.0
      %2570 = vmatprep.subr.mxu0 0.0
      %2571 = vmatpush1.msra.mxu0 0.0
      %2572 = vmatprep.subr.mxu0 0.0
      %2573 = vmatpush1.msra.mxu0 0.0
      %2574 = vmatprep.subr.mxu0 0.0
      %2575 = vmatpush1.msra.mxu0 0.0
      %2576 = vmatprep.subr.mxu0 0.0
      %2577 = vmatpush1.msra.mxu0 0.0
      %2578 = vmatprep.subr.mxu0 0.0
      %2579 = vmatpush1.msra.mxu0 0.0
      %2580 = vmatprep.subr.mxu0 0.0
      %2581 = vmatpush1.msra.mxu0 0.0
      %2582 = vmatprep.subr.mxu0 0.0
      %2583 = vmatpush1.msra.mxu0 0.0
      %2584 = vmatprep.subr.mxu0 0.0
      %2585 = vmatpush1.msra.mxu0 0.0
      %2586 = vmatprep.subr.mxu0 0.0
      %2587 = vmatpush1.msra.mxu0 0.0
      %2588 = vmatprep.subr.mxu0 0.0
      %2589 = vmatpush1.msra.mxu0 0.0
      %2590 = vmatprep.subr.mxu0 0.0
      %2591 = vmatpush1.msra.mxu0 0.0
      %2592 = vmatprep.subr.mxu0 0.0
      %2593 = vmatpush1.msra.mxu0 0.0
      %2594 = vmatprep.subr.mxu0 0.0
      %2595 = vmatpush1.msra.mxu0 0.0
      %2596 = vmatprep.subr.mxu0 0.0
      %2597 = vmatpush1.msra.mxu0 0.0
      %2598 = vmatprep.mubr.f32.mxu0 0.0
      %2599 = vmatmul.mubr.f32.gmra.mrb[0].mxu0 %v2436
      %v2600 = vpop.f32.mrb[0].mxu0
      %v2601 = vadd.f32 0.0, %v2600
      %v2602 = vpop.f32.mrb[0].mxu0
      %2603 = vmatprep.mubr.f32.mxu0 0.0
      %2604 = vmatmul.mubr.f32.gmra.mrb[0].mxu0 %v2439
      %v2605 = vpop.f32.mrb[0].mxu0
      %v2606 = vadd.f32 0.0, %v2605
      %v2607 = vpop.f32.mrb[0].mxu0
      %2608 = vmatprep.mubr.f32.mxu0 0.0
      %2609 = vmatmul.mubr.f32.gmra.mrb[0].mxu0 %v2442
      %v2610 = vpop.f32.mrb[0].mxu0
      %v2611 = vadd.f32 0.0, %v2610
      %v2612 = vpop.f32.mrb[0].mxu0
      %2613 = vmatprep.mubr.f32.mxu0 0.0
      %2614 = vmatmul.mubr.f32.gmra.mrb[0].mxu0 %v2445
      %v2615 = vpop.f32.mrb[0].mxu0
      %v2616 = vadd.f32 0.0, %v2615
      %v2617 = vpop.f32.mrb[0].mxu0
      %2618 = vmatprep.mubr.f32.mxu0 0.0
      %2619 = vmatmul.mubr.f32.gmra.mrb[0].mxu0 %v2448
      %v2620 = vpop.f32.mrb[0].mxu0
      %v2621 = vadd.f32 0.0, %v2620
      %v2622 = vpop.f32.mrb[0].mxu0
      %2623 = vmatprep.mubr.f32.mxu0 0.0
      %2624 = vmatmul.mubr.f32.gmra.mrb[0].mxu0 %v2451
      %v2625 = vpop.f32.mrb[0].mxu0
      %v2626 = vadd.f32 0.0, %v2625
      %v2627 = vpop.f32.mrb[0].mxu0
      %2628 = vmatprep.mubr.f32.mxu0 0.0
      %2629 = vmatmul.mubr.f32.gmra.mrb[0].mxu0 %v2454
      %v2630 = vpop.f32.mrb[0].mxu0
      %v2631 = vadd.f32 0.0, %v2630
      %v2632 = vpop.f32.mrb[0].mxu0
      %2633 = vmatprep.mubr.f32.mxu0 0.0
      %2634 = vmatmul.mubr.f32.gmra.mrb[0].mxu0 %v2457
      %v2635 = vpop.f32.mrb[0].mxu0
      %v2636 = vadd.f32 0.0, %v2635
      %v2637 = vpop.f32.mrb[0].mxu0
      %2638 = vmatprep.mubr.f32.mxu0 0.0
      %2639 = vmatmul.mubr.f32.gmra.mrb[0].mxu0 %v2460
      %v2640 = vpop.f32.mrb[0].mxu0
      %v2641 = vadd.f32 0.0, %v2640
      %v2642 = vpop.f32.mrb[0].mxu0
      %2643 = vmatprep.mubr.f32.mxu0 0.0
      %2644 = vmatmul.mubr.f32.gmra.mrb[0].mxu0 %v2463
      %v2645 = vpop.f32.mrb[0].mxu0
      %v2646 = vadd.f32 0.0, %v2645
      %v2647 = vpop.f32.mrb[0].mxu0
      %2648 = vmatprep.mubr.f32.mxu0 0.0
      %2649 = vmatmul.mubr.f32.gmra.mrb[0].mxu0 %v2466
      %v2650 = vpop.f32.mrb[0].mxu0
      %v2651 = vadd.f32 0.0, %v2650
      %v2652 = vpop.f32.mrb[0].mxu0
      %2653 = vmatprep.mubr.f32.mxu0 0.0
      %2654 = vmatmul.mubr.f32.gmra.mrb[0].mxu0 %v2469
      %v2655 = vpop.f32.mrb[0].mxu0
      %v2656 = vadd.f32 0.0, %v2655
      %v2657 = vpop.f32.mrb[0].mxu0
      %2658 = vmatprep.mubr.f32.mxu0 0.0
      %2659 = vmatmul.mubr.f32.gmra.mrb[0].mxu0 %v2472
      %v2660 = vpop.f32.mrb[0].mxu0
      %v2661 = vadd.f32 0.0, %v2660
      %v2662 = vpop.f32.mrb[0].mxu0
      %2663 = vmatprep.mubr.f32.mxu0 0.0
      %2664 = vmatmul.mubr.f32.gmra.mrb[0].mxu0 %v2475
      %v2665 = vpop.f32.mrb[0].mxu0
      %v2666 = vadd.f32 0.0, %v2665
      %v2667 = vpop.f32.mrb[0].mxu0
      %2668 = vmatprep.mubr.f32.mxu0 0.0
      %2669 = vmatmul.mubr.f32.gmra.mrb[0].mxu0 %v2478
      %v2670 = vpop.f32.mrb[0].mxu0
      %v2671 = vadd.f32 0.0, %v2670
      %v2672 = vpop.f32.mrb[0].mxu0
      %2673 = vmatprep.mubr.f32.mxu0 0.0
      %2674 = vmatmul.mubr.f32.gmra.mrb[0].mxu0 %v2481
      %v2675 = vpop.f32.mrb[0].mxu0
      %v2676 = vadd.f32 0.0, %v2675
      %v2677 = vpop.f32.mrb[0].mxu0
      %2678 = vmatprep.mubr.f32.mxu0 0.0
      %2679 = vmatmul.mubr.f32.gmra.mrb[0].mxu0 %v2484
      %v2680 = vpop.f32.mrb[0].mxu0
      %v2681 = vadd.f32 0.0, %v2680
      %v2682 = vpop.f32.mrb[0].mxu0
      %2683 = vmatprep.mubr.f32.mxu0 0.0
      %2684 = vmatmul.mubr.f32.gmra.mrb[0].mxu0 %v2487
      %v2685 = vpop.f32.mrb[0].mxu0
      %v2686 = vadd.f32 0.0, %v2685
      %v2687 = vpop.f32.mrb[0].mxu0
      %2688 = vmatprep.mubr.f32.mxu0 0.0
      %2689 = vmatmul.mubr.f32.gmra.mrb[0].mxu0 %v2490
      %v2690 = vpop.f32.mrb[0].mxu0
      %v2691 = vadd.f32 0.0, %v2690
      %v2692 = vpop.f32.mrb[0].mxu0
      %2693 = vmatprep.mubr.f32.mxu0 0.0
      %2694 = vmatmul.mubr.f32.gmra.mrb[0].mxu0 %v2493
      %v2695 = vpop.f32.mrb[0].mxu0
      %v2696 = vadd.f32 0.0, %v2695
      %v2697 = vpop.f32.mrb[0].mxu0
      %2698 = vmatprep.mubr.f32.mxu0 0.0
      %2699 = vmatmul.mubr.f32.gmra.mrb[0].mxu0 %v2496
      %v2700 = vpop.f32.mrb[0].mxu0
      %v2701 = vadd.f32 0.0, %v2700
      %v2702 = vpop.f32.mrb[0].mxu0
      %2703 = vmatprep.mubr.f32.mxu0 0.0
      %2704 = vmatmul.mubr.f32.gmra.mrb[0].mxu0 %v2499
      %v2705 = vpop.f32.mrb[0].mxu0
      %v2706 = vadd.f32 0.0, %v2705
      %v2707 = vpop.f32.mrb[0].mxu0
      %2708 = vmatprep.mubr.f32.mxu0 0.0
      %2709 = vmatmul.mubr.f32.gmra.mrb[0].mxu0 %v2502
      %v2710 = vpop.f32.mrb[0].mxu0
      %v2711 = vadd.f32 0.0, %v2710
      %v2712 = vpop.f32.mrb[0].mxu0
      %2713 = vmatprep.mubr.f32.mxu0 0.0
      %2714 = vmatmul.mubr.f32.gmra.mrb[0].mxu0 %v2505
      %v2715 = vpop.f32.mrb[0].mxu0
      %v2716 = vadd.f32 0.0, %v2715
      %v2717 = vpop.f32.mrb[0].mxu0
      %2718 = vmatprep.mubr.f32.mxu0 0.0
      %2719 = vmatmul.mubr.f32.gmra.mrb[0].mxu0 %v2508
      %v2720 = vpop.f32.mrb[0].mxu0
      %v2721 = vadd.f32 0.0, %v2720
      %v2722 = vpop.f32.mrb[0].mxu0
      %2723 = vmatprep.mubr.f32.mxu0 0.0
      %2724 = vmatmul.mubr.f32.gmra.mrb[0].mxu0 %v2511
      %v2725 = vpop.f32.mrb[0].mxu0
      %v2726 = vadd.f32 0.0, %v2725
      %v2727 = vpop.f32.mrb[0].mxu0
      %2728 = vmatprep.mubr.f32.mxu0 0.0
      %2729 = vmatmul.mubr.f32.gmra.mrb[0].mxu0 %v2514
      %v2730 = vpop.f32.mrb[0].mxu0
      %v2731 = vadd.f32 0.0, %v2730
      %v2732 = vpop.f32.mrb[0].mxu0
      %2733 = vmatprep.mubr.f32.mxu0 0.0
      %2734 = vmatmul.mubr.f32.gmra.mrb[0].mxu0 %v2517
      %v2735 = vpop.f32.mrb[0].mxu0
      %v2736 = vadd.f32 0.0, %v2735
      %v2737 = vpop.f32.mrb[0].mxu0
      %2738 = vmatprep.mubr.f32.mxu0 0.0
      %2739 = vmatmul.mubr.f32.gmra.mrb[0].mxu0 %v2520
      %v2740 = vpop.f32.mrb[0].mxu0
      %v2741 = vadd.f32 0.0, %v2740
      %v2742 = vpop.f32.mrb[0].mxu0
      %2743 = vmatprep.mubr.f32.mxu0 0.0
      %2744 = vmatmul.mubr.f32.gmra.mrb[0].mxu0 %v2523
      %v2745 = vpop.f32.mrb[0].mxu0
      %v2746 = vadd.f32 0.0, %v2745
      %v2747 = vpop.f32.mrb[0].mxu0
      %2748 = vmatprep.mubr.f32.mxu0 0.0
      %2749 = vmatmul.mubr.f32.gmra.mrb[0].mxu0 %v2526
      %v2750 = vpop.f32.mrb[0].mxu0
      %v2751 = vadd.f32 0.0, %v2750
      %v2752 = vpop.f32.mrb[0].mxu0
      %2753 = vmatprep.mubr.f32.mxu0 0.0
      %2754 = vmatmul.mubr.f32.gmra.mrb[0].mxu0 %v2529
      %v2755 = vpop.f32.mrb[0].mxu0
      %v2756 = vadd.f32 0.0, %v2755
      %v2757 = vpop.f32.mrb[0].mxu0
      %2758 = vdwg.mxu0
      %v2759 = vld [vmem:[#allocation2] sm:$0xff]
      %v2760 = vld [vmem:[#allocation2 + $0x8] sm:$0xff]
      %v2761 = vld [vmem:[#allocation2 + $0x10] sm:$0xff]
      %v2762 = vld [vmem:[#allocation2 + $0x18] sm:$0xff]
      %v2763 = vld [vmem:[#allocation2 + $0x20] sm:$0xff]
      %v2764 = vld [vmem:[#allocation2 + $0x28] sm:$0xff]
      %v2765 = vld [vmem:[#allocation2 + $0x30] sm:$0xff]
      %v2766 = vld [vmem:[#allocation2 + $0x38] sm:$0xff]
      %v2767 = vld [vmem:[#allocation2 + $0x40] sm:$0xff]
      %v2768 = vld [vmem:[#allocation2 + $0x48] sm:$0xff]
      %v2769 = vld [vmem:[#allocation2 + $0x50] sm:$0xff]
      %v2770 = vld [vmem:[#allocation2 + $0x58] sm:$0xff]
      %v2771 = vld [vmem:[#allocation2 + $0x60] sm:$0xff]
      %v2772 = vld [vmem:[#allocation2 + $0x68] sm:$0xff]
      %v2773 = vld [vmem:[#allocation2 + $0x70] sm:$0xff]
      %v2774 = vld [vmem:[#allocation2 + $0x78] sm:$0xff]
      %v2775 = vld [vmem:[#allocation2 + $0x80] sm:$0xff]
      %v2776 = vld [vmem:[#allocation2 + $0x88] sm:$0xff]
      %v2777 = vld [vmem:[#allocation2 + $0x90] sm:$0xff]
      %v2778 = vld [vmem:[#allocation2 + $0x98] sm:$0xff]
      %v2779 = vld [vmem:[#allocation2 + $0xa0] sm:$0xff]
      %v2780 = vld [vmem:[#allocation2 + $0xa8] sm:$0xff]
      %v2781 = vld [vmem:[#allocation2 + $0xb0] sm:$0xff]
      %v2782 = vld [vmem:[#allocation2 + $0xb8] sm:$0xff]
      %v2783 = vld [vmem:[#allocation2 + $0xc0] sm:$0xff]
      %v2784 = vld [vmem:[#allocation2 + $0xc8] sm:$0xff]
      %v2785 = vld [vmem:[#allocation2 + $0xd0] sm:$0xff]
      %v2786 = vld [vmem:[#allocation2 + $0xd8] sm:$0xff]
      %v2787 = vld [vmem:[#allocation2 + $0xe0] sm:$0xff]
      %v2788 = vld [vmem:[#allocation2 + $0xe8] sm:$0xff]
      %v2789 = vld [vmem:[#allocation2 + $0xf0] sm:$0xff]
      %v2790 = vld [vmem:[#allocation2 + $0xf8] sm:$0xff]
      %v2791 = vadd.f32 %v2759, %v2601
      %v2792 = vadd.f32 %v2760, %v2606
      %v2793 = vadd.f32 %v2761, %v2611
      %v2794 = vadd.f32 %v2762, %v2616
      %v2795 = vadd.f32 %v2763, %v2621
      %v2796 = vadd.f32 %v2764, %v2626
      %v2797 = vadd.f32 %v2765, %v2631
      %v2798 = vadd.f32 %v2766, %v2636
      %v2799 = vadd.f32 %v2767, %v2641
      %v2800 = vadd.f32 %v2768, %v2646
      %v2801 = vadd.f32 %v2769, %v2651
      %v2802 = vadd.f32 %v2770, %v2656
      %v2803 = vadd.f32 %v2771, %v2661
      %v2804 = vadd.f32 %v2772, %v2666
      %v2805 = vadd.f32 %v2773, %v2671
      %v2806 = vadd.f32 %v2774, %v2676
      %v2807 = vadd.f32 %v2775, %v2681
      %v2808 = vadd.f32 %v2776, %v2686
      %v2809 = vadd.f32 %v2777, %v2691
      %v2810 = vadd.f32 %v2778, %v2696
      %v2811 = vadd.f32 %v2779, %v2701
      %v2812 = vadd.f32 %v2780, %v2706
      %v2813 = vadd.f32 %v2781, %v2711
      %v2814 = vadd.f32 %v2782, %v2716
      %v2815 = vadd.f32 %v2783, %v2721
      %v2816 = vadd.f32 %v2784, %v2726
      %v2817 = vadd.f32 %v2785, %v2731
      %v2818 = vadd.f32 %v2786, %v2736
      %v2819 = vadd.f32 %v2787, %v2741
      %v2820 = vadd.f32 %v2788, %v2746
      %v2821 = vadd.f32 %v2789, %v2751
      %v2822 = vadd.f32 %v2790, %v2756
      %2823 = vst [vmem:[#allocation2] sm:$0xff] %v2791
      %2824 = vst [vmem:[#allocation2 + $0x8] sm:$0xff] %v2792
      %2825 = vst [vmem:[#allocation2 + $0x10] sm:$0xff] %v2793
      %2826 = vst [vmem:[#allocation2 + $0x18] sm:$0xff] %v2794
      %2827 = vst [vmem:[#allocation2 + $0x20] sm:$0xff] %v2795
      %2828 = vst [vmem:[#allocation2 + $0x28] sm:$0xff] %v2796
      %2829 = vst [vmem:[#allocation2 + $0x30] sm:$0xff] %v2797
      %2830 = vst [vmem:[#allocation2 + $0x38] sm:$0xff] %v2798
      %2831 = vst [vmem:[#allocation2 + $0x40] sm:$0xff] %v2799
      %2832 = vst [vmem:[#allocation2 + $0x48] sm:$0xff] %v2800
      %2833 = vst [vmem:[#allocation2 + $0x50] sm:$0xff] %v2801
      %2834 = vst [vmem:[#allocation2 + $0x58] sm:$0xff] %v2802
      %2835 = vst [vmem:[#allocation2 + $0x60] sm:$0xff] %v2803
      %2836 = vst [vmem:[#allocation2 + $0x68] sm:$0xff] %v2804
      %2837 = vst [vmem:[#allocation2 + $0x70] sm:$0xff] %v2805
      %2838 = vst [vmem:[#allocation2 + $0x78] sm:$0xff] %v2806
      %2839 = vst [vmem:[#allocation2 + $0x80] sm:$0xff] %v2807
      %2840 = vst [vmem:[#allocation2 + $0x88] sm:$0xff] %v2808
      %2841 = vst [vmem:[#allocation2 + $0x90] sm:$0xff] %v2809
      %2842 = vst [vmem:[#allocation2 + $0x98] sm:$0xff] %v2810
      %2843 = vst [vmem:[#allocation2 + $0xa0] sm:$0xff] %v2811
      %2844 = vst [vmem:[#allocation2 + $0xa8] sm:$0xff] %v2812
      %2845 = vst [vmem:[#allocation2 + $0xb0] sm:$0xff] %v2813
      %2846 = vst [vmem:[#allocation2 + $0xb8] sm:$0xff] %v2814
      %2847 = vst [vmem:[#allocation2 + $0xc0] sm:$0xff] %v2815
      %2848 = vst [vmem:[#allocation2 + $0xc8] sm:$0xff] %v2816
      %2849 = vst [vmem:[#allocation2 + $0xd0] sm:$0xff] %v2817
      %2850 = vst [vmem:[#allocation2 + $0xd8] sm:$0xff] %v2818
      %2851 = vst [vmem:[#allocation2 + $0xe0] sm:$0xff] %v2819
      %2852 = vst [vmem:[#allocation2 + $0xe8] sm:$0xff] %v2820
      %2853 = vst [vmem:[#allocation2 + $0xf0] sm:$0xff] %v2821
      %2854 = vst [vmem:[#allocation2 + $0xf8] sm:$0xff] %v2822
      %s2855 = sadd.s32 %s188, 2
      %s2856 = smul.u32 %s2855, 24
      %s2857 = scalar_lea.vmem %s181, %s2856
      %v2858 = vld [vmem:[%s2857] sm:$0xff]
      %v2859 = vld [vmem:[%s2857 + $0x8] sm:$0xff]
      %v2860 = vld [vmem:[%s2857 + $0x18] sm:$0xff]
      %v2861 = vld [vmem:[%s2857 + $0x20] sm:$0xff]
      %v2862 = vld [vmem:[%s2857 + $0x30] sm:$0xff]
      %v2863 = vld [vmem:[%s2857 + $0x38] sm:$0xff]
      %v2864 = vld [vmem:[%s2857 + $0x48] sm:$0xff]
      %v2865 = vld [vmem:[%s2857 + $0x50] sm:$0xff]
      %v2866 = vld [vmem:[%s2857 + $0x60] sm:$0xff]
      %v2867 = vld [vmem:[%s2857 + $0x68] sm:$0xff]
      %v2868 = vld [vmem:[%s2857 + $0x78] sm:$0xff]
      %v2869 = vld [vmem:[%s2857 + $0x80] sm:$0xff]
      %v2870 = vld [vmem:[%s2857 + $0x90] sm:$0xff]
      %v2871 = vld [vmem:[%s2857 + $0x98] sm:$0xff]
      %v2872 = vld [vmem:[%s2857 + $0xa8] sm:$0xff]
      %v2873 = vld [vmem:[%s2857 + $0xb0] sm:$0xff]
      %v2874 = vld [vmem:[%s2857 + $0xc0] sm:$0xff]
      %v2875 = vld [vmem:[%s2857 + $0xc8] sm:$0xff]
      %v2876 = vld [vmem:[%s2857 + $0xd8] sm:$0xff]
      %v2877 = vld [vmem:[%s2857 + $0xe0] sm:$0xff]
      %v2878 = vld [vmem:[%s2857 + $0xf0] sm:$0xff]
      %v2879 = vld [vmem:[%s2857 + $0xf8] sm:$0xff]
      %v2880 = vld [vmem:[%s2857 + $0x108] sm:$0xff]
      %v2881 = vld [vmem:[%s2857 + $0x110] sm:$0xff]
      %v2882 = vld [vmem:[%s2857 + $0x120] sm:$0xff]
      %v2883 = vld [vmem:[%s2857 + $0x128] sm:$0xff]
      %v2884 = vld [vmem:[%s2857 + $0x138] sm:$0xff]
      %v2885 = vld [vmem:[%s2857 + $0x140] sm:$0xff]
      %v2886 = vld [vmem:[%s2857 + $0x150] sm:$0xff]
      %v2887 = vld [vmem:[%s2857 + $0x158] sm:$0xff]
      %v2888 = vld [vmem:[%s2857 + $0x168] sm:$0xff]
      %v2889 = vld [vmem:[%s2857 + $0x170] sm:$0xff]
      %s2890 = scalar_lea.vmem %s1, 24
      %v2891 = vld [vmem:[%s2890] sm:$0xf]
      %v2893 = vsel %vm224, %v2858, 0
      %v2896 = vsel %vm224, %v2859, 0
      %v2899 = vsel %vm224, %v2860, 0
      %v2902 = vsel %vm224, %v2861, 0
      %v2905 = vsel %vm224, %v2862, 0
      %v2908 = vsel %vm224, %v2863, 0
      %v2911 = vsel %vm224, %v2864, 0
      %v2914 = vsel %vm224, %v2865, 0
      %v2917 = vsel %vm224, %v2866, 0
      %v2920 = vsel %vm224, %v2867, 0
      %v2923 = vsel %vm224, %v2868, 0
      %v2926 = vsel %vm224, %v2869, 0
      %v2929 = vsel %vm224, %v2870, 0
      %v2932 = vsel %vm224, %v2871, 0
      %v2935 = vsel %vm224, %v2872, 0
      %v2938 = vsel %vm224, %v2873, 0
      %v2941 = vsel %vm224, %v2874, 0
      %v2944 = vsel %vm224, %v2875, 0
      %v2947 = vsel %vm224, %v2876, 0
      %v2950 = vsel %vm224, %v2877, 0
      %v2953 = vsel %vm224, %v2878, 0
      %v2956 = vsel %vm224, %v2879, 0
      %v2959 = vsel %vm224, %v2880, 0
      %v2962 = vsel %vm224, %v2881, 0
      %v2965 = vsel %vm224, %v2882, 0
      %v2968 = vsel %vm224, %v2883, 0
      %v2971 = vsel %vm224, %v2884, 0
      %v2974 = vsel %vm224, %v2885, 0
      %v2977 = vsel %vm224, %v2886, 0
      %v2980 = vsel %vm224, %v2887, 0
      %v2983 = vsel %vm224, %v2888, 0
      %v2986 = vsel %vm224, %v2889, 0
      %v2989 = vsel %vm321, %v2891, 0
      %2991 = vmatprep.subr.mxu0 0.0
      %2992 = vmatpush1.msra.mxu0 %v2989
      %2993 = vmatprep.subr.mxu0 0.0
      %2994 = vmatpush1.msra.mxu0 0.0
      %2995 = vmatprep.subr.mxu0 0.0
      %2996 = vmatpush1.msra.mxu0 0.0
      %2997 = vmatprep.subr.mxu0 0.0
      %2998 = vmatpush1.msra.mxu0 0.0
      %2999 = vmatprep.subr.mxu0 0.0
      %3000 = vmatpush1.msra.mxu0 0.0
      %3001 = vmatprep.subr.mxu0 0.0
      %3002 = vmatpush1.msra.mxu0 0.0
      %3003 = vmatprep.subr.mxu0 0.0
      %3004 = vmatpush1.msra.mxu0 0.0
      %3005 = vmatprep.subr.mxu0 0.0
      %3006 = vmatpush1.msra.mxu0 0.0
      %3007 = vmatprep.subr.mxu0 0.0
      %3008 = vmatpush1.msra.mxu0 0.0
      %3009 = vmatprep.subr.mxu0 0.0
      %3010 = vmatpush1.msra.mxu0 0.0
      %3011 = vmatprep.subr.mxu0 0.0
      %3012 = vmatpush1.msra.mxu0 0.0
      %3013 = vmatprep.subr.mxu0 0.0
      %3014 = vmatpush1.msra.mxu0 0.0
      %3015 = vmatprep.subr.mxu0 0.0
      %3016 = vmatpush1.msra.mxu0 0.0
      %3017 = vmatprep.subr.mxu0 0.0
      %3018 = vmatpush1.msra.mxu0 0.0
      %3019 = vmatprep.subr.mxu0 0.0
      %3020 = vmatpush1.msra.mxu0 0.0
      %3021 = vmatprep.subr.mxu0 0.0
      %3022 = vmatpush1.msra.mxu0 0.0
      %3023 = vmatprep.subr.mxu0 0.0
      %3024 = vmatpush1.msra.mxu0 0.0
      %3025 = vmatprep.subr.mxu0 0.0
      %3026 = vmatpush1.msra.mxu0 0.0
      %3027 = vmatprep.subr.mxu0 0.0
      %3028 = vmatpush1.msra.mxu0 0.0
      %3029 = vmatprep.subr.mxu0 0.0
      %3030 = vmatpush1.msra.mxu0 0.0
      %3031 = vmatprep.subr.mxu0 0.0
      %3032 = vmatpush1.msra.mxu0 0.0
      %3033 = vmatprep.subr.mxu0 0.0
      %3034 = vmatpush1.msra.mxu0 0.0
      %3035 = vmatprep.subr.mxu0 0.0
      %3036 = vmatpush1.msra.mxu0 0.0
      %3037 = vmatprep.subr.mxu0 0.0
      %3038 = vmatpush1.msra.mxu0 0.0
      %3039 = vmatprep.subr.mxu0 0.0
      %3040 = vmatpush1.msra.mxu0 0.0
      %3041 = vmatprep.subr.mxu0 0.0
      %3042 = vmatpush1.msra.mxu0 0.0
      %3043 = vmatprep.subr.mxu0 0.0
      %3044 = vmatpush1.msra.mxu0 0.0
      %3045 = vmatprep.subr.mxu0 0.0
      %3046 = vmatpush1.msra.mxu0 0.0
      %3047 = vmatprep.subr.mxu0 0.0
      %3048 = vmatpush1.msra.mxu0 0.0
      %3049 = vmatprep.subr.mxu0 0.0
      %3050 = vmatpush1.msra.mxu0 0.0
      %3051 = vmatprep.subr.mxu0 0.0
      %3052 = vmatpush1.msra.mxu0 0.0
      %3053 = vmatprep.subr.mxu0 0.0
      %3054 = vmatpush1.msra.mxu0 0.0
      %3055 = vmatprep.mubr.f32.mxu0 0.0
      %3056 = vmatmul.mubr.f32.gmra.mrb[0].mxu0 %v2893
      %v3057 = vpop.f32.mrb[0].mxu0
      %v3058 = vadd.f32 0.0, %v3057
      %v3059 = vpop.f32.mrb[0].mxu0
      %3060 = vmatprep.mubr.f32.mxu0 0.0
      %3061 = vmatmul.mubr.f32.gmra.mrb[0].mxu0 %v2896
      %v3062 = vpop.f32.mrb[0].mxu0
      %v3063 = vadd.f32 0.0, %v3062
      %v3064 = vpop.f32.mrb[0].mxu0
      %3065 = vmatprep.mubr.f32.mxu0 0.0
      %3066 = vmatmul.mubr.f32.gmra.mrb[0].mxu0 %v2899
      %v3067 = vpop.f32.mrb[0].mxu0
      %v3068 = vadd.f32 0.0, %v3067
      %v3069 = vpop.f32.mrb[0].mxu0
      %3070 = vmatprep.mubr.f32.mxu0 0.0
      %3071 = vmatmul.mubr.f32.gmra.mrb[0].mxu0 %v2902
      %v3072 = vpop.f32.mrb[0].mxu0
      %v3073 = vadd.f32 0.0, %v3072
      %v3074 = vpop.f32.mrb[0].mxu0
      %3075 = vmatprep.mubr.f32.mxu0 0.0
      %3076 = vmatmul.mubr.f32.gmra.mrb[0].mxu0 %v2905
      %v3077 = vpop.f32.mrb[0].mxu0
      %v3078 = vadd.f32 0.0, %v3077
      %v3079 = vpop.f32.mrb[0].mxu0
      %3080 = vmatprep.mubr.f32.mxu0 0.0
      %3081 = vmatmul.mubr.f32.gmra.mrb[0].mxu0 %v2908
      %v3082 = vpop.f32.mrb[0].mxu0
      %v3083 = vadd.f32 0.0, %v3082
      %v3084 = vpop.f32.mrb[0].mxu0
      %3085 = vmatprep.mubr.f32.mxu0 0.0
      %3086 = vmatmul.mubr.f32.gmra.mrb[0].mxu0 %v2911
      %v3087 = vpop.f32.mrb[0].mxu0
      %v3088 = vadd.f32 0.0, %v3087
      %v3089 = vpop.f32.mrb[0].mxu0
      %3090 = vmatprep.mubr.f32.mxu0 0.0
      %3091 = vmatmul.mubr.f32.gmra.mrb[0].mxu0 %v2914
      %v3092 = vpop.f32.mrb[0].mxu0
      %v3093 = vadd.f32 0.0, %v3092
      %v3094 = vpop.f32.mrb[0].mxu0
      %3095 = vmatprep.mubr.f32.mxu0 0.0
      %3096 = vmatmul.mubr.f32.gmra.mrb[0].mxu0 %v2917
      %v3097 = vpop.f32.mrb[0].mxu0
      %v3098 = vadd.f32 0.0, %v3097
      %v3099 = vpop.f32.mrb[0].mxu0
      %3100 = vmatprep.mubr.f32.mxu0 0.0
      %3101 = vmatmul.mubr.f32.gmra.mrb[0].mxu0 %v2920
      %v3102 = vpop.f32.mrb[0].mxu0
      %v3103 = vadd.f32 0.0, %v3102
      %v3104 = vpop.f32.mrb[0].mxu0
      %3105 = vmatprep.mubr.f32.mxu0 0.0
      %3106 = vmatmul.mubr.f32.gmra.mrb[0].mxu0 %v2923
      %v3107 = vpop.f32.mrb[0].mxu0
      %v3108 = vadd.f32 0.0, %v3107
      %v3109 = vpop.f32.mrb[0].mxu0
      %3110 = vmatprep.mubr.f32.mxu0 0.0
      %3111 = vmatmul.mubr.f32.gmra.mrb[0].mxu0 %v2926
      %v3112 = vpop.f32.mrb[0].mxu0
      %v3113 = vadd.f32 0.0, %v3112
      %v3114 = vpop.f32.mrb[0].mxu0
      %3115 = vmatprep.mubr.f32.mxu0 0.0
      %3116 = vmatmul.mubr.f32.gmra.mrb[0].mxu0 %v2929
      %v3117 = vpop.f32.mrb[0].mxu0
      %v3118 = vadd.f32 0.0, %v3117
      %v3119 = vpop.f32.mrb[0].mxu0
      %3120 = vmatprep.mubr.f32.mxu0 0.0
      %3121 = vmatmul.mubr.f32.gmra.mrb[0].mxu0 %v2932
      %v3122 = vpop.f32.mrb[0].mxu0
      %v3123 = vadd.f32 0.0, %v3122
      %v3124 = vpop.f32.mrb[0].mxu0
      %3125 = vmatprep.mubr.f32.mxu0 0.0
      %3126 = vmatmul.mubr.f32.gmra.mrb[0].mxu0 %v2935
      %v3127 = vpop.f32.mrb[0].mxu0
      %v3128 = vadd.f32 0.0, %v3127
      %v3129 = vpop.f32.mrb[0].mxu0
      %3130 = vmatprep.mubr.f32.mxu0 0.0
      %3131 = vmatmul.mubr.f32.gmra.mrb[0].mxu0 %v2938
      %v3132 = vpop.f32.mrb[0].mxu0
      %v3133 = vadd.f32 0.0, %v3132
      %v3134 = vpop.f32.mrb[0].mxu0
      %3135 = vmatprep.mubr.f32.mxu0 0.0
      %3136 = vmatmul.mubr.f32.gmra.mrb[0].mxu0 %v2941
      %v3137 = vpop.f32.mrb[0].mxu0
      %v3138 = vadd.f32 0.0, %v3137
      %v3139 = vpop.f32.mrb[0].mxu0
      %3140 = vmatprep.mubr.f32.mxu0 0.0
      %3141 = vmatmul.mubr.f32.gmra.mrb[0].mxu0 %v2944
      %v3142 = vpop.f32.mrb[0].mxu0
      %v3143 = vadd.f32 0.0, %v3142
      %v3144 = vpop.f32.mrb[0].mxu0
      %3145 = vmatprep.mubr.f32.mxu0 0.0
      %3146 = vmatmul.mubr.f32.gmra.mrb[0].mxu0 %v2947
      %v3147 = vpop.f32.mrb[0].mxu0
      %v3148 = vadd.f32 0.0, %v3147
      %v3149 = vpop.f32.mrb[0].mxu0
      %3150 = vmatprep.mubr.f32.mxu0 0.0
      %3151 = vmatmul.mubr.f32.gmra.mrb[0].mxu0 %v2950
      %v3152 = vpop.f32.mrb[0].mxu0
      %v3153 = vadd.f32 0.0, %v3152
      %v3154 = vpop.f32.mrb[0].mxu0
      %3155 = vmatprep.mubr.f32.mxu0 0.0
      %3156 = vmatmul.mubr.f32.gmra.mrb[0].mxu0 %v2953
      %v3157 = vpop.f32.mrb[0].mxu0
      %v3158 = vadd.f32 0.0, %v3157
      %v3159 = vpop.f32.mrb[0].mxu0
      %3160 = vmatprep.mubr.f32.mxu0 0.0
      %3161 = vmatmul.mubr.f32.gmra.mrb[0].mxu0 %v2956
      %v3162 = vpop.f32.mrb[0].mxu0
      %v3163 = vadd.f32 0.0, %v3162
      %v3164 = vpop.f32.mrb[0].mxu0
      %3165 = vmatprep.mubr.f32.mxu0 0.0
      %3166 = vmatmul.mubr.f32.gmra.mrb[0].mxu0 %v2959
      %v3167 = vpop.f32.mrb[0].mxu0
      %v3168 = vadd.f32 0.0, %v3167
      %v3169 = vpop.f32.mrb[0].mxu0
      %3170 = vmatprep.mubr.f32.mxu0 0.0
      %3171 = vmatmul.mubr.f32.gmra.mrb[0].mxu0 %v2962
      %v3172 = vpop.f32.mrb[0].mxu0
      %v3173 = vadd.f32 0.0, %v3172
      %v3174 = vpop.f32.mrb[0].mxu0
      %3175 = vmatprep.mubr.f32.mxu0 0.0
      %3176 = vmatmul.mubr.f32.gmra.mrb[0].mxu0 %v2965
      %v3177 = vpop.f32.mrb[0].mxu0
      %v3178 = vadd.f32 0.0, %v3177
      %v3179 = vpop.f32.mrb[0].mxu0
      %3180 = vmatprep.mubr.f32.mxu0 0.0
      %3181 = vmatmul.mubr.f32.gmra.mrb[0].mxu0 %v2968
      %v3182 = vpop.f32.mrb[0].mxu0
      %v3183 = vadd.f32 0.0, %v3182
      %v3184 = vpop.f32.mrb[0].mxu0
      %3185 = vmatprep.mubr.f32.mxu0 0.0
      %3186 = vmatmul.mubr.f32.gmra.mrb[0].mxu0 %v2971
      %v3187 = vpop.f32.mrb[0].mxu0
      %v3188 = vadd.f32 0.0, %v3187
      %v3189 = vpop.f32.mrb[0].mxu0
      %3190 = vmatprep.mubr.f32.mxu0 0.0
      %3191 = vmatmul.mubr.f32.gmra.mrb[0].mxu0 %v2974
      %v3192 = vpop.f32.mrb[0].mxu0
      %v3193 = vadd.f32 0.0, %v3192
      %v3194 = vpop.f32.mrb[0].mxu0
      %3195 = vmatprep.mubr.f32.mxu0 0.0
      %3196 = vmatmul.mubr.f32.gmra.mrb[0].mxu0 %v2977
      %v3197 = vpop.f32.mrb[0].mxu0
      %v3198 = vadd.f32 0.0, %v3197
      %v3199 = vpop.f32.mrb[0].mxu0
      %3200 = vmatprep.mubr.f32.mxu0 0.0
      %3201 = vmatmul.mubr.f32.gmra.mrb[0].mxu0 %v2980
      %v3202 = vpop.f32.mrb[0].mxu0
      %v3203 = vadd.f32 0.0, %v3202
      %v3204 = vpop.f32.mrb[0].mxu0
      %3205 = vmatprep.mubr.f32.mxu0 0.0
      %3206 = vmatmul.mubr.f32.gmra.mrb[0].mxu0 %v2983
      %v3207 = vpop.f32.mrb[0].mxu0
      %v3208 = vadd.f32 0.0, %v3207
      %v3209 = vpop.f32.mrb[0].mxu0
      %3210 = vmatprep.mubr.f32.mxu0 0.0
      %3211 = vmatmul.mubr.f32.gmra.mrb[0].mxu0 %v2986
      %v3212 = vpop.f32.mrb[0].mxu0
      %v3213 = vadd.f32 0.0, %v3212
      %v3214 = vpop.f32.mrb[0].mxu0
      %3215 = vdwg.mxu0
      %v3216 = vld [vmem:[#allocation2] sm:$0xff]
      %v3217 = vld [vmem:[#allocation2 + $0x8] sm:$0xff]
      %v3218 = vld [vmem:[#allocation2 + $0x10] sm:$0xff]
      %v3219 = vld [vmem:[#allocation2 + $0x18] sm:$0xff]
      %v3220 = vld [vmem:[#allocation2 + $0x20] sm:$0xff]
      %v3221 = vld [vmem:[#allocation2 + $0x28] sm:$0xff]
      %v3222 = vld [vmem:[#allocation2 + $0x30] sm:$0xff]
      %v3223 = vld [vmem:[#allocation2 + $0x38] sm:$0xff]
      %v3224 = vld [vmem:[#allocation2 + $0x40] sm:$0xff]
      %v3225 = vld [vmem:[#allocation2 + $0x48] sm:$0xff]
      %v3226 = vld [vmem:[#allocation2 + $0x50] sm:$0xff]
      %v3227 = vld [vmem:[#allocation2 + $0x58] sm:$0xff]
      %v3228 = vld [vmem:[#allocation2 + $0x60] sm:$0xff]
      %v3229 = vld [vmem:[#allocation2 + $0x68] sm:$0xff]
      %v3230 = vld [vmem:[#allocation2 + $0x70] sm:$0xff]
      %v3231 = vld [vmem:[#allocation2 + $0x78] sm:$0xff]
      %v3232 = vld [vmem:[#allocation2 + $0x80] sm:$0xff]
      %v3233 = vld [vmem:[#allocation2 + $0x88] sm:$0xff]
      %v3234 = vld [vmem:[#allocation2 + $0x90] sm:$0xff]
      %v3235 = vld [vmem:[#allocation2 + $0x98] sm:$0xff]
      %v3236 = vld [vmem:[#allocation2 + $0xa0] sm:$0xff]
      %v3237 = vld [vmem:[#allocation2 + $0xa8] sm:$0xff]
      %v3238 = vld [vmem:[#allocation2 + $0xb0] sm:$0xff]
      %v3239 = vld [vmem:[#allocation2 + $0xb8] sm:$0xff]
      %v3240 = vld [vmem:[#allocation2 + $0xc0] sm:$0xff]
      %v3241 = vld [vmem:[#allocation2 + $0xc8] sm:$0xff]
      %v3242 = vld [vmem:[#allocation2 + $0xd0] sm:$0xff]
      %v3243 = vld [vmem:[#allocation2 + $0xd8] sm:$0xff]
      %v3244 = vld [vmem:[#allocation2 + $0xe0] sm:$0xff]
      %v3245 = vld [vmem:[#allocation2 + $0xe8] sm:$0xff]
      %v3246 = vld [vmem:[#allocation2 + $0xf0] sm:$0xff]
      %v3247 = vld [vmem:[#allocation2 + $0xf8] sm:$0xff]
      %v3248 = vadd.f32 %v3216, %v3058
      %v3249 = vadd.f32 %v3217, %v3063
      %v3250 = vadd.f32 %v3218, %v3068
      %v3251 = vadd.f32 %v3219, %v3073
      %v3252 = vadd.f32 %v3220, %v3078
      %v3253 = vadd.f32 %v3221, %v3083
      %v3254 = vadd.f32 %v3222, %v3088
      %v3255 = vadd.f32 %v3223, %v3093
      %v3256 = vadd.f32 %v3224, %v3098
      %v3257 = vadd.f32 %v3225, %v3103
      %v3258 = vadd.f32 %v3226, %v3108
      %v3259 = vadd.f32 %v3227, %v3113
      %v3260 = vadd.f32 %v3228, %v3118
      %v3261 = vadd.f32 %v3229, %v3123
      %v3262 = vadd.f32 %v3230, %v3128
      %v3263 = vadd.f32 %v3231, %v3133
      %v3264 = vadd.f32 %v3232, %v3138
      %v3265 = vadd.f32 %v3233, %v3143
      %v3266 = vadd.f32 %v3234, %v3148
      %v3267 = vadd.f32 %v3235, %v3153
      %v3268 = vadd.f32 %v3236, %v3158
      %v3269 = vadd.f32 %v3237, %v3163
      %v3270 = vadd.f32 %v3238, %v3168
      %v3271 = vadd.f32 %v3239, %v3173
      %v3272 = vadd.f32 %v3240, %v3178
      %v3273 = vadd.f32 %v3241, %v3183
      %v3274 = vadd.f32 %v3242, %v3188
      %v3275 = vadd.f32 %v3243, %v3193
      %v3276 = vadd.f32 %v3244, %v3198
      %v3277 = vadd.f32 %v3245, %v3203
      %v3278 = vadd.f32 %v3246, %v3208
      %v3279 = vadd.f32 %v3247, %v3213
      %3280 = vst [vmem:[#allocation2] sm:$0xff] %v3248
      %3281 = vst [vmem:[#allocation2 + $0x8] sm:$0xff] %v3249
      %3282 = vst [vmem:[#allocation2 + $0x10] sm:$0xff] %v3250
      %3283 = vst [vmem:[#allocation2 + $0x18] sm:$0xff] %v3251
      %3284 = vst [vmem:[#allocation2 + $0x20] sm:$0xff] %v3252
      %3285 = vst [vmem:[#allocation2 + $0x28] sm:$0xff] %v3253
      %3286 = vst [vmem:[#allocation2 + $0x30] sm:$0xff] %v3254
      %3287 = vst [vmem:[#allocation2 + $0x38] sm:$0xff] %v3255
      %3288 = vst [vmem:[#allocation2 + $0x40] sm:$0xff] %v3256
      %3289 = vst [vmem:[#allocation2 + $0x48] sm:$0xff] %v3257
      %3290 = vst [vmem:[#allocation2 + $0x50] sm:$0xff] %v3258
      %3291 = vst [vmem:[#allocation2 + $0x58] sm:$0xff] %v3259
      %3292 = vst [vmem:[#allocation2 + $0x60] sm:$0xff] %v3260
      %3293 = vst [vmem:[#allocation2 + $0x68] sm:$0xff] %v3261
      %3294 = vst [vmem:[#allocation2 + $0x70] sm:$0xff] %v3262
      %3295 = vst [vmem:[#allocation2 + $0x78] sm:$0xff] %v3263
      %3296 = vst [vmem:[#allocation2 + $0x80] sm:$0xff] %v3264
      %3297 = vst [vmem:[#allocation2 + $0x88] sm:$0xff] %v3265
      %3298 = vst [vmem:[#allocation2 + $0x90] sm:$0xff] %v3266
      %3299 = vst [vmem:[#allocation2 + $0x98] sm:$0xff] %v3267
      %3300 = vst [vmem:[#allocation2 + $0xa0] sm:$0xff] %v3268
      %3301 = vst [vmem:[#allocation2 + $0xa8] sm:$0xff] %v3269
      %3302 = vst [vmem:[#allocation2 + $0xb0] sm:$0xff] %v3270
      %3303 = vst [vmem:[#allocation2 + $0xb8] sm:$0xff] %v3271
      %3304 = vst [vmem:[#allocation2 + $0xc0] sm:$0xff] %v3272
      %3305 = vst [vmem:[#allocation2 + $0xc8] sm:$0xff] %v3273
      %3306 = vst [vmem:[#allocation2 + $0xd0] sm:$0xff] %v3274
      %3307 = vst [vmem:[#allocation2 + $0xd8] sm:$0xff] %v3275
      %3308 = vst [vmem:[#allocation2 + $0xe0] sm:$0xff] %v3276
      %3309 = vst [vmem:[#allocation2 + $0xe8] sm:$0xff] %v3277
      %3310 = vst [vmem:[#allocation2 + $0xf0] sm:$0xff] %v3278
      %3311 = vst [vmem:[#allocation2 + $0xf8] sm:$0xff] %v3279
      %v3312 = vld [vmem:[%s2857 + $0x1] sm:$0xff]
      %v3313 = vld [vmem:[%s2857 + $0x9] sm:$0xff]
      %v3314 = vld [vmem:[%s2857 + $0x19] sm:$0xff]
      %v3315 = vld [vmem:[%s2857 + $0x21] sm:$0xff]
      %v3316 = vld [vmem:[%s2857 + $0x31] sm:$0xff]
      %v3317 = vld [vmem:[%s2857 + $0x39] sm:$0xff]
      %v3318 = vld [vmem:[%s2857 + $0x49] sm:$0xff]
      %v3319 = vld [vmem:[%s2857 + $0x51] sm:$0xff]
      %v3320 = vld [vmem:[%s2857 + $0x61] sm:$0xff]
      %v3321 = vld [vmem:[%s2857 + $0x69] sm:$0xff]
      %v3322 = vld [vmem:[%s2857 + $0x79] sm:$0xff]
      %v3323 = vld [vmem:[%s2857 + $0x81] sm:$0xff]
      %v3324 = vld [vmem:[%s2857 + $0x91] sm:$0xff]
      %v3325 = vld [vmem:[%s2857 + $0x99] sm:$0xff]
      %v3326 = vld [vmem:[%s2857 + $0xa9] sm:$0xff]
      %v3327 = vld [vmem:[%s2857 + $0xb1] sm:$0xff]
      %v3328 = vld [vmem:[%s2857 + $0xc1] sm:$0xff]
      %v3329 = vld [vmem:[%s2857 + $0xc9] sm:$0xff]
      %v3330 = vld [vmem:[%s2857 + $0xd9] sm:$0xff]
      %v3331 = vld [vmem:[%s2857 + $0xe1] sm:$0xff]
      %v3332 = vld [vmem:[%s2857 + $0xf1] sm:$0xff]
      %v3333 = vld [vmem:[%s2857 + $0xf9] sm:$0xff]
      %v3334 = vld [vmem:[%s2857 + $0x109] sm:$0xff]
      %v3335 = vld [vmem:[%s2857 + $0x111] sm:$0xff]
      %v3336 = vld [vmem:[%s2857 + $0x121] sm:$0xff]
      %v3337 = vld [vmem:[%s2857 + $0x129] sm:$0xff]
      %v3338 = vld [vmem:[%s2857 + $0x139] sm:$0xff]
      %v3339 = vld [vmem:[%s2857 + $0x141] sm:$0xff]
      %v3340 = vld [vmem:[%s2857 + $0x151] sm:$0xff]
      %v3341 = vld [vmem:[%s2857 + $0x159] sm:$0xff]
      %v3342 = vld [vmem:[%s2857 + $0x169] sm:$0xff]
      %v3343 = vld [vmem:[%s2857 + $0x171] sm:$0xff]
      %s3344 = scalar_lea.vmem %s1, 28
      %v3345 = vld [vmem:[%s3344] sm:$0xf]
      %v3347 = vsel %vm224, %v3312, 0
      %v3350 = vsel %vm224, %v3313, 0
      %v3353 = vsel %vm224, %v3314, 0
      %v3356 = vsel %vm224, %v3315, 0
      %v3359 = vsel %vm224, %v3316, 0
      %v3362 = vsel %vm224, %v3317, 0
      %v3365 = vsel %vm224, %v3318, 0
      %v3368 = vsel %vm224, %v3319, 0
      %v3371 = vsel %vm224, %v3320, 0
      %v3374 = vsel %vm224, %v3321, 0
      %v3377 = vsel %vm224, %v3322, 0
      %v3380 = vsel %vm224, %v3323, 0
      %v3383 = vsel %vm224, %v3324, 0
      %v3386 = vsel %vm224, %v3325, 0
      %v3389 = vsel %vm224, %v3326, 0
      %v3392 = vsel %vm224, %v3327, 0
      %v3395 = vsel %vm224, %v3328, 0
      %v3398 = vsel %vm224, %v3329, 0
      %v3401 = vsel %vm224, %v3330, 0
      %v3404 = vsel %vm224, %v3331, 0
      %v3407 = vsel %vm224, %v3332, 0
      %v3410 = vsel %vm224, %v3333, 0
      %v3413 = vsel %vm224, %v3334, 0
      %v3416 = vsel %vm224, %v3335, 0
      %v3419 = vsel %vm224, %v3336, 0
      %v3422 = vsel %vm224, %v3337, 0
      %v3425 = vsel %vm224, %v3338, 0
      %v3428 = vsel %vm224, %v3339, 0
      %v3431 = vsel %vm224, %v3340, 0
      %v3434 = vsel %vm224, %v3341, 0
      %v3437 = vsel %vm224, %v3342, 0
      %v3440 = vsel %vm224, %v3343, 0
      %v3443 = vsel %vm321, %v3345, 0
      %3445 = vmatprep.subr.mxu0 0.0
      %3446 = vmatpush1.msra.mxu0 %v3443
      %3447 = vmatprep.subr.mxu0 0.0
      %3448 = vmatpush1.msra.mxu0 0.0
      %3449 = vmatprep.subr.mxu0 0.0
      %3450 = vmatpush1.msra.mxu0 0.0
      %3451 = vmatprep.subr.mxu0 0.0
      %3452 = vmatpush1.msra.mxu0 0.0
      %3453 = vmatprep.subr.mxu0 0.0
      %3454 = vmatpush1.msra.mxu0 0.0
      %3455 = vmatprep.subr.mxu0 0.0
      %3456 = vmatpush1.msra.mxu0 0.0
      %3457 = vmatprep.subr.mxu0 0.0
      %3458 = vmatpush1.msra.mxu0 0.0
      %3459 = vmatprep.subr.mxu0 0.0
      %3460 = vmatpush1.msra.mxu0 0.0
      %3461 = vmatprep.subr.mxu0 0.0
      %3462 = vmatpush1.msra.mxu0 0.0
      %3463 = vmatprep.subr.mxu0 0.0
      %3464 = vmatpush1.msra.mxu0 0.0
      %3465 = vmatprep.subr.mxu0 0.0
      %3466 = vmatpush1.msra.mxu0 0.0
      %3467 = vmatprep.subr.mxu0 0.0
      %3468 = vmatpush1.msra.mxu0 0.0
      %3469 = vmatprep.subr.mxu0 0.0
      %3470 = vmatpush1.msra.mxu0 0.0
      %3471 = vmatprep.subr.mxu0 0.0
      %3472 = vmatpush1.msra.mxu0 0.0
      %3473 = vmatprep.subr.mxu0 0.0
      %3474 = vmatpush1.msra.mxu0 0.0
      %3475 = vmatprep.subr.mxu0 0.0
      %3476 = vmatpush1.msra.mxu0 0.0
      %3477 = vmatprep.subr.mxu0 0.0
      %3478 = vmatpush1.msra.mxu0 0.0
      %3479 = vmatprep.subr.mxu0 0.0
      %3480 = vmatpush1.msra.mxu0 0.0
      %3481 = vmatprep.subr.mxu0 0.0
      %3482 = vmatpush1.msra.mxu0 0.0
      %3483 = vmatprep.subr.mxu0 0.0
      %3484 = vmatpush1.msra.mxu0 0.0
      %3485 = vmatprep.subr.mxu0 0.0
      %3486 = vmatpush1.msra.mxu0 0.0
      %3487 = vmatprep.subr.mxu0 0.0
      %3488 = vmatpush1.msra.mxu0 0.0
      %3489 = vmatprep.subr.mxu0 0.0
      %3490 = vmatpush1.msra.mxu0 0.0
      %3491 = vmatprep.subr.mxu0 0.0
      %3492 = vmatpush1.msra.mxu0 0.0
      %3493 = vmatprep.subr.mxu0 0.0
      %3494 = vmatpush1.msra.mxu0 0.0
      %3495 = vmatprep.subr.mxu0 0.0
      %3496 = vmatpush1.msra.mxu0 0.0
      %3497 = vmatprep.subr.mxu0 0.0
      %3498 = vmatpush1.msra.mxu0 0.0
      %3499 = vmatprep.subr.mxu0 0.0
      %3500 = vmatpush1.msra.mxu0 0.0
      %3501 = vmatprep.subr.mxu0 0.0
      %3502 = vmatpush1.msra.mxu0 0.0
      %3503 = vmatprep.subr.mxu0 0.0
      %3504 = vmatpush1.msra.mxu0 0.0
      %3505 = vmatprep.subr.mxu0 0.0
      %3506 = vmatpush1.msra.mxu0 0.0
      %3507 = vmatprep.subr.mxu0 0.0
      %3508 = vmatpush1.msra.mxu0 0.0
      %3509 = vmatprep.mubr.f32.mxu0 0.0
      %3510 = vmatmul.mubr.f32.gmra.mrb[0].mxu0 %v3347
      %v3511 = vpop.f32.mrb[0].mxu0
      %v3512 = vadd.f32 0.0, %v3511
      %v3513 = vpop.f32.mrb[0].mxu0
      %3514 = vmatprep.mubr.f32.mxu0 0.0
      %3515 = vmatmul.mubr.f32.gmra.mrb[0].mxu0 %v3350
      %v3516 = vpop.f32.mrb[0].mxu0
      %v3517 = vadd.f32 0.0, %v3516
      %v3518 = vpop.f32.mrb[0].mxu0
      %3519 = vmatprep.mubr.f32.mxu0 0.0
      %3520 = vmatmul.mubr.f32.gmra.mrb[0].mxu0 %v3353
      %v3521 = vpop.f32.mrb[0].mxu0
      %v3522 = vadd.f32 0.0, %v3521
      %v3523 = vpop.f32.mrb[0].mxu0
      %3524 = vmatprep.mubr.f32.mxu0 0.0
      %3525 = vmatmul.mubr.f32.gmra.mrb[0].mxu0 %v3356
      %v3526 = vpop.f32.mrb[0].mxu0
      %v3527 = vadd.f32 0.0, %v3526
      %v3528 = vpop.f32.mrb[0].mxu0
      %3529 = vmatprep.mubr.f32.mxu0 0.0
      %3530 = vmatmul.mubr.f32.gmra.mrb[0].mxu0 %v3359
      %v3531 = vpop.f32.mrb[0].mxu0
      %v3532 = vadd.f32 0.0, %v3531
      %v3533 = vpop.f32.mrb[0].mxu0
      %3534 = vmatprep.mubr.f32.mxu0 0.0
      %3535 = vmatmul.mubr.f32.gmra.mrb[0].mxu0 %v3362
      %v3536 = vpop.f32.mrb[0].mxu0
      %v3537 = vadd.f32 0.0, %v3536
      %v3538 = vpop.f32.mrb[0].mxu0
      %3539 = vmatprep.mubr.f32.mxu0 0.0
      %3540 = vmatmul.mubr.f32.gmra.mrb[0].mxu0 %v3365
      %v3541 = vpop.f32.mrb[0].mxu0
      %v3542 = vadd.f32 0.0, %v3541
      %v3543 = vpop.f32.mrb[0].mxu0
      %3544 = vmatprep.mubr.f32.mxu0 0.0
      %3545 = vmatmul.mubr.f32.gmra.mrb[0].mxu0 %v3368
      %v3546 = vpop.f32.mrb[0].mxu0
      %v3547 = vadd.f32 0.0, %v3546
      %v3548 = vpop.f32.mrb[0].mxu0
      %3549 = vmatprep.mubr.f32.mxu0 0.0
      %3550 = vmatmul.mubr.f32.gmra.mrb[0].mxu0 %v3371
      %v3551 = vpop.f32.mrb[0].mxu0
      %v3552 = vadd.f32 0.0, %v3551
      %v3553 = vpop.f32.mrb[0].mxu0
      %3554 = vmatprep.mubr.f32.mxu0 0.0
      %3555 = vmatmul.mubr.f32.gmra.mrb[0].mxu0 %v3374
      %v3556 = vpop.f32.mrb[0].mxu0
      %v3557 = vadd.f32 0.0, %v3556
      %v3558 = vpop.f32.mrb[0].mxu0
      %3559 = vmatprep.mubr.f32.mxu0 0.0
      %3560 = vmatmul.mubr.f32.gmra.mrb[0].mxu0 %v3377
      %v3561 = vpop.f32.mrb[0].mxu0
      %v3562 = vadd.f32 0.0, %v3561
      %v3563 = vpop.f32.mrb[0].mxu0
      %3564 = vmatprep.mubr.f32.mxu0 0.0
      %3565 = vmatmul.mubr.f32.gmra.mrb[0].mxu0 %v3380
      %v3566 = vpop.f32.mrb[0].mxu0
      %v3567 = vadd.f32 0.0, %v3566
      %v3568 = vpop.f32.mrb[0].mxu0
      %3569 = vmatprep.mubr.f32.mxu0 0.0
      %3570 = vmatmul.mubr.f32.gmra.mrb[0].mxu0 %v3383
      %v3571 = vpop.f32.mrb[0].mxu0
      %v3572 = vadd.f32 0.0, %v3571
      %v3573 = vpop.f32.mrb[0].mxu0
      %3574 = vmatprep.mubr.f32.mxu0 0.0
      %3575 = vmatmul.mubr.f32.gmra.mrb[0].mxu0 %v3386
      %v3576 = vpop.f32.mrb[0].mxu0
      %v3577 = vadd.f32 0.0, %v3576
      %v3578 = vpop.f32.mrb[0].mxu0
      %3579 = vmatprep.mubr.f32.mxu0 0.0
      %3580 = vmatmul.mubr.f32.gmra.mrb[0].mxu0 %v3389
      %v3581 = vpop.f32.mrb[0].mxu0
      %v3582 = vadd.f32 0.0, %v3581
      %v3583 = vpop.f32.mrb[0].mxu0
      %3584 = vmatprep.mubr.f32.mxu0 0.0
      %3585 = vmatmul.mubr.f32.gmra.mrb[0].mxu0 %v3392
      %v3586 = vpop.f32.mrb[0].mxu0
      %v3587 = vadd.f32 0.0, %v3586
      %v3588 = vpop.f32.mrb[0].mxu0
      %3589 = vmatprep.mubr.f32.mxu0 0.0
      %3590 = vmatmul.mubr.f32.gmra.mrb[0].mxu0 %v3395
      %v3591 = vpop.f32.mrb[0].mxu0
      %v3592 = vadd.f32 0.0, %v3591
      %v3593 = vpop.f32.mrb[0].mxu0
      %3594 = vmatprep.mubr.f32.mxu0 0.0
      %3595 = vmatmul.mubr.f32.gmra.mrb[0].mxu0 %v3398
      %v3596 = vpop.f32.mrb[0].mxu0
      %v3597 = vadd.f32 0.0, %v3596
      %v3598 = vpop.f32.mrb[0].mxu0
      %3599 = vmatprep.mubr.f32.mxu0 0.0
      %3600 = vmatmul.mubr.f32.gmra.mrb[0].mxu0 %v3401
      %v3601 = vpop.f32.mrb[0].mxu0
      %v3602 = vadd.f32 0.0, %v3601
      %v3603 = vpop.f32.mrb[0].mxu0
      %3604 = vmatprep.mubr.f32.mxu0 0.0
      %3605 = vmatmul.mubr.f32.gmra.mrb[0].mxu0 %v3404
      %v3606 = vpop.f32.mrb[0].mxu0
      %v3607 = vadd.f32 0.0, %v3606
      %v3608 = vpop.f32.mrb[0].mxu0
      %3609 = vmatprep.mubr.f32.mxu0 0.0
      %3610 = vmatmul.mubr.f32.gmra.mrb[0].mxu0 %v3407
      %v3611 = vpop.f32.mrb[0].mxu0
      %v3612 = vadd.f32 0.0, %v3611
      %v3613 = vpop.f32.mrb[0].mxu0
      %3614 = vmatprep.mubr.f32.mxu0 0.0
      %3615 = vmatmul.mubr.f32.gmra.mrb[0].mxu0 %v3410
      %v3616 = vpop.f32.mrb[0].mxu0
      %v3617 = vadd.f32 0.0, %v3616
      %v3618 = vpop.f32.mrb[0].mxu0
      %3619 = vmatprep.mubr.f32.mxu0 0.0
      %3620 = vmatmul.mubr.f32.gmra.mrb[0].mxu0 %v3413
      %v3621 = vpop.f32.mrb[0].mxu0
      %v3622 = vadd.f32 0.0, %v3621
      %v3623 = vpop.f32.mrb[0].mxu0
      %3624 = vmatprep.mubr.f32.mxu0 0.0
      %3625 = vmatmul.mubr.f32.gmra.mrb[0].mxu0 %v3416
      %v3626 = vpop.f32.mrb[0].mxu0
      %v3627 = vadd.f32 0.0, %v3626
      %v3628 = vpop.f32.mrb[0].mxu0
      %3629 = vmatprep.mubr.f32.mxu0 0.0
      %3630 = vmatmul.mubr.f32.gmra.mrb[0].mxu0 %v3419
      %v3631 = vpop.f32.mrb[0].mxu0
      %v3632 = vadd.f32 0.0, %v3631
      %v3633 = vpop.f32.mrb[0].mxu0
      %3634 = vmatprep.mubr.f32.mxu0 0.0
      %3635 = vmatmul.mubr.f32.gmra.mrb[0].mxu0 %v3422
      %v3636 = vpop.f32.mrb[0].mxu0
      %v3637 = vadd.f32 0.0, %v3636
      %v3638 = vpop.f32.mrb[0].mxu0
      %3639 = vmatprep.mubr.f32.mxu0 0.0
      %3640 = vmatmul.mubr.f32.gmra.mrb[0].mxu0 %v3425
      %v3641 = vpop.f32.mrb[0].mxu0
      %v3642 = vadd.f32 0.0, %v3641
      %v3643 = vpop.f32.mrb[0].mxu0
      %3644 = vmatprep.mubr.f32.mxu0 0.0
      %3645 = vmatmul.mubr.f32.gmra.mrb[0].mxu0 %v3428
      %v3646 = vpop.f32.mrb[0].mxu0
      %v3647 = vadd.f32 0.0, %v3646
      %v3648 = vpop.f32.mrb[0].mxu0
      %3649 = vmatprep.mubr.f32.mxu0 0.0
      %3650 = vmatmul.mubr.f32.gmra.mrb[0].mxu0 %v3431
      %v3651 = vpop.f32.mrb[0].mxu0
      %v3652 = vadd.f32 0.0, %v3651
      %v3653 = vpop.f32.mrb[0].mxu0
      %3654 = vmatprep.mubr.f32.mxu0 0.0
      %3655 = vmatmul.mubr.f32.gmra.mrb[0].mxu0 %v3434
      %v3656 = vpop.f32.mrb[0].mxu0
      %v3657 = vadd.f32 0.0, %v3656
      %v3658 = vpop.f32.mrb[0].mxu0
      %3659 = vmatprep.mubr.f32.mxu0 0.0
      %3660 = vmatmul.mubr.f32.gmra.mrb[0].mxu0 %v3437
      %v3661 = vpop.f32.mrb[0].mxu0
      %v3662 = vadd.f32 0.0, %v3661
      %v3663 = vpop.f32.mrb[0].mxu0
      %3664 = vmatprep.mubr.f32.mxu0 0.0
      %3665 = vmatmul.mubr.f32.gmra.mrb[0].mxu0 %v3440
      %v3666 = vpop.f32.mrb[0].mxu0
      %v3667 = vadd.f32 0.0, %v3666
      %v3668 = vpop.f32.mrb[0].mxu0
      %3669 = vdwg.mxu0
      %v3670 = vld [vmem:[#allocation2] sm:$0xff]
      %v3671 = vld [vmem:[#allocation2 + $0x8] sm:$0xff]
      %v3672 = vld [vmem:[#allocation2 + $0x10] sm:$0xff]
      %v3673 = vld [vmem:[#allocation2 + $0x18] sm:$0xff]
      %v3674 = vld [vmem:[#allocation2 + $0x20] sm:$0xff]
      %v3675 = vld [vmem:[#allocation2 + $0x28] sm:$0xff]
      %v3676 = vld [vmem:[#allocation2 + $0x30] sm:$0xff]
      %v3677 = vld [vmem:[#allocation2 + $0x38] sm:$0xff]
      %v3678 = vld [vmem:[#allocation2 + $0x40] sm:$0xff]
      %v3679 = vld [vmem:[#allocation2 + $0x48] sm:$0xff]
      %v3680 = vld [vmem:[#allocation2 + $0x50] sm:$0xff]
      %v3681 = vld [vmem:[#allocation2 + $0x58] sm:$0xff]
      %v3682 = vld [vmem:[#allocation2 + $0x60] sm:$0xff]
      %v3683 = vld [vmem:[#allocation2 + $0x68] sm:$0xff]
      %v3684 = vld [vmem:[#allocation2 + $0x70] sm:$0xff]
      %v3685 = vld [vmem:[#allocation2 + $0x78] sm:$0xff]
      %v3686 = vld [vmem:[#allocation2 + $0x80] sm:$0xff]
      %v3687 = vld [vmem:[#allocation2 + $0x88] sm:$0xff]
      %v3688 = vld [vmem:[#allocation2 + $0x90] sm:$0xff]
      %v3689 = vld [vmem:[#allocation2 + $0x98] sm:$0xff]
      %v3690 = vld [vmem:[#allocation2 + $0xa0] sm:$0xff]
      %v3691 = vld [vmem:[#allocation2 + $0xa8] sm:$0xff]
      %v3692 = vld [vmem:[#allocation2 + $0xb0] sm:$0xff]
      %v3693 = vld [vmem:[#allocation2 + $0xb8] sm:$0xff]
      %v3694 = vld [vmem:[#allocation2 + $0xc0] sm:$0xff]
      %v3695 = vld [vmem:[#allocation2 + $0xc8] sm:$0xff]
      %v3696 = vld [vmem:[#allocation2 + $0xd0] sm:$0xff]
      %v3697 = vld [vmem:[#allocation2 + $0xd8] sm:$0xff]
      %v3698 = vld [vmem:[#allocation2 + $0xe0] sm:$0xff]
      %v3699 = vld [vmem:[#allocation2 + $0xe8] sm:$0xff]
      %v3700 = vld [vmem:[#allocation2 + $0xf0] sm:$0xff]
      %v3701 = vld [vmem:[#allocation2 + $0xf8] sm:$0xff]
      %v3702 = vadd.f32 %v3670, %v3512
      %v3703 = vadd.f32 %v3671, %v3517
      %v3704 = vadd.f32 %v3672, %v3522
      %v3705 = vadd.f32 %v3673, %v3527
      %v3706 = vadd.f32 %v3674, %v3532
      %v3707 = vadd.f32 %v3675, %v3537
      %v3708 = vadd.f32 %v3676, %v3542
      %v3709 = vadd.f32 %v3677, %v3547
      %v3710 = vadd.f32 %v3678, %v3552
      %v3711 = vadd.f32 %v3679, %v3557
      %v3712 = vadd.f32 %v3680, %v3562
      %v3713 = vadd.f32 %v3681, %v3567
      %v3714 = vadd.f32 %v3682, %v3572
      %v3715 = vadd.f32 %v3683, %v3577
      %v3716 = vadd.f32 %v3684, %v3582
      %v3717 = vadd.f32 %v3685, %v3587
      %v3718 = vadd.f32 %v3686, %v3592
      %v3719 = vadd.f32 %v3687, %v3597
      %v3720 = vadd.f32 %v3688, %v3602
      %v3721 = vadd.f32 %v3689, %v3607
      %v3722 = vadd.f32 %v3690, %v3612
      %v3723 = vadd.f32 %v3691, %v3617
      %v3724 = vadd.f32 %v3692, %v3622
      %v3725 = vadd.f32 %v3693, %v3627
      %v3726 = vadd.f32 %v3694, %v3632
      %v3727 = vadd.f32 %v3695, %v3637
      %v3728 = vadd.f32 %v3696, %v3642
      %v3729 = vadd.f32 %v3697, %v3647
      %v3730 = vadd.f32 %v3698, %v3652
      %v3731 = vadd.f32 %v3699, %v3657
      %v3732 = vadd.f32 %v3700, %v3662
      %v3733 = vadd.f32 %v3701, %v3667
      %3734 = vst [vmem:[#allocation2] sm:$0xff] %v3702
      %3735 = vst [vmem:[#allocation2 + $0x8] sm:$0xff] %v3703
      %3736 = vst [vmem:[#allocation2 + $0x10] sm:$0xff] %v3704
      %3737 = vst [vmem:[#allocation2 + $0x18] sm:$0xff] %v3705
      %3738 = vst [vmem:[#allocation2 + $0x20] sm:$0xff] %v3706
      %3739 = vst [vmem:[#allocation2 + $0x28] sm:$0xff] %v3707
      %3740 = vst [vmem:[#allocation2 + $0x30] sm:$0xff] %v3708
      %3741 = vst [vmem:[#allocation2 + $0x38] sm:$0xff] %v3709
      %3742 = vst [vmem:[#allocation2 + $0x40] sm:$0xff] %v3710
      %3743 = vst [vmem:[#allocation2 + $0x48] sm:$0xff] %v3711
      %3744 = vst [vmem:[#allocation2 + $0x50] sm:$0xff] %v3712
      %3745 = vst [vmem:[#allocation2 + $0x58] sm:$0xff] %v3713
      %3746 = vst [vmem:[#allocation2 + $0x60] sm:$0xff] %v3714
      %3747 = vst [vmem:[#allocation2 + $0x68] sm:$0xff] %v3715
      %3748 = vst [vmem:[#allocation2 + $0x70] sm:$0xff] %v3716
      %3749 = vst [vmem:[#allocation2 + $0x78] sm:$0xff] %v3717
      %3750 = vst [vmem:[#allocation2 + $0x80] sm:$0xff] %v3718
      %3751 = vst [vmem:[#allocation2 + $0x88] sm:$0xff] %v3719
      %3752 = vst [vmem:[#allocation2 + $0x90] sm:$0xff] %v3720
      %3753 = vst [vmem:[#allocation2 + $0x98] sm:$0xff] %v3721
      %3754 = vst [vmem:[#allocation2 + $0xa0] sm:$0xff] %v3722
      %3755 = vst [vmem:[#allocation2 + $0xa8] sm:$0xff] %v3723
      %3756 = vst [vmem:[#allocation2 + $0xb0] sm:$0xff] %v3724
      %3757 = vst [vmem:[#allocation2 + $0xb8] sm:$0xff] %v3725
      %3758 = vst [vmem:[#allocation2 + $0xc0] sm:$0xff] %v3726
      %3759 = vst [vmem:[#allocation2 + $0xc8] sm:$0xff] %v3727
      %3760 = vst [vmem:[#allocation2 + $0xd0] sm:$0xff] %v3728
      %3761 = vst [vmem:[#allocation2 + $0xd8] sm:$0xff] %v3729
      %3762 = vst [vmem:[#allocation2 + $0xe0] sm:$0xff] %v3730
      %3763 = vst [vmem:[#allocation2 + $0xe8] sm:$0xff] %v3731
      %3764 = vst [vmem:[#allocation2 + $0xf0] sm:$0xff] %v3732
      %3765 = vst [vmem:[#allocation2 + $0xf8] sm:$0xff] %v3733
      %v3766 = vld [vmem:[%s2857 + $0x2] sm:$0xff]
      %v3767 = vld [vmem:[%s2857 + $0xa] sm:$0xff]
      %v3768 = vld [vmem:[%s2857 + $0x1a] sm:$0xff]
      %v3769 = vld [vmem:[%s2857 + $0x22] sm:$0xff]
      %v3770 = vld [vmem:[%s2857 + $0x32] sm:$0xff]
      %v3771 = vld [vmem:[%s2857 + $0x3a] sm:$0xff]
      %v3772 = vld [vmem:[%s2857 + $0x4a] sm:$0xff]
      %v3773 = vld [vmem:[%s2857 + $0x52] sm:$0xff]
      %v3774 = vld [vmem:[%s2857 + $0x62] sm:$0xff]
      %v3775 = vld [vmem:[%s2857 + $0x6a] sm:$0xff]
      %v3776 = vld [vmem:[%s2857 + $0x7a] sm:$0xff]
      %v3777 = vld [vmem:[%s2857 + $0x82] sm:$0xff]
      %v3778 = vld [vmem:[%s2857 + $0x92] sm:$0xff]
      %v3779 = vld [vmem:[%s2857 + $0x9a] sm:$0xff]
      %v3780 = vld [vmem:[%s2857 + $0xaa] sm:$0xff]
      %v3781 = vld [vmem:[%s2857 + $0xb2] sm:$0xff]
      %v3782 = vld [vmem:[%s2857 + $0xc2] sm:$0xff]
      %v3783 = vld [vmem:[%s2857 + $0xca] sm:$0xff]
      %v3784 = vld [vmem:[%s2857 + $0xda] sm:$0xff]
      %v3785 = vld [vmem:[%s2857 + $0xe2] sm:$0xff]
      %v3786 = vld [vmem:[%s2857 + $0xf2] sm:$0xff]
      %v3787 = vld [vmem:[%s2857 + $0xfa] sm:$0xff]
      %v3788 = vld [vmem:[%s2857 + $0x10a] sm:$0xff]
      %v3789 = vld [vmem:[%s2857 + $0x112] sm:$0xff]
      %v3790 = vld [vmem:[%s2857 + $0x122] sm:$0xff]
      %v3791 = vld [vmem:[%s2857 + $0x12a] sm:$0xff]
      %v3792 = vld [vmem:[%s2857 + $0x13a] sm:$0xff]
      %v3793 = vld [vmem:[%s2857 + $0x142] sm:$0xff]
      %v3794 = vld [vmem:[%s2857 + $0x152] sm:$0xff]
      %v3795 = vld [vmem:[%s2857 + $0x15a] sm:$0xff]
      %v3796 = vld [vmem:[%s2857 + $0x16a] sm:$0xff]
      %v3797 = vld [vmem:[%s2857 + $0x172] sm:$0xff]
      %s3798 = scalar_lea.vmem %s1, 32
      %v3799 = vld [vmem:[%s3798] sm:$0xf]
      %v3801 = vsel %vm224, %v3766, 0
      %v3804 = vsel %vm224, %v3767, 0
      %v3807 = vsel %vm224, %v3768, 0
      %v3810 = vsel %vm224, %v3769, 0
      %v3813 = vsel %vm224, %v3770, 0
      %v3816 = vsel %vm224, %v3771, 0
      %v3819 = vsel %vm224, %v3772, 0
      %v3822 = vsel %vm224, %v3773, 0
      %v3825 = vsel %vm224, %v3774, 0
      %v3828 = vsel %vm224, %v3775, 0
      %v3831 = vsel %vm224, %v3776, 0
      %v3834 = vsel %vm224, %v3777, 0
      %v3837 = vsel %vm224, %v3778, 0
      %v3840 = vsel %vm224, %v3779, 0
      %v3843 = vsel %vm224, %v3780, 0
      %v3846 = vsel %vm224, %v3781, 0
      %v3849 = vsel %vm224, %v3782, 0
      %v3852 = vsel %vm224, %v3783, 0
      %v3855 = vsel %vm224, %v3784, 0
      %v3858 = vsel %vm224, %v3785, 0
      %v3861 = vsel %vm224, %v3786, 0
      %v3864 = vsel %vm224, %v3787, 0
      %v3867 = vsel %vm224, %v3788, 0
      %v3870 = vsel %vm224, %v3789, 0
      %v3873 = vsel %vm224, %v3790, 0
      %v3876 = vsel %vm224, %v3791, 0
      %v3879 = vsel %vm224, %v3792, 0
      %v3882 = vsel %vm224, %v3793, 0
      %v3885 = vsel %vm224, %v3794, 0
      %v3888 = vsel %vm224, %v3795, 0
      %v3891 = vsel %vm224, %v3796, 0
      %v3894 = vsel %vm224, %v3797, 0
      %v3897 = vsel %vm321, %v3799, 0
      %3899 = vmatprep.subr.mxu0 0.0
      %3900 = vmatpush1.msra.mxu0 %v3897
      %3901 = vmatprep.subr.mxu0 0.0
      %3902 = vmatpush1.msra.mxu0 0.0
      %3903 = vmatprep.subr.mxu0 0.0
      %3904 = vmatpush1.msra.mxu0 0.0
      %3905 = vmatprep.subr.mxu0 0.0
      %3906 = vmatpush1.msra.mxu0 0.0
      %3907 = vmatprep.subr.mxu0 0.0
      %3908 = vmatpush1.msra.mxu0 0.0
      %3909 = vmatprep.subr.mxu0 0.0
      %3910 = vmatpush1.msra.mxu0 0.0
      %3911 = vmatprep.subr.mxu0 0.0
      %3912 = vmatpush1.msra.mxu0 0.0
      %3913 = vmatprep.subr.mxu0 0.0
      %3914 = vmatpush1.msra.mxu0 0.0
      %3915 = vmatprep.subr.mxu0 0.0
      %3916 = vmatpush1.msra.mxu0 0.0
      %3917 = vmatprep.subr.mxu0 0.0
      %3918 = vmatpush1.msra.mxu0 0.0
      %3919 = vmatprep.subr.mxu0 0.0
      %3920 = vmatpush1.msra.mxu0 0.0
      %3921 = vmatprep.subr.mxu0 0.0
      %3922 = vmatpush1.msra.mxu0 0.0
      %3923 = vmatprep.subr.mxu0 0.0
      %3924 = vmatpush1.msra.mxu0 0.0
      %3925 = vmatprep.subr.mxu0 0.0
      %3926 = vmatpush1.msra.mxu0 0.0
      %3927 = vmatprep.subr.mxu0 0.0
      %3928 = vmatpush1.msra.mxu0 0.0
      %3929 = vmatprep.subr.mxu0 0.0
      %3930 = vmatpush1.msra.mxu0 0.0
      %3931 = vmatprep.subr.mxu0 0.0
      %3932 = vmatpush1.msra.mxu0 0.0
      %3933 = vmatprep.subr.mxu0 0.0
      %3934 = vmatpush1.msra.mxu0 0.0
      %3935 = vmatprep.subr.mxu0 0.0
      %3936 = vmatpush1.msra.mxu0 0.0
      %3937 = vmatprep.subr.mxu0 0.0
      %3938 = vmatpush1.msra.mxu0 0.0
      %3939 = vmatprep.subr.mxu0 0.0
      %3940 = vmatpush1.msra.mxu0 0.0
      %3941 = vmatprep.subr.mxu0 0.0
      %3942 = vmatpush1.msra.mxu0 0.0
      %3943 = vmatprep.subr.mxu0 0.0
      %3944 = vmatpush1.msra.mxu0 0.0
      %3945 = vmatprep.subr.mxu0 0.0
      %3946 = vmatpush1.msra.mxu0 0.0
      %3947 = vmatprep.subr.mxu0 0.0
      %3948 = vmatpush1.msra.mxu0 0.0
      %3949 = vmatprep.subr.mxu0 0.0
      %3950 = vmatpush1.msra.mxu0 0.0
      %3951 = vmatprep.subr.mxu0 0.0
      %3952 = vmatpush1.msra.mxu0 0.0
      %3953 = vmatprep.subr.mxu0 0.0
      %3954 = vmatpush1.msra.mxu0 0.0
      %3955 = vmatprep.subr.mxu0 0.0
      %3956 = vmatpush1.msra.mxu0 0.0
      %3957 = vmatprep.subr.mxu0 0.0
      %3958 = vmatpush1.msra.mxu0 0.0
      %3959 = vmatprep.subr.mxu0 0.0
      %3960 = vmatpush1.msra.mxu0 0.0
      %3961 = vmatprep.subr.mxu0 0.0
      %3962 = vmatpush1.msra.mxu0 0.0
      %3963 = vmatprep.mubr.f32.mxu0 0.0
      %3964 = vmatmul.mubr.f32.gmra.mrb[0].mxu0 %v3801
      %v3965 = vpop.f32.mrb[0].mxu0
      %v3966 = vadd.f32 0.0, %v3965
      %v3967 = vpop.f32.mrb[0].mxu0
      %3968 = vmatprep.mubr.f32.mxu0 0.0
      %3969 = vmatmul.mubr.f32.gmra.mrb[0].mxu0 %v3804
      %v3970 = vpop.f32.mrb[0].mxu0
      %v3971 = vadd.f32 0.0, %v3970
      %v3972 = vpop.f32.mrb[0].mxu0
      %3973 = vmatprep.mubr.f32.mxu0 0.0
      %3974 = vmatmul.mubr.f32.gmra.mrb[0].mxu0 %v3807
      %v3975 = vpop.f32.mrb[0].mxu0
      %v3976 = vadd.f32 0.0, %v3975
      %v3977 = vpop.f32.mrb[0].mxu0
      %3978 = vmatprep.mubr.f32.mxu0 0.0
      %3979 = vmatmul.mubr.f32.gmra.mrb[0].mxu0 %v3810
      %v3980 = vpop.f32.mrb[0].mxu0
      %v3981 = vadd.f32 0.0, %v3980
      %v3982 = vpop.f32.mrb[0].mxu0
      %3983 = vmatprep.mubr.f32.mxu0 0.0
      %3984 = vmatmul.mubr.f32.gmra.mrb[0].mxu0 %v3813
      %v3985 = vpop.f32.mrb[0].mxu0
      %v3986 = vadd.f32 0.0, %v3985
      %v3987 = vpop.f32.mrb[0].mxu0
      %3988 = vmatprep.mubr.f32.mxu0 0.0
      %3989 = vmatmul.mubr.f32.gmra.mrb[0].mxu0 %v3816
      %v3990 = vpop.f32.mrb[0].mxu0
      %v3991 = vadd.f32 0.0, %v3990
      %v3992 = vpop.f32.mrb[0].mxu0
      %3993 = vmatprep.mubr.f32.mxu0 0.0
      %3994 = vmatmul.mubr.f32.gmra.mrb[0].mxu0 %v3819
      %v3995 = vpop.f32.mrb[0].mxu0
      %v3996 = vadd.f32 0.0, %v3995
      %v3997 = vpop.f32.mrb[0].mxu0
      %3998 = vmatprep.mubr.f32.mxu0 0.0
      %3999 = vmatmul.mubr.f32.gmra.mrb[0].mxu0 %v3822
      %v4000 = vpop.f32.mrb[0].mxu0
      %v4001 = vadd.f32 0.0, %v4000
      %v4002 = vpop.f32.mrb[0].mxu0
      %4003 = vmatprep.mubr.f32.mxu0 0.0
      %4004 = vmatmul.mubr.f32.gmra.mrb[0].mxu0 %v3825
      %v4005 = vpop.f32.mrb[0].mxu0
      %v4006 = vadd.f32 0.0, %v4005
      %v4007 = vpop.f32.mrb[0].mxu0
      %4008 = vmatprep.mubr.f32.mxu0 0.0
      %4009 = vmatmul.mubr.f32.gmra.mrb[0].mxu0 %v3828
      %v4010 = vpop.f32.mrb[0].mxu0
      %v4011 = vadd.f32 0.0, %v4010
      %v4012 = vpop.f32.mrb[0].mxu0
      %4013 = vmatprep.mubr.f32.mxu0 0.0
      %4014 = vmatmul.mubr.f32.gmra.mrb[0].mxu0 %v3831
      %v4015 = vpop.f32.mrb[0].mxu0
      %v4016 = vadd.f32 0.0, %v4015
      %v4017 = vpop.f32.mrb[0].mxu0
      %4018 = vmatprep.mubr.f32.mxu0 0.0
      %4019 = vmatmul.mubr.f32.gmra.mrb[0].mxu0 %v3834
      %v4020 = vpop.f32.mrb[0].mxu0
      %v4021 = vadd.f32 0.0, %v4020
      %v4022 = vpop.f32.mrb[0].mxu0
      %4023 = vmatprep.mubr.f32.mxu0 0.0
      %4024 = vmatmul.mubr.f32.gmra.mrb[0].mxu0 %v3837
      %v4025 = vpop.f32.mrb[0].mxu0
      %v4026 = vadd.f32 0.0, %v4025
      %v4027 = vpop.f32.mrb[0].mxu0
      %4028 = vmatprep.mubr.f32.mxu0 0.0
      %4029 = vmatmul.mubr.f32.gmra.mrb[0].mxu0 %v3840
      %v4030 = vpop.f32.mrb[0].mxu0
      %v4031 = vadd.f32 0.0, %v4030
      %v4032 = vpop.f32.mrb[0].mxu0
      %4033 = vmatprep.mubr.f32.mxu0 0.0
      %4034 = vmatmul.mubr.f32.gmra.mrb[0].mxu0 %v3843
      %v4035 = vpop.f32.mrb[0].mxu0
      %v4036 = vadd.f32 0.0, %v4035
      %v4037 = vpop.f32.mrb[0].mxu0
      %4038 = vmatprep.mubr.f32.mxu0 0.0
      %4039 = vmatmul.mubr.f32.gmra.mrb[0].mxu0 %v3846
      %v4040 = vpop.f32.mrb[0].mxu0
      %v4041 = vadd.f32 0.0, %v4040
      %v4042 = vpop.f32.mrb[0].mxu0
      %4043 = vmatprep.mubr.f32.mxu0 0.0
      %4044 = vmatmul.mubr.f32.gmra.mrb[0].mxu0 %v3849
      %v4045 = vpop.f32.mrb[0].mxu0
      %v4046 = vadd.f32 0.0, %v4045
      %v4047 = vpop.f32.mrb[0].mxu0
      %4048 = vmatprep.mubr.f32.mxu0 0.0
      %4049 = vmatmul.mubr.f32.gmra.mrb[0].mxu0 %v3852
      %v4050 = vpop.f32.mrb[0].mxu0
      %v4051 = vadd.f32 0.0, %v4050
      %v4052 = vpop.f32.mrb[0].mxu0
      %4053 = vmatprep.mubr.f32.mxu0 0.0
      %4054 = vmatmul.mubr.f32.gmra.mrb[0].mxu0 %v3855
      %v4055 = vpop.f32.mrb[0].mxu0
      %v4056 = vadd.f32 0.0, %v4055
      %v4057 = vpop.f32.mrb[0].mxu0
      %4058 = vmatprep.mubr.f32.mxu0 0.0
      %4059 = vmatmul.mubr.f32.gmra.mrb[0].mxu0 %v3858
      %v4060 = vpop.f32.mrb[0].mxu0
      %v4061 = vadd.f32 0.0, %v4060
      %v4062 = vpop.f32.mrb[0].mxu0
      %4063 = vmatprep.mubr.f32.mxu0 0.0
      %4064 = vmatmul.mubr.f32.gmra.mrb[0].mxu0 %v3861
      %v4065 = vpop.f32.mrb[0].mxu0
      %v4066 = vadd.f32 0.0, %v4065
      %v4067 = vpop.f32.mrb[0].mxu0
      %4068 = vmatprep.mubr.f32.mxu0 0.0
      %4069 = vmatmul.mubr.f32.gmra.mrb[0].mxu0 %v3864
      %v4070 = vpop.f32.mrb[0].mxu0
      %v4071 = vadd.f32 0.0, %v4070
      %v4072 = vpop.f32.mrb[0].mxu0
      %4073 = vmatprep.mubr.f32.mxu0 0.0
      %4074 = vmatmul.mubr.f32.gmra.mrb[0].mxu0 %v3867
      %v4075 = vpop.f32.mrb[0].mxu0
      %v4076 = vadd.f32 0.0, %v4075
      %v4077 = vpop.f32.mrb[0].mxu0
      %4078 = vmatprep.mubr.f32.mxu0 0.0
      %4079 = vmatmul.mubr.f32.gmra.mrb[0].mxu0 %v3870
      %v4080 = vpop.f32.mrb[0].mxu0
      %v4081 = vadd.f32 0.0, %v4080
      %v4082 = vpop.f32.mrb[0].mxu0
      %4083 = vmatprep.mubr.f32.mxu0 0.0
      %4084 = vmatmul.mubr.f32.gmra.mrb[0].mxu0 %v3873
      %v4085 = vpop.f32.mrb[0].mxu0
      %v4086 = vadd.f32 0.0, %v4085
      %v4087 = vpop.f32.mrb[0].mxu0
      %4088 = vmatprep.mubr.f32.mxu0 0.0
      %4089 = vmatmul.mubr.f32.gmra.mrb[0].mxu0 %v3876
      %v4090 = vpop.f32.mrb[0].mxu0
      %v4091 = vadd.f32 0.0, %v4090
      %v4092 = vpop.f32.mrb[0].mxu0
      %4093 = vmatprep.mubr.f32.mxu0 0.0
      %4094 = vmatmul.mubr.f32.gmra.mrb[0].mxu0 %v3879
      %v4095 = vpop.f32.mrb[0].mxu0
      %v4096 = vadd.f32 0.0, %v4095
      %v4097 = vpop.f32.mrb[0].mxu0
      %4098 = vmatprep.mubr.f32.mxu0 0.0
      %4099 = vmatmul.mubr.f32.gmra.mrb[0].mxu0 %v3882
      %v4100 = vpop.f32.mrb[0].mxu0
      %v4101 = vadd.f32 0.0, %v4100
      %v4102 = vpop.f32.mrb[0].mxu0
      %4103 = vmatprep.mubr.f32.mxu0 0.0
      %4104 = vmatmul.mubr.f32.gmra.mrb[0].mxu0 %v3885
      %v4105 = vpop.f32.mrb[0].mxu0
      %v4106 = vadd.f32 0.0, %v4105
      %v4107 = vpop.f32.mrb[0].mxu0
      %4108 = vmatprep.mubr.f32.mxu0 0.0
      %4109 = vmatmul.mubr.f32.gmra.mrb[0].mxu0 %v3888
      %v4110 = vpop.f32.mrb[0].mxu0
      %v4111 = vadd.f32 0.0, %v4110
      %v4112 = vpop.f32.mrb[0].mxu0
      %4113 = vmatprep.mubr.f32.mxu0 0.0
      %4114 = vmatmul.mubr.f32.gmra.mrb[0].mxu0 %v3891
      %v4115 = vpop.f32.mrb[0].mxu0
      %v4116 = vadd.f32 0.0, %v4115
      %v4117 = vpop.f32.mrb[0].mxu0
      %4118 = vmatprep.mubr.f32.mxu0 0.0
      %4119 = vmatmul.mubr.f32.gmra.mrb[0].mxu0 %v3894
      %v4120 = vpop.f32.mrb[0].mxu0
      %v4121 = vadd.f32 0.0, %v4120
      %v4122 = vpop.f32.mrb[0].mxu0
      %4123 = vdwg.mxu0
      %v4124 = vld [vmem:[#allocation2] sm:$0xff]
      %v4125 = vld [vmem:[#allocation2 + $0x8] sm:$0xff]
      %v4126 = vld [vmem:[#allocation2 + $0x10] sm:$0xff]
      %v4127 = vld [vmem:[#allocation2 + $0x18] sm:$0xff]
      %v4128 = vld [vmem:[#allocation2 + $0x20] sm:$0xff]
      %v4129 = vld [vmem:[#allocation2 + $0x28] sm:$0xff]
      %v4130 = vld [vmem:[#allocation2 + $0x30] sm:$0xff]
      %v4131 = vld [vmem:[#allocation2 + $0x38] sm:$0xff]
      %v4132 = vld [vmem:[#allocation2 + $0x40] sm:$0xff]
      %v4133 = vld [vmem:[#allocation2 + $0x48] sm:$0xff]
      %v4134 = vld [vmem:[#allocation2 + $0x50] sm:$0xff]
      %v4135 = vld [vmem:[#allocation2 + $0x58] sm:$0xff]
      %v4136 = vld [vmem:[#allocation2 + $0x60] sm:$0xff]
      %v4137 = vld [vmem:[#allocation2 + $0x68] sm:$0xff]
      %v4138 = vld [vmem:[#allocation2 + $0x70] sm:$0xff]
      %v4139 = vld [vmem:[#allocation2 + $0x78] sm:$0xff]
      %v4140 = vld [vmem:[#allocation2 + $0x80] sm:$0xff]
      %v4141 = vld [vmem:[#allocation2 + $0x88] sm:$0xff]
      %v4142 = vld [vmem:[#allocation2 + $0x90] sm:$0xff]
      %v4143 = vld [vmem:[#allocation2 + $0x98] sm:$0xff]
      %v4144 = vld [vmem:[#allocation2 + $0xa0] sm:$0xff]
      %v4145 = vld [vmem:[#allocation2 + $0xa8] sm:$0xff]
      %v4146 = vld [vmem:[#allocation2 + $0xb0] sm:$0xff]
      %v4147 = vld [vmem:[#allocation2 + $0xb8] sm:$0xff]
      %v4148 = vld [vmem:[#allocation2 + $0xc0] sm:$0xff]
      %v4149 = vld [vmem:[#allocation2 + $0xc8] sm:$0xff]
      %v4150 = vld [vmem:[#allocation2 + $0xd0] sm:$0xff]
      %v4151 = vld [vmem:[#allocation2 + $0xd8] sm:$0xff]
      %v4152 = vld [vmem:[#allocation2 + $0xe0] sm:$0xff]
      %v4153 = vld [vmem:[#allocation2 + $0xe8] sm:$0xff]
      %v4154 = vld [vmem:[#allocation2 + $0xf0] sm:$0xff]
      %v4155 = vld [vmem:[#allocation2 + $0xf8] sm:$0xff]
      %v4156 = vadd.f32 %v4124, %v3966
      %v4157 = vadd.f32 %v4125, %v3971
      %v4158 = vadd.f32 %v4126, %v3976
      %v4159 = vadd.f32 %v4127, %v3981
      %v4160 = vadd.f32 %v4128, %v3986
      %v4161 = vadd.f32 %v4129, %v3991
      %v4162 = vadd.f32 %v4130, %v3996
      %v4163 = vadd.f32 %v4131, %v4001
      %v4164 = vadd.f32 %v4132, %v4006
      %v4165 = vadd.f32 %v4133, %v4011
      %v4166 = vadd.f32 %v4134, %v4016
      %v4167 = vadd.f32 %v4135, %v4021
      %v4168 = vadd.f32 %v4136, %v4026
      %v4169 = vadd.f32 %v4137, %v4031
      %v4170 = vadd.f32 %v4138, %v4036
      %v4171 = vadd.f32 %v4139, %v4041
      %v4172 = vadd.f32 %v4140, %v4046
      %v4173 = vadd.f32 %v4141, %v4051
      %v4174 = vadd.f32 %v4142, %v4056
      %v4175 = vadd.f32 %v4143, %v4061
      %v4176 = vadd.f32 %v4144, %v4066
      %v4177 = vadd.f32 %v4145, %v4071
      %v4178 = vadd.f32 %v4146, %v4076
      %v4179 = vadd.f32 %v4147, %v4081
      %v4180 = vadd.f32 %v4148, %v4086
      %v4181 = vadd.f32 %v4149, %v4091
      %v4182 = vadd.f32 %v4150, %v4096
      %v4183 = vadd.f32 %v4151, %v4101
      %v4184 = vadd.f32 %v4152, %v4106
      %v4185 = vadd.f32 %v4153, %v4111
      %v4186 = vadd.f32 %v4154, %v4116
      %v4187 = vadd.f32 %v4155, %v4121
      %4188 = vst [vmem:[#allocation2] sm:$0xff] %v4156
      %4189 = vst [vmem:[#allocation2 + $0x8] sm:$0xff] %v4157
      %4190 = vst [vmem:[#allocation2 + $0x10] sm:$0xff] %v4158
      %4191 = vst [vmem:[#allocation2 + $0x18] sm:$0xff] %v4159
      %4192 = vst [vmem:[#allocation2 + $0x20] sm:$0xff] %v4160
      %4193 = vst [vmem:[#allocation2 + $0x28] sm:$0xff] %v4161
      %4194 = vst [vmem:[#allocation2 + $0x30] sm:$0xff] %v4162
      %4195 = vst [vmem:[#allocation2 + $0x38] sm:$0xff] %v4163
      %4196 = vst [vmem:[#allocation2 + $0x40] sm:$0xff] %v4164
      %4197 = vst [vmem:[#allocation2 + $0x48] sm:$0xff] %v4165
      %4198 = vst [vmem:[#allocation2 + $0x50] sm:$0xff] %v4166
      %4199 = vst [vmem:[#allocation2 + $0x58] sm:$0xff] %v4167
      %4200 = vst [vmem:[#allocation2 + $0x60] sm:$0xff] %v4168
      %4201 = vst [vmem:[#allocation2 + $0x68] sm:$0xff] %v4169
      %4202 = vst [vmem:[#allocation2 + $0x70] sm:$0xff] %v4170
      %4203 = vst [vmem:[#allocation2 + $0x78] sm:$0xff] %v4171
      %4204 = vst [vmem:[#allocation2 + $0x80] sm:$0xff] %v4172
      %4205 = vst [vmem:[#allocation2 + $0x88] sm:$0xff] %v4173
      %4206 = vst [vmem:[#allocation2 + $0x90] sm:$0xff] %v4174
      %4207 = vst [vmem:[#allocation2 + $0x98] sm:$0xff] %v4175
      %4208 = vst [vmem:[#allocation2 + $0xa0] sm:$0xff] %v4176
      %4209 = vst [vmem:[#allocation2 + $0xa8] sm:$0xff] %v4177
      %4210 = vst [vmem:[#allocation2 + $0xb0] sm:$0xff] %v4178
      %4211 = vst [vmem:[#allocation2 + $0xb8] sm:$0xff] %v4179
      %4212 = vst [vmem:[#allocation2 + $0xc0] sm:$0xff] %v4180
      %4213 = vst [vmem:[#allocation2 + $0xc8] sm:$0xff] %v4181
      %4214 = vst [vmem:[#allocation2 + $0xd0] sm:$0xff] %v4182
      %4215 = vst [vmem:[#allocation2 + $0xd8] sm:$0xff] %v4183
      %4216 = vst [vmem:[#allocation2 + $0xe0] sm:$0xff] %v4184
      %4217 = vst [vmem:[#allocation2 + $0xe8] sm:$0xff] %v4185
      %4218 = vst [vmem:[#allocation2 + $0xf0] sm:$0xff] %v4186
      %4219 = vst [vmem:[#allocation2 + $0xf8] sm:$0xff] %v4187
      %p4220 = scmp.eq.s32.totalorder %s20, 0
      // Predicated region
      $region29: #{up_conv_forward.2} parent=27 // pred_check
        %p4221 = pneg %p4220
      $region30: #{up_conv_forward.2} parent=27 // pred_check_branch
        %4223 = sbr.rel (%p4221) target = $region32
      $region31: #{up_conv_forward.2} parent=27 // pred_region
        %4224 = vst [vmem:[%s184] sm:$0x1] 0.0
        %4225 = vst [vmem:[%s187] sm:$0x1] 0.0
      $region32: #{up_conv_forward.2} parent=27 // pred_fallthru
        _
      %v4226 = vld [vmem:[#allocation2] sm:$0xff]
      %v4227 = vld [vmem:[#allocation2 + $0x8] sm:$0xff]
      %v4228 = vld [vmem:[#allocation2 + $0x10] sm:$0xff]
      %v4229 = vld [vmem:[#allocation2 + $0x18] sm:$0xff]
      %v4230 = vld [vmem:[#allocation2 + $0x20] sm:$0xff]
      %v4231 = vld [vmem:[#allocation2 + $0x28] sm:$0xff]
      %v4232 = vld [vmem:[#allocation2 + $0x30] sm:$0xff]
      %v4233 = vld [vmem:[#allocation2 + $0x38] sm:$0xff]
      %v4234 = vld [vmem:[#allocation2 + $0x40] sm:$0xff]
      %v4235 = vld [vmem:[#allocation2 + $0x48] sm:$0xff]
      %v4236 = vld [vmem:[#allocation2 + $0x50] sm:$0xff]
      %v4237 = vld [vmem:[#allocation2 + $0x58] sm:$0xff]
      %v4238 = vld [vmem:[#allocation2 + $0x60] sm:$0xff]
      %v4239 = vld [vmem:[#allocation2 + $0x68] sm:$0xff]
      %v4240 = vld [vmem:[#allocation2 + $0x70] sm:$0xff]
      %v4241 = vld [vmem:[#allocation2 + $0x78] sm:$0xff]
      %v4242 = vld [vmem:[#allocation2 + $0x80] sm:$0xff]
      %v4243 = vld [vmem:[#allocation2 + $0x88] sm:$0xff]
      %v4244 = vld [vmem:[#allocation2 + $0x90] sm:$0xff]
      %v4245 = vld [vmem:[#allocation2 + $0x98] sm:$0xff]
      %v4246 = vld [vmem:[#allocation2 + $0xa0] sm:$0xff]
      %v4247 = vld [vmem:[#allocation2 + $0xa8] sm:$0xff]
      %v4248 = vld [vmem:[#allocation2 + $0xb0] sm:$0xff]
      %v4249 = vld [vmem:[#allocation2 + $0xb8] sm:$0xff]
      %v4250 = vld [vmem:[#allocation2 + $0xc0] sm:$0xff]
      %v4251 = vld [vmem:[#allocation2 + $0xc8] sm:$0xff]
      %v4252 = vld [vmem:[#allocation2 + $0xd0] sm:$0xff]
      %v4253 = vld [vmem:[#allocation2 + $0xd8] sm:$0xff]
      %v4254 = vld [vmem:[#allocation2 + $0xe0] sm:$0xff]
      %v4255 = vld [vmem:[#allocation2 + $0xe8] sm:$0xff]
      %v4256 = vld [vmem:[#allocation2 + $0xf0] sm:$0xff]
      %v4257 = vld [vmem:[#allocation2 + $0xf8] sm:$0xff]
      %v4258 = vadd.f32 %v4226, %v4227
      %v4259 = vadd.f32 %v4258, %v4228
      %v4260 = vadd.f32 %v4259, %v4229
      %v4261 = vadd.f32 %v4260, %v4230
      %v4262 = vadd.f32 %v4261, %v4231
      %v4263 = vadd.f32 %v4262, %v4232
      %v4264 = vadd.f32 %v4263, %v4233
      %v4265 = vadd.f32 %v4264, %v4234
      %v4266 = vadd.f32 %v4265, %v4235
      %v4267 = vadd.f32 %v4266, %v4236
      %v4268 = vadd.f32 %v4267, %v4237
      %v4269 = vadd.f32 %v4268, %v4238
      %v4270 = vadd.f32 %v4269, %v4239
      %v4271 = vadd.f32 %v4270, %v4240
      %v4272 = vadd.f32 %v4271, %v4241
      %v4273 = vadd.f32 %v4272, %v4242
      %v4274 = vadd.f32 %v4273, %v4243
      %v4275 = vadd.f32 %v4274, %v4244
      %v4276 = vadd.f32 %v4275, %v4245
      %v4277 = vadd.f32 %v4276, %v4246
      %v4278 = vadd.f32 %v4277, %v4247
      %v4279 = vadd.f32 %v4278, %v4248
      %v4280 = vadd.f32 %v4279, %v4249
      %v4281 = vadd.f32 %v4280, %v4250
      %v4282 = vadd.f32 %v4281, %v4251
      %v4283 = vadd.f32 %v4282, %v4252
      %v4284 = vadd.f32 %v4283, %v4253
      %v4285 = vadd.f32 %v4284, %v4254
      %v4286 = vadd.f32 %v4285, %v4255
      %v4287 = vadd.f32 %v4286, %v4256
      %v4288 = vadd.f32 %v4287, %v4257
      %v4289 = vrot.slane %v4288, 4
      %v4290 = vadd.f32 %v4288, %v4289
      %v4291 = vrot.slane %v4290, 2
      %v4292 = vadd.f32 %v4290, %v4291
      %v4293 = vrot.slane %v4292, 1
      %v4294 = vadd.f32 %v4292, %v4293
      %v4295 = vadd.f32 %v4294, 0.0
      %v4296 = vmul.f32 %v4226, %v4226
      %v4297 = vmul.f32 %v4227, %v4227
      %v4298 = vmul.f32 %v4228, %v4228
      %v4299 = vmul.f32 %v4229, %v4229
      %v4300 = vmul.f32 %v4230, %v4230
      %v4301 = vmul.f32 %v4231, %v4231
      %v4302 = vmul.f32 %v4232, %v4232
      %v4303 = vmul.f32 %v4233, %v4233
      %v4304 = vmul.f32 %v4234, %v4234
      %v4305 = vmul.f32 %v4235, %v4235
      %v4306 = vmul.f32 %v4236, %v4236
      %v4307 = vmul.f32 %v4237, %v4237
      %v4308 = vmul.f32 %v4238, %v4238
      %v4309 = vmul.f32 %v4239, %v4239
      %v4310 = vmul.f32 %v4240, %v4240
      %v4311 = vmul.f32 %v4241, %v4241
      %v4312 = vmul.f32 %v4242, %v4242
      %v4313 = vmul.f32 %v4243, %v4243
      %v4314 = vmul.f32 %v4244, %v4244
      %v4315 = vmul.f32 %v4245, %v4245
      %v4316 = vmul.f32 %v4246, %v4246
      %v4317 = vmul.f32 %v4247, %v4247
      %v4318 = vmul.f32 %v4248, %v4248
      %v4319 = vmul.f32 %v4249, %v4249
      %v4320 = vmul.f32 %v4250, %v4250
      %v4321 = vmul.f32 %v4251, %v4251
      %v4322 = vmul.f32 %v4252, %v4252
      %v4323 = vmul.f32 %v4253, %v4253
      %v4324 = vmul.f32 %v4254, %v4254
      %v4325 = vmul.f32 %v4255, %v4255
      %v4326 = vmul.f32 %v4256, %v4256
      %v4327 = vmul.f32 %v4257, %v4257
      %v4328 = vadd.f32 %v4296, %v4297
      %v4329 = vadd.f32 %v4328, %v4298
      %v4330 = vadd.f32 %v4329, %v4299
      %v4331 = vadd.f32 %v4330, %v4300
      %v4332 = vadd.f32 %v4331, %v4301
      %v4333 = vadd.f32 %v4332, %v4302
      %v4334 = vadd.f32 %v4333, %v4303
      %v4335 = vadd.f32 %v4334, %v4304
      %v4336 = vadd.f32 %v4335, %v4305
      %v4337 = vadd.f32 %v4336, %v4306
      %v4338 = vadd.f32 %v4337, %v4307
      %v4339 = vadd.f32 %v4338, %v4308
      %v4340 = vadd.f32 %v4339, %v4309
      %v4341 = vadd.f32 %v4340, %v4310
      %v4342 = vadd.f32 %v4341, %v4311
      %v4343 = vadd.f32 %v4342, %v4312
      %v4344 = vadd.f32 %v4343, %v4313
      %v4345 = vadd.f32 %v4344, %v4314
      %v4346 = vadd.f32 %v4345, %v4315
      %v4347 = vadd.f32 %v4346, %v4316
      %v4348 = vadd.f32 %v4347, %v4317
      %v4349 = vadd.f32 %v4348, %v4318
      %v4350 = vadd.f32 %v4349, %v4319
      %v4351 = vadd.f32 %v4350, %v4320
      %v4352 = vadd.f32 %v4351, %v4321
      %v4353 = vadd.f32 %v4352, %v4322
      %v4354 = vadd.f32 %v4353, %v4323
      %v4355 = vadd.f32 %v4354, %v4324
      %v4356 = vadd.f32 %v4355, %v4325
      %v4357 = vadd.f32 %v4356, %v4326
      %v4358 = vadd.f32 %v4357, %v4327
      %v4359 = vrot.slane %v4358, 4
      %v4360 = vadd.f32 %v4358, %v4359
      %v4361 = vrot.slane %v4360, 2
      %v4362 = vadd.f32 %v4360, %v4361
      %v4363 = vrot.slane %v4362, 1
      %v4364 = vadd.f32 %v4362, %v4363
      %v4365 = vadd.f32 %v4364, 0.0
      %v4366 = vld [vmem:[%s184] sm:$0x1]
      %v4367 = vadd.f32 %v4366, %v4295
      %4368 = vst [vmem:[%s184] sm:$0x1] %v4367
      %v4369 = vld [vmem:[%s187] sm:$0x1]
      %v4370 = vadd.f32 %v4369, %v4365
      %4371 = vst [vmem:[%s187] sm:$0x1] %v4370
      %p4372 = scmp.lt.s32.totalorder %s19, 1
      %s4373 = scalar_select %p4372, %s19, 1
      %s4374 = scalar_lea.vmem %s2, %s4373
      %p4375 = scmp.lt.s32.totalorder %s19, 1
      %s4376 = scalar_select %p4375, %s19, 1
      %s4377 = scalar_lea.vmem %s3, %s4376
      // Predicated region
      $region33: #{up_conv_forward.2} parent=27 // pred_check
        %p4378 = pneg %p92
      $region34: #{up_conv_forward.2} parent=27 // pred_check_branch
        %4380 = sbr.rel (%p4378) target = $region36
      $region35: #{up_conv_forward.2} parent=27 // pred_region
        _
      $region36: #{up_conv_forward.2} parent=27 // pred_fallthru
        _
      // Predicated region
      $region37: #{up_conv_forward.2} parent=27 // pred_check
        %p4381 = pneg %p118
      $region38: #{up_conv_forward.2} parent=27 // pred_check_branch
        %4383 = sbr.rel (%p4381) target = $region40
      $region39: #{up_conv_forward.2} parent=27 // pred_region
        _
      $region40: #{up_conv_forward.2} parent=27 // pred_fallthru
        _
    $region28: #{up_conv_forward.2} parent=5 // pred_fallthru
      _
    %p4384 = scmp.le.s32.totalorder 2, %s10
    // Predicated region
    $region41: #{up_conv_forward.2} parent=5 // pred_check
      %p4385 = pneg %p4384
    $region42: #{up_conv_forward.2} parent=5 // pred_check_branch
      %4387 = sbr.rel (%p4385) target = $region44
    $region43: #{up_conv_forward.2} parent=5 // pred_region
      %s4388 = ssub.s32 %s10, 2
      // Predicated region
      $region45: #{up_conv_forward.2} parent=43 // pred_check
        %p4389 = pneg %p98
      $region46: #{up_conv_forward.2} parent=43 // pred_check_branch
        %4391 = sbr.rel (%p4389) target = $region48
      $region47: #{up_conv_forward.2} parent=43 // pred_region
        %p4392 = scmp.lt.s32.totalorder %s21, 1
        %s4393 = scalar_select %p4392, %s21, 1
        %s4394 = scalar_lea.vmem %s2, %s4393
      $region48: #{up_conv_forward.2} parent=43 // pred_fallthru
        _
      // Predicated region
      $region49: #{up_conv_forward.2} parent=43 // pred_check
        %p4395 = pneg %p124
      $region50: #{up_conv_forward.2} parent=43 // pred_check_branch
        %4397 = sbr.rel (%p4395) target = $region52
      $region51: #{up_conv_forward.2} parent=43 // pred_region
        %p4398 = scmp.lt.s32.totalorder %s21, 1
        %s4399 = scalar_select %p4398, %s21, 1
        %s4400 = scalar_lea.vmem %s3, %s4399
      $region52: #{up_conv_forward.2} parent=43 // pred_fallthru
        _
    $region44: #{up_conv_forward.2} parent=5 // pred_fallthru
      _
  $region6: #{up_conv_forward.2} parent=0 // loop_footer
    %s14 = sadd.s32 1, %s10
  $region7: #{up_conv_forward.2} parent=0 // loop_footer_branch
    %9 = sbr.rel target = $region3
  $region8: #{up_conv_forward.2} parent=0 // loop_exit
    _

// kernel: up_conv_forward.3
$region0: #{up_conv_forward.3}
  #allocation0 [shape = 'u32[]', space=smem, size = 0x4, offset = 0x4, fixed_abs, tag = 'smem constant byte address 0x4 - core index']
  #allocation1 [shape = 'u32[144,128]{1,0:T(1,128)}', space=vmem, size = 0x12000, scoped, tag = 'internal scratch']
  #allocation2 [shape = 'f32[256,128]{1,0:T(8,128)}', space=vmem, size = 0x20000, scoped, tag = 'scratch operand']
  %s0 = inlined_call_operand.vmem [shape: f32[2,18,18,4], index: 0, kind: input, shape index: {}]
  %s1 = inlined_call_operand.vmem [shape: f32[9,4,128], index: 1, kind: input, shape index: {}]
  %s2 = inlined_call_operand.vmem [shape: f32[1,128], index: 2, kind: input, shape index: {}]
  %s3 = inlined_call_operand.vmem [shape: f32[1,128], index: 3, kind: input, shape index: {}]
  %s4 = inlined_call_operand.vmem [shape: f32[2,256,128], index: 4, kind: output, shape index: {}]
  %s5 = sld [smem:[#allocation0]]
  $region49: #{up_conv_forward.3} parent=0
    _
  %s7 = ssub.s32 1, %s5
  %s8 = scalar_select 0, %s7, %s5
  loop: start=0, step=1, limit=4
  $region2: #{up_conv_forward.3} parent=0 // loop_pre_header
    _
  $region3: #{up_conv_forward.3} parent=0 // loop_header
    %s10 = sphi 0, %s14
    %p11 = scmp.ge.s32.totalorder %s10, 4
    %s17 = sphi 0, %s29
    %s18 = sphi 0, %s25
    %s19 = sphi 0, %s17
    %s20 = sphi 0, %s18
    %s21 = sphi 0, %s19
    %s22 = sphi 0, %s20
    %s32 = sphi 0, %s34
    %s35 = sphi 0, %s32
    %s36 = sphi 0, %s35
    %s52 = sphi 0, %s36
    %s56 = sphi 0, %s56
    %s58 = sphi 0, %s56
    %s59 = sphi 0, %s58
    %s73 = sphi 0, %s59
    %s77 = sphi 0, %s77
    %s79 = sphi 0, %s77
    %s80 = sphi 0, %s79
    %s94 = sphi 0, %s80
    %s98 = sphi 0, %s98
    %s100 = sphi 0, %s98
    %s101 = sphi 0, %s100
    %s115 = sphi 0, %s101
    %s123 = sphi 0, %s125
    %s126 = sphi 0, %s123
    %s127 = sphi 0, %s126
    %s143 = sphi 0, %s127
  $region4: #{up_conv_forward.3} parent=0 // loop_header_branch
    %13 = sbr.rel (%p11) target = $region8
  $region5: #{up_conv_forward.3} parent=0 // loop_body
    %s15 = ssub.s32 %s10, 1
    %s16 = ssub.s32 %s10, 2
    %s23 = sadd.s32 1, %s18
    %p24 = scmp.ge.s32.totalorder %s23, 1
    %s25 = scalar_select %p24, 0, %s23
    %s26 = sadd.s32 1, %s17
    %s27 = scalar_select %p24, %s26, %s17
    %p28 = scmp.ge.s32.totalorder %s27, 2
    %s29 = scalar_select %p28, 0, %s27
    %s30 = ssub.s32 %s17, %s29
    %p31 = scmp.eq.s32.totalorder %s30, 0
    %s33 = sadd.s32 %s32, 1
    %s34 = scalar_select %p31, %s32, %s33
    %p37 = pneg %p31
    %p38 = scmp.eq.s32.totalorder %s10, 1
    %p39 = por %p37, %p38
    %p40 = scmp.ne.s32.totalorder %s32, %s35
    %p41 = scmp.eq.s32.totalorder %s10, 0
    %p42 = por %p40, %p41
    %p43 = scmp.ne.s32.totalorder %s32, %s35
    %p44 = scmp.eq.s32.totalorder %s15, 1
    %p45 = por %p43, %p44
    %p46 = scmp.ne.s32.totalorder %s35, %s36
    %p47 = scmp.eq.s32.totalorder %s15, 0
    %p48 = por %p46, %p47
    %p49 = scmp.ne.s32.totalorder %s35, %s36
    %p50 = scmp.eq.s32.totalorder %s16, 1
    %p51 = por %p49, %p50
    %p53 = scmp.ne.s32.totalorder %s36, %s52
    %p54 = scmp.eq.s32.totalorder %s16, 0
    %p55 = por %p53, %p54
    %s57 = sadd.s32 %s56, 1
    %p60 = scmp.eq.s32.totalorder %s10, 1
    %p61 = scmp.ne.s32.totalorder %s56, %s58
    %p62 = scmp.eq.s32.totalorder %s10, 0
    %p63 = por %p61, %p62
    %p64 = scmp.ne.s32.totalorder %s56, %s58
    %p65 = scmp.eq.s32.totalorder %s15, 1
    %p66 = por %p64, %p65
    %p67 = scmp.ne.s32.totalorder %s58, %s59
    %p68 = scmp.eq.s32.totalorder %s15, 0
    %p69 = por %p67, %p68
    %p70 = scmp.ne.s32.totalorder %s58, %s59
    %p71 = scmp.eq.s32.totalorder %s16, 1
    %p72 = por %p70, %p71
    %p74 = scmp.ne.s32.totalorder %s59, %s73
    %p75 = scmp.eq.s32.totalorder %s16, 0
    %p76 = por %p74, %p75
    %s78 = sadd.s32 %s77, 1
    %p81 = scmp.eq.s32.totalorder %s10, 1
    %p82 = scmp.ne.s32.totalorder %s77, %s79
    %p83 = scmp.eq.s32.totalorder %s10, 0
    %p84 = por %p82, %p83
    %p85 = scmp.ne.s32.totalorder %s77, %s79
    %p86 = scmp.eq.s32.totalorder %s15, 1
    %p87 = por %p85, %p86
    %p88 = scmp.ne.s32.totalorder %s79, %s80
    %p89 = scmp.eq.s32.totalorder %s15, 0
    %p90 = por %p88, %p89
    %p91 = scmp.ne.s32.totalorder %s79, %s80
    %p92 = scmp.eq.s32.totalorder %s16, 1
    %p93 = por %p91, %p92
    %p95 = scmp.ne.s32.totalorder %s80, %s94
    %p96 = scmp.eq.s32.totalorder %s16, 0
    %p97 = por %p95, %p96
    %s99 = sadd.s32 %s98, 1
    %p102 = scmp.eq.s32.totalorder %s10, 1
    %p103 = scmp.ne.s32.totalorder %s98, %s100
    %p104 = scmp.eq.s32.totalorder %s10, 0
    %p105 = por %p103, %p104
    %p106 = scmp.ne.s32.totalorder %s98, %s100
    %p107 = scmp.eq.s32.totalorder %s15, 1
    %p108 = por %p106, %p107
    %p109 = scmp.ne.s32.totalorder %s100, %s101
    %p110 = scmp.eq.s32.totalorder %s15, 0
    %p111 = por %p109, %p110
    %p112 = scmp.ne.s32.totalorder %s100, %s101
    %p113 = scmp.eq.s32.totalorder %s16, 1
    %p114 = por %p112, %p113
    %p116 = scmp.ne.s32.totalorder %s101, %s115
    %p117 = scmp.eq.s32.totalorder %s16, 0
    %p118 = por %p116, %p117
    %s119 = ssub.s32 %s17, %s29
    %s120 = ssub.s32 %s18, %s25
    %s121 = sor.u32 %s119, %s120
    %p122 = scmp.eq.s32.totalorder %s121, 0
    %s124 = sadd.s32 %s123, 1
    %s125 = scalar_select %p122, %s123, %s124
    %p128 = pneg %p122
    %p129 = scmp.eq.s32.totalorder %s10, 1
    %p130 = por %p128, %p129
    %p131 = scmp.ne.s32.totalorder %s123, %s126
    %p132 = scmp.eq.s32.totalorder %s10, 0
    %p133 = por %p131, %p132
    %p134 = scmp.ne.s32.totalorder %s123, %s126
    %p135 = scmp.eq.s32.totalorder %s15, 1
    %p136 = por %p134, %p135
    %p137 = scmp.ne.s32.totalorder %s126, %s127
    %p138 = scmp.eq.s32.totalorder %s15, 0
    %p139 = por %p137, %p138
    %p140 = scmp.ne.s32.totalorder %s126, %s127
    %p141 = scmp.eq.s32.totalorder %s16, 1
    %p142 = por %p140, %p141
    %p144 = scmp.ne.s32.totalorder %s127, %s143
    %p145 = scmp.eq.s32.totalorder %s16, 0
    %p146 = por %p144, %p145
    %p147 = scmp.le.s32.totalorder 1, %s10
    %p148 = scmp.lt.s32.totalorder %s10, 3
    %p149 = pnand %p147, %p148
    %p150 = pneg %p149
    // Predicated region
    $region9: #{up_conv_forward.3} parent=5 // pred_check
      _
    $region10: #{up_conv_forward.3} parent=5 // pred_check_branch
      %152 = sbr.rel (%p149) target = $region12
    $region11: #{up_conv_forward.3} parent=5 // pred_region
      %s153 = ssub.s32 %s10, 1
      // Predicated region
      $region13: #{up_conv_forward.3} parent=11 // pred_check
        %p154 = pneg %p69
      $region14: #{up_conv_forward.3} parent=11 // pred_check_branch
        %156 = sbr.rel (%p154) target = $region16
      $region15: #{up_conv_forward.3} parent=11 // pred_region
        _
      $region16: #{up_conv_forward.3} parent=11 // pred_fallthru
        _
      // Predicated region
      $region17: #{up_conv_forward.3} parent=11 // pred_check
        %p157 = pneg %p90
      $region18: #{up_conv_forward.3} parent=11 // pred_check_branch
        %159 = sbr.rel (%p157) target = $region20
      $region19: #{up_conv_forward.3} parent=11 // pred_region
        _
      $region20: #{up_conv_forward.3} parent=11 // pred_fallthru
        _
      // Predicated region
      $region21: #{up_conv_forward.3} parent=11 // pred_check
        %p160 = pneg %p111
      $region22: #{up_conv_forward.3} parent=11 // pred_check_branch
        %162 = sbr.rel (%p160) target = $region24
      $region23: #{up_conv_forward.3} parent=11 // pred_region
        _
      $region24: #{up_conv_forward.3} parent=11 // pred_fallthru
        _
    $region12: #{up_conv_forward.3} parent=5 // pred_fallthru
      _
    %p163 = scmp.lt.s32.totalorder %s10, 2
    // Predicated region
    $region25: #{up_conv_forward.3} parent=5 // pred_check
      %p164 = pneg %p163
    $region26: #{up_conv_forward.3} parent=5 // pred_check_branch
      %166 = sbr.rel (%p164) target = $region28
    $region27: #{up_conv_forward.3} parent=5 // pred_region
      // Predicated region
      $region29: #{up_conv_forward.3} parent=27 // pred_check
        %p167 = pneg %p42
      $region30: #{up_conv_forward.3} parent=27 // pred_check_branch
        %169 = sbr.rel (%p167) target = $region32
      $region31: #{up_conv_forward.3} parent=27 // pred_region
        %p170 = scmp.lt.s32.totalorder %s17, 1
        %s171 = scalar_select %p170, %s17, 1
        %s172 = smul.addr %s171, 54
        %s173 = smul.addr %s172, 8
        %s174 = scalar_lea.vmem %s0, %s173
      $region32: #{up_conv_forward.3} parent=27 // pred_fallthru
        _
    $region28: #{up_conv_forward.3} parent=5 // pred_fallthru
      _
    %p175 = scmp.le.s32.totalorder 1, %s10
    %p176 = scmp.lt.s32.totalorder %s10, 3
    %p177 = pnand %p175, %p176
    %p178 = pneg %p177
    // Predicated region
    $region33: #{up_conv_forward.3} parent=5 // pred_check
      _
    $region34: #{up_conv_forward.3} parent=5 // pred_check_branch
      %180 = sbr.rel (%p177) target = $region36
    $region35: #{up_conv_forward.3} parent=5 // pred_region
      %s181 = ssub.s32 %s10, 1
      %p182 = scmp.lt.s32.totalorder %s19, 1
      %s183 = scalar_select %p182, %s19, 1
      %s184 = smul.addr %s183, 54
      %s185 = smul.addr %s184, 8
      %s186 = scalar_lea.vmem %s0, %s185
      %p187 = pneg %p48
      %p188 = pneg %p45
      %p189 = pneg %p69
      %p190 = pneg %p66
      %p191 = pneg %p90
      %p192 = pneg %p87
      %p193 = pneg %p111
      %p194 = pneg %p108
      %p195 = pneg %p139
      %p196 = pneg %p136
      %s197 = smul.u32 32, %s20
      %p198 = scmp.lt.s32.totalorder %s19, 1
      %s199 = scalar_select %p198, %s19, 1
      %p200 = scmp.lt.s32.totalorder %s197, 31
      %s201 = scalar_select %p200, %s197, 31
      %s202 = smul.addr %s199, 32
      %s203 = sadd.s32 %s201, %s202
      %s204 = smul.addr %s203, 8
      %s205 = scalar_lea.vmem %s4, %s204
      %p206 = scmp.lt.s32.totalorder %s19, 1
      %s207 = scalar_select %p206, %s19, 1
      %s208 = smul.addr %s207, 54
      %s209 = smul.addr %s208, 8
      %s210 = scalar_lea.vmem %s0, %s209
      %s211 = smul.u32 32, %s20
      %p212 = scmp.lt.s32.totalorder %s19, 1
      %s213 = scalar_select %p212, %s19, 1
      %p214 = scmp.lt.s32.totalorder %s211, 31
      %s215 = scalar_select %p214, %s211, 31
      %s216 = smul.addr %s213, 32
      %s217 = sadd.s32 %s215, %s216
      %s218 = smul.addr %s217, 8
      %s219 = scalar_lea.vmem %s4, %s218
      %s220 = smul.u32 32, %s20
      %s221 = smul.u32 %s20, 16
      %s222 = smul.u32 %s221, 24
      %s223 = scalar_lea.vmem %s210, %s222
      %v224 = vld [vmem:[%s223] sm:$0xff]
      %v225 = vld [vmem:[%s223 + $0x8] sm:$0xff]
      %v226 = vld [vmem:[%s223 + $0x18] sm:$0xff]
      %v227 = vld [vmem:[%s223 + $0x20] sm:$0xff]
      %v228 = vld [vmem:[%s223 + $0x30] sm:$0xff]
      %v229 = vld [vmem:[%s223 + $0x38] sm:$0xff]
      %v230 = vld [vmem:[%s223 + $0x48] sm:$0xff]
      %v231 = vld [vmem:[%s223 + $0x50] sm:$0xff]
      %v232 = vld [vmem:[%s223 + $0x60] sm:$0xff]
      %v233 = vld [vmem:[%s223 + $0x68] sm:$0xff]
      %v234 = vld [vmem:[%s223 + $0x78] sm:$0xff]
      %v235 = vld [vmem:[%s223 + $0x80] sm:$0xff]
      %v236 = vld [vmem:[%s223 + $0x90] sm:$0xff]
      %v237 = vld [vmem:[%s223 + $0x98] sm:$0xff]
      %v238 = vld [vmem:[%s223 + $0xa8] sm:$0xff]
      %v239 = vld [vmem:[%s223 + $0xb0] sm:$0xff]
      %v240 = vld [vmem:[%s223 + $0xc0] sm:$0xff]
      %v241 = vld [vmem:[%s223 + $0xc8] sm:$0xff]
      %v242 = vld [vmem:[%s223 + $0xd8] sm:$0xff]
      %v243 = vld [vmem:[%s223 + $0xe0] sm:$0xff]
      %v244 = vld [vmem:[%s223 + $0xf0] sm:$0xff]
      %v245 = vld [vmem:[%s223 + $0xf8] sm:$0xff]
      %v246 = vld [vmem:[%s223 + $0x108] sm:$0xff]
      %v247 = vld [vmem:[%s223 + $0x110] sm:$0xff]
      %v248 = vld [vmem:[%s223 + $0x120] sm:$0xff]
      %v249 = vld [vmem:[%s223 + $0x128] sm:$0xff]
      %v250 = vld [vmem:[%s223 + $0x138] sm:$0xff]
      %v251 = vld [vmem:[%s223 + $0x140] sm:$0xff]
      %v252 = vld [vmem:[%s223 + $0x150] sm:$0xff]
      %v253 = vld [vmem:[%s223 + $0x158] sm:$0xff]
      %v254 = vld [vmem:[%s223 + $0x168] sm:$0xff]
      %v255 = vld [vmem:[%s223 + $0x170] sm:$0xff]
      %v256 = vld [vmem:[%s1] sm:$0xf]
      %vm257 = vcmask 31744
      %v259 = vsel %vm257, %v224, 0
      %v262 = vsel %vm257, %v225, 0
      %v265 = vsel %vm257, %v226, 0
      %v268 = vsel %vm257, %v227, 0
      %v271 = vsel %vm257, %v228, 0
      %v274 = vsel %vm257, %v229, 0
      %v277 = vsel %vm257, %v230, 0
      %v280 = vsel %vm257, %v231, 0
      %v283 = vsel %vm257, %v232, 0
      %v286 = vsel %vm257, %v233, 0
      %v289 = vsel %vm257, %v234, 0
      %v292 = vsel %vm257, %v235, 0
      %v295 = vsel %vm257, %v236, 0
      %v298 = vsel %vm257, %v237, 0
      %v301 = vsel %vm257, %v238, 0
      %v304 = vsel %vm257, %v239, 0
      %v307 = vsel %vm257, %v240, 0
      %v310 = vsel %vm257, %v241, 0
      %v313 = vsel %vm257, %v242, 0
      %v316 = vsel %vm257, %v243, 0
      %v319 = vsel %vm257, %v244, 0
      %v322 = vsel %vm257, %v245, 0
      %v325 = vsel %vm257, %v246, 0
      %v328 = vsel %vm257, %v247, 0
      %v331 = vsel %vm257, %v248, 0
      %v334 = vsel %vm257, %v249, 0
      %v337 = vsel %vm257, %v250, 0
      %v340 = vsel %vm257, %v251, 0
      %v343 = vsel %vm257, %v252, 0
      %v346 = vsel %vm257, %v253, 0
      %v349 = vsel %vm257, %v254, 0
      %v352 = vsel %vm257, %v255, 0
      %vm354 = vcmask 1043456
      %v356 = vsel %vm354, %v256, 0
      %358 = vmatprep.subr.mxu0 0.0
      %359 = vmatpush1.msra.mxu0 %v356
      %360 = vmatprep.subr.mxu0 0.0
      %361 = vmatpush1.msra.mxu0 0.0
      %362 = vmatprep.subr.mxu0 0.0
      %363 = vmatpush1.msra.mxu0 0.0
      %364 = vmatprep.subr.mxu0 0.0
      %365 = vmatpush1.msra.mxu0 0.0
      %366 = vmatprep.subr.mxu0 0.0
      %367 = vmatpush1.msra.mxu0 0.0
      %368 = vmatprep.subr.mxu0 0.0
      %369 = vmatpush1.msra.mxu0 0.0
      %370 = vmatprep.subr.mxu0 0.0
      %371 = vmatpush1.msra.mxu0 0.0
      %372 = vmatprep.subr.mxu0 0.0
      %373 = vmatpush1.msra.mxu0 0.0
      %374 = vmatprep.subr.mxu0 0.0
      %375 = vmatpush1.msra.mxu0 0.0
      %376 = vmatprep.subr.mxu0 0.0
      %377 = vmatpush1.msra.mxu0 0.0
      %378 = vmatprep.subr.mxu0 0.0
      %379 = vmatpush1.msra.mxu0 0.0
      %380 = vmatprep.subr.mxu0 0.0
      %381 = vmatpush1.msra.mxu0 0.0
      %382 = vmatprep.subr.mxu0 0.0
      %383 = vmatpush1.msra.mxu0 0.0
      %384 = vmatprep.subr.mxu0 0.0
      %385 = vmatpush1.msra.mxu0 0.0
      %386 = vmatprep.subr.mxu0 0.0
      %387 = vmatpush1.msra.mxu0 0.0
      %388 = vmatprep.subr.mxu0 0.0
      %389 = vmatpush1.msra.mxu0 0.0
      %390 = vmatprep.subr.mxu0 0.0
      %391 = vmatpush1.msra.mxu0 0.0
      %392 = vmatprep.subr.mxu0 0.0
      %393 = vmatpush1.msra.mxu0 0.0
      %394 = vmatprep.subr.mxu0 0.0
      %395 = vmatpush1.msra.mxu0 0.0
      %396 = vmatprep.subr.mxu0 0.0
      %397 = vmatpush1.msra.mxu0 0.0
      %398 = vmatprep.subr.mxu0 0.0
      %399 = vmatpush1.msra.mxu0 0.0
      %400 = vmatprep.subr.mxu0 0.0
      %401 = vmatpush1.msra.mxu0 0.0
      %402 = vmatprep.subr.mxu0 0.0
      %403 = vmatpush1.msra.mxu0 0.0
      %404 = vmatprep.subr.mxu0 0.0
      %405 = vmatpush1.msra.mxu0 0.0
      %406 = vmatprep.subr.mxu0 0.0
      %407 = vmatpush1.msra.mxu0 0.0
      %408 = vmatprep.subr.mxu0 0.0
      %409 = vmatpush1.msra.mxu0 0.0
      %410 = vmatprep.subr.mxu0 0.0
      %411 = vmatpush1.msra.mxu0 0.0
      %412 = vmatprep.subr.mxu0 0.0
      %413 = vmatpush1.msra.mxu0 0.0
      %414 = vmatprep.subr.mxu0 0.0
      %415 = vmatpush1.msra.mxu0 0.0
      %416 = vmatprep.subr.mxu0 0.0
      %417 = vmatpush1.msra.mxu0 0.0
      %418 = vmatprep.subr.mxu0 0.0
      %419 = vmatpush1.msra.mxu0 0.0
      %420 = vmatprep.subr.mxu0 0.0
      %421 = vmatpush1.msra.mxu0 0.0
      %422 = vmatprep.mubr.f32.mxu0 0.0
      %423 = vmatmul.mubr.f32.gmra.mrb[0].mxu0 %v259
      %v424 = vpop.f32.mrb[0].mxu0
      %v425 = vadd.f32 0.0, %v424
      %v426 = vpop.f32.mrb[0].mxu0
      %427 = vmatprep.mubr.f32.mxu0 0.0
      %428 = vmatmul.mubr.f32.gmra.mrb[0].mxu0 %v262
      %v429 = vpop.f32.mrb[0].mxu0
      %v430 = vadd.f32 0.0, %v429
      %v431 = vpop.f32.mrb[0].mxu0
      %432 = vmatprep.mubr.f32.mxu0 0.0
      %433 = vmatmul.mubr.f32.gmra.mrb[0].mxu0 %v265
      %v434 = vpop.f32.mrb[0].mxu0
      %v435 = vadd.f32 0.0, %v434
      %v436 = vpop.f32.mrb[0].mxu0
      %437 = vmatprep.mubr.f32.mxu0 0.0
      %438 = vmatmul.mubr.f32.gmra.mrb[0].mxu0 %v268
      %v439 = vpop.f32.mrb[0].mxu0
      %v440 = vadd.f32 0.0, %v439
      %v441 = vpop.f32.mrb[0].mxu0
      %442 = vmatprep.mubr.f32.mxu0 0.0
      %443 = vmatmul.mubr.f32.gmra.mrb[0].mxu0 %v271
      %v444 = vpop.f32.mrb[0].mxu0
      %v445 = vadd.f32 0.0, %v444
      %v446 = vpop.f32.mrb[0].mxu0
      %447 = vmatprep.mubr.f32.mxu0 0.0
      %448 = vmatmul.mubr.f32.gmra.mrb[0].mxu0 %v274
      %v449 = vpop.f32.mrb[0].mxu0
      %v450 = vadd.f32 0.0, %v449
      %v451 = vpop.f32.mrb[0].mxu0
      %452 = vmatprep.mubr.f32.mxu0 0.0
      %453 = vmatmul.mubr.f32.gmra.mrb[0].mxu0 %v277
      %v454 = vpop.f32.mrb[0].mxu0
      %v455 = vadd.f32 0.0, %v454
      %v456 = vpop.f32.mrb[0].mxu0
      %457 = vmatprep.mubr.f32.mxu0 0.0
      %458 = vmatmul.mubr.f32.gmra.mrb[0].mxu0 %v280
      %v459 = vpop.f32.mrb[0].mxu0
      %v460 = vadd.f32 0.0, %v459
      %v461 = vpop.f32.mrb[0].mxu0
      %462 = vmatprep.mubr.f32.mxu0 0.0
      %463 = vmatmul.mubr.f32.gmra.mrb[0].mxu0 %v283
      %v464 = vpop.f32.mrb[0].mxu0
      %v465 = vadd.f32 0.0, %v464
      %v466 = vpop.f32.mrb[0].mxu0
      %467 = vmatprep.mubr.f32.mxu0 0.0
      %468 = vmatmul.mubr.f32.gmra.mrb[0].mxu0 %v286
      %v469 = vpop.f32.mrb[0].mxu0
      %v470 = vadd.f32 0.0, %v469
      %v471 = vpop.f32.mrb[0].mxu0
      %472 = vmatprep.mubr.f32.mxu0 0.0
      %473 = vmatmul.mubr.f32.gmra.mrb[0].mxu0 %v289
      %v474 = vpop.f32.mrb[0].mxu0
      %v475 = vadd.f32 0.0, %v474
      %v476 = vpop.f32.mrb[0].mxu0
      %477 = vmatprep.mubr.f32.mxu0 0.0
      %478 = vmatmul.mubr.f32.gmra.mrb[0].mxu0 %v292
      %v479 = vpop.f32.mrb[0].mxu0
      %v480 = vadd.f32 0.0, %v479
      %v481 = vpop.f32.mrb[0].mxu0
      %482 = vmatprep.mubr.f32.mxu0 0.0
      %483 = vmatmul.mubr.f32.gmra.mrb[0].mxu0 %v295
      %v484 = vpop.f32.mrb[0].mxu0
      %v485 = vadd.f32 0.0, %v484
      %v486 = vpop.f32.mrb[0].mxu0
      %487 = vmatprep.mubr.f32.mxu0 0.0
      %488 = vmatmul.mubr.f32.gmra.mrb[0].mxu0 %v298
      %v489 = vpop.f32.mrb[0].mxu0
      %v490 = vadd.f32 0.0, %v489
      %v491 = vpop.f32.mrb[0].mxu0
      %492 = vmatprep.mubr.f32.mxu0 0.0
      %493 = vmatmul.mubr.f32.gmra.mrb[0].mxu0 %v301
      %v494 = vpop.f32.mrb[0].mxu0
      %v495 = vadd.f32 0.0, %v494
      %v496 = vpop.f32.mrb[0].mxu0
      %497 = vmatprep.mubr.f32.mxu0 0.0
      %498 = vmatmul.mubr.f32.gmra.mrb[0].mxu0 %v304
      %v499 = vpop.f32.mrb[0].mxu0
      %v500 = vadd.f32 0.0, %v499
      %v501 = vpop.f32.mrb[0].mxu0
      %502 = vmatprep.mubr.f32.mxu0 0.0
      %503 = vmatmul.mubr.f32.gmra.mrb[0].mxu0 %v307
      %v504 = vpop.f32.mrb[0].mxu0
      %v505 = vadd.f32 0.0, %v504
      %v506 = vpop.f32.mrb[0].mxu0
      %507 = vmatprep.mubr.f32.mxu0 0.0
      %508 = vmatmul.mubr.f32.gmra.mrb[0].mxu0 %v310
      %v509 = vpop.f32.mrb[0].mxu0
      %v510 = vadd.f32 0.0, %v509
      %v511 = vpop.f32.mrb[0].mxu0
      %512 = vmatprep.mubr.f32.mxu0 0.0
      %513 = vmatmul.mubr.f32.gmra.mrb[0].mxu0 %v313
      %v514 = vpop.f32.mrb[0].mxu0
      %v515 = vadd.f32 0.0, %v514
      %v516 = vpop.f32.mrb[0].mxu0
      %517 = vmatprep.mubr.f32.mxu0 0.0
      %518 = vmatmul.mubr.f32.gmra.mrb[0].mxu0 %v316
      %v519 = vpop.f32.mrb[0].mxu0
      %v520 = vadd.f32 0.0, %v519
      %v521 = vpop.f32.mrb[0].mxu0
      %522 = vmatprep.mubr.f32.mxu0 0.0
      %523 = vmatmul.mubr.f32.gmra.mrb[0].mxu0 %v319
      %v524 = vpop.f32.mrb[0].mxu0
      %v525 = vadd.f32 0.0, %v524
      %v526 = vpop.f32.mrb[0].mxu0
      %527 = vmatprep.mubr.f32.mxu0 0.0
      %528 = vmatmul.mubr.f32.gmra.mrb[0].mxu0 %v322
      %v529 = vpop.f32.mrb[0].mxu0
      %v530 = vadd.f32 0.0, %v529
      %v531 = vpop.f32.mrb[0].mxu0
      %532 = vmatprep.mubr.f32.mxu0 0.0
      %533 = vmatmul.mubr.f32.gmra.mrb[0].mxu0 %v325
      %v534 = vpop.f32.mrb[0].mxu0
      %v535 = vadd.f32 0.0, %v534
      %v536 = vpop.f32.mrb[0].mxu0
      %537 = vmatprep.mubr.f32.mxu0 0.0
      %538 = vmatmul.mubr.f32.gmra.mrb[0].mxu0 %v328
      %v539 = vpop.f32.mrb[0].mxu0
      %v540 = vadd.f32 0.0, %v539
      %v541 = vpop.f32.mrb[0].mxu0
      %542 = vmatprep.mubr.f32.mxu0 0.0
      %543 = vmatmul.mubr.f32.gmra.mrb[0].mxu0 %v331
      %v544 = vpop.f32.mrb[0].mxu0
      %v545 = vadd.f32 0.0, %v544
      %v546 = vpop.f32.mrb[0].mxu0
      %547 = vmatprep.mubr.f32.mxu0 0.0
      %548 = vmatmul.mubr.f32.gmra.mrb[0].mxu0 %v334
      %v549 = vpop.f32.mrb[0].mxu0
      %v550 = vadd.f32 0.0, %v549
      %v551 = vpop.f32.mrb[0].mxu0
      %552 = vmatprep.mubr.f32.mxu0 0.0
      %553 = vmatmul.mubr.f32.gmra.mrb[0].mxu0 %v337
      %v554 = vpop.f32.mrb[0].mxu0
      %v555 = vadd.f32 0.0, %v554
      %v556 = vpop.f32.mrb[0].mxu0
      %557 = vmatprep.mubr.f32.mxu0 0.0
      %558 = vmatmul.mubr.f32.gmra.mrb[0].mxu0 %v340
      %v559 = vpop.f32.mrb[0].mxu0
      %v560 = vadd.f32 0.0, %v559
      %v561 = vpop.f32.mrb[0].mxu0
      %562 = vmatprep.mubr.f32.mxu0 0.0
      %563 = vmatmul.mubr.f32.gmra.mrb[0].mxu0 %v343
      %v564 = vpop.f32.mrb[0].mxu0
      %v565 = vadd.f32 0.0, %v564
      %v566 = vpop.f32.mrb[0].mxu0
      %567 = vmatprep.mubr.f32.mxu0 0.0
      %568 = vmatmul.mubr.f32.gmra.mrb[0].mxu0 %v346
      %v569 = vpop.f32.mrb[0].mxu0
      %v570 = vadd.f32 0.0, %v569
      %v571 = vpop.f32.mrb[0].mxu0
      %572 = vmatprep.mubr.f32.mxu0 0.0
      %573 = vmatmul.mubr.f32.gmra.mrb[0].mxu0 %v349
      %v574 = vpop.f32.mrb[0].mxu0
      %v575 = vadd.f32 0.0, %v574
      %v576 = vpop.f32.mrb[0].mxu0
      %577 = vmatprep.mubr.f32.mxu0 0.0
      %578 = vmatmul.mubr.f32.gmra.mrb[0].mxu0 %v352
      %v579 = vpop.f32.mrb[0].mxu0
      %v580 = vadd.f32 0.0, %v579
      %v581 = vpop.f32.mrb[0].mxu0
      %582 = vdwg.mxu0
      %583 = vst [vmem:[#allocation2] sm:$0xff] %v425
      %584 = vst [vmem:[#allocation2 + $0x8] sm:$0xff] %v430
      %585 = vst [vmem:[#allocation2 + $0x10] sm:$0xff] %v435
      %586 = vst [vmem:[#allocation2 + $0x18] sm:$0xff] %v440
      %587 = vst [vmem:[#allocation2 + $0x20] sm:$0xff] %v445
      %588 = vst [vmem:[#allocation2 + $0x28] sm:$0xff] %v450
      %589 = vst [vmem:[#allocation2 + $0x30] sm:$0xff] %v455
      %590 = vst [vmem:[#allocation2 + $0x38] sm:$0xff] %v460
      %591 = vst [vmem:[#allocation2 + $0x40] sm:$0xff] %v465
      %592 = vst [vmem:[#allocation2 + $0x48] sm:$0xff] %v470
      %593 = vst [vmem:[#allocation2 + $0x50] sm:$0xff] %v475
      %594 = vst [vmem:[#allocation2 + $0x58] sm:$0xff] %v480
      %595 = vst [vmem:[#allocation2 + $0x60] sm:$0xff] %v485
      %596 = vst [vmem:[#allocation2 + $0x68] sm:$0xff] %v490
      %597 = vst [vmem:[#allocation2 + $0x70] sm:$0xff] %v495
      %598 = vst [vmem:[#allocation2 + $0x78] sm:$0xff] %v500
      %599 = vst [vmem:[#allocation2 + $0x80] sm:$0xff] %v505
      %600 = vst [vmem:[#allocation2 + $0x88] sm:$0xff] %v510
      %601 = vst [vmem:[#allocation2 + $0x90] sm:$0xff] %v515
      %602 = vst [vmem:[#allocation2 + $0x98] sm:$0xff] %v520
      %603 = vst [vmem:[#allocation2 + $0xa0] sm:$0xff] %v525
      %604 = vst [vmem:[#allocation2 + $0xa8] sm:$0xff] %v530
      %605 = vst [vmem:[#allocation2 + $0xb0] sm:$0xff] %v535
      %606 = vst [vmem:[#allocation2 + $0xb8] sm:$0xff] %v540
      %607 = vst [vmem:[#allocation2 + $0xc0] sm:$0xff] %v545
      %608 = vst [vmem:[#allocation2 + $0xc8] sm:$0xff] %v550
      %609 = vst [vmem:[#allocation2 + $0xd0] sm:$0xff] %v555
      %610 = vst [vmem:[#allocation2 + $0xd8] sm:$0xff] %v560
      %611 = vst [vmem:[#allocation2 + $0xe0] sm:$0xff] %v565
      %612 = vst [vmem:[#allocation2 + $0xe8] sm:$0xff] %v570
      %613 = vst [vmem:[#allocation2 + $0xf0] sm:$0xff] %v575
      %614 = vst [vmem:[#allocation2 + $0xf8] sm:$0xff] %v580
      %v615 = vld [vmem:[%s223 + $0x1] sm:$0xff]
      %v616 = vld [vmem:[%s223 + $0x9] sm:$0xff]
      %v617 = vld [vmem:[%s223 + $0x19] sm:$0xff]
      %v618 = vld [vmem:[%s223 + $0x21] sm:$0xff]
      %v619 = vld [vmem:[%s223 + $0x31] sm:$0xff]
      %v620 = vld [vmem:[%s223 + $0x39] sm:$0xff]
      %v621 = vld [vmem:[%s223 + $0x49] sm:$0xff]
      %v622 = vld [vmem:[%s223 + $0x51] sm:$0xff]
      %v623 = vld [vmem:[%s223 + $0x61] sm:$0xff]
      %v624 = vld [vmem:[%s223 + $0x69] sm:$0xff]
      %v625 = vld [vmem:[%s223 + $0x79] sm:$0xff]
      %v626 = vld [vmem:[%s223 + $0x81] sm:$0xff]
      %v627 = vld [vmem:[%s223 + $0x91] sm:$0xff]
      %v628 = vld [vmem:[%s223 + $0x99] sm:$0xff]
      %v629 = vld [vmem:[%s223 + $0xa9] sm:$0xff]
      %v630 = vld [vmem:[%s223 + $0xb1] sm:$0xff]
      %v631 = vld [vmem:[%s223 + $0xc1] sm:$0xff]
      %v632 = vld [vmem:[%s223 + $0xc9] sm:$0xff]
      %v633 = vld [vmem:[%s223 + $0xd9] sm:$0xff]
      %v634 = vld [vmem:[%s223 + $0xe1] sm:$0xff]
      %v635 = vld [vmem:[%s223 + $0xf1] sm:$0xff]
      %v636 = vld [vmem:[%s223 + $0xf9] sm:$0xff]
      %v637 = vld [vmem:[%s223 + $0x109] sm:$0xff]
      %v638 = vld [vmem:[%s223 + $0x111] sm:$0xff]
      %v639 = vld [vmem:[%s223 + $0x121] sm:$0xff]
      %v640 = vld [vmem:[%s223 + $0x129] sm:$0xff]
      %v641 = vld [vmem:[%s223 + $0x139] sm:$0xff]
      %v642 = vld [vmem:[%s223 + $0x141] sm:$0xff]
      %v643 = vld [vmem:[%s223 + $0x151] sm:$0xff]
      %v644 = vld [vmem:[%s223 + $0x159] sm:$0xff]
      %v645 = vld [vmem:[%s223 + $0x169] sm:$0xff]
      %v646 = vld [vmem:[%s223 + $0x171] sm:$0xff]
      %s647 = scalar_lea.vmem %s1, 4
      %v648 = vld [vmem:[%s647] sm:$0xf]
      %v650 = vsel %vm257, %v615, 0
      %v653 = vsel %vm257, %v616, 0
      %v656 = vsel %vm257, %v617, 0
      %v659 = vsel %vm257, %v618, 0
      %v662 = vsel %vm257, %v619, 0
      %v665 = vsel %vm257, %v620, 0
      %v668 = vsel %vm257, %v621, 0
      %v671 = vsel %vm257, %v622, 0
      %v674 = vsel %vm257, %v623, 0
      %v677 = vsel %vm257, %v624, 0
      %v680 = vsel %vm257, %v625, 0
      %v683 = vsel %vm257, %v626, 0
      %v686 = vsel %vm257, %v627, 0
      %v689 = vsel %vm257, %v628, 0
      %v692 = vsel %vm257, %v629, 0
      %v695 = vsel %vm257, %v630, 0
      %v698 = vsel %vm257, %v631, 0
      %v701 = vsel %vm257, %v632, 0
      %v704 = vsel %vm257, %v633, 0
      %v707 = vsel %vm257, %v634, 0
      %v710 = vsel %vm257, %v635, 0
      %v713 = vsel %vm257, %v636, 0
      %v716 = vsel %vm257, %v637, 0
      %v719 = vsel %vm257, %v638, 0
      %v722 = vsel %vm257, %v639, 0
      %v725 = vsel %vm257, %v640, 0
      %v728 = vsel %vm257, %v641, 0
      %v731 = vsel %vm257, %v642, 0
      %v734 = vsel %vm257, %v643, 0
      %v737 = vsel %vm257, %v644, 0
      %v740 = vsel %vm257, %v645, 0
      %v743 = vsel %vm257, %v646, 0
      %v746 = vsel %vm354, %v648, 0
      %748 = vmatprep.subr.mxu0 0.0
      %749 = vmatpush1.msra.mxu0 %v746
      %750 = vmatprep.subr.mxu0 0.0
      %751 = vmatpush1.msra.mxu0 0.0
      %752 = vmatprep.subr.mxu0 0.0
      %753 = vmatpush1.msra.mxu0 0.0
      %754 = vmatprep.subr.mxu0 0.0
      %755 = vmatpush1.msra.mxu0 0.0
      %756 = vmatprep.subr.mxu0 0.0
      %757 = vmatpush1.msra.mxu0 0.0
      %758 = vmatprep.subr.mxu0 0.0
      %759 = vmatpush1.msra.mxu0 0.0
      %760 = vmatprep.subr.mxu0 0.0
      %761 = vmatpush1.msra.mxu0 0.0
      %762 = vmatprep.subr.mxu0 0.0
      %763 = vmatpush1.msra.mxu0 0.0
      %764 = vmatprep.subr.mxu0 0.0
      %765 = vmatpush1.msra.mxu0 0.0
      %766 = vmatprep.subr.mxu0 0.0
      %767 = vmatpush1.msra.mxu0 0.0
      %768 = vmatprep.subr.mxu0 0.0
      %769 = vmatpush1.msra.mxu0 0.0
      %770 = vmatprep.subr.mxu0 0.0
      %771 = vmatpush1.msra.mxu0 0.0
      %772 = vmatprep.subr.mxu0 0.0
      %773 = vmatpush1.msra.mxu0 0.0
      %774 = vmatprep.subr.mxu0 0.0
      %775 = vmatpush1.msra.mxu0 0.0
      %776 = vmatprep.subr.mxu0 0.0
      %777 = vmatpush1.msra.mxu0 0.0
      %778 = vmatprep.subr.mxu0 0.0
      %779 = vmatpush1.msra.mxu0 0.0
      %780 = vmatprep.subr.mxu0 0.0
      %781 = vmatpush1.msra.mxu0 0.0
      %782 = vmatprep.subr.mxu0 0.0
      %783 = vmatpush1.msra.mxu0 0.0
      %784 = vmatprep.subr.mxu0 0.0
      %785 = vmatpush1.msra.mxu0 0.0
      %786 = vmatprep.subr.mxu0 0.0
      %787 = vmatpush1.msra.mxu0 0.0
      %788 = vmatprep.subr.mxu0 0.0
      %789 = vmatpush1.msra.mxu0 0.0
      %790 = vmatprep.subr.mxu0 0.0
      %791 = vmatpush1.msra.mxu0 0.0
      %792 = vmatprep.subr.mxu0 0.0
      %793 = vmatpush1.msra.mxu0 0.0
      %794 = vmatprep.subr.mxu0 0.0
      %795 = vmatpush1.msra.mxu0 0.0
      %796 = vmatprep.subr.mxu0 0.0
      %797 = vmatpush1.msra.mxu0 0.0
      %798 = vmatprep.subr.mxu0 0.0
      %799 = vmatpush1.msra.mxu0 0.0
      %800 = vmatprep.subr.mxu0 0.0
      %801 = vmatpush1.msra.mxu0 0.0
      %802 = vmatprep.subr.mxu0 0.0
      %803 = vmatpush1.msra.mxu0 0.0
      %804 = vmatprep.subr.mxu0 0.0
      %805 = vmatpush1.msra.mxu0 0.0
      %806 = vmatprep.subr.mxu0 0.0
      %807 = vmatpush1.msra.mxu0 0.0
      %808 = vmatprep.subr.mxu0 0.0
      %809 = vmatpush1.msra.mxu0 0.0
      %810 = vmatprep.subr.mxu0 0.0
      %811 = vmatpush1.msra.mxu0 0.0
      %812 = vmatprep.mubr.f32.mxu0 0.0
      %813 = vmatmul.mubr.f32.gmra.mrb[0].mxu0 %v650
      %v814 = vpop.f32.mrb[0].mxu0
      %v815 = vadd.f32 0.0, %v814
      %v816 = vpop.f32.mrb[0].mxu0
      %817 = vmatprep.mubr.f32.mxu0 0.0
      %818 = vmatmul.mubr.f32.gmra.mrb[0].mxu0 %v653
      %v819 = vpop.f32.mrb[0].mxu0
      %v820 = vadd.f32 0.0, %v819
      %v821 = vpop.f32.mrb[0].mxu0
      %822 = vmatprep.mubr.f32.mxu0 0.0
      %823 = vmatmul.mubr.f32.gmra.mrb[0].mxu0 %v656
      %v824 = vpop.f32.mrb[0].mxu0
      %v825 = vadd.f32 0.0, %v824
      %v826 = vpop.f32.mrb[0].mxu0
      %827 = vmatprep.mubr.f32.mxu0 0.0
      %828 = vmatmul.mubr.f32.gmra.mrb[0].mxu0 %v659
      %v829 = vpop.f32.mrb[0].mxu0
      %v830 = vadd.f32 0.0, %v829
      %v831 = vpop.f32.mrb[0].mxu0
      %832 = vmatprep.mubr.f32.mxu0 0.0
      %833 = vmatmul.mubr.f32.gmra.mrb[0].mxu0 %v662
      %v834 = vpop.f32.mrb[0].mxu0
      %v835 = vadd.f32 0.0, %v834
      %v836 = vpop.f32.mrb[0].mxu0
      %837 = vmatprep.mubr.f32.mxu0 0.0
      %838 = vmatmul.mubr.f32.gmra.mrb[0].mxu0 %v665
      %v839 = vpop.f32.mrb[0].mxu0
      %v840 = vadd.f32 0.0, %v839
      %v841 = vpop.f32.mrb[0].mxu0
      %842 = vmatprep.mubr.f32.mxu0 0.0
      %843 = vmatmul.mubr.f32.gmra.mrb[0].mxu0 %v668
      %v844 = vpop.f32.mrb[0].mxu0
      %v845 = vadd.f32 0.0, %v844
      %v846 = vpop.f32.mrb[0].mxu0
      %847 = vmatprep.mubr.f32.mxu0 0.0
      %848 = vmatmul.mubr.f32.gmra.mrb[0].mxu0 %v671
      %v849 = vpop.f32.mrb[0].mxu0
      %v850 = vadd.f32 0.0, %v849
      %v851 = vpop.f32.mrb[0].mxu0
      %852 = vmatprep.mubr.f32.mxu0 0.0
      %853 = vmatmul.mubr.f32.gmra.mrb[0].mxu0 %v674
      %v854 = vpop.f32.mrb[0].mxu0
      %v855 = vadd.f32 0.0, %v854
      %v856 = vpop.f32.mrb[0].mxu0
      %857 = vmatprep.mubr.f32.mxu0 0.0
      %858 = vmatmul.mubr.f32.gmra.mrb[0].mxu0 %v677
      %v859 = vpop.f32.mrb[0].mxu0
      %v860 = vadd.f32 0.0, %v859
      %v861 = vpop.f32.mrb[0].mxu0
      %862 = vmatprep.mubr.f32.mxu0 0.0
      %863 = vmatmul.mubr.f32.gmra.mrb[0].mxu0 %v680
      %v864 = vpop.f32.mrb[0].mxu0
      %v865 = vadd.f32 0.0, %v864
      %v866 = vpop.f32.mrb[0].mxu0
      %867 = vmatprep.mubr.f32.mxu0 0.0
      %868 = vmatmul.mubr.f32.gmra.mrb[0].mxu0 %v683
      %v869 = vpop.f32.mrb[0].mxu0
      %v870 = vadd.f32 0.0, %v869
      %v871 = vpop.f32.mrb[0].mxu0
      %872 = vmatprep.mubr.f32.mxu0 0.0
      %873 = vmatmul.mubr.f32.gmra.mrb[0].mxu0 %v686
      %v874 = vpop.f32.mrb[0].mxu0
      %v875 = vadd.f32 0.0, %v874
      %v876 = vpop.f32.mrb[0].mxu0
      %877 = vmatprep.mubr.f32.mxu0 0.0
      %878 = vmatmul.mubr.f32.gmra.mrb[0].mxu0 %v689
      %v879 = vpop.f32.mrb[0].mxu0
      %v880 = vadd.f32 0.0, %v879
      %v881 = vpop.f32.mrb[0].mxu0
      %882 = vmatprep.mubr.f32.mxu0 0.0
      %883 = vmatmul.mubr.f32.gmra.mrb[0].mxu0 %v692
      %v884 = vpop.f32.mrb[0].mxu0
      %v885 = vadd.f32 0.0, %v884
      %v886 = vpop.f32.mrb[0].mxu0
      %887 = vmatprep.mubr.f32.mxu0 0.0
      %888 = vmatmul.mubr.f32.gmra.mrb[0].mxu0 %v695
      %v889 = vpop.f32.mrb[0].mxu0
      %v890 = vadd.f32 0.0, %v889
      %v891 = vpop.f32.mrb[0].mxu0
      %892 = vmatprep.mubr.f32.mxu0 0.0
      %893 = vmatmul.mubr.f32.gmra.mrb[0].mxu0 %v698
      %v894 = vpop.f32.mrb[0].mxu0
      %v895 = vadd.f32 0.0, %v894
      %v896 = vpop.f32.mrb[0].mxu0
      %897 = vmatprep.mubr.f32.mxu0 0.0
      %898 = vmatmul.mubr.f32.gmra.mrb[0].mxu0 %v701
      %v899 = vpop.f32.mrb[0].mxu0
      %v900 = vadd.f32 0.0, %v899
      %v901 = vpop.f32.mrb[0].mxu0
      %902 = vmatprep.mubr.f32.mxu0 0.0
      %903 = vmatmul.mubr.f32.gmra.mrb[0].mxu0 %v704
      %v904 = vpop.f32.mrb[0].mxu0
      %v905 = vadd.f32 0.0, %v904
      %v906 = vpop.f32.mrb[0].mxu0
      %907 = vmatprep.mubr.f32.mxu0 0.0
      %908 = vmatmul.mubr.f32.gmra.mrb[0].mxu0 %v707
      %v909 = vpop.f32.mrb[0].mxu0
      %v910 = vadd.f32 0.0, %v909
      %v911 = vpop.f32.mrb[0].mxu0
      %912 = vmatprep.mubr.f32.mxu0 0.0
      %913 = vmatmul.mubr.f32.gmra.mrb[0].mxu0 %v710
      %v914 = vpop.f32.mrb[0].mxu0
      %v915 = vadd.f32 0.0, %v914
      %v916 = vpop.f32.mrb[0].mxu0
      %917 = vmatprep.mubr.f32.mxu0 0.0
      %918 = vmatmul.mubr.f32.gmra.mrb[0].mxu0 %v713
      %v919 = vpop.f32.mrb[0].mxu0
      %v920 = vadd.f32 0.0, %v919
      %v921 = vpop.f32.mrb[0].mxu0
      %922 = vmatprep.mubr.f32.mxu0 0.0
      %923 = vmatmul.mubr.f32.gmra.mrb[0].mxu0 %v716
      %v924 = vpop.f32.mrb[0].mxu0
      %v925 = vadd.f32 0.0, %v924
      %v926 = vpop.f32.mrb[0].mxu0
      %927 = vmatprep.mubr.f32.mxu0 0.0
      %928 = vmatmul.mubr.f32.gmra.mrb[0].mxu0 %v719
      %v929 = vpop.f32.mrb[0].mxu0
      %v930 = vadd.f32 0.0, %v929
      %v931 = vpop.f32.mrb[0].mxu0
      %932 = vmatprep.mubr.f32.mxu0 0.0
      %933 = vmatmul.mubr.f32.gmra.mrb[0].mxu0 %v722
      %v934 = vpop.f32.mrb[0].mxu0
      %v935 = vadd.f32 0.0, %v934
      %v936 = vpop.f32.mrb[0].mxu0
      %937 = vmatprep.mubr.f32.mxu0 0.0
      %938 = vmatmul.mubr.f32.gmra.mrb[0].mxu0 %v725
      %v939 = vpop.f32.mrb[0].mxu0
      %v940 = vadd.f32 0.0, %v939
      %v941 = vpop.f32.mrb[0].mxu0
      %942 = vmatprep.mubr.f32.mxu0 0.0
      %943 = vmatmul.mubr.f32.gmra.mrb[0].mxu0 %v728
      %v944 = vpop.f32.mrb[0].mxu0
      %v945 = vadd.f32 0.0, %v944
      %v946 = vpop.f32.mrb[0].mxu0
      %947 = vmatprep.mubr.f32.mxu0 0.0
      %948 = vmatmul.mubr.f32.gmra.mrb[0].mxu0 %v731
      %v949 = vpop.f32.mrb[0].mxu0
      %v950 = vadd.f32 0.0, %v949
      %v951 = vpop.f32.mrb[0].mxu0
      %952 = vmatprep.mubr.f32.mxu0 0.0
      %953 = vmatmul.mubr.f32.gmra.mrb[0].mxu0 %v734
      %v954 = vpop.f32.mrb[0].mxu0
      %v955 = vadd.f32 0.0, %v954
      %v956 = vpop.f32.mrb[0].mxu0
      %957 = vmatprep.mubr.f32.mxu0 0.0
      %958 = vmatmul.mubr.f32.gmra.mrb[0].mxu0 %v737
      %v959 = vpop.f32.mrb[0].mxu0
      %v960 = vadd.f32 0.0, %v959
      %v961 = vpop.f32.mrb[0].mxu0
      %962 = vmatprep.mubr.f32.mxu0 0.0
      %963 = vmatmul.mubr.f32.gmra.mrb[0].mxu0 %v740
      %v964 = vpop.f32.mrb[0].mxu0
      %v965 = vadd.f32 0.0, %v964
      %v966 = vpop.f32.mrb[0].mxu0
      %967 = vmatprep.mubr.f32.mxu0 0.0
      %968 = vmatmul.mubr.f32.gmra.mrb[0].mxu0 %v743
      %v969 = vpop.f32.mrb[0].mxu0
      %v970 = vadd.f32 0.0, %v969
      %v971 = vpop.f32.mrb[0].mxu0
      %972 = vdwg.mxu0
      %v973 = vld [vmem:[#allocation2] sm:$0xff]
      %v974 = vld [vmem:[#allocation2 + $0x8] sm:$0xff]
      %v975 = vld [vmem:[#allocation2 + $0x10] sm:$0xff]
      %v976 = vld [vmem:[#allocation2 + $0x18] sm:$0xff]
      %v977 = vld [vmem:[#allocation2 + $0x20] sm:$0xff]
      %v978 = vld [vmem:[#allocation2 + $0x28] sm:$0xff]
      %v979 = vld [vmem:[#allocation2 + $0x30] sm:$0xff]
      %v980 = vld [vmem:[#allocation2 + $0x38] sm:$0xff]
      %v981 = vld [vmem:[#allocation2 + $0x40] sm:$0xff]
      %v982 = vld [vmem:[#allocation2 + $0x48] sm:$0xff]
      %v983 = vld [vmem:[#allocation2 + $0x50] sm:$0xff]
      %v984 = vld [vmem:[#allocation2 + $0x58] sm:$0xff]
      %v985 = vld [vmem:[#allocation2 + $0x60] sm:$0xff]
      %v986 = vld [vmem:[#allocation2 + $0x68] sm:$0xff]
      %v987 = vld [vmem:[#allocation2 + $0x70] sm:$0xff]
      %v988 = vld [vmem:[#allocation2 + $0x78] sm:$0xff]
      %v989 = vld [vmem:[#allocation2 + $0x80] sm:$0xff]
      %v990 = vld [vmem:[#allocation2 + $0x88] sm:$0xff]
      %v991 = vld [vmem:[#allocation2 + $0x90] sm:$0xff]
      %v992 = vld [vmem:[#allocation2 + $0x98] sm:$0xff]
      %v993 = vld [vmem:[#allocation2 + $0xa0] sm:$0xff]
      %v994 = vld [vmem:[#allocation2 + $0xa8] sm:$0xff]
      %v995 = vld [vmem:[#allocation2 + $0xb0] sm:$0xff]
      %v996 = vld [vmem:[#allocation2 + $0xb8] sm:$0xff]
      %v997 = vld [vmem:[#allocation2 + $0xc0] sm:$0xff]
      %v998 = vld [vmem:[#allocation2 + $0xc8] sm:$0xff]
      %v999 = vld [vmem:[#allocation2 + $0xd0] sm:$0xff]
      %v1000 = vld [vmem:[#allocation2 + $0xd8] sm:$0xff]
      %v1001 = vld [vmem:[#allocation2 + $0xe0] sm:$0xff]
      %v1002 = vld [vmem:[#allocation2 + $0xe8] sm:$0xff]
      %v1003 = vld [vmem:[#allocation2 + $0xf0] sm:$0xff]
      %v1004 = vld [vmem:[#allocation2 + $0xf8] sm:$0xff]
      %v1005 = vadd.f32 %v973, %v815
      %v1006 = vadd.f32 %v974, %v820
      %v1007 = vadd.f32 %v975, %v825
      %v1008 = vadd.f32 %v976, %v830
      %v1009 = vadd.f32 %v977, %v835
      %v1010 = vadd.f32 %v978, %v840
      %v1011 = vadd.f32 %v979, %v845
      %v1012 = vadd.f32 %v980, %v850
      %v1013 = vadd.f32 %v981, %v855
      %v1014 = vadd.f32 %v982, %v860
      %v1015 = vadd.f32 %v983, %v865
      %v1016 = vadd.f32 %v984, %v870
      %v1017 = vadd.f32 %v985, %v875
      %v1018 = vadd.f32 %v986, %v880
      %v1019 = vadd.f32 %v987, %v885
      %v1020 = vadd.f32 %v988, %v890
      %v1021 = vadd.f32 %v989, %v895
      %v1022 = vadd.f32 %v990, %v900
      %v1023 = vadd.f32 %v991, %v905
      %v1024 = vadd.f32 %v992, %v910
      %v1025 = vadd.f32 %v993, %v915
      %v1026 = vadd.f32 %v994, %v920
      %v1027 = vadd.f32 %v995, %v925
      %v1028 = vadd.f32 %v996, %v930
      %v1029 = vadd.f32 %v997, %v935
      %v1030 = vadd.f32 %v998, %v940
      %v1031 = vadd.f32 %v999, %v945
      %v1032 = vadd.f32 %v1000, %v950
      %v1033 = vadd.f32 %v1001, %v955
      %v1034 = vadd.f32 %v1002, %v960
      %v1035 = vadd.f32 %v1003, %v965
      %v1036 = vadd.f32 %v1004, %v970
      %1037 = vst [vmem:[#allocation2] sm:$0xff] %v1005
      %1038 = vst [vmem:[#allocation2 + $0x8] sm:$0xff] %v1006
      %1039 = vst [vmem:[#allocation2 + $0x10] sm:$0xff] %v1007
      %1040 = vst [vmem:[#allocation2 + $0x18] sm:$0xff] %v1008
      %1041 = vst [vmem:[#allocation2 + $0x20] sm:$0xff] %v1009
      %1042 = vst [vmem:[#allocation2 + $0x28] sm:$0xff] %v1010
      %1043 = vst [vmem:[#allocation2 + $0x30] sm:$0xff] %v1011
      %1044 = vst [vmem:[#allocation2 + $0x38] sm:$0xff] %v1012
      %1045 = vst [vmem:[#allocation2 + $0x40] sm:$0xff] %v1013
      %1046 = vst [vmem:[#allocation2 + $0x48] sm:$0xff] %v1014
      %1047 = vst [vmem:[#allocation2 + $0x50] sm:$0xff] %v1015
      %1048 = vst [vmem:[#allocation2 + $0x58] sm:$0xff] %v1016
      %1049 = vst [vmem:[#allocation2 + $0x60] sm:$0xff] %v1017
      %1050 = vst [vmem:[#allocation2 + $0x68] sm:$0xff] %v1018
      %1051 = vst [vmem:[#allocation2 + $0x70] sm:$0xff] %v1019
      %1052 = vst [vmem:[#allocation2 + $0x78] sm:$0xff] %v1020
      %1053 = vst [vmem:[#allocation2 + $0x80] sm:$0xff] %v1021
      %1054 = vst [vmem:[#allocation2 + $0x88] sm:$0xff] %v1022
      %1055 = vst [vmem:[#allocation2 + $0x90] sm:$0xff] %v1023
      %1056 = vst [vmem:[#allocation2 + $0x98] sm:$0xff] %v1024
      %1057 = vst [vmem:[#allocation2 + $0xa0] sm:$0xff] %v1025
      %1058 = vst [vmem:[#allocation2 + $0xa8] sm:$0xff] %v1026
      %1059 = vst [vmem:[#allocation2 + $0xb0] sm:$0xff] %v1027
      %1060 = vst [vmem:[#allocation2 + $0xb8] sm:$0xff] %v1028
      %1061 = vst [vmem:[#allocation2 + $0xc0] sm:$0xff] %v1029
      %1062 = vst [vmem:[#allocation2 + $0xc8] sm:$0xff] %v1030
      %1063 = vst [vmem:[#allocation2 + $0xd0] sm:$0xff] %v1031
      %1064 = vst [vmem:[#allocation2 + $0xd8] sm:$0xff] %v1032
      %1065 = vst [vmem:[#allocation2 + $0xe0] sm:$0xff] %v1033
      %1066 = vst [vmem:[#allocation2 + $0xe8] sm:$0xff] %v1034
      %1067 = vst [vmem:[#allocation2 + $0xf0] sm:$0xff] %v1035
      %1068 = vst [vmem:[#allocation2 + $0xf8] sm:$0xff] %v1036
      %v1069 = vld [vmem:[%s223 + $0x2] sm:$0xff]
      %v1070 = vld [vmem:[%s223 + $0xa] sm:$0xff]
      %v1071 = vld [vmem:[%s223 + $0x1a] sm:$0xff]
      %v1072 = vld [vmem:[%s223 + $0x22] sm:$0xff]
      %v1073 = vld [vmem:[%s223 + $0x32] sm:$0xff]
      %v1074 = vld [vmem:[%s223 + $0x3a] sm:$0xff]
      %v1075 = vld [vmem:[%s223 + $0x4a] sm:$0xff]
      %v1076 = vld [vmem:[%s223 + $0x52] sm:$0xff]
      %v1077 = vld [vmem:[%s223 + $0x62] sm:$0xff]
      %v1078 = vld [vmem:[%s223 + $0x6a] sm:$0xff]
      %v1079 = vld [vmem:[%s223 + $0x7a] sm:$0xff]
      %v1080 = vld [vmem:[%s223 + $0x82] sm:$0xff]
      %v1081 = vld [vmem:[%s223 + $0x92] sm:$0xff]
      %v1082 = vld [vmem:[%s223 + $0x9a] sm:$0xff]
      %v1083 = vld [vmem:[%s223 + $0xaa] sm:$0xff]
      %v1084 = vld [vmem:[%s223 + $0xb2] sm:$0xff]
      %v1085 = vld [vmem:[%s223 + $0xc2] sm:$0xff]
      %v1086 = vld [vmem:[%s223 + $0xca] sm:$0xff]
      %v1087 = vld [vmem:[%s223 + $0xda] sm:$0xff]
      %v1088 = vld [vmem:[%s223 + $0xe2] sm:$0xff]
      %v1089 = vld [vmem:[%s223 + $0xf2] sm:$0xff]
      %v1090 = vld [vmem:[%s223 + $0xfa] sm:$0xff]
      %v1091 = vld [vmem:[%s223 + $0x10a] sm:$0xff]
      %v1092 = vld [vmem:[%s223 + $0x112] sm:$0xff]
      %v1093 = vld [vmem:[%s223 + $0x122] sm:$0xff]
      %v1094 = vld [vmem:[%s223 + $0x12a] sm:$0xff]
      %v1095 = vld [vmem:[%s223 + $0x13a] sm:$0xff]
      %v1096 = vld [vmem:[%s223 + $0x142] sm:$0xff]
      %v1097 = vld [vmem:[%s223 + $0x152] sm:$0xff]
      %v1098 = vld [vmem:[%s223 + $0x15a] sm:$0xff]
      %v1099 = vld [vmem:[%s223 + $0x16a] sm:$0xff]
      %v1100 = vld [vmem:[%s223 + $0x172] sm:$0xff]
      %s1101 = scalar_lea.vmem %s1, 8
      %v1102 = vld [vmem:[%s1101] sm:$0xf]
      %v1104 = vsel %vm257, %v1069, 0
      %v1107 = vsel %vm257, %v1070, 0
      %v1110 = vsel %vm257, %v1071, 0
      %v1113 = vsel %vm257, %v1072, 0
      %v1116 = vsel %vm257, %v1073, 0
      %v1119 = vsel %vm257, %v1074, 0
      %v1122 = vsel %vm257, %v1075, 0
      %v1125 = vsel %vm257, %v1076, 0
      %v1128 = vsel %vm257, %v1077, 0
      %v1131 = vsel %vm257, %v1078, 0
      %v1134 = vsel %vm257, %v1079, 0
      %v1137 = vsel %vm257, %v1080, 0
      %v1140 = vsel %vm257, %v1081, 0
      %v1143 = vsel %vm257, %v1082, 0
      %v1146 = vsel %vm257, %v1083, 0
      %v1149 = vsel %vm257, %v1084, 0
      %v1152 = vsel %vm257, %v1085, 0
      %v1155 = vsel %vm257, %v1086, 0
      %v1158 = vsel %vm257, %v1087, 0
      %v1161 = vsel %vm257, %v1088, 0
      %v1164 = vsel %vm257, %v1089, 0
      %v1167 = vsel %vm257, %v1090, 0
      %v1170 = vsel %vm257, %v1091, 0
      %v1173 = vsel %vm257, %v1092, 0
      %v1176 = vsel %vm257, %v1093, 0
      %v1179 = vsel %vm257, %v1094, 0
      %v1182 = vsel %vm257, %v1095, 0
      %v1185 = vsel %vm257, %v1096, 0
      %v1188 = vsel %vm257, %v1097, 0
      %v1191 = vsel %vm257, %v1098, 0
      %v1194 = vsel %vm257, %v1099, 0
      %v1197 = vsel %vm257, %v1100, 0
      %v1200 = vsel %vm354, %v1102, 0
      %1202 = vmatprep.subr.mxu0 0.0
      %1203 = vmatpush1.msra.mxu0 %v1200
      %1204 = vmatprep.subr.mxu0 0.0
      %1205 = vmatpush1.msra.mxu0 0.0
      %1206 = vmatprep.subr.mxu0 0.0
      %1207 = vmatpush1.msra.mxu0 0.0
      %1208 = vmatprep.subr.mxu0 0.0
      %1209 = vmatpush1.msra.mxu0 0.0
      %1210 = vmatprep.subr.mxu0 0.0
      %1211 = vmatpush1.msra.mxu0 0.0
      %1212 = vmatprep.subr.mxu0 0.0
      %1213 = vmatpush1.msra.mxu0 0.0
      %1214 = vmatprep.subr.mxu0 0.0
      %1215 = vmatpush1.msra.mxu0 0.0
      %1216 = vmatprep.subr.mxu0 0.0
      %1217 = vmatpush1.msra.mxu0 0.0
      %1218 = vmatprep.subr.mxu0 0.0
      %1219 = vmatpush1.msra.mxu0 0.0
      %1220 = vmatprep.subr.mxu0 0.0
      %1221 = vmatpush1.msra.mxu0 0.0
      %1222 = vmatprep.subr.mxu0 0.0
      %1223 = vmatpush1.msra.mxu0 0.0
      %1224 = vmatprep.subr.mxu0 0.0
      %1225 = vmatpush1.msra.mxu0 0.0
      %1226 = vmatprep.subr.mxu0 0.0
      %1227 = vmatpush1.msra.mxu0 0.0
      %1228 = vmatprep.subr.mxu0 0.0
      %1229 = vmatpush1.msra.mxu0 0.0
      %1230 = vmatprep.subr.mxu0 0.0
      %1231 = vmatpush1.msra.mxu0 0.0
      %1232 = vmatprep.subr.mxu0 0.0
      %1233 = vmatpush1.msra.mxu0 0.0
      %1234 = vmatprep.subr.mxu0 0.0
      %1235 = vmatpush1.msra.mxu0 0.0
      %1236 = vmatprep.subr.mxu0 0.0
      %1237 = vmatpush1.msra.mxu0 0.0
      %1238 = vmatprep.subr.mxu0 0.0
      %1239 = vmatpush1.msra.mxu0 0.0
      %1240 = vmatprep.subr.mxu0 0.0
      %1241 = vmatpush1.msra.mxu0 0.0
      %1242 = vmatprep.subr.mxu0 0.0
      %1243 = vmatpush1.msra.mxu0 0.0
      %1244 = vmatprep.subr.mxu0 0.0
      %1245 = vmatpush1.msra.mxu0 0.0
      %1246 = vmatprep.subr.mxu0 0.0
      %1247 = vmatpush1.msra.mxu0 0.0
      %1248 = vmatprep.subr.mxu0 0.0
      %1249 = vmatpush1.msra.mxu0 0.0
      %1250 = vmatprep.subr.mxu0 0.0
      %1251 = vmatpush1.msra.mxu0 0.0
      %1252 = vmatprep.subr.mxu0 0.0
      %1253 = vmatpush1.msra.mxu0 0.0
      %1254 = vmatprep.subr.mxu0 0.0
      %1255 = vmatpush1.msra.mxu0 0.0
      %1256 = vmatprep.subr.mxu0 0.0
      %1257 = vmatpush1.msra.mxu0 0.0
      %1258 = vmatprep.subr.mxu0 0.0
      %1259 = vmatpush1.msra.mxu0 0.0
      %1260 = vmatprep.subr.mxu0 0.0
      %1261 = vmatpush1.msra.mxu0 0.0
      %1262 = vmatprep.subr.mxu0 0.0
      %1263 = vmatpush1.msra.mxu0 0.0
      %1264 = vmatprep.subr.mxu0 0.0
      %1265 = vmatpush1.msra.mxu0 0.0
      %1266 = vmatprep.mubr.f32.mxu0 0.0
      %1267 = vmatmul.mubr.f32.gmra.mrb[0].mxu0 %v1104
      %v1268 = vpop.f32.mrb[0].mxu0
      %v1269 = vadd.f32 0.0, %v1268
      %v1270 = vpop.f32.mrb[0].mxu0
      %1271 = vmatprep.mubr.f32.mxu0 0.0
      %1272 = vmatmul.mubr.f32.gmra.mrb[0].mxu0 %v1107
      %v1273 = vpop.f32.mrb[0].mxu0
      %v1274 = vadd.f32 0.0, %v1273
      %v1275 = vpop.f32.mrb[0].mxu0
      %1276 = vmatprep.mubr.f32.mxu0 0.0
      %1277 = vmatmul.mubr.f32.gmra.mrb[0].mxu0 %v1110
      %v1278 = vpop.f32.mrb[0].mxu0
      %v1279 = vadd.f32 0.0, %v1278
      %v1280 = vpop.f32.mrb[0].mxu0
      %1281 = vmatprep.mubr.f32.mxu0 0.0
      %1282 = vmatmul.mubr.f32.gmra.mrb[0].mxu0 %v1113
      %v1283 = vpop.f32.mrb[0].mxu0
      %v1284 = vadd.f32 0.0, %v1283
      %v1285 = vpop.f32.mrb[0].mxu0
      %1286 = vmatprep.mubr.f32.mxu0 0.0
      %1287 = vmatmul.mubr.f32.gmra.mrb[0].mxu0 %v1116
      %v1288 = vpop.f32.mrb[0].mxu0
      %v1289 = vadd.f32 0.0, %v1288
      %v1290 = vpop.f32.mrb[0].mxu0
      %1291 = vmatprep.mubr.f32.mxu0 0.0
      %1292 = vmatmul.mubr.f32.gmra.mrb[0].mxu0 %v1119
      %v1293 = vpop.f32.mrb[0].mxu0
      %v1294 = vadd.f32 0.0, %v1293
      %v1295 = vpop.f32.mrb[0].mxu0
      %1296 = vmatprep.mubr.f32.mxu0 0.0
      %1297 = vmatmul.mubr.f32.gmra.mrb[0].mxu0 %v1122
      %v1298 = vpop.f32.mrb[0].mxu0
      %v1299 = vadd.f32 0.0, %v1298
      %v1300 = vpop.f32.mrb[0].mxu0
      %1301 = vmatprep.mubr.f32.mxu0 0.0
      %1302 = vmatmul.mubr.f32.gmra.mrb[0].mxu0 %v1125
      %v1303 = vpop.f32.mrb[0].mxu0
      %v1304 = vadd.f32 0.0, %v1303
      %v1305 = vpop.f32.mrb[0].mxu0
      %1306 = vmatprep.mubr.f32.mxu0 0.0
      %1307 = vmatmul.mubr.f32.gmra.mrb[0].mxu0 %v1128
      %v1308 = vpop.f32.mrb[0].mxu0
      %v1309 = vadd.f32 0.0, %v1308
      %v1310 = vpop.f32.mrb[0].mxu0
      %1311 = vmatprep.mubr.f32.mxu0 0.0
      %1312 = vmatmul.mubr.f32.gmra.mrb[0].mxu0 %v1131
      %v1313 = vpop.f32.mrb[0].mxu0
      %v1314 = vadd.f32 0.0, %v1313
      %v1315 = vpop.f32.mrb[0].mxu0
      %1316 = vmatprep.mubr.f32.mxu0 0.0
      %1317 = vmatmul.mubr.f32.gmra.mrb[0].mxu0 %v1134
      %v1318 = vpop.f32.mrb[0].mxu0
      %v1319 = vadd.f32 0.0, %v1318
      %v1320 = vpop.f32.mrb[0].mxu0
      %1321 = vmatprep.mubr.f32.mxu0 0.0
      %1322 = vmatmul.mubr.f32.gmra.mrb[0].mxu0 %v1137
      %v1323 = vpop.f32.mrb[0].mxu0
      %v1324 = vadd.f32 0.0, %v1323
      %v1325 = vpop.f32.mrb[0].mxu0
      %1326 = vmatprep.mubr.f32.mxu0 0.0
      %1327 = vmatmul.mubr.f32.gmra.mrb[0].mxu0 %v1140
      %v1328 = vpop.f32.mrb[0].mxu0
      %v1329 = vadd.f32 0.0, %v1328
      %v1330 = vpop.f32.mrb[0].mxu0
      %1331 = vmatprep.mubr.f32.mxu0 0.0
      %1332 = vmatmul.mubr.f32.gmra.mrb[0].mxu0 %v1143
      %v1333 = vpop.f32.mrb[0].mxu0
      %v1334 = vadd.f32 0.0, %v1333
      %v1335 = vpop.f32.mrb[0].mxu0
      %1336 = vmatprep.mubr.f32.mxu0 0.0
      %1337 = vmatmul.mubr.f32.gmra.mrb[0].mxu0 %v1146
      %v1338 = vpop.f32.mrb[0].mxu0
      %v1339 = vadd.f32 0.0, %v1338
      %v1340 = vpop.f32.mrb[0].mxu0
      %1341 = vmatprep.mubr.f32.mxu0 0.0
      %1342 = vmatmul.mubr.f32.gmra.mrb[0].mxu0 %v1149
      %v1343 = vpop.f32.mrb[0].mxu0
      %v1344 = vadd.f32 0.0, %v1343
      %v1345 = vpop.f32.mrb[0].mxu0
      %1346 = vmatprep.mubr.f32.mxu0 0.0
      %1347 = vmatmul.mubr.f32.gmra.mrb[0].mxu0 %v1152
      %v1348 = vpop.f32.mrb[0].mxu0
      %v1349 = vadd.f32 0.0, %v1348
      %v1350 = vpop.f32.mrb[0].mxu0
      %1351 = vmatprep.mubr.f32.mxu0 0.0
      %1352 = vmatmul.mubr.f32.gmra.mrb[0].mxu0 %v1155
      %v1353 = vpop.f32.mrb[0].mxu0
      %v1354 = vadd.f32 0.0, %v1353
      %v1355 = vpop.f32.mrb[0].mxu0
      %1356 = vmatprep.mubr.f32.mxu0 0.0
      %1357 = vmatmul.mubr.f32.gmra.mrb[0].mxu0 %v1158
      %v1358 = vpop.f32.mrb[0].mxu0
      %v1359 = vadd.f32 0.0, %v1358
      %v1360 = vpop.f32.mrb[0].mxu0
      %1361 = vmatprep.mubr.f32.mxu0 0.0
      %1362 = vmatmul.mubr.f32.gmra.mrb[0].mxu0 %v1161
      %v1363 = vpop.f32.mrb[0].mxu0
      %v1364 = vadd.f32 0.0, %v1363
      %v1365 = vpop.f32.mrb[0].mxu0
      %1366 = vmatprep.mubr.f32.mxu0 0.0
      %1367 = vmatmul.mubr.f32.gmra.mrb[0].mxu0 %v1164
      %v1368 = vpop.f32.mrb[0].mxu0
      %v1369 = vadd.f32 0.0, %v1368
      %v1370 = vpop.f32.mrb[0].mxu0
      %1371 = vmatprep.mubr.f32.mxu0 0.0
      %1372 = vmatmul.mubr.f32.gmra.mrb[0].mxu0 %v1167
      %v1373 = vpop.f32.mrb[0].mxu0
      %v1374 = vadd.f32 0.0, %v1373
      %v1375 = vpop.f32.mrb[0].mxu0
      %1376 = vmatprep.mubr.f32.mxu0 0.0
      %1377 = vmatmul.mubr.f32.gmra.mrb[0].mxu0 %v1170
      %v1378 = vpop.f32.mrb[0].mxu0
      %v1379 = vadd.f32 0.0, %v1378
      %v1380 = vpop.f32.mrb[0].mxu0
      %1381 = vmatprep.mubr.f32.mxu0 0.0
      %1382 = vmatmul.mubr.f32.gmra.mrb[0].mxu0 %v1173
      %v1383 = vpop.f32.mrb[0].mxu0
      %v1384 = vadd.f32 0.0, %v1383
      %v1385 = vpop.f32.mrb[0].mxu0
      %1386 = vmatprep.mubr.f32.mxu0 0.0
      %1387 = vmatmul.mubr.f32.gmra.mrb[0].mxu0 %v1176
      %v1388 = vpop.f32.mrb[0].mxu0
      %v1389 = vadd.f32 0.0, %v1388
      %v1390 = vpop.f32.mrb[0].mxu0
      %1391 = vmatprep.mubr.f32.mxu0 0.0
      %1392 = vmatmul.mubr.f32.gmra.mrb[0].mxu0 %v1179
      %v1393 = vpop.f32.mrb[0].mxu0
      %v1394 = vadd.f32 0.0, %v1393
      %v1395 = vpop.f32.mrb[0].mxu0
      %1396 = vmatprep.mubr.f32.mxu0 0.0
      %1397 = vmatmul.mubr.f32.gmra.mrb[0].mxu0 %v1182
      %v1398 = vpop.f32.mrb[0].mxu0
      %v1399 = vadd.f32 0.0, %v1398
      %v1400 = vpop.f32.mrb[0].mxu0
      %1401 = vmatprep.mubr.f32.mxu0 0.0
      %1402 = vmatmul.mubr.f32.gmra.mrb[0].mxu0 %v1185
      %v1403 = vpop.f32.mrb[0].mxu0
      %v1404 = vadd.f32 0.0, %v1403
      %v1405 = vpop.f32.mrb[0].mxu0
      %1406 = vmatprep.mubr.f32.mxu0 0.0
      %1407 = vmatmul.mubr.f32.gmra.mrb[0].mxu0 %v1188
      %v1408 = vpop.f32.mrb[0].mxu0
      %v1409 = vadd.f32 0.0, %v1408
      %v1410 = vpop.f32.mrb[0].mxu0
      %1411 = vmatprep.mubr.f32.mxu0 0.0
      %1412 = vmatmul.mubr.f32.gmra.mrb[0].mxu0 %v1191
      %v1413 = vpop.f32.mrb[0].mxu0
      %v1414 = vadd.f32 0.0, %v1413
      %v1415 = vpop.f32.mrb[0].mxu0
      %1416 = vmatprep.mubr.f32.mxu0 0.0
      %1417 = vmatmul.mubr.f32.gmra.mrb[0].mxu0 %v1194
      %v1418 = vpop.f32.mrb[0].mxu0
      %v1419 = vadd.f32 0.0, %v1418
      %v1420 = vpop.f32.mrb[0].mxu0
      %1421 = vmatprep.mubr.f32.mxu0 0.0
      %1422 = vmatmul.mubr.f32.gmra.mrb[0].mxu0 %v1197
      %v1423 = vpop.f32.mrb[0].mxu0
      %v1424 = vadd.f32 0.0, %v1423
      %v1425 = vpop.f32.mrb[0].mxu0
      %1426 = vdwg.mxu0
      %v1427 = vld [vmem:[#allocation2] sm:$0xff]
      %v1428 = vld [vmem:[#allocation2 + $0x8] sm:$0xff]
      %v1429 = vld [vmem:[#allocation2 + $0x10] sm:$0xff]
      %v1430 = vld [vmem:[#allocation2 + $0x18] sm:$0xff]
      %v1431 = vld [vmem:[#allocation2 + $0x20] sm:$0xff]
      %v1432 = vld [vmem:[#allocation2 + $0x28] sm:$0xff]
      %v1433 = vld [vmem:[#allocation2 + $0x30] sm:$0xff]
      %v1434 = vld [vmem:[#allocation2 + $0x38] sm:$0xff]
      %v1435 = vld [vmem:[#allocation2 + $0x40] sm:$0xff]
      %v1436 = vld [vmem:[#allocation2 + $0x48] sm:$0xff]
      %v1437 = vld [vmem:[#allocation2 + $0x50] sm:$0xff]
      %v1438 = vld [vmem:[#allocation2 + $0x58] sm:$0xff]
      %v1439 = vld [vmem:[#allocation2 + $0x60] sm:$0xff]
      %v1440 = vld [vmem:[#allocation2 + $0x68] sm:$0xff]
      %v1441 = vld [vmem:[#allocation2 + $0x70] sm:$0xff]
      %v1442 = vld [vmem:[#allocation2 + $0x78] sm:$0xff]
      %v1443 = vld [vmem:[#allocation2 + $0x80] sm:$0xff]
      %v1444 = vld [vmem:[#allocation2 + $0x88] sm:$0xff]
      %v1445 = vld [vmem:[#allocation2 + $0x90] sm:$0xff]
      %v1446 = vld [vmem:[#allocation2 + $0x98] sm:$0xff]
      %v1447 = vld [vmem:[#allocation2 + $0xa0] sm:$0xff]
      %v1448 = vld [vmem:[#allocation2 + $0xa8] sm:$0xff]
      %v1449 = vld [vmem:[#allocation2 + $0xb0] sm:$0xff]
      %v1450 = vld [vmem:[#allocation2 + $0xb8] sm:$0xff]
      %v1451 = vld [vmem:[#allocation2 + $0xc0] sm:$0xff]
      %v1452 = vld [vmem:[#allocation2 + $0xc8] sm:$0xff]
      %v1453 = vld [vmem:[#allocation2 + $0xd0] sm:$0xff]
      %v1454 = vld [vmem:[#allocation2 + $0xd8] sm:$0xff]
      %v1455 = vld [vmem:[#allocation2 + $0xe0] sm:$0xff]
      %v1456 = vld [vmem:[#allocation2 + $0xe8] sm:$0xff]
      %v1457 = vld [vmem:[#allocation2 + $0xf0] sm:$0xff]
      %v1458 = vld [vmem:[#allocation2 + $0xf8] sm:$0xff]
      %v1459 = vadd.f32 %v1427, %v1269
      %v1460 = vadd.f32 %v1428, %v1274
      %v1461 = vadd.f32 %v1429, %v1279
      %v1462 = vadd.f32 %v1430, %v1284
      %v1463 = vadd.f32 %v1431, %v1289
      %v1464 = vadd.f32 %v1432, %v1294
      %v1465 = vadd.f32 %v1433, %v1299
      %v1466 = vadd.f32 %v1434, %v1304
      %v1467 = vadd.f32 %v1435, %v1309
      %v1468 = vadd.f32 %v1436, %v1314
      %v1469 = vadd.f32 %v1437, %v1319
      %v1470 = vadd.f32 %v1438, %v1324
      %v1471 = vadd.f32 %v1439, %v1329
      %v1472 = vadd.f32 %v1440, %v1334
      %v1473 = vadd.f32 %v1441, %v1339
      %v1474 = vadd.f32 %v1442, %v1344
      %v1475 = vadd.f32 %v1443, %v1349
      %v1476 = vadd.f32 %v1444, %v1354
      %v1477 = vadd.f32 %v1445, %v1359
      %v1478 = vadd.f32 %v1446, %v1364
      %v1479 = vadd.f32 %v1447, %v1369
      %v1480 = vadd.f32 %v1448, %v1374
      %v1481 = vadd.f32 %v1449, %v1379
      %v1482 = vadd.f32 %v1450, %v1384
      %v1483 = vadd.f32 %v1451, %v1389
      %v1484 = vadd.f32 %v1452, %v1394
      %v1485 = vadd.f32 %v1453, %v1399
      %v1486 = vadd.f32 %v1454, %v1404
      %v1487 = vadd.f32 %v1455, %v1409
      %v1488 = vadd.f32 %v1456, %v1414
      %v1489 = vadd.f32 %v1457, %v1419
      %v1490 = vadd.f32 %v1458, %v1424
      %1491 = vst [vmem:[#allocation2] sm:$0xff] %v1459
      %1492 = vst [vmem:[#allocation2 + $0x8] sm:$0xff] %v1460
      %1493 = vst [vmem:[#allocation2 + $0x10] sm:$0xff] %v1461
      %1494 = vst [vmem:[#allocation2 + $0x18] sm:$0xff] %v1462
      %1495 = vst [vmem:[#allocation2 + $0x20] sm:$0xff] %v1463
      %1496 = vst [vmem:[#allocation2 + $0x28] sm:$0xff] %v1464
      %1497 = vst [vmem:[#allocation2 + $0x30] sm:$0xff] %v1465
      %1498 = vst [vmem:[#allocation2 + $0x38] sm:$0xff] %v1466
      %1499 = vst [vmem:[#allocation2 + $0x40] sm:$0xff] %v1467
      %1500 = vst [vmem:[#allocation2 + $0x48] sm:$0xff] %v1468
      %1501 = vst [vmem:[#allocation2 + $0x50] sm:$0xff] %v1469
      %1502 = vst [vmem:[#allocation2 + $0x58] sm:$0xff] %v1470
      %1503 = vst [vmem:[#allocation2 + $0x60] sm:$0xff] %v1471
      %1504 = vst [vmem:[#allocation2 + $0x68] sm:$0xff] %v1472
      %1505 = vst [vmem:[#allocation2 + $0x70] sm:$0xff] %v1473
      %1506 = vst [vmem:[#allocation2 + $0x78] sm:$0xff] %v1474
      %1507 = vst [vmem:[#allocation2 + $0x80] sm:$0xff] %v1475
      %1508 = vst [vmem:[#allocation2 + $0x88] sm:$0xff] %v1476
      %1509 = vst [vmem:[#allocation2 + $0x90] sm:$0xff] %v1477
      %1510 = vst [vmem:[#allocation2 + $0x98] sm:$0xff] %v1478
      %1511 = vst [vmem:[#allocation2 + $0xa0] sm:$0xff] %v1479
      %1512 = vst [vmem:[#allocation2 + $0xa8] sm:$0xff] %v1480
      %1513 = vst [vmem:[#allocation2 + $0xb0] sm:$0xff] %v1481
      %1514 = vst [vmem:[#allocation2 + $0xb8] sm:$0xff] %v1482
      %1515 = vst [vmem:[#allocation2 + $0xc0] sm:$0xff] %v1483
      %1516 = vst [vmem:[#allocation2 + $0xc8] sm:$0xff] %v1484
      %1517 = vst [vmem:[#allocation2 + $0xd0] sm:$0xff] %v1485
      %1518 = vst [vmem:[#allocation2 + $0xd8] sm:$0xff] %v1486
      %1519 = vst [vmem:[#allocation2 + $0xe0] sm:$0xff] %v1487
      %1520 = vst [vmem:[#allocation2 + $0xe8] sm:$0xff] %v1488
      %1521 = vst [vmem:[#allocation2 + $0xf0] sm:$0xff] %v1489
      %1522 = vst [vmem:[#allocation2 + $0xf8] sm:$0xff] %v1490
      %s1523 = sadd.s32 %s221, 1
      %s1524 = smul.u32 %s1523, 24
      %s1525 = scalar_lea.vmem %s210, %s1524
      %v1526 = vld [vmem:[%s1525] sm:$0xff]
      %v1527 = vld [vmem:[%s1525 + $0x8] sm:$0xff]
      %v1528 = vld [vmem:[%s1525 + $0x18] sm:$0xff]
      %v1529 = vld [vmem:[%s1525 + $0x20] sm:$0xff]
      %v1530 = vld [vmem:[%s1525 + $0x30] sm:$0xff]
      %v1531 = vld [vmem:[%s1525 + $0x38] sm:$0xff]
      %v1532 = vld [vmem:[%s1525 + $0x48] sm:$0xff]
      %v1533 = vld [vmem:[%s1525 + $0x50] sm:$0xff]
      %v1534 = vld [vmem:[%s1525 + $0x60] sm:$0xff]
      %v1535 = vld [vmem:[%s1525 + $0x68] sm:$0xff]
      %v1536 = vld [vmem:[%s1525 + $0x78] sm:$0xff]
      %v1537 = vld [vmem:[%s1525 + $0x80] sm:$0xff]
      %v1538 = vld [vmem:[%s1525 + $0x90] sm:$0xff]
      %v1539 = vld [vmem:[%s1525 + $0x98] sm:$0xff]
      %v1540 = vld [vmem:[%s1525 + $0xa8] sm:$0xff]
      %v1541 = vld [vmem:[%s1525 + $0xb0] sm:$0xff]
      %v1542 = vld [vmem:[%s1525 + $0xc0] sm:$0xff]
      %v1543 = vld [vmem:[%s1525 + $0xc8] sm:$0xff]
      %v1544 = vld [vmem:[%s1525 + $0xd8] sm:$0xff]
      %v1545 = vld [vmem:[%s1525 + $0xe0] sm:$0xff]
      %v1546 = vld [vmem:[%s1525 + $0xf0] sm:$0xff]
      %v1547 = vld [vmem:[%s1525 + $0xf8] sm:$0xff]
      %v1548 = vld [vmem:[%s1525 + $0x108] sm:$0xff]
      %v1549 = vld [vmem:[%s1525 + $0x110] sm:$0xff]
      %v1550 = vld [vmem:[%s1525 + $0x120] sm:$0xff]
      %v1551 = vld [vmem:[%s1525 + $0x128] sm:$0xff]
      %v1552 = vld [vmem:[%s1525 + $0x138] sm:$0xff]
      %v1553 = vld [vmem:[%s1525 + $0x140] sm:$0xff]
      %v1554 = vld [vmem:[%s1525 + $0x150] sm:$0xff]
      %v1555 = vld [vmem:[%s1525 + $0x158] sm:$0xff]
      %v1556 = vld [vmem:[%s1525 + $0x168] sm:$0xff]
      %v1557 = vld [vmem:[%s1525 + $0x170] sm:$0xff]
      %s1558 = scalar_lea.vmem %s1, 12
      %v1559 = vld [vmem:[%s1558] sm:$0xf]
      %v1561 = vsel %vm257, %v1526, 0
      %v1564 = vsel %vm257, %v1527, 0
      %v1567 = vsel %vm257, %v1528, 0
      %v1570 = vsel %vm257, %v1529, 0
      %v1573 = vsel %vm257, %v1530, 0
      %v1576 = vsel %vm257, %v1531, 0
      %v1579 = vsel %vm257, %v1532, 0
      %v1582 = vsel %vm257, %v1533, 0
      %v1585 = vsel %vm257, %v1534, 0
      %v1588 = vsel %vm257, %v1535, 0
      %v1591 = vsel %vm257, %v1536, 0
      %v1594 = vsel %vm257, %v1537, 0
      %v1597 = vsel %vm257, %v1538, 0
      %v1600 = vsel %vm257, %v1539, 0
      %v1603 = vsel %vm257, %v1540, 0
      %v1606 = vsel %vm257, %v1541, 0
      %v1609 = vsel %vm257, %v1542, 0
      %v1612 = vsel %vm257, %v1543, 0
      %v1615 = vsel %vm257, %v1544, 0
      %v1618 = vsel %vm257, %v1545, 0
      %v1621 = vsel %vm257, %v1546, 0
      %v1624 = vsel %vm257, %v1547, 0
      %v1627 = vsel %vm257, %v1548, 0
      %v1630 = vsel %vm257, %v1549, 0
      %v1633 = vsel %vm257, %v1550, 0
      %v1636 = vsel %vm257, %v1551, 0
      %v1639 = vsel %vm257, %v1552, 0
      %v1642 = vsel %vm257, %v1553, 0
      %v1645 = vsel %vm257, %v1554, 0
      %v1648 = vsel %vm257, %v1555, 0
      %v1651 = vsel %vm257, %v1556, 0
      %v1654 = vsel %vm257, %v1557, 0
      %v1657 = vsel %vm354, %v1559, 0
      %1659 = vmatprep.subr.mxu0 0.0
      %1660 = vmatpush1.msra.mxu0 %v1657
      %1661 = vmatprep.subr.mxu0 0.0
      %1662 = vmatpush1.msra.mxu0 0.0
      %1663 = vmatprep.subr.mxu0 0.0
      %1664 = vmatpush1.msra.mxu0 0.0
      %1665 = vmatprep.subr.mxu0 0.0
      %1666 = vmatpush1.msra.mxu0 0.0
      %1667 = vmatprep.subr.mxu0 0.0
      %1668 = vmatpush1.msra.mxu0 0.0
      %1669 = vmatprep.subr.mxu0 0.0
      %1670 = vmatpush1.msra.mxu0 0.0
      %1671 = vmatprep.subr.mxu0 0.0
      %1672 = vmatpush1.msra.mxu0 0.0
      %1673 = vmatprep.subr.mxu0 0.0
      %1674 = vmatpush1.msra.mxu0 0.0
      %1675 = vmatprep.subr.mxu0 0.0
      %1676 = vmatpush1.msra.mxu0 0.0
      %1677 = vmatprep.subr.mxu0 0.0
      %1678 = vmatpush1.msra.mxu0 0.0
      %1679 = vmatprep.subr.mxu0 0.0
      %1680 = vmatpush1.msra.mxu0 0.0
      %1681 = vmatprep.subr.mxu0 0.0
      %1682 = vmatpush1.msra.mxu0 0.0
      %1683 = vmatprep.subr.mxu0 0.0
      %1684 = vmatpush1.msra.mxu0 0.0
      %1685 = vmatprep.subr.mxu0 0.0
      %1686 = vmatpush1.msra.mxu0 0.0
      %1687 = vmatprep.subr.mxu0 0.0
      %1688 = vmatpush1.msra.mxu0 0.0
      %1689 = vmatprep.subr.mxu0 0.0
      %1690 = vmatpush1.msra.mxu0 0.0
      %1691 = vmatprep.subr.mxu0 0.0
      %1692 = vmatpush1.msra.mxu0 0.0
      %1693 = vmatprep.subr.mxu0 0.0
      %1694 = vmatpush1.msra.mxu0 0.0
      %1695 = vmatprep.subr.mxu0 0.0
      %1696 = vmatpush1.msra.mxu0 0.0
      %1697 = vmatprep.subr.mxu0 0.0
      %1698 = vmatpush1.msra.mxu0 0.0
      %1699 = vmatprep.subr.mxu0 0.0
      %1700 = vmatpush1.msra.mxu0 0.0
      %1701 = vmatprep.subr.mxu0 0.0
      %1702 = vmatpush1.msra.mxu0 0.0
      %1703 = vmatprep.subr.mxu0 0.0
      %1704 = vmatpush1.msra.mxu0 0.0
      %1705 = vmatprep.subr.mxu0 0.0
      %1706 = vmatpush1.msra.mxu0 0.0
      %1707 = vmatprep.subr.mxu0 0.0
      %1708 = vmatpush1.msra.mxu0 0.0
      %1709 = vmatprep.subr.mxu0 0.0
      %1710 = vmatpush1.msra.mxu0 0.0
      %1711 = vmatprep.subr.mxu0 0.0
      %1712 = vmatpush1.msra.mxu0 0.0
      %1713 = vmatprep.subr.mxu0 0.0
      %1714 = vmatpush1.msra.mxu0 0.0
      %1715 = vmatprep.subr.mxu0 0.0
      %1716 = vmatpush1.msra.mxu0 0.0
      %1717 = vmatprep.subr.mxu0 0.0
      %1718 = vmatpush1.msra.mxu0 0.0
      %1719 = vmatprep.subr.mxu0 0.0
      %1720 = vmatpush1.msra.mxu0 0.0
      %1721 = vmatprep.subr.mxu0 0.0
      %1722 = vmatpush1.msra.mxu0 0.0
      %1723 = vmatprep.mubr.f32.mxu0 0.0
      %1724 = vmatmul.mubr.f32.gmra.mrb[0].mxu0 %v1561
      %v1725 = vpop.f32.mrb[0].mxu0
      %v1726 = vadd.f32 0.0, %v1725
      %v1727 = vpop.f32.mrb[0].mxu0
      %1728 = vmatprep.mubr.f32.mxu0 0.0
      %1729 = vmatmul.mubr.f32.gmra.mrb[0].mxu0 %v1564
      %v1730 = vpop.f32.mrb[0].mxu0
      %v1731 = vadd.f32 0.0, %v1730
      %v1732 = vpop.f32.mrb[0].mxu0
      %1733 = vmatprep.mubr.f32.mxu0 0.0
      %1734 = vmatmul.mubr.f32.gmra.mrb[0].mxu0 %v1567
      %v1735 = vpop.f32.mrb[0].mxu0
      %v1736 = vadd.f32 0.0, %v1735
      %v1737 = vpop.f32.mrb[0].mxu0
      %1738 = vmatprep.mubr.f32.mxu0 0.0
      %1739 = vmatmul.mubr.f32.gmra.mrb[0].mxu0 %v1570
      %v1740 = vpop.f32.mrb[0].mxu0
      %v1741 = vadd.f32 0.0, %v1740
      %v1742 = vpop.f32.mrb[0].mxu0
      %1743 = vmatprep.mubr.f32.mxu0 0.0
      %1744 = vmatmul.mubr.f32.gmra.mrb[0].mxu0 %v1573
      %v1745 = vpop.f32.mrb[0].mxu0
      %v1746 = vadd.f32 0.0, %v1745
      %v1747 = vpop.f32.mrb[0].mxu0
      %1748 = vmatprep.mubr.f32.mxu0 0.0
      %1749 = vmatmul.mubr.f32.gmra.mrb[0].mxu0 %v1576
      %v1750 = vpop.f32.mrb[0].mxu0
      %v1751 = vadd.f32 0.0, %v1750
      %v1752 = vpop.f32.mrb[0].mxu0
      %1753 = vmatprep.mubr.f32.mxu0 0.0
      %1754 = vmatmul.mubr.f32.gmra.mrb[0].mxu0 %v1579
      %v1755 = vpop.f32.mrb[0].mxu0
      %v1756 = vadd.f32 0.0, %v1755
      %v1757 = vpop.f32.mrb[0].mxu0
      %1758 = vmatprep.mubr.f32.mxu0 0.0
      %1759 = vmatmul.mubr.f32.gmra.mrb[0].mxu0 %v1582
      %v1760 = vpop.f32.mrb[0].mxu0
      %v1761 = vadd.f32 0.0, %v1760
      %v1762 = vpop.f32.mrb[0].mxu0
      %1763 = vmatprep.mubr.f32.mxu0 0.0
      %1764 = vmatmul.mubr.f32.gmra.mrb[0].mxu0 %v1585
      %v1765 = vpop.f32.mrb[0].mxu0
      %v1766 = vadd.f32 0.0, %v1765
      %v1767 = vpop.f32.mrb[0].mxu0
      %1768 = vmatprep.mubr.f32.mxu0 0.0
      %1769 = vmatmul.mubr.f32.gmra.mrb[0].mxu0 %v1588
      %v1770 = vpop.f32.mrb[0].mxu0
      %v1771 = vadd.f32 0.0, %v1770
      %v1772 = vpop.f32.mrb[0].mxu0
      %1773 = vmatprep.mubr.f32.mxu0 0.0
      %1774 = vmatmul.mubr.f32.gmra.mrb[0].mxu0 %v1591
      %v1775 = vpop.f32.mrb[0].mxu0
      %v1776 = vadd.f32 0.0, %v1775
      %v1777 = vpop.f32.mrb[0].mxu0
      %1778 = vmatprep.mubr.f32.mxu0 0.0
      %1779 = vmatmul.mubr.f32.gmra.mrb[0].mxu0 %v1594
      %v1780 = vpop.f32.mrb[0].mxu0
      %v1781 = vadd.f32 0.0, %v1780
      %v1782 = vpop.f32.mrb[0].mxu0
      %1783 = vmatprep.mubr.f32.mxu0 0.0
      %1784 = vmatmul.mubr.f32.gmra.mrb[0].mxu0 %v1597
      %v1785 = vpop.f32.mrb[0].mxu0
      %v1786 = vadd.f32 0.0, %v1785
      %v1787 = vpop.f32.mrb[0].mxu0
      %1788 = vmatprep.mubr.f32.mxu0 0.0
      %1789 = vmatmul.mubr.f32.gmra.mrb[0].mxu0 %v1600
      %v1790 = vpop.f32.mrb[0].mxu0
      %v1791 = vadd.f32 0.0, %v1790
      %v1792 = vpop.f32.mrb[0].mxu0
      %1793 = vmatprep.mubr.f32.mxu0 0.0
      %1794 = vmatmul.mubr.f32.gmra.mrb[0].mxu0 %v1603
      %v1795 = vpop.f32.mrb[0].mxu0
      %v1796 = vadd.f32 0.0, %v1795
      %v1797 = vpop.f32.mrb[0].mxu0
      %1798 = vmatprep.mubr.f32.mxu0 0.0
      %1799 = vmatmul.mubr.f32.gmra.mrb[0].mxu0 %v1606
      %v1800 = vpop.f32.mrb[0].mxu0
      %v1801 = vadd.f32 0.0, %v1800
      %v1802 = vpop.f32.mrb[0].mxu0
      %1803 = vmatprep.mubr.f32.mxu0 0.0
      %1804 = vmatmul.mubr.f32.gmra.mrb[0].mxu0 %v1609
      %v1805 = vpop.f32.mrb[0].mxu0
      %v1806 = vadd.f32 0.0, %v1805
      %v1807 = vpop.f32.mrb[0].mxu0
      %1808 = vmatprep.mubr.f32.mxu0 0.0
      %1809 = vmatmul.mubr.f32.gmra.mrb[0].mxu0 %v1612
      %v1810 = vpop.f32.mrb[0].mxu0
      %v1811 = vadd.f32 0.0, %v1810
      %v1812 = vpop.f32.mrb[0].mxu0
      %1813 = vmatprep.mubr.f32.mxu0 0.0
      %1814 = vmatmul.mubr.f32.gmra.mrb[0].mxu0 %v1615
      %v1815 = vpop.f32.mrb[0].mxu0
      %v1816 = vadd.f32 0.0, %v1815
      %v1817 = vpop.f32.mrb[0].mxu0
      %1818 = vmatprep.mubr.f32.mxu0 0.0
      %1819 = vmatmul.mubr.f32.gmra.mrb[0].mxu0 %v1618
      %v1820 = vpop.f32.mrb[0].mxu0
      %v1821 = vadd.f32 0.0, %v1820
      %v1822 = vpop.f32.mrb[0].mxu0
      %1823 = vmatprep.mubr.f32.mxu0 0.0
      %1824 = vmatmul.mubr.f32.gmra.mrb[0].mxu0 %v1621
      %v1825 = vpop.f32.mrb[0].mxu0
      %v1826 = vadd.f32 0.0, %v1825
      %v1827 = vpop.f32.mrb[0].mxu0
      %1828 = vmatprep.mubr.f32.mxu0 0.0
      %1829 = vmatmul.mubr.f32.gmra.mrb[0].mxu0 %v1624
      %v1830 = vpop.f32.mrb[0].mxu0
      %v1831 = vadd.f32 0.0, %v1830
      %v1832 = vpop.f32.mrb[0].mxu0
      %1833 = vmatprep.mubr.f32.mxu0 0.0
      %1834 = vmatmul.mubr.f32.gmra.mrb[0].mxu0 %v1627
      %v1835 = vpop.f32.mrb[0].mxu0
      %v1836 = vadd.f32 0.0, %v1835
      %v1837 = vpop.f32.mrb[0].mxu0
      %1838 = vmatprep.mubr.f32.mxu0 0.0
      %1839 = vmatmul.mubr.f32.gmra.mrb[0].mxu0 %v1630
      %v1840 = vpop.f32.mrb[0].mxu0
      %v1841 = vadd.f32 0.0, %v1840
      %v1842 = vpop.f32.mrb[0].mxu0
      %1843 = vmatprep.mubr.f32.mxu0 0.0
      %1844 = vmatmul.mubr.f32.gmra.mrb[0].mxu0 %v1633
      %v1845 = vpop.f32.mrb[0].mxu0
      %v1846 = vadd.f32 0.0, %v1845
      %v1847 = vpop.f32.mrb[0].mxu0
      %1848 = vmatprep.mubr.f32.mxu0 0.0
      %1849 = vmatmul.mubr.f32.gmra.mrb[0].mxu0 %v1636
      %v1850 = vpop.f32.mrb[0].mxu0
      %v1851 = vadd.f32 0.0, %v1850
      %v1852 = vpop.f32.mrb[0].mxu0
      %1853 = vmatprep.mubr.f32.mxu0 0.0
      %1854 = vmatmul.mubr.f32.gmra.mrb[0].mxu0 %v1639
      %v1855 = vpop.f32.mrb[0].mxu0
      %v1856 = vadd.f32 0.0, %v1855
      %v1857 = vpop.f32.mrb[0].mxu0
      %1858 = vmatprep.mubr.f32.mxu0 0.0
      %1859 = vmatmul.mubr.f32.gmra.mrb[0].mxu0 %v1642
      %v1860 = vpop.f32.mrb[0].mxu0
      %v1861 = vadd.f32 0.0, %v1860
      %v1862 = vpop.f32.mrb[0].mxu0
      %1863 = vmatprep.mubr.f32.mxu0 0.0
      %1864 = vmatmul.mubr.f32.gmra.mrb[0].mxu0 %v1645
      %v1865 = vpop.f32.mrb[0].mxu0
      %v1866 = vadd.f32 0.0, %v1865
      %v1867 = vpop.f32.mrb[0].mxu0
      %1868 = vmatprep.mubr.f32.mxu0 0.0
      %1869 = vmatmul.mubr.f32.gmra.mrb[0].mxu0 %v1648
      %v1870 = vpop.f32.mrb[0].mxu0
      %v1871 = vadd.f32 0.0, %v1870
      %v1872 = vpop.f32.mrb[0].mxu0
      %1873 = vmatprep.mubr.f32.mxu0 0.0
      %1874 = vmatmul.mubr.f32.gmra.mrb[0].mxu0 %v1651
      %v1875 = vpop.f32.mrb[0].mxu0
      %v1876 = vadd.f32 0.0, %v1875
      %v1877 = vpop.f32.mrb[0].mxu0
      %1878 = vmatprep.mubr.f32.mxu0 0.0
      %1879 = vmatmul.mubr.f32.gmra.mrb[0].mxu0 %v1654
      %v1880 = vpop.f32.mrb[0].mxu0
      %v1881 = vadd.f32 0.0, %v1880
      %v1882 = vpop.f32.mrb[0].mxu0
      %1883 = vdwg.mxu0
      %v1884 = vld [vmem:[#allocation2] sm:$0xff]
      %v1885 = vld [vmem:[#allocation2 + $0x8] sm:$0xff]
      %v1886 = vld [vmem:[#allocation2 + $0x10] sm:$0xff]
      %v1887 = vld [vmem:[#allocation2 + $0x18] sm:$0xff]
      %v1888 = vld [vmem:[#allocation2 + $0x20] sm:$0xff]
      %v1889 = vld [vmem:[#allocation2 + $0x28] sm:$0xff]
      %v1890 = vld [vmem:[#allocation2 + $0x30] sm:$0xff]
      %v1891 = vld [vmem:[#allocation2 + $0x38] sm:$0xff]
      %v1892 = vld [vmem:[#allocation2 + $0x40] sm:$0xff]
      %v1893 = vld [vmem:[#allocation2 + $0x48] sm:$0xff]
      %v1894 = vld [vmem:[#allocation2 + $0x50] sm:$0xff]
      %v1895 = vld [vmem:[#allocation2 + $0x58] sm:$0xff]
      %v1896 = vld [vmem:[#allocation2 + $0x60] sm:$0xff]
      %v1897 = vld [vmem:[#allocation2 + $0x68] sm:$0xff]
      %v1898 = vld [vmem:[#allocation2 + $0x70] sm:$0xff]
      %v1899 = vld [vmem:[#allocation2 + $0x78] sm:$0xff]
      %v1900 = vld [vmem:[#allocation2 + $0x80] sm:$0xff]
      %v1901 = vld [vmem:[#allocation2 + $0x88] sm:$0xff]
      %v1902 = vld [vmem:[#allocation2 + $0x90] sm:$0xff]
      %v1903 = vld [vmem:[#allocation2 + $0x98] sm:$0xff]
      %v1904 = vld [vmem:[#allocation2 + $0xa0] sm:$0xff]
      %v1905 = vld [vmem:[#allocation2 + $0xa8] sm:$0xff]
      %v1906 = vld [vmem:[#allocation2 + $0xb0] sm:$0xff]
      %v1907 = vld [vmem:[#allocation2 + $0xb8] sm:$0xff]
      %v1908 = vld [vmem:[#allocation2 + $0xc0] sm:$0xff]
      %v1909 = vld [vmem:[#allocation2 + $0xc8] sm:$0xff]
      %v1910 = vld [vmem:[#allocation2 + $0xd0] sm:$0xff]
      %v1911 = vld [vmem:[#allocation2 + $0xd8] sm:$0xff]
      %v1912 = vld [vmem:[#allocation2 + $0xe0] sm:$0xff]
      %v1913 = vld [vmem:[#allocation2 + $0xe8] sm:$0xff]
      %v1914 = vld [vmem:[#allocation2 + $0xf0] sm:$0xff]
      %v1915 = vld [vmem:[#allocation2 + $0xf8] sm:$0xff]
      %v1916 = vadd.f32 %v1884, %v1726
      %v1917 = vadd.f32 %v1885, %v1731
      %v1918 = vadd.f32 %v1886, %v1736
      %v1919 = vadd.f32 %v1887, %v1741
      %v1920 = vadd.f32 %v1888, %v1746
      %v1921 = vadd.f32 %v1889, %v1751
      %v1922 = vadd.f32 %v1890, %v1756
      %v1923 = vadd.f32 %v1891, %v1761
      %v1924 = vadd.f32 %v1892, %v1766
      %v1925 = vadd.f32 %v1893, %v1771
      %v1926 = vadd.f32 %v1894, %v1776
      %v1927 = vadd.f32 %v1895, %v1781
      %v1928 = vadd.f32 %v1896, %v1786
      %v1929 = vadd.f32 %v1897, %v1791
      %v1930 = vadd.f32 %v1898, %v1796
      %v1931 = vadd.f32 %v1899, %v1801
      %v1932 = vadd.f32 %v1900, %v1806
      %v1933 = vadd.f32 %v1901, %v1811
      %v1934 = vadd.f32 %v1902, %v1816
      %v1935 = vadd.f32 %v1903, %v1821
      %v1936 = vadd.f32 %v1904, %v1826
      %v1937 = vadd.f32 %v1905, %v1831
      %v1938 = vadd.f32 %v1906, %v1836
      %v1939 = vadd.f32 %v1907, %v1841
      %v1940 = vadd.f32 %v1908, %v1846
      %v1941 = vadd.f32 %v1909, %v1851
      %v1942 = vadd.f32 %v1910, %v1856
      %v1943 = vadd.f32 %v1911, %v1861
      %v1944 = vadd.f32 %v1912, %v1866
      %v1945 = vadd.f32 %v1913, %v1871
      %v1946 = vadd.f32 %v1914, %v1876
      %v1947 = vadd.f32 %v1915, %v1881
      %1948 = vst [vmem:[#allocation2] sm:$0xff] %v1916
      %1949 = vst [vmem:[#allocation2 + $0x8] sm:$0xff] %v1917
      %1950 = vst [vmem:[#allocation2 + $0x10] sm:$0xff] %v1918
      %1951 = vst [vmem:[#allocation2 + $0x18] sm:$0xff] %v1919
      %1952 = vst [vmem:[#allocation2 + $0x20] sm:$0xff] %v1920
      %1953 = vst [vmem:[#allocation2 + $0x28] sm:$0xff] %v1921
      %1954 = vst [vmem:[#allocation2 + $0x30] sm:$0xff] %v1922
      %1955 = vst [vmem:[#allocation2 + $0x38] sm:$0xff] %v1923
      %1956 = vst [vmem:[#allocation2 + $0x40] sm:$0xff] %v1924
      %1957 = vst [vmem:[#allocation2 + $0x48] sm:$0xff] %v1925
      %1958 = vst [vmem:[#allocation2 + $0x50] sm:$0xff] %v1926
      %1959 = vst [vmem:[#allocation2 + $0x58] sm:$0xff] %v1927
      %1960 = vst [vmem:[#allocation2 + $0x60] sm:$0xff] %v1928
      %1961 = vst [vmem:[#allocation2 + $0x68] sm:$0xff] %v1929
      %1962 = vst [vmem:[#allocation2 + $0x70] sm:$0xff] %v1930
      %1963 = vst [vmem:[#allocation2 + $0x78] sm:$0xff] %v1931
      %1964 = vst [vmem:[#allocation2 + $0x80] sm:$0xff] %v1932
      %1965 = vst [vmem:[#allocation2 + $0x88] sm:$0xff] %v1933
      %1966 = vst [vmem:[#allocation2 + $0x90] sm:$0xff] %v1934
      %1967 = vst [vmem:[#allocation2 + $0x98] sm:$0xff] %v1935
      %1968 = vst [vmem:[#allocation2 + $0xa0] sm:$0xff] %v1936
      %1969 = vst [vmem:[#allocation2 + $0xa8] sm:$0xff] %v1937
      %1970 = vst [vmem:[#allocation2 + $0xb0] sm:$0xff] %v1938
      %1971 = vst [vmem:[#allocation2 + $0xb8] sm:$0xff] %v1939
      %1972 = vst [vmem:[#allocation2 + $0xc0] sm:$0xff] %v1940
      %1973 = vst [vmem:[#allocation2 + $0xc8] sm:$0xff] %v1941
      %1974 = vst [vmem:[#allocation2 + $0xd0] sm:$0xff] %v1942
      %1975 = vst [vmem:[#allocation2 + $0xd8] sm:$0xff] %v1943
      %1976 = vst [vmem:[#allocation2 + $0xe0] sm:$0xff] %v1944
      %1977 = vst [vmem:[#allocation2 + $0xe8] sm:$0xff] %v1945
      %1978 = vst [vmem:[#allocation2 + $0xf0] sm:$0xff] %v1946
      %1979 = vst [vmem:[#allocation2 + $0xf8] sm:$0xff] %v1947
      %v1980 = vld [vmem:[%s1525 + $0x1] sm:$0xff]
      %v1981 = vld [vmem:[%s1525 + $0x9] sm:$0xff]
      %v1982 = vld [vmem:[%s1525 + $0x19] sm:$0xff]
      %v1983 = vld [vmem:[%s1525 + $0x21] sm:$0xff]
      %v1984 = vld [vmem:[%s1525 + $0x31] sm:$0xff]
      %v1985 = vld [vmem:[%s1525 + $0x39] sm:$0xff]
      %v1986 = vld [vmem:[%s1525 + $0x49] sm:$0xff]
      %v1987 = vld [vmem:[%s1525 + $0x51] sm:$0xff]
      %v1988 = vld [vmem:[%s1525 + $0x61] sm:$0xff]
      %v1989 = vld [vmem:[%s1525 + $0x69] sm:$0xff]
      %v1990 = vld [vmem:[%s1525 + $0x79] sm:$0xff]
      %v1991 = vld [vmem:[%s1525 + $0x81] sm:$0xff]
      %v1992 = vld [vmem:[%s1525 + $0x91] sm:$0xff]
      %v1993 = vld [vmem:[%s1525 + $0x99] sm:$0xff]
      %v1994 = vld [vmem:[%s1525 + $0xa9] sm:$0xff]
      %v1995 = vld [vmem:[%s1525 + $0xb1] sm:$0xff]
      %v1996 = vld [vmem:[%s1525 + $0xc1] sm:$0xff]
      %v1997 = vld [vmem:[%s1525 + $0xc9] sm:$0xff]
      %v1998 = vld [vmem:[%s1525 + $0xd9] sm:$0xff]
      %v1999 = vld [vmem:[%s1525 + $0xe1] sm:$0xff]
      %v2000 = vld [vmem:[%s1525 + $0xf1] sm:$0xff]
      %v2001 = vld [vmem:[%s1525 + $0xf9] sm:$0xff]
      %v2002 = vld [vmem:[%s1525 + $0x109] sm:$0xff]
      %v2003 = vld [vmem:[%s1525 + $0x111] sm:$0xff]
      %v2004 = vld [vmem:[%s1525 + $0x121] sm:$0xff]
      %v2005 = vld [vmem:[%s1525 + $0x129] sm:$0xff]
      %v2006 = vld [vmem:[%s1525 + $0x139] sm:$0xff]
      %v2007 = vld [vmem:[%s1525 + $0x141] sm:$0xff]
      %v2008 = vld [vmem:[%s1525 + $0x151] sm:$0xff]
      %v2009 = vld [vmem:[%s1525 + $0x159] sm:$0xff]
      %v2010 = vld [vmem:[%s1525 + $0x169] sm:$0xff]
      %v2011 = vld [vmem:[%s1525 + $0x171] sm:$0xff]
      %s2012 = scalar_lea.vmem %s1, 16
      %v2013 = vld [vmem:[%s2012] sm:$0xf]
      %v2015 = vsel %vm257, %v1980, 0
      %v2018 = vsel %vm257, %v1981, 0
      %v2021 = vsel %vm257, %v1982, 0
      %v2024 = vsel %vm257, %v1983, 0
      %v2027 = vsel %vm257, %v1984, 0
      %v2030 = vsel %vm257, %v1985, 0
      %v2033 = vsel %vm257, %v1986, 0
      %v2036 = vsel %vm257, %v1987, 0
      %v2039 = vsel %vm257, %v1988, 0
      %v2042 = vsel %vm257, %v1989, 0
      %v2045 = vsel %vm257, %v1990, 0
      %v2048 = vsel %vm257, %v1991, 0
      %v2051 = vsel %vm257, %v1992, 0
      %v2054 = vsel %vm257, %v1993, 0
      %v2057 = vsel %vm257, %v1994, 0
      %v2060 = vsel %vm257, %v1995, 0
      %v2063 = vsel %vm257, %v1996, 0
      %v2066 = vsel %vm257, %v1997, 0
      %v2069 = vsel %vm257, %v1998, 0
      %v2072 = vsel %vm257, %v1999, 0
      %v2075 = vsel %vm257, %v2000, 0
      %v2078 = vsel %vm257, %v2001, 0
      %v2081 = vsel %vm257, %v2002, 0
      %v2084 = vsel %vm257, %v2003, 0
      %v2087 = vsel %vm257, %v2004, 0
      %v2090 = vsel %vm257, %v2005, 0
      %v2093 = vsel %vm257, %v2006, 0
      %v2096 = vsel %vm257, %v2007, 0
      %v2099 = vsel %vm257, %v2008, 0
      %v2102 = vsel %vm257, %v2009, 0
      %v2105 = vsel %vm257, %v2010, 0
      %v2108 = vsel %vm257, %v2011, 0
      %v2111 = vsel %vm354, %v2013, 0
      %2113 = vmatprep.subr.mxu0 0.0
      %2114 = vmatpush1.msra.mxu0 %v2111
      %2115 = vmatprep.subr.mxu0 0.0
      %2116 = vmatpush1.msra.mxu0 0.0
      %2117 = vmatprep.subr.mxu0 0.0
      %2118 = vmatpush1.msra.mxu0 0.0
      %2119 = vmatprep.subr.mxu0 0.0
      %2120 = vmatpush1.msra.mxu0 0.0
      %2121 = vmatprep.subr.mxu0 0.0
      %2122 = vmatpush1.msra.mxu0 0.0
      %2123 = vmatprep.subr.mxu0 0.0
      %2124 = vmatpush1.msra.mxu0 0.0
      %2125 = vmatprep.subr.mxu0 0.0
      %2126 = vmatpush1.msra.mxu0 0.0
      %2127 = vmatprep.subr.mxu0 0.0
      %2128 = vmatpush1.msra.mxu0 0.0
      %2129 = vmatprep.subr.mxu0 0.0
      %2130 = vmatpush1.msra.mxu0 0.0
      %2131 = vmatprep.subr.mxu0 0.0
      %2132 = vmatpush1.msra.mxu0 0.0
      %2133 = vmatprep.subr.mxu0 0.0
      %2134 = vmatpush1.msra.mxu0 0.0
      %2135 = vmatprep.subr.mxu0 0.0
      %2136 = vmatpush1.msra.mxu0 0.0
      %2137 = vmatprep.subr.mxu0 0.0
      %2138 = vmatpush1.msra.mxu0 0.0
      %2139 = vmatprep.subr.mxu0 0.0
      %2140 = vmatpush1.msra.mxu0 0.0
      %2141 = vmatprep.subr.mxu0 0.0
      %2142 = vmatpush1.msra.mxu0 0.0
      %2143 = vmatprep.subr.mxu0 0.0
      %2144 = vmatpush1.msra.mxu0 0.0
      %2145 = vmatprep.subr.mxu0 0.0
      %2146 = vmatpush1.msra.mxu0 0.0
      %2147 = vmatprep.subr.mxu0 0.0
      %2148 = vmatpush1.msra.mxu0 0.0
      %2149 = vmatprep.subr.mxu0 0.0
      %2150 = vmatpush1.msra.mxu0 0.0
      %2151 = vmatprep.subr.mxu0 0.0
      %2152 = vmatpush1.msra.mxu0 0.0
      %2153 = vmatprep.subr.mxu0 0.0
      %2154 = vmatpush1.msra.mxu0 0.0
      %2155 = vmatprep.subr.mxu0 0.0
      %2156 = vmatpush1.msra.mxu0 0.0
      %2157 = vmatprep.subr.mxu0 0.0
      %2158 = vmatpush1.msra.mxu0 0.0
      %2159 = vmatprep.subr.mxu0 0.0
      %2160 = vmatpush1.msra.mxu0 0.0
      %2161 = vmatprep.subr.mxu0 0.0
      %2162 = vmatpush1.msra.mxu0 0.0
      %2163 = vmatprep.subr.mxu0 0.0
      %2164 = vmatpush1.msra.mxu0 0.0
      %2165 = vmatprep.subr.mxu0 0.0
      %2166 = vmatpush1.msra.mxu0 0.0
      %2167 = vmatprep.subr.mxu0 0.0
      %2168 = vmatpush1.msra.mxu0 0.0
      %2169 = vmatprep.subr.mxu0 0.0
      %2170 = vmatpush1.msra.mxu0 0.0
      %2171 = vmatprep.subr.mxu0 0.0
      %2172 = vmatpush1.msra.mxu0 0.0
      %2173 = vmatprep.subr.mxu0 0.0
      %2174 = vmatpush1.msra.mxu0 0.0
      %2175 = vmatprep.subr.mxu0 0.0
      %2176 = vmatpush1.msra.mxu0 0.0
      %2177 = vmatprep.mubr.f32.mxu0 0.0
      %2178 = vmatmul.mubr.f32.gmra.mrb[0].mxu0 %v2015
      %v2179 = vpop.f32.mrb[0].mxu0
      %v2180 = vadd.f32 0.0, %v2179
      %v2181 = vpop.f32.mrb[0].mxu0
      %2182 = vmatprep.mubr.f32.mxu0 0.0
      %2183 = vmatmul.mubr.f32.gmra.mrb[0].mxu0 %v2018
      %v2184 = vpop.f32.mrb[0].mxu0
      %v2185 = vadd.f32 0.0, %v2184
      %v2186 = vpop.f32.mrb[0].mxu0
      %2187 = vmatprep.mubr.f32.mxu0 0.0
      %2188 = vmatmul.mubr.f32.gmra.mrb[0].mxu0 %v2021
      %v2189 = vpop.f32.mrb[0].mxu0
      %v2190 = vadd.f32 0.0, %v2189
      %v2191 = vpop.f32.mrb[0].mxu0
      %2192 = vmatprep.mubr.f32.mxu0 0.0
      %2193 = vmatmul.mubr.f32.gmra.mrb[0].mxu0 %v2024
      %v2194 = vpop.f32.mrb[0].mxu0
      %v2195 = vadd.f32 0.0, %v2194
      %v2196 = vpop.f32.mrb[0].mxu0
      %2197 = vmatprep.mubr.f32.mxu0 0.0
      %2198 = vmatmul.mubr.f32.gmra.mrb[0].mxu0 %v2027
      %v2199 = vpop.f32.mrb[0].mxu0
      %v2200 = vadd.f32 0.0, %v2199
      %v2201 = vpop.f32.mrb[0].mxu0
      %2202 = vmatprep.mubr.f32.mxu0 0.0
      %2203 = vmatmul.mubr.f32.gmra.mrb[0].mxu0 %v2030
      %v2204 = vpop.f32.mrb[0].mxu0
      %v2205 = vadd.f32 0.0, %v2204
      %v2206 = vpop.f32.mrb[0].mxu0
      %2207 = vmatprep.mubr.f32.mxu0 0.0
      %2208 = vmatmul.mubr.f32.gmra.mrb[0].mxu0 %v2033
      %v2209 = vpop.f32.mrb[0].mxu0
      %v2210 = vadd.f32 0.0, %v2209
      %v2211 = vpop.f32.mrb[0].mxu0
      %2212 = vmatprep.mubr.f32.mxu0 0.0
      %2213 = vmatmul.mubr.f32.gmra.mrb[0].mxu0 %v2036
      %v2214 = vpop.f32.mrb[0].mxu0
      %v2215 = vadd.f32 0.0, %v2214
      %v2216 = vpop.f32.mrb[0].mxu0
      %2217 = vmatprep.mubr.f32.mxu0 0.0
      %2218 = vmatmul.mubr.f32.gmra.mrb[0].mxu0 %v2039
      %v2219 = vpop.f32.mrb[0].mxu0
      %v2220 = vadd.f32 0.0, %v2219
      %v2221 = vpop.f32.mrb[0].mxu0
      %2222 = vmatprep.mubr.f32.mxu0 0.0
      %2223 = vmatmul.mubr.f32.gmra.mrb[0].mxu0 %v2042
      %v2224 = vpop.f32.mrb[0].mxu0
      %v2225 = vadd.f32 0.0, %v2224
      %v2226 = vpop.f32.mrb[0].mxu0
      %2227 = vmatprep.mubr.f32.mxu0 0.0
      %2228 = vmatmul.mubr.f32.gmra.mrb[0].mxu0 %v2045
      %v2229 = vpop.f32.mrb[0].mxu0
      %v2230 = vadd.f32 0.0, %v2229
      %v2231 = vpop.f32.mrb[0].mxu0
      %2232 = vmatprep.mubr.f32.mxu0 0.0
      %2233 = vmatmul.mubr.f32.gmra.mrb[0].mxu0 %v2048
      %v2234 = vpop.f32.mrb[0].mxu0
      %v2235 = vadd.f32 0.0, %v2234
      %v2236 = vpop.f32.mrb[0].mxu0
      %2237 = vmatprep.mubr.f32.mxu0 0.0
      %2238 = vmatmul.mubr.f32.gmra.mrb[0].mxu0 %v2051
      %v2239 = vpop.f32.mrb[0].mxu0
      %v2240 = vadd.f32 0.0, %v2239
      %v2241 = vpop.f32.mrb[0].mxu0
      %2242 = vmatprep.mubr.f32.mxu0 0.0
      %2243 = vmatmul.mubr.f32.gmra.mrb[0].mxu0 %v2054
      %v2244 = vpop.f32.mrb[0].mxu0
      %v2245 = vadd.f32 0.0, %v2244
      %v2246 = vpop.f32.mrb[0].mxu0
      %2247 = vmatprep.mubr.f32.mxu0 0.0
      %2248 = vmatmul.mubr.f32.gmra.mrb[0].mxu0 %v2057
      %v2249 = vpop.f32.mrb[0].mxu0
      %v2250 = vadd.f32 0.0, %v2249
      %v2251 = vpop.f32.mrb[0].mxu0
      %2252 = vmatprep.mubr.f32.mxu0 0.0
      %2253 = vmatmul.mubr.f32.gmra.mrb[0].mxu0 %v2060
      %v2254 = vpop.f32.mrb[0].mxu0
      %v2255 = vadd.f32 0.0, %v2254
      %v2256 = vpop.f32.mrb[0].mxu0
      %2257 = vmatprep.mubr.f32.mxu0 0.0
      %2258 = vmatmul.mubr.f32.gmra.mrb[0].mxu0 %v2063
      %v2259 = vpop.f32.mrb[0].mxu0
      %v2260 = vadd.f32 0.0, %v2259
      %v2261 = vpop.f32.mrb[0].mxu0
      %2262 = vmatprep.mubr.f32.mxu0 0.0
      %2263 = vmatmul.mubr.f32.gmra.mrb[0].mxu0 %v2066
      %v2264 = vpop.f32.mrb[0].mxu0
      %v2265 = vadd.f32 0.0, %v2264
      %v2266 = vpop.f32.mrb[0].mxu0
      %2267 = vmatprep.mubr.f32.mxu0 0.0
      %2268 = vmatmul.mubr.f32.gmra.mrb[0].mxu0 %v2069
      %v2269 = vpop.f32.mrb[0].mxu0
      %v2270 = vadd.f32 0.0, %v2269
      %v2271 = vpop.f32.mrb[0].mxu0
      %2272 = vmatprep.mubr.f32.mxu0 0.0
      %2273 = vmatmul.mubr.f32.gmra.mrb[0].mxu0 %v2072
      %v2274 = vpop.f32.mrb[0].mxu0
      %v2275 = vadd.f32 0.0, %v2274
      %v2276 = vpop.f32.mrb[0].mxu0
      %2277 = vmatprep.mubr.f32.mxu0 0.0
      %2278 = vmatmul.mubr.f32.gmra.mrb[0].mxu0 %v2075
      %v2279 = vpop.f32.mrb[0].mxu0
      %v2280 = vadd.f32 0.0, %v2279
      %v2281 = vpop.f32.mrb[0].mxu0
      %2282 = vmatprep.mubr.f32.mxu0 0.0
      %2283 = vmatmul.mubr.f32.gmra.mrb[0].mxu0 %v2078
      %v2284 = vpop.f32.mrb[0].mxu0
      %v2285 = vadd.f32 0.0, %v2284
      %v2286 = vpop.f32.mrb[0].mxu0
      %2287 = vmatprep.mubr.f32.mxu0 0.0
      %2288 = vmatmul.mubr.f32.gmra.mrb[0].mxu0 %v2081
      %v2289 = vpop.f32.mrb[0].mxu0
      %v2290 = vadd.f32 0.0, %v2289
      %v2291 = vpop.f32.mrb[0].mxu0
      %2292 = vmatprep.mubr.f32.mxu0 0.0
      %2293 = vmatmul.mubr.f32.gmra.mrb[0].mxu0 %v2084
      %v2294 = vpop.f32.mrb[0].mxu0
      %v2295 = vadd.f32 0.0, %v2294
      %v2296 = vpop.f32.mrb[0].mxu0
      %2297 = vmatprep.mubr.f32.mxu0 0.0
      %2298 = vmatmul.mubr.f32.gmra.mrb[0].mxu0 %v2087
      %v2299 = vpop.f32.mrb[0].mxu0
      %v2300 = vadd.f32 0.0, %v2299
      %v2301 = vpop.f32.mrb[0].mxu0
      %2302 = vmatprep.mubr.f32.mxu0 0.0
      %2303 = vmatmul.mubr.f32.gmra.mrb[0].mxu0 %v2090
      %v2304 = vpop.f32.mrb[0].mxu0
      %v2305 = vadd.f32 0.0, %v2304
      %v2306 = vpop.f32.mrb[0].mxu0
      %2307 = vmatprep.mubr.f32.mxu0 0.0
      %2308 = vmatmul.mubr.f32.gmra.mrb[0].mxu0 %v2093
      %v2309 = vpop.f32.mrb[0].mxu0
      %v2310 = vadd.f32 0.0, %v2309
      %v2311 = vpop.f32.mrb[0].mxu0
      %2312 = vmatprep.mubr.f32.mxu0 0.0
      %2313 = vmatmul.mubr.f32.gmra.mrb[0].mxu0 %v2096
      %v2314 = vpop.f32.mrb[0].mxu0
      %v2315 = vadd.f32 0.0, %v2314
      %v2316 = vpop.f32.mrb[0].mxu0
      %2317 = vmatprep.mubr.f32.mxu0 0.0
      %2318 = vmatmul.mubr.f32.gmra.mrb[0].mxu0 %v2099
      %v2319 = vpop.f32.mrb[0].mxu0
      %v2320 = vadd.f32 0.0, %v2319
      %v2321 = vpop.f32.mrb[0].mxu0
      %2322 = vmatprep.mubr.f32.mxu0 0.0
      %2323 = vmatmul.mubr.f32.gmra.mrb[0].mxu0 %v2102
      %v2324 = vpop.f32.mrb[0].mxu0
      %v2325 = vadd.f32 0.0, %v2324
      %v2326 = vpop.f32.mrb[0].mxu0
      %2327 = vmatprep.mubr.f32.mxu0 0.0
      %2328 = vmatmul.mubr.f32.gmra.mrb[0].mxu0 %v2105
      %v2329 = vpop.f32.mrb[0].mxu0
      %v2330 = vadd.f32 0.0, %v2329
      %v2331 = vpop.f32.mrb[0].mxu0
      %2332 = vmatprep.mubr.f32.mxu0 0.0
      %2333 = vmatmul.mubr.f32.gmra.mrb[0].mxu0 %v2108
      %v2334 = vpop.f32.mrb[0].mxu0
      %v2335 = vadd.f32 0.0, %v2334
      %v2336 = vpop.f32.mrb[0].mxu0
      %2337 = vdwg.mxu0
      %v2338 = vld [vmem:[#allocation2] sm:$0xff]
      %v2339 = vld [vmem:[#allocation2 + $0x8] sm:$0xff]
      %v2340 = vld [vmem:[#allocation2 + $0x10] sm:$0xff]
      %v2341 = vld [vmem:[#allocation2 + $0x18] sm:$0xff]
      %v2342 = vld [vmem:[#allocation2 + $0x20] sm:$0xff]
      %v2343 = vld [vmem:[#allocation2 + $0x28] sm:$0xff]
      %v2344 = vld [vmem:[#allocation2 + $0x30] sm:$0xff]
      %v2345 = vld [vmem:[#allocation2 + $0x38] sm:$0xff]
      %v2346 = vld [vmem:[#allocation2 + $0x40] sm:$0xff]
      %v2347 = vld [vmem:[#allocation2 + $0x48] sm:$0xff]
      %v2348 = vld [vmem:[#allocation2 + $0x50] sm:$0xff]
      %v2349 = vld [vmem:[#allocation2 + $0x58] sm:$0xff]
      %v2350 = vld [vmem:[#allocation2 + $0x60] sm:$0xff]
      %v2351 = vld [vmem:[#allocation2 + $0x68] sm:$0xff]
      %v2352 = vld [vmem:[#allocation2 + $0x70] sm:$0xff]
      %v2353 = vld [vmem:[#allocation2 + $0x78] sm:$0xff]
      %v2354 = vld [vmem:[#allocation2 + $0x80] sm:$0xff]
      %v2355 = vld [vmem:[#allocation2 + $0x88] sm:$0xff]
      %v2356 = vld [vmem:[#allocation2 + $0x90] sm:$0xff]
      %v2357 = vld [vmem:[#allocation2 + $0x98] sm:$0xff]
      %v2358 = vld [vmem:[#allocation2 + $0xa0] sm:$0xff]
      %v2359 = vld [vmem:[#allocation2 + $0xa8] sm:$0xff]
      %v2360 = vld [vmem:[#allocation2 + $0xb0] sm:$0xff]
      %v2361 = vld [vmem:[#allocation2 + $0xb8] sm:$0xff]
      %v2362 = vld [vmem:[#allocation2 + $0xc0] sm:$0xff]
      %v2363 = vld [vmem:[#allocation2 + $0xc8] sm:$0xff]
      %v2364 = vld [vmem:[#allocation2 + $0xd0] sm:$0xff]
      %v2365 = vld [vmem:[#allocation2 + $0xd8] sm:$0xff]
      %v2366 = vld [vmem:[#allocation2 + $0xe0] sm:$0xff]
      %v2367 = vld [vmem:[#allocation2 + $0xe8] sm:$0xff]
      %v2368 = vld [vmem:[#allocation2 + $0xf0] sm:$0xff]
      %v2369 = vld [vmem:[#allocation2 + $0xf8] sm:$0xff]
      %v2370 = vadd.f32 %v2338, %v2180
      %v2371 = vadd.f32 %v2339, %v2185
      %v2372 = vadd.f32 %v2340, %v2190
      %v2373 = vadd.f32 %v2341, %v2195
      %v2374 = vadd.f32 %v2342, %v2200
      %v2375 = vadd.f32 %v2343, %v2205
      %v2376 = vadd.f32 %v2344, %v2210
      %v2377 = vadd.f32 %v2345, %v2215
      %v2378 = vadd.f32 %v2346, %v2220
      %v2379 = vadd.f32 %v2347, %v2225
      %v2380 = vadd.f32 %v2348, %v2230
      %v2381 = vadd.f32 %v2349, %v2235
      %v2382 = vadd.f32 %v2350, %v2240
      %v2383 = vadd.f32 %v2351, %v2245
      %v2384 = vadd.f32 %v2352, %v2250
      %v2385 = vadd.f32 %v2353, %v2255
      %v2386 = vadd.f32 %v2354, %v2260
      %v2387 = vadd.f32 %v2355, %v2265
      %v2388 = vadd.f32 %v2356, %v2270
      %v2389 = vadd.f32 %v2357, %v2275
      %v2390 = vadd.f32 %v2358, %v2280
      %v2391 = vadd.f32 %v2359, %v2285
      %v2392 = vadd.f32 %v2360, %v2290
      %v2393 = vadd.f32 %v2361, %v2295
      %v2394 = vadd.f32 %v2362, %v2300
      %v2395 = vadd.f32 %v2363, %v2305
      %v2396 = vadd.f32 %v2364, %v2310
      %v2397 = vadd.f32 %v2365, %v2315
      %v2398 = vadd.f32 %v2366, %v2320
      %v2399 = vadd.f32 %v2367, %v2325
      %v2400 = vadd.f32 %v2368, %v2330
      %v2401 = vadd.f32 %v2369, %v2335
      %2402 = vst [vmem:[#allocation2] sm:$0xff] %v2370
      %2403 = vst [vmem:[#allocation2 + $0x8] sm:$0xff] %v2371
      %2404 = vst [vmem:[#allocation2 + $0x10] sm:$0xff] %v2372
      %2405 = vst [vmem:[#allocation2 + $0x18] sm:$0xff] %v2373
      %2406 = vst [vmem:[#allocation2 + $0x20] sm:$0xff] %v2374
      %2407 = vst [vmem:[#allocation2 + $0x28] sm:$0xff] %v2375
      %2408 = vst [vmem:[#allocation2 + $0x30] sm:$0xff] %v2376
      %2409 = vst [vmem:[#allocation2 + $0x38] sm:$0xff] %v2377
      %2410 = vst [vmem:[#allocation2 + $0x40] sm:$0xff] %v2378
      %2411 = vst [vmem:[#allocation2 + $0x48] sm:$0xff] %v2379
      %2412 = vst [vmem:[#allocation2 + $0x50] sm:$0xff] %v2380
      %2413 = vst [vmem:[#allocation2 + $0x58] sm:$0xff] %v2381
      %2414 = vst [vmem:[#allocation2 + $0x60] sm:$0xff] %v2382
      %2415 = vst [vmem:[#allocation2 + $0x68] sm:$0xff] %v2383
      %2416 = vst [vmem:[#allocation2 + $0x70] sm:$0xff] %v2384
      %2417 = vst [vmem:[#allocation2 + $0x78] sm:$0xff] %v2385
      %2418 = vst [vmem:[#allocation2 + $0x80] sm:$0xff] %v2386
      %2419 = vst [vmem:[#allocation2 + $0x88] sm:$0xff] %v2387
      %2420 = vst [vmem:[#allocation2 + $0x90] sm:$0xff] %v2388
      %2421 = vst [vmem:[#allocation2 + $0x98] sm:$0xff] %v2389
      %2422 = vst [vmem:[#allocation2 + $0xa0] sm:$0xff] %v2390
      %2423 = vst [vmem:[#allocation2 + $0xa8] sm:$0xff] %v2391
      %2424 = vst [vmem:[#allocation2 + $0xb0] sm:$0xff] %v2392
      %2425 = vst [vmem:[#allocation2 + $0xb8] sm:$0xff] %v2393
      %2426 = vst [vmem:[#allocation2 + $0xc0] sm:$0xff] %v2394
      %2427 = vst [vmem:[#allocation2 + $0xc8] sm:$0xff] %v2395
      %2428 = vst [vmem:[#allocation2 + $0xd0] sm:$0xff] %v2396
      %2429 = vst [vmem:[#allocation2 + $0xd8] sm:$0xff] %v2397
      %2430 = vst [vmem:[#allocation2 + $0xe0] sm:$0xff] %v2398
      %2431 = vst [vmem:[#allocation2 + $0xe8] sm:$0xff] %v2399
      %2432 = vst [vmem:[#allocation2 + $0xf0] sm:$0xff] %v2400
      %2433 = vst [vmem:[#allocation2 + $0xf8] sm:$0xff] %v2401
      %v2434 = vld [vmem:[%s1525 + $0x2] sm:$0xff]
      %v2435 = vld [vmem:[%s1525 + $0xa] sm:$0xff]
      %v2436 = vld [vmem:[%s1525 + $0x1a] sm:$0xff]
      %v2437 = vld [vmem:[%s1525 + $0x22] sm:$0xff]
      %v2438 = vld [vmem:[%s1525 + $0x32] sm:$0xff]
      %v2439 = vld [vmem:[%s1525 + $0x3a] sm:$0xff]
      %v2440 = vld [vmem:[%s1525 + $0x4a] sm:$0xff]
      %v2441 = vld [vmem:[%s1525 + $0x52] sm:$0xff]
      %v2442 = vld [vmem:[%s1525 + $0x62] sm:$0xff]
      %v2443 = vld [vmem:[%s1525 + $0x6a] sm:$0xff]
      %v2444 = vld [vmem:[%s1525 + $0x7a] sm:$0xff]
      %v2445 = vld [vmem:[%s1525 + $0x82] sm:$0xff]
      %v2446 = vld [vmem:[%s1525 + $0x92] sm:$0xff]
      %v2447 = vld [vmem:[%s1525 + $0x9a] sm:$0xff]
      %v2448 = vld [vmem:[%s1525 + $0xaa] sm:$0xff]
      %v2449 = vld [vmem:[%s1525 + $0xb2] sm:$0xff]
      %v2450 = vld [vmem:[%s1525 + $0xc2] sm:$0xff]
      %v2451 = vld [vmem:[%s1525 + $0xca] sm:$0xff]
      %v2452 = vld [vmem:[%s1525 + $0xda] sm:$0xff]
      %v2453 = vld [vmem:[%s1525 + $0xe2] sm:$0xff]
      %v2454 = vld [vmem:[%s1525 + $0xf2] sm:$0xff]
      %v2455 = vld [vmem:[%s1525 + $0xfa] sm:$0xff]
      %v2456 = vld [vmem:[%s1525 + $0x10a] sm:$0xff]
      %v2457 = vld [vmem:[%s1525 + $0x112] sm:$0xff]
      %v2458 = vld [vmem:[%s1525 + $0x122] sm:$0xff]
      %v2459 = vld [vmem:[%s1525 + $0x12a] sm:$0xff]
      %v2460 = vld [vmem:[%s1525 + $0x13a] sm:$0xff]
      %v2461 = vld [vmem:[%s1525 + $0x142] sm:$0xff]
      %v2462 = vld [vmem:[%s1525 + $0x152] sm:$0xff]
      %v2463 = vld [vmem:[%s1525 + $0x15a] sm:$0xff]
      %v2464 = vld [vmem:[%s1525 + $0x16a] sm:$0xff]
      %v2465 = vld [vmem:[%s1525 + $0x172] sm:$0xff]
      %s2466 = scalar_lea.vmem %s1, 20
      %v2467 = vld [vmem:[%s2466] sm:$0xf]
      %v2469 = vsel %vm257, %v2434, 0
      %v2472 = vsel %vm257, %v2435, 0
      %v2475 = vsel %vm257, %v2436, 0
      %v2478 = vsel %vm257, %v2437, 0
      %v2481 = vsel %vm257, %v2438, 0
      %v2484 = vsel %vm257, %v2439, 0
      %v2487 = vsel %vm257, %v2440, 0
      %v2490 = vsel %vm257, %v2441, 0
      %v2493 = vsel %vm257, %v2442, 0
      %v2496 = vsel %vm257, %v2443, 0
      %v2499 = vsel %vm257, %v2444, 0
      %v2502 = vsel %vm257, %v2445, 0
      %v2505 = vsel %vm257, %v2446, 0
      %v2508 = vsel %vm257, %v2447, 0
      %v2511 = vsel %vm257, %v2448, 0
      %v2514 = vsel %vm257, %v2449, 0
      %v2517 = vsel %vm257, %v2450, 0
      %v2520 = vsel %vm257, %v2451, 0
      %v2523 = vsel %vm257, %v2452, 0
      %v2526 = vsel %vm257, %v2453, 0
      %v2529 = vsel %vm257, %v2454, 0
      %v2532 = vsel %vm257, %v2455, 0
      %v2535 = vsel %vm257, %v2456, 0
      %v2538 = vsel %vm257, %v2457, 0
      %v2541 = vsel %vm257, %v2458, 0
      %v2544 = vsel %vm257, %v2459, 0
      %v2547 = vsel %vm257, %v2460, 0
      %v2550 = vsel %vm257, %v2461, 0
      %v2553 = vsel %vm257, %v2462, 0
      %v2556 = vsel %vm257, %v2463, 0
      %v2559 = vsel %vm257, %v2464, 0
      %v2562 = vsel %vm257, %v2465, 0
      %v2565 = vsel %vm354, %v2467, 0
      %2567 = vmatprep.subr.mxu0 0.0
      %2568 = vmatpush1.msra.mxu0 %v2565
      %2569 = vmatprep.subr.mxu0 0.0
      %2570 = vmatpush1.msra.mxu0 0.0
      %2571 = vmatprep.subr.mxu0 0.0
      %2572 = vmatpush1.msra.mxu0 0.0
      %2573 = vmatprep.subr.mxu0 0.0
      %2574 = vmatpush1.msra.mxu0 0.0
      %2575 = vmatprep.subr.mxu0 0.0
      %2576 = vmatpush1.msra.mxu0 0.0
      %2577 = vmatprep.subr.mxu0 0.0
      %2578 = vmatpush1.msra.mxu0 0.0
      %2579 = vmatprep.subr.mxu0 0.0
      %2580 = vmatpush1.msra.mxu0 0.0
      %2581 = vmatprep.subr.mxu0 0.0
      %2582 = vmatpush1.msra.mxu0 0.0
      %2583 = vmatprep.subr.mxu0 0.0
      %2584 = vmatpush1.msra.mxu0 0.0
      %2585 = vmatprep.subr.mxu0 0.0
      %2586 = vmatpush1.msra.mxu0 0.0
      %2587 = vmatprep.subr.mxu0 0.0
      %2588 = vmatpush1.msra.mxu0 0.0
      %2589 = vmatprep.subr.mxu0 0.0
      %2590 = vmatpush1.msra.mxu0 0.0
      %2591 = vmatprep.subr.mxu0 0.0
      %2592 = vmatpush1.msra.mxu0 0.0
      %2593 = vmatprep.subr.mxu0 0.0
      %2594 = vmatpush1.msra.mxu0 0.0
      %2595 = vmatprep.subr.mxu0 0.0
      %2596 = vmatpush1.msra.mxu0 0.0
      %2597 = vmatprep.subr.mxu0 0.0
      %2598 = vmatpush1.msra.mxu0 0.0
      %2599 = vmatprep.subr.mxu0 0.0
      %2600 = vmatpush1.msra.mxu0 0.0
      %2601 = vmatprep.subr.mxu0 0.0
      %2602 = vmatpush1.msra.mxu0 0.0
      %2603 = vmatprep.subr.mxu0 0.0
      %2604 = vmatpush1.msra.mxu0 0.0
      %2605 = vmatprep.subr.mxu0 0.0
      %2606 = vmatpush1.msra.mxu0 0.0
      %2607 = vmatprep.subr.mxu0 0.0
      %2608 = vmatpush1.msra.mxu0 0.0
      %2609 = vmatprep.subr.mxu0 0.0
      %2610 = vmatpush1.msra.mxu0 0.0
      %2611 = vmatprep.subr.mxu0 0.0
      %2612 = vmatpush1.msra.mxu0 0.0
      %2613 = vmatprep.subr.mxu0 0.0
      %2614 = vmatpush1.msra.mxu0 0.0
      %2615 = vmatprep.subr.mxu0 0.0
      %2616 = vmatpush1.msra.mxu0 0.0
      %2617 = vmatprep.subr.mxu0 0.0
      %2618 = vmatpush1.msra.mxu0 0.0
      %2619 = vmatprep.subr.mxu0 0.0
      %2620 = vmatpush1.msra.mxu0 0.0
      %2621 = vmatprep.subr.mxu0 0.0
      %2622 = vmatpush1.msra.mxu0 0.0
      %2623 = vmatprep.subr.mxu0 0.0
      %2624 = vmatpush1.msra.mxu0 0.0
      %2625 = vmatprep.subr.mxu0 0.0
      %2626 = vmatpush1.msra.mxu0 0.0
      %2627 = vmatprep.subr.mxu0 0.0
      %2628 = vmatpush1.msra.mxu0 0.0
      %2629 = vmatprep.subr.mxu0 0.0
      %2630 = vmatpush1.msra.mxu0 0.0
      %2631 = vmatprep.mubr.f32.mxu0 0.0
      %2632 = vmatmul.mubr.f32.gmra.mrb[0].mxu0 %v2469
      %v2633 = vpop.f32.mrb[0].mxu0
      %v2634 = vadd.f32 0.0, %v2633
      %v2635 = vpop.f32.mrb[0].mxu0
      %2636 = vmatprep.mubr.f32.mxu0 0.0
      %2637 = vmatmul.mubr.f32.gmra.mrb[0].mxu0 %v2472
      %v2638 = vpop.f32.mrb[0].mxu0
      %v2639 = vadd.f32 0.0, %v2638
      %v2640 = vpop.f32.mrb[0].mxu0
      %2641 = vmatprep.mubr.f32.mxu0 0.0
      %2642 = vmatmul.mubr.f32.gmra.mrb[0].mxu0 %v2475
      %v2643 = vpop.f32.mrb[0].mxu0
      %v2644 = vadd.f32 0.0, %v2643
      %v2645 = vpop.f32.mrb[0].mxu0
      %2646 = vmatprep.mubr.f32.mxu0 0.0
      %2647 = vmatmul.mubr.f32.gmra.mrb[0].mxu0 %v2478
      %v2648 = vpop.f32.mrb[0].mxu0
      %v2649 = vadd.f32 0.0, %v2648
      %v2650 = vpop.f32.mrb[0].mxu0
      %2651 = vmatprep.mubr.f32.mxu0 0.0
      %2652 = vmatmul.mubr.f32.gmra.mrb[0].mxu0 %v2481
      %v2653 = vpop.f32.mrb[0].mxu0
      %v2654 = vadd.f32 0.0, %v2653
      %v2655 = vpop.f32.mrb[0].mxu0
      %2656 = vmatprep.mubr.f32.mxu0 0.0
      %2657 = vmatmul.mubr.f32.gmra.mrb[0].mxu0 %v2484
      %v2658 = vpop.f32.mrb[0].mxu0
      %v2659 = vadd.f32 0.0, %v2658
      %v2660 = vpop.f32.mrb[0].mxu0
      %2661 = vmatprep.mubr.f32.mxu0 0.0
      %2662 = vmatmul.mubr.f32.gmra.mrb[0].mxu0 %v2487
      %v2663 = vpop.f32.mrb[0].mxu0
      %v2664 = vadd.f32 0.0, %v2663
      %v2665 = vpop.f32.mrb[0].mxu0
      %2666 = vmatprep.mubr.f32.mxu0 0.0
      %2667 = vmatmul.mubr.f32.gmra.mrb[0].mxu0 %v2490
      %v2668 = vpop.f32.mrb[0].mxu0
      %v2669 = vadd.f32 0.0, %v2668
      %v2670 = vpop.f32.mrb[0].mxu0
      %2671 = vmatprep.mubr.f32.mxu0 0.0
      %2672 = vmatmul.mubr.f32.gmra.mrb[0].mxu0 %v2493
      %v2673 = vpop.f32.mrb[0].mxu0
      %v2674 = vadd.f32 0.0, %v2673
      %v2675 = vpop.f32.mrb[0].mxu0
      %2676 = vmatprep.mubr.f32.mxu0 0.0
      %2677 = vmatmul.mubr.f32.gmra.mrb[0].mxu0 %v2496
      %v2678 = vpop.f32.mrb[0].mxu0
      %v2679 = vadd.f32 0.0, %v2678
      %v2680 = vpop.f32.mrb[0].mxu0
      %2681 = vmatprep.mubr.f32.mxu0 0.0
      %2682 = vmatmul.mubr.f32.gmra.mrb[0].mxu0 %v2499
      %v2683 = vpop.f32.mrb[0].mxu0
      %v2684 = vadd.f32 0.0, %v2683
      %v2685 = vpop.f32.mrb[0].mxu0
      %2686 = vmatprep.mubr.f32.mxu0 0.0
      %2687 = vmatmul.mubr.f32.gmra.mrb[0].mxu0 %v2502
      %v2688 = vpop.f32.mrb[0].mxu0
      %v2689 = vadd.f32 0.0, %v2688
      %v2690 = vpop.f32.mrb[0].mxu0
      %2691 = vmatprep.mubr.f32.mxu0 0.0
      %2692 = vmatmul.mubr.f32.gmra.mrb[0].mxu0 %v2505
      %v2693 = vpop.f32.mrb[0].mxu0
      %v2694 = vadd.f32 0.0, %v2693
      %v2695 = vpop.f32.mrb[0].mxu0
      %2696 = vmatprep.mubr.f32.mxu0 0.0
      %2697 = vmatmul.mubr.f32.gmra.mrb[0].mxu0 %v2508
      %v2698 = vpop.f32.mrb[0].mxu0
      %v2699 = vadd.f32 0.0, %v2698
      %v2700 = vpop.f32.mrb[0].mxu0
      %2701 = vmatprep.mubr.f32.mxu0 0.0
      %2702 = vmatmul.mubr.f32.gmra.mrb[0].mxu0 %v2511
      %v2703 = vpop.f32.mrb[0].mxu0
      %v2704 = vadd.f32 0.0, %v2703
      %v2705 = vpop.f32.mrb[0].mxu0
      %2706 = vmatprep.mubr.f32.mxu0 0.0
      %2707 = vmatmul.mubr.f32.gmra.mrb[0].mxu0 %v2514
      %v2708 = vpop.f32.mrb[0].mxu0
      %v2709 = vadd.f32 0.0, %v2708
      %v2710 = vpop.f32.mrb[0].mxu0
      %2711 = vmatprep.mubr.f32.mxu0 0.0
      %2712 = vmatmul.mubr.f32.gmra.mrb[0].mxu0 %v2517
      %v2713 = vpop.f32.mrb[0].mxu0
      %v2714 = vadd.f32 0.0, %v2713
      %v2715 = vpop.f32.mrb[0].mxu0
      %2716 = vmatprep.mubr.f32.mxu0 0.0
      %2717 = vmatmul.mubr.f32.gmra.mrb[0].mxu0 %v2520
      %v2718 = vpop.f32.mrb[0].mxu0
      %v2719 = vadd.f32 0.0, %v2718
      %v2720 = vpop.f32.mrb[0].mxu0
      %2721 = vmatprep.mubr.f32.mxu0 0.0
      %2722 = vmatmul.mubr.f32.gmra.mrb[0].mxu0 %v2523
      %v2723 = vpop.f32.mrb[0].mxu0
      %v2724 = vadd.f32 0.0, %v2723
      %v2725 = vpop.f32.mrb[0].mxu0
      %2726 = vmatprep.mubr.f32.mxu0 0.0
      %2727 = vmatmul.mubr.f32.gmra.mrb[0].mxu0 %v2526
      %v2728 = vpop.f32.mrb[0].mxu0
      %v2729 = vadd.f32 0.0, %v2728
      %v2730 = vpop.f32.mrb[0].mxu0
      %2731 = vmatprep.mubr.f32.mxu0 0.0
      %2732 = vmatmul.mubr.f32.gmra.mrb[0].mxu0 %v2529
      %v2733 = vpop.f32.mrb[0].mxu0
      %v2734 = vadd.f32 0.0, %v2733
      %v2735 = vpop.f32.mrb[0].mxu0
      %2736 = vmatprep.mubr.f32.mxu0 0.0
      %2737 = vmatmul.mubr.f32.gmra.mrb[0].mxu0 %v2532
      %v2738 = vpop.f32.mrb[0].mxu0
      %v2739 = vadd.f32 0.0, %v2738
      %v2740 = vpop.f32.mrb[0].mxu0
      %2741 = vmatprep.mubr.f32.mxu0 0.0
      %2742 = vmatmul.mubr.f32.gmra.mrb[0].mxu0 %v2535
      %v2743 = vpop.f32.mrb[0].mxu0
      %v2744 = vadd.f32 0.0, %v2743
      %v2745 = vpop.f32.mrb[0].mxu0
      %2746 = vmatprep.mubr.f32.mxu0 0.0
      %2747 = vmatmul.mubr.f32.gmra.mrb[0].mxu0 %v2538
      %v2748 = vpop.f32.mrb[0].mxu0
      %v2749 = vadd.f32 0.0, %v2748
      %v2750 = vpop.f32.mrb[0].mxu0
      %2751 = vmatprep.mubr.f32.mxu0 0.0
      %2752 = vmatmul.mubr.f32.gmra.mrb[0].mxu0 %v2541
      %v2753 = vpop.f32.mrb[0].mxu0
      %v2754 = vadd.f32 0.0, %v2753
      %v2755 = vpop.f32.mrb[0].mxu0
      %2756 = vmatprep.mubr.f32.mxu0 0.0
      %2757 = vmatmul.mubr.f32.gmra.mrb[0].mxu0 %v2544
      %v2758 = vpop.f32.mrb[0].mxu0
      %v2759 = vadd.f32 0.0, %v2758
      %v2760 = vpop.f32.mrb[0].mxu0
      %2761 = vmatprep.mubr.f32.mxu0 0.0
      %2762 = vmatmul.mubr.f32.gmra.mrb[0].mxu0 %v2547
      %v2763 = vpop.f32.mrb[0].mxu0
      %v2764 = vadd.f32 0.0, %v2763
      %v2765 = vpop.f32.mrb[0].mxu0
      %2766 = vmatprep.mubr.f32.mxu0 0.0
      %2767 = vmatmul.mubr.f32.gmra.mrb[0].mxu0 %v2550
      %v2768 = vpop.f32.mrb[0].mxu0
      %v2769 = vadd.f32 0.0, %v2768
      %v2770 = vpop.f32.mrb[0].mxu0
      %2771 = vmatprep.mubr.f32.mxu0 0.0
      %2772 = vmatmul.mubr.f32.gmra.mrb[0].mxu0 %v2553
      %v2773 = vpop.f32.mrb[0].mxu0
      %v2774 = vadd.f32 0.0, %v2773
      %v2775 = vpop.f32.mrb[0].mxu0
      %2776 = vmatprep.mubr.f32.mxu0 0.0
      %2777 = vmatmul.mubr.f32.gmra.mrb[0].mxu0 %v2556
      %v2778 = vpop.f32.mrb[0].mxu0
      %v2779 = vadd.f32 0.0, %v2778
      %v2780 = vpop.f32.mrb[0].mxu0
      %2781 = vmatprep.mubr.f32.mxu0 0.0
      %2782 = vmatmul.mubr.f32.gmra.mrb[0].mxu0 %v2559
      %v2783 = vpop.f32.mrb[0].mxu0
      %v2784 = vadd.f32 0.0, %v2783
      %v2785 = vpop.f32.mrb[0].mxu0
      %2786 = vmatprep.mubr.f32.mxu0 0.0
      %2787 = vmatmul.mubr.f32.gmra.mrb[0].mxu0 %v2562
      %v2788 = vpop.f32.mrb[0].mxu0
      %v2789 = vadd.f32 0.0, %v2788
      %v2790 = vpop.f32.mrb[0].mxu0
      %2791 = vdwg.mxu0
      %v2792 = vld [vmem:[#allocation2] sm:$0xff]
      %v2793 = vld [vmem:[#allocation2 + $0x8] sm:$0xff]
      %v2794 = vld [vmem:[#allocation2 + $0x10] sm:$0xff]
      %v2795 = vld [vmem:[#allocation2 + $0x18] sm:$0xff]
      %v2796 = vld [vmem:[#allocation2 + $0x20] sm:$0xff]
      %v2797 = vld [vmem:[#allocation2 + $0x28] sm:$0xff]
      %v2798 = vld [vmem:[#allocation2 + $0x30] sm:$0xff]
      %v2799 = vld [vmem:[#allocation2 + $0x38] sm:$0xff]
      %v2800 = vld [vmem:[#allocation2 + $0x40] sm:$0xff]
      %v2801 = vld [vmem:[#allocation2 + $0x48] sm:$0xff]
      %v2802 = vld [vmem:[#allocation2 + $0x50] sm:$0xff]
      %v2803 = vld [vmem:[#allocation2 + $0x58] sm:$0xff]
      %v2804 = vld [vmem:[#allocation2 + $0x60] sm:$0xff]
      %v2805 = vld [vmem:[#allocation2 + $0x68] sm:$0xff]
      %v2806 = vld [vmem:[#allocation2 + $0x70] sm:$0xff]
      %v2807 = vld [vmem:[#allocation2 + $0x78] sm:$0xff]
      %v2808 = vld [vmem:[#allocation2 + $0x80] sm:$0xff]
      %v2809 = vld [vmem:[#allocation2 + $0x88] sm:$0xff]
      %v2810 = vld [vmem:[#allocation2 + $0x90] sm:$0xff]
      %v2811 = vld [vmem:[#allocation2 + $0x98] sm:$0xff]
      %v2812 = vld [vmem:[#allocation2 + $0xa0] sm:$0xff]
      %v2813 = vld [vmem:[#allocation2 + $0xa8] sm:$0xff]
      %v2814 = vld [vmem:[#allocation2 + $0xb0] sm:$0xff]
      %v2815 = vld [vmem:[#allocation2 + $0xb8] sm:$0xff]
      %v2816 = vld [vmem:[#allocation2 + $0xc0] sm:$0xff]
      %v2817 = vld [vmem:[#allocation2 + $0xc8] sm:$0xff]
      %v2818 = vld [vmem:[#allocation2 + $0xd0] sm:$0xff]
      %v2819 = vld [vmem:[#allocation2 + $0xd8] sm:$0xff]
      %v2820 = vld [vmem:[#allocation2 + $0xe0] sm:$0xff]
      %v2821 = vld [vmem:[#allocation2 + $0xe8] sm:$0xff]
      %v2822 = vld [vmem:[#allocation2 + $0xf0] sm:$0xff]
      %v2823 = vld [vmem:[#allocation2 + $0xf8] sm:$0xff]
      %v2824 = vadd.f32 %v2792, %v2634
      %v2825 = vadd.f32 %v2793, %v2639
      %v2826 = vadd.f32 %v2794, %v2644
      %v2827 = vadd.f32 %v2795, %v2649
      %v2828 = vadd.f32 %v2796, %v2654
      %v2829 = vadd.f32 %v2797, %v2659
      %v2830 = vadd.f32 %v2798, %v2664
      %v2831 = vadd.f32 %v2799, %v2669
      %v2832 = vadd.f32 %v2800, %v2674
      %v2833 = vadd.f32 %v2801, %v2679
      %v2834 = vadd.f32 %v2802, %v2684
      %v2835 = vadd.f32 %v2803, %v2689
      %v2836 = vadd.f32 %v2804, %v2694
      %v2837 = vadd.f32 %v2805, %v2699
      %v2838 = vadd.f32 %v2806, %v2704
      %v2839 = vadd.f32 %v2807, %v2709
      %v2840 = vadd.f32 %v2808, %v2714
      %v2841 = vadd.f32 %v2809, %v2719
      %v2842 = vadd.f32 %v2810, %v2724
      %v2843 = vadd.f32 %v2811, %v2729
      %v2844 = vadd.f32 %v2812, %v2734
      %v2845 = vadd.f32 %v2813, %v2739
      %v2846 = vadd.f32 %v2814, %v2744
      %v2847 = vadd.f32 %v2815, %v2749
      %v2848 = vadd.f32 %v2816, %v2754
      %v2849 = vadd.f32 %v2817, %v2759
      %v2850 = vadd.f32 %v2818, %v2764
      %v2851 = vadd.f32 %v2819, %v2769
      %v2852 = vadd.f32 %v2820, %v2774
      %v2853 = vadd.f32 %v2821, %v2779
      %v2854 = vadd.f32 %v2822, %v2784
      %v2855 = vadd.f32 %v2823, %v2789
      %2856 = vst [vmem:[#allocation2] sm:$0xff] %v2824
      %2857 = vst [vmem:[#allocation2 + $0x8] sm:$0xff] %v2825
      %2858 = vst [vmem:[#allocation2 + $0x10] sm:$0xff] %v2826
      %2859 = vst [vmem:[#allocation2 + $0x18] sm:$0xff] %v2827
      %2860 = vst [vmem:[#allocation2 + $0x20] sm:$0xff] %v2828
      %2861 = vst [vmem:[#allocation2 + $0x28] sm:$0xff] %v2829
      %2862 = vst [vmem:[#allocation2 + $0x30] sm:$0xff] %v2830
      %2863 = vst [vmem:[#allocation2 + $0x38] sm:$0xff] %v2831
      %2864 = vst [vmem:[#allocation2 + $0x40] sm:$0xff] %v2832
      %2865 = vst [vmem:[#allocation2 + $0x48] sm:$0xff] %v2833
      %2866 = vst [vmem:[#allocation2 + $0x50] sm:$0xff] %v2834
      %2867 = vst [vmem:[#allocation2 + $0x58] sm:$0xff] %v2835
      %2868 = vst [vmem:[#allocation2 + $0x60] sm:$0xff] %v2836
      %2869 = vst [vmem:[#allocation2 + $0x68] sm:$0xff] %v2837
      %2870 = vst [vmem:[#allocation2 + $0x70] sm:$0xff] %v2838
      %2871 = vst [vmem:[#allocation2 + $0x78] sm:$0xff] %v2839
      %2872 = vst [vmem:[#allocation2 + $0x80] sm:$0xff] %v2840
      %2873 = vst [vmem:[#allocation2 + $0x88] sm:$0xff] %v2841
      %2874 = vst [vmem:[#allocation2 + $0x90] sm:$0xff] %v2842
      %2875 = vst [vmem:[#allocation2 + $0x98] sm:$0xff] %v2843
      %2876 = vst [vmem:[#allocation2 + $0xa0] sm:$0xff] %v2844
      %2877 = vst [vmem:[#allocation2 + $0xa8] sm:$0xff] %v2845
      %2878 = vst [vmem:[#allocation2 + $0xb0] sm:$0xff] %v2846
      %2879 = vst [vmem:[#allocation2 + $0xb8] sm:$0xff] %v2847
      %2880 = vst [vmem:[#allocation2 + $0xc0] sm:$0xff] %v2848
      %2881 = vst [vmem:[#allocation2 + $0xc8] sm:$0xff] %v2849
      %2882 = vst [vmem:[#allocation2 + $0xd0] sm:$0xff] %v2850
      %2883 = vst [vmem:[#allocation2 + $0xd8] sm:$0xff] %v2851
      %2884 = vst [vmem:[#allocation2 + $0xe0] sm:$0xff] %v2852
      %2885 = vst [vmem:[#allocation2 + $0xe8] sm:$0xff] %v2853
      %2886 = vst [vmem:[#allocation2 + $0xf0] sm:$0xff] %v2854
      %2887 = vst [vmem:[#allocation2 + $0xf8] sm:$0xff] %v2855
      %s2888 = sadd.s32 %s221, 2
      %s2889 = smul.u32 %s2888, 24
      %s2890 = scalar_lea.vmem %s210, %s2889
      %v2891 = vld [vmem:[%s2890] sm:$0xff]
      %v2892 = vld [vmem:[%s2890 + $0x8] sm:$0xff]
      %v2893 = vld [vmem:[%s2890 + $0x18] sm:$0xff]
      %v2894 = vld [vmem:[%s2890 + $0x20] sm:$0xff]
      %v2895 = vld [vmem:[%s2890 + $0x30] sm:$0xff]
      %v2896 = vld [vmem:[%s2890 + $0x38] sm:$0xff]
      %v2897 = vld [vmem:[%s2890 + $0x48] sm:$0xff]
      %v2898 = vld [vmem:[%s2890 + $0x50] sm:$0xff]
      %v2899 = vld [vmem:[%s2890 + $0x60] sm:$0xff]
      %v2900 = vld [vmem:[%s2890 + $0x68] sm:$0xff]
      %v2901 = vld [vmem:[%s2890 + $0x78] sm:$0xff]
      %v2902 = vld [vmem:[%s2890 + $0x80] sm:$0xff]
      %v2903 = vld [vmem:[%s2890 + $0x90] sm:$0xff]
      %v2904 = vld [vmem:[%s2890 + $0x98] sm:$0xff]
      %v2905 = vld [vmem:[%s2890 + $0xa8] sm:$0xff]
      %v2906 = vld [vmem:[%s2890 + $0xb0] sm:$0xff]
      %v2907 = vld [vmem:[%s2890 + $0xc0] sm:$0xff]
      %v2908 = vld [vmem:[%s2890 + $0xc8] sm:$0xff]
      %v2909 = vld [vmem:[%s2890 + $0xd8] sm:$0xff]
      %v2910 = vld [vmem:[%s2890 + $0xe0] sm:$0xff]
      %v2911 = vld [vmem:[%s2890 + $0xf0] sm:$0xff]
      %v2912 = vld [vmem:[%s2890 + $0xf8] sm:$0xff]
      %v2913 = vld [vmem:[%s2890 + $0x108] sm:$0xff]
      %v2914 = vld [vmem:[%s2890 + $0x110] sm:$0xff]
      %v2915 = vld [vmem:[%s2890 + $0x120] sm:$0xff]
      %v2916 = vld [vmem:[%s2890 + $0x128] sm:$0xff]
      %v2917 = vld [vmem:[%s2890 + $0x138] sm:$0xff]
      %v2918 = vld [vmem:[%s2890 + $0x140] sm:$0xff]
      %v2919 = vld [vmem:[%s2890 + $0x150] sm:$0xff]
      %v2920 = vld [vmem:[%s2890 + $0x158] sm:$0xff]
      %v2921 = vld [vmem:[%s2890 + $0x168] sm:$0xff]
      %v2922 = vld [vmem:[%s2890 + $0x170] sm:$0xff]
      %s2923 = scalar_lea.vmem %s1, 24
      %v2924 = vld [vmem:[%s2923] sm:$0xf]
      %v2926 = vsel %vm257, %v2891, 0
      %v2929 = vsel %vm257, %v2892, 0
      %v2932 = vsel %vm257, %v2893, 0
      %v2935 = vsel %vm257, %v2894, 0
      %v2938 = vsel %vm257, %v2895, 0
      %v2941 = vsel %vm257, %v2896, 0
      %v2944 = vsel %vm257, %v2897, 0
      %v2947 = vsel %vm257, %v2898, 0
      %v2950 = vsel %vm257, %v2899, 0
      %v2953 = vsel %vm257, %v2900, 0
      %v2956 = vsel %vm257, %v2901, 0
      %v2959 = vsel %vm257, %v2902, 0
      %v2962 = vsel %vm257, %v2903, 0
      %v2965 = vsel %vm257, %v2904, 0
      %v2968 = vsel %vm257, %v2905, 0
      %v2971 = vsel %vm257, %v2906, 0
      %v2974 = vsel %vm257, %v2907, 0
      %v2977 = vsel %vm257, %v2908, 0
      %v2980 = vsel %vm257, %v2909, 0
      %v2983 = vsel %vm257, %v2910, 0
      %v2986 = vsel %vm257, %v2911, 0
      %v2989 = vsel %vm257, %v2912, 0
      %v2992 = vsel %vm257, %v2913, 0
      %v2995 = vsel %vm257, %v2914, 0
      %v2998 = vsel %vm257, %v2915, 0
      %v3001 = vsel %vm257, %v2916, 0
      %v3004 = vsel %vm257, %v2917, 0
      %v3007 = vsel %vm257, %v2918, 0
      %v3010 = vsel %vm257, %v2919, 0
      %v3013 = vsel %vm257, %v2920, 0
      %v3016 = vsel %vm257, %v2921, 0
      %v3019 = vsel %vm257, %v2922, 0
      %v3022 = vsel %vm354, %v2924, 0
      %3024 = vmatprep.subr.mxu0 0.0
      %3025 = vmatpush1.msra.mxu0 %v3022
      %3026 = vmatprep.subr.mxu0 0.0
      %3027 = vmatpush1.msra.mxu0 0.0
      %3028 = vmatprep.subr.mxu0 0.0
      %3029 = vmatpush1.msra.mxu0 0.0
      %3030 = vmatprep.subr.mxu0 0.0
      %3031 = vmatpush1.msra.mxu0 0.0
      %3032 = vmatprep.subr.mxu0 0.0
      %3033 = vmatpush1.msra.mxu0 0.0
      %3034 = vmatprep.subr.mxu0 0.0
      %3035 = vmatpush1.msra.mxu0 0.0
      %3036 = vmatprep.subr.mxu0 0.0
      %3037 = vmatpush1.msra.mxu0 0.0
      %3038 = vmatprep.subr.mxu0 0.0
      %3039 = vmatpush1.msra.mxu0 0.0
      %3040 = vmatprep.subr.mxu0 0.0
      %3041 = vmatpush1.msra.mxu0 0.0
      %3042 = vmatprep.subr.mxu0 0.0
      %3043 = vmatpush1.msra.mxu0 0.0
      %3044 = vmatprep.subr.mxu0 0.0
      %3045 = vmatpush1.msra.mxu0 0.0
      %3046 = vmatprep.subr.mxu0 0.0
      %3047 = vmatpush1.msra.mxu0 0.0
      %3048 = vmatprep.subr.mxu0 0.0
      %3049 = vmatpush1.msra.mxu0 0.0
      %3050 = vmatprep.subr.mxu0 0.0
      %3051 = vmatpush1.msra.mxu0 0.0
      %3052 = vmatprep.subr.mxu0 0.0
      %3053 = vmatpush1.msra.mxu0 0.0
      %3054 = vmatprep.subr.mxu0 0.0
      %3055 = vmatpush1.msra.mxu0 0.0
      %3056 = vmatprep.subr.mxu0 0.0
      %3057 = vmatpush1.msra.mxu0 0.0
      %3058 = vmatprep.subr.mxu0 0.0
      %3059 = vmatpush1.msra.mxu0 0.0
      %3060 = vmatprep.subr.mxu0 0.0
      %3061 = vmatpush1.msra.mxu0 0.0
      %3062 = vmatprep.subr.mxu0 0.0
      %3063 = vmatpush1.msra.mxu0 0.0
      %3064 = vmatprep.subr.mxu0 0.0
      %3065 = vmatpush1.msra.mxu0 0.0
      %3066 = vmatprep.subr.mxu0 0.0
      %3067 = vmatpush1.msra.mxu0 0.0
      %3068 = vmatprep.subr.mxu0 0.0
      %3069 = vmatpush1.msra.mxu0 0.0
      %3070 = vmatprep.subr.mxu0 0.0
      %3071 = vmatpush1.msra.mxu0 0.0
      %3072 = vmatprep.subr.mxu0 0.0
      %3073 = vmatpush1.msra.mxu0 0.0
      %3074 = vmatprep.subr.mxu0 0.0
      %3075 = vmatpush1.msra.mxu0 0.0
      %3076 = vmatprep.subr.mxu0 0.0
      %3077 = vmatpush1.msra.mxu0 0.0
      %3078 = vmatprep.subr.mxu0 0.0
      %3079 = vmatpush1.msra.mxu0 0.0
      %3080 = vmatprep.subr.mxu0 0.0
      %3081 = vmatpush1.msra.mxu0 0.0
      %3082 = vmatprep.subr.mxu0 0.0
      %3083 = vmatpush1.msra.mxu0 0.0
      %3084 = vmatprep.subr.mxu0 0.0
      %3085 = vmatpush1.msra.mxu0 0.0
      %3086 = vmatprep.subr.mxu0 0.0
      %3087 = vmatpush1.msra.mxu0 0.0
      %3088 = vmatprep.mubr.f32.mxu0 0.0
      %3089 = vmatmul.mubr.f32.gmra.mrb[0].mxu0 %v2926
      %v3090 = vpop.f32.mrb[0].mxu0
      %v3091 = vadd.f32 0.0, %v3090
      %v3092 = vpop.f32.mrb[0].mxu0
      %3093 = vmatprep.mubr.f32.mxu0 0.0
      %3094 = vmatmul.mubr.f32.gmra.mrb[0].mxu0 %v2929
      %v3095 = vpop.f32.mrb[0].mxu0
      %v3096 = vadd.f32 0.0, %v3095
      %v3097 = vpop.f32.mrb[0].mxu0
      %3098 = vmatprep.mubr.f32.mxu0 0.0
      %3099 = vmatmul.mubr.f32.gmra.mrb[0].mxu0 %v2932
      %v3100 = vpop.f32.mrb[0].mxu0
      %v3101 = vadd.f32 0.0, %v3100
      %v3102 = vpop.f32.mrb[0].mxu0
      %3103 = vmatprep.mubr.f32.mxu0 0.0
      %3104 = vmatmul.mubr.f32.gmra.mrb[0].mxu0 %v2935
      %v3105 = vpop.f32.mrb[0].mxu0
      %v3106 = vadd.f32 0.0, %v3105
      %v3107 = vpop.f32.mrb[0].mxu0
      %3108 = vmatprep.mubr.f32.mxu0 0.0
      %3109 = vmatmul.mubr.f32.gmra.mrb[0].mxu0 %v2938
      %v3110 = vpop.f32.mrb[0].mxu0
      %v3111 = vadd.f32 0.0, %v3110
      %v3112 = vpop.f32.mrb[0].mxu0
      %3113 = vmatprep.mubr.f32.mxu0 0.0
      %3114 = vmatmul.mubr.f32.gmra.mrb[0].mxu0 %v2941
      %v3115 = vpop.f32.mrb[0].mxu0
      %v3116 = vadd.f32 0.0, %v3115
      %v3117 = vpop.f32.mrb[0].mxu0
      %3118 = vmatprep.mubr.f32.mxu0 0.0
      %3119 = vmatmul.mubr.f32.gmra.mrb[0].mxu0 %v2944
      %v3120 = vpop.f32.mrb[0].mxu0
      %v3121 = vadd.f32 0.0, %v3120
      %v3122 = vpop.f32.mrb[0].mxu0
      %3123 = vmatprep.mubr.f32.mxu0 0.0
      %3124 = vmatmul.mubr.f32.gmra.mrb[0].mxu0 %v2947
      %v3125 = vpop.f32.mrb[0].mxu0
      %v3126 = vadd.f32 0.0, %v3125
      %v3127 = vpop.f32.mrb[0].mxu0
      %3128 = vmatprep.mubr.f32.mxu0 0.0
      %3129 = vmatmul.mubr.f32.gmra.mrb[0].mxu0 %v2950
      %v3130 = vpop.f32.mrb[0].mxu0
      %v3131 = vadd.f32 0.0, %v3130
      %v3132 = vpop.f32.mrb[0].mxu0
      %3133 = vmatprep.mubr.f32.mxu0 0.0
      %3134 = vmatmul.mubr.f32.gmra.mrb[0].mxu0 %v2953
      %v3135 = vpop.f32.mrb[0].mxu0
      %v3136 = vadd.f32 0.0, %v3135
      %v3137 = vpop.f32.mrb[0].mxu0
      %3138 = vmatprep.mubr.f32.mxu0 0.0
      %3139 = vmatmul.mubr.f32.gmra.mrb[0].mxu0 %v2956
      %v3140 = vpop.f32.mrb[0].mxu0
      %v3141 = vadd.f32 0.0, %v3140
      %v3142 = vpop.f32.mrb[0].mxu0
      %3143 = vmatprep.mubr.f32.mxu0 0.0
      %3144 = vmatmul.mubr.f32.gmra.mrb[0].mxu0 %v2959
      %v3145 = vpop.f32.mrb[0].mxu0
      %v3146 = vadd.f32 0.0, %v3145
      %v3147 = vpop.f32.mrb[0].mxu0
      %3148 = vmatprep.mubr.f32.mxu0 0.0
      %3149 = vmatmul.mubr.f32.gmra.mrb[0].mxu0 %v2962
      %v3150 = vpop.f32.mrb[0].mxu0
      %v3151 = vadd.f32 0.0, %v3150
      %v3152 = vpop.f32.mrb[0].mxu0
      %3153 = vmatprep.mubr.f32.mxu0 0.0
      %3154 = vmatmul.mubr.f32.gmra.mrb[0].mxu0 %v2965
      %v3155 = vpop.f32.mrb[0].mxu0
      %v3156 = vadd.f32 0.0, %v3155
      %v3157 = vpop.f32.mrb[0].mxu0
      %3158 = vmatprep.mubr.f32.mxu0 0.0
      %3159 = vmatmul.mubr.f32.gmra.mrb[0].mxu0 %v2968
      %v3160 = vpop.f32.mrb[0].mxu0
      %v3161 = vadd.f32 0.0, %v3160
      %v3162 = vpop.f32.mrb[0].mxu0
      %3163 = vmatprep.mubr.f32.mxu0 0.0
      %3164 = vmatmul.mubr.f32.gmra.mrb[0].mxu0 %v2971
      %v3165 = vpop.f32.mrb[0].mxu0
      %v3166 = vadd.f32 0.0, %v3165
      %v3167 = vpop.f32.mrb[0].mxu0
      %3168 = vmatprep.mubr.f32.mxu0 0.0
      %3169 = vmatmul.mubr.f32.gmra.mrb[0].mxu0 %v2974
      %v3170 = vpop.f32.mrb[0].mxu0
      %v3171 = vadd.f32 0.0, %v3170
      %v3172 = vpop.f32.mrb[0].mxu0
      %3173 = vmatprep.mubr.f32.mxu0 0.0
      %3174 = vmatmul.mubr.f32.gmra.mrb[0].mxu0 %v2977
      %v3175 = vpop.f32.mrb[0].mxu0
      %v3176 = vadd.f32 0.0, %v3175
      %v3177 = vpop.f32.mrb[0].mxu0
      %3178 = vmatprep.mubr.f32.mxu0 0.0
      %3179 = vmatmul.mubr.f32.gmra.mrb[0].mxu0 %v2980
      %v3180 = vpop.f32.mrb[0].mxu0
      %v3181 = vadd.f32 0.0, %v3180
      %v3182 = vpop.f32.mrb[0].mxu0
      %3183 = vmatprep.mubr.f32.mxu0 0.0
      %3184 = vmatmul.mubr.f32.gmra.mrb[0].mxu0 %v2983
      %v3185 = vpop.f32.mrb[0].mxu0
      %v3186 = vadd.f32 0.0, %v3185
      %v3187 = vpop.f32.mrb[0].mxu0
      %3188 = vmatprep.mubr.f32.mxu0 0.0
      %3189 = vmatmul.mubr.f32.gmra.mrb[0].mxu0 %v2986
      %v3190 = vpop.f32.mrb[0].mxu0
      %v3191 = vadd.f32 0.0, %v3190
      %v3192 = vpop.f32.mrb[0].mxu0
      %3193 = vmatprep.mubr.f32.mxu0 0.0
      %3194 = vmatmul.mubr.f32.gmra.mrb[0].mxu0 %v2989
      %v3195 = vpop.f32.mrb[0].mxu0
      %v3196 = vadd.f32 0.0, %v3195
      %v3197 = vpop.f32.mrb[0].mxu0
      %3198 = vmatprep.mubr.f32.mxu0 0.0
      %3199 = vmatmul.mubr.f32.gmra.mrb[0].mxu0 %v2992
      %v3200 = vpop.f32.mrb[0].mxu0
      %v3201 = vadd.f32 0.0, %v3200
      %v3202 = vpop.f32.mrb[0].mxu0
      %3203 = vmatprep.mubr.f32.mxu0 0.0
      %3204 = vmatmul.mubr.f32.gmra.mrb[0].mxu0 %v2995
      %v3205 = vpop.f32.mrb[0].mxu0
      %v3206 = vadd.f32 0.0, %v3205
      %v3207 = vpop.f32.mrb[0].mxu0
      %3208 = vmatprep.mubr.f32.mxu0 0.0
      %3209 = vmatmul.mubr.f32.gmra.mrb[0].mxu0 %v2998
      %v3210 = vpop.f32.mrb[0].mxu0
      %v3211 = vadd.f32 0.0, %v3210
      %v3212 = vpop.f32.mrb[0].mxu0
      %3213 = vmatprep.mubr.f32.mxu0 0.0
      %3214 = vmatmul.mubr.f32.gmra.mrb[0].mxu0 %v3001
      %v3215 = vpop.f32.mrb[0].mxu0
      %v3216 = vadd.f32 0.0, %v3215
      %v3217 = vpop.f32.mrb[0].mxu0
      %3218 = vmatprep.mubr.f32.mxu0 0.0
      %3219 = vmatmul.mubr.f32.gmra.mrb[0].mxu0 %v3004
      %v3220 = vpop.f32.mrb[0].mxu0
      %v3221 = vadd.f32 0.0, %v3220
      %v3222 = vpop.f32.mrb[0].mxu0
      %3223 = vmatprep.mubr.f32.mxu0 0.0
      %3224 = vmatmul.mubr.f32.gmra.mrb[0].mxu0 %v3007
      %v3225 = vpop.f32.mrb[0].mxu0
      %v3226 = vadd.f32 0.0, %v3225
      %v3227 = vpop.f32.mrb[0].mxu0
      %3228 = vmatprep.mubr.f32.mxu0 0.0
      %3229 = vmatmul.mubr.f32.gmra.mrb[0].mxu0 %v3010
      %v3230 = vpop.f32.mrb[0].mxu0
      %v3231 = vadd.f32 0.0, %v3230
      %v3232 = vpop.f32.mrb[0].mxu0
      %3233 = vmatprep.mubr.f32.mxu0 0.0
      %3234 = vmatmul.mubr.f32.gmra.mrb[0].mxu0 %v3013
      %v3235 = vpop.f32.mrb[0].mxu0
      %v3236 = vadd.f32 0.0, %v3235
      %v3237 = vpop.f32.mrb[0].mxu0
      %3238 = vmatprep.mubr.f32.mxu0 0.0
      %3239 = vmatmul.mubr.f32.gmra.mrb[0].mxu0 %v3016
      %v3240 = vpop.f32.mrb[0].mxu0
      %v3241 = vadd.f32 0.0, %v3240
      %v3242 = vpop.f32.mrb[0].mxu0
      %3243 = vmatprep.mubr.f32.mxu0 0.0
      %3244 = vmatmul.mubr.f32.gmra.mrb[0].mxu0 %v3019
      %v3245 = vpop.f32.mrb[0].mxu0
      %v3246 = vadd.f32 0.0, %v3245
      %v3247 = vpop.f32.mrb[0].mxu0
      %3248 = vdwg.mxu0
      %v3249 = vld [vmem:[#allocation2] sm:$0xff]
      %v3250 = vld [vmem:[#allocation2 + $0x8] sm:$0xff]
      %v3251 = vld [vmem:[#allocation2 + $0x10] sm:$0xff]
      %v3252 = vld [vmem:[#allocation2 + $0x18] sm:$0xff]
      %v3253 = vld [vmem:[#allocation2 + $0x20] sm:$0xff]
      %v3254 = vld [vmem:[#allocation2 + $0x28] sm:$0xff]
      %v3255 = vld [vmem:[#allocation2 + $0x30] sm:$0xff]
      %v3256 = vld [vmem:[#allocation2 + $0x38] sm:$0xff]
      %v3257 = vld [vmem:[#allocation2 + $0x40] sm:$0xff]
      %v3258 = vld [vmem:[#allocation2 + $0x48] sm:$0xff]
      %v3259 = vld [vmem:[#allocation2 + $0x50] sm:$0xff]
      %v3260 = vld [vmem:[#allocation2 + $0x58] sm:$0xff]
      %v3261 = vld [vmem:[#allocation2 + $0x60] sm:$0xff]
      %v3262 = vld [vmem:[#allocation2 + $0x68] sm:$0xff]
      %v3263 = vld [vmem:[#allocation2 + $0x70] sm:$0xff]
      %v3264 = vld [vmem:[#allocation2 + $0x78] sm:$0xff]
      %v3265 = vld [vmem:[#allocation2 + $0x80] sm:$0xff]
      %v3266 = vld [vmem:[#allocation2 + $0x88] sm:$0xff]
      %v3267 = vld [vmem:[#allocation2 + $0x90] sm:$0xff]
      %v3268 = vld [vmem:[#allocation2 + $0x98] sm:$0xff]
      %v3269 = vld [vmem:[#allocation2 + $0xa0] sm:$0xff]
      %v3270 = vld [vmem:[#allocation2 + $0xa8] sm:$0xff]
      %v3271 = vld [vmem:[#allocation2 + $0xb0] sm:$0xff]
      %v3272 = vld [vmem:[#allocation2 + $0xb8] sm:$0xff]
      %v3273 = vld [vmem:[#allocation2 + $0xc0] sm:$0xff]
      %v3274 = vld [vmem:[#allocation2 + $0xc8] sm:$0xff]
      %v3275 = vld [vmem:[#allocation2 + $0xd0] sm:$0xff]
      %v3276 = vld [vmem:[#allocation2 + $0xd8] sm:$0xff]
      %v3277 = vld [vmem:[#allocation2 + $0xe0] sm:$0xff]
      %v3278 = vld [vmem:[#allocation2 + $0xe8] sm:$0xff]
      %v3279 = vld [vmem:[#allocation2 + $0xf0] sm:$0xff]
      %v3280 = vld [vmem:[#allocation2 + $0xf8] sm:$0xff]
      %v3281 = vadd.f32 %v3249, %v3091
      %v3282 = vadd.f32 %v3250, %v3096
      %v3283 = vadd.f32 %v3251, %v3101
      %v3284 = vadd.f32 %v3252, %v3106
      %v3285 = vadd.f32 %v3253, %v3111
      %v3286 = vadd.f32 %v3254, %v3116
      %v3287 = vadd.f32 %v3255, %v3121
      %v3288 = vadd.f32 %v3256, %v3126
      %v3289 = vadd.f32 %v3257, %v3131
      %v3290 = vadd.f32 %v3258, %v3136
      %v3291 = vadd.f32 %v3259, %v3141
      %v3292 = vadd.f32 %v3260, %v3146
      %v3293 = vadd.f32 %v3261, %v3151
      %v3294 = vadd.f32 %v3262, %v3156
      %v3295 = vadd.f32 %v3263, %v3161
      %v3296 = vadd.f32 %v3264, %v3166
      %v3297 = vadd.f32 %v3265, %v3171
      %v3298 = vadd.f32 %v3266, %v3176
      %v3299 = vadd.f32 %v3267, %v3181
      %v3300 = vadd.f32 %v3268, %v3186
      %v3301 = vadd.f32 %v3269, %v3191
      %v3302 = vadd.f32 %v3270, %v3196
      %v3303 = vadd.f32 %v3271, %v3201
      %v3304 = vadd.f32 %v3272, %v3206
      %v3305 = vadd.f32 %v3273, %v3211
      %v3306 = vadd.f32 %v3274, %v3216
      %v3307 = vadd.f32 %v3275, %v3221
      %v3308 = vadd.f32 %v3276, %v3226
      %v3309 = vadd.f32 %v3277, %v3231
      %v3310 = vadd.f32 %v3278, %v3236
      %v3311 = vadd.f32 %v3279, %v3241
      %v3312 = vadd.f32 %v3280, %v3246
      %3313 = vst [vmem:[#allocation2] sm:$0xff] %v3281
      %3314 = vst [vmem:[#allocation2 + $0x8] sm:$0xff] %v3282
      %3315 = vst [vmem:[#allocation2 + $0x10] sm:$0xff] %v3283
      %3316 = vst [vmem:[#allocation2 + $0x18] sm:$0xff] %v3284
      %3317 = vst [vmem:[#allocation2 + $0x20] sm:$0xff] %v3285
      %3318 = vst [vmem:[#allocation2 + $0x28] sm:$0xff] %v3286
      %3319 = vst [vmem:[#allocation2 + $0x30] sm:$0xff] %v3287
      %3320 = vst [vmem:[#allocation2 + $0x38] sm:$0xff] %v3288
      %3321 = vst [vmem:[#allocation2 + $0x40] sm:$0xff] %v3289
      %3322 = vst [vmem:[#allocation2 + $0x48] sm:$0xff] %v3290
      %3323 = vst [vmem:[#allocation2 + $0x50] sm:$0xff] %v3291
      %3324 = vst [vmem:[#allocation2 + $0x58] sm:$0xff] %v3292
      %3325 = vst [vmem:[#allocation2 + $0x60] sm:$0xff] %v3293
      %3326 = vst [vmem:[#allocation2 + $0x68] sm:$0xff] %v3294
      %3327 = vst [vmem:[#allocation2 + $0x70] sm:$0xff] %v3295
      %3328 = vst [vmem:[#allocation2 + $0x78] sm:$0xff] %v3296
      %3329 = vst [vmem:[#allocation2 + $0x80] sm:$0xff] %v3297
      %3330 = vst [vmem:[#allocation2 + $0x88] sm:$0xff] %v3298
      %3331 = vst [vmem:[#allocation2 + $0x90] sm:$0xff] %v3299
      %3332 = vst [vmem:[#allocation2 + $0x98] sm:$0xff] %v3300
      %3333 = vst [vmem:[#allocation2 + $0xa0] sm:$0xff] %v3301
      %3334 = vst [vmem:[#allocation2 + $0xa8] sm:$0xff] %v3302
      %3335 = vst [vmem:[#allocation2 + $0xb0] sm:$0xff] %v3303
      %3336 = vst [vmem:[#allocation2 + $0xb8] sm:$0xff] %v3304
      %3337 = vst [vmem:[#allocation2 + $0xc0] sm:$0xff] %v3305
      %3338 = vst [vmem:[#allocation2 + $0xc8] sm:$0xff] %v3306
      %3339 = vst [vmem:[#allocation2 + $0xd0] sm:$0xff] %v3307
      %3340 = vst [vmem:[#allocation2 + $0xd8] sm:$0xff] %v3308
      %3341 = vst [vmem:[#allocation2 + $0xe0] sm:$0xff] %v3309
      %3342 = vst [vmem:[#allocation2 + $0xe8] sm:$0xff] %v3310
      %3343 = vst [vmem:[#allocation2 + $0xf0] sm:$0xff] %v3311
      %3344 = vst [vmem:[#allocation2 + $0xf8] sm:$0xff] %v3312
      %v3345 = vld [vmem:[%s2890 + $0x1] sm:$0xff]
      %v3346 = vld [vmem:[%s2890 + $0x9] sm:$0xff]
      %v3347 = vld [vmem:[%s2890 + $0x19] sm:$0xff]
      %v3348 = vld [vmem:[%s2890 + $0x21] sm:$0xff]
      %v3349 = vld [vmem:[%s2890 + $0x31] sm:$0xff]
      %v3350 = vld [vmem:[%s2890 + $0x39] sm:$0xff]
      %v3351 = vld [vmem:[%s2890 + $0x49] sm:$0xff]
      %v3352 = vld [vmem:[%s2890 + $0x51] sm:$0xff]
      %v3353 = vld [vmem:[%s2890 + $0x61] sm:$0xff]
      %v3354 = vld [vmem:[%s2890 + $0x69] sm:$0xff]
      %v3355 = vld [vmem:[%s2890 + $0x79] sm:$0xff]
      %v3356 = vld [vmem:[%s2890 + $0x81] sm:$0xff]
      %v3357 = vld [vmem:[%s2890 + $0x91] sm:$0xff]
      %v3358 = vld [vmem:[%s2890 + $0x99] sm:$0xff]
      %v3359 = vld [vmem:[%s2890 + $0xa9] sm:$0xff]
      %v3360 = vld [vmem:[%s2890 + $0xb1] sm:$0xff]
      %v3361 = vld [vmem:[%s2890 + $0xc1] sm:$0xff]
      %v3362 = vld [vmem:[%s2890 + $0xc9] sm:$0xff]
      %v3363 = vld [vmem:[%s2890 + $0xd9] sm:$0xff]
      %v3364 = vld [vmem:[%s2890 + $0xe1] sm:$0xff]
      %v3365 = vld [vmem:[%s2890 + $0xf1] sm:$0xff]
      %v3366 = vld [vmem:[%s2890 + $0xf9] sm:$0xff]
      %v3367 = vld [vmem:[%s2890 + $0x109] sm:$0xff]
      %v3368 = vld [vmem:[%s2890 + $0x111] sm:$0xff]
      %v3369 = vld [vmem:[%s2890 + $0x121] sm:$0xff]
      %v3370 = vld [vmem:[%s2890 + $0x129] sm:$0xff]
      %v3371 = vld [vmem:[%s2890 + $0x139] sm:$0xff]
      %v3372 = vld [vmem:[%s2890 + $0x141] sm:$0xff]
      %v3373 = vld [vmem:[%s2890 + $0x151] sm:$0xff]
      %v3374 = vld [vmem:[%s2890 + $0x159] sm:$0xff]
      %v3375 = vld [vmem:[%s2890 + $0x169] sm:$0xff]
      %v3376 = vld [vmem:[%s2890 + $0x171] sm:$0xff]
      %s3377 = scalar_lea.vmem %s1, 28
      %v3378 = vld [vmem:[%s3377] sm:$0xf]
      %v3380 = vsel %vm257, %v3345, 0
      %v3383 = vsel %vm257, %v3346, 0
      %v3386 = vsel %vm257, %v3347, 0
      %v3389 = vsel %vm257, %v3348, 0
      %v3392 = vsel %vm257, %v3349, 0
      %v3395 = vsel %vm257, %v3350, 0
      %v3398 = vsel %vm257, %v3351, 0
      %v3401 = vsel %vm257, %v3352, 0
      %v3404 = vsel %vm257, %v3353, 0
      %v3407 = vsel %vm257, %v3354, 0
      %v3410 = vsel %vm257, %v3355, 0
      %v3413 = vsel %vm257, %v3356, 0
      %v3416 = vsel %vm257, %v3357, 0
      %v3419 = vsel %vm257, %v3358, 0
      %v3422 = vsel %vm257, %v3359, 0
      %v3425 = vsel %vm257, %v3360, 0
      %v3428 = vsel %vm257, %v3361, 0
      %v3431 = vsel %vm257, %v3362, 0
      %v3434 = vsel %vm257, %v3363, 0
      %v3437 = vsel %vm257, %v3364, 0
      %v3440 = vsel %vm257, %v3365, 0
      %v3443 = vsel %vm257, %v3366, 0
      %v3446 = vsel %vm257, %v3367, 0
      %v3449 = vsel %vm257, %v3368, 0
      %v3452 = vsel %vm257, %v3369, 0
      %v3455 = vsel %vm257, %v3370, 0
      %v3458 = vsel %vm257, %v3371, 0
      %v3461 = vsel %vm257, %v3372, 0
      %v3464 = vsel %vm257, %v3373, 0
      %v3467 = vsel %vm257, %v3374, 0
      %v3470 = vsel %vm257, %v3375, 0
      %v3473 = vsel %vm257, %v3376, 0
      %v3476 = vsel %vm354, %v3378, 0
      %3478 = vmatprep.subr.mxu0 0.0
      %3479 = vmatpush1.msra.mxu0 %v3476
      %3480 = vmatprep.subr.mxu0 0.0
      %3481 = vmatpush1.msra.mxu0 0.0
      %3482 = vmatprep.subr.mxu0 0.0
      %3483 = vmatpush1.msra.mxu0 0.0
      %3484 = vmatprep.subr.mxu0 0.0
      %3485 = vmatpush1.msra.mxu0 0.0
      %3486 = vmatprep.subr.mxu0 0.0
      %3487 = vmatpush1.msra.mxu0 0.0
      %3488 = vmatprep.subr.mxu0 0.0
      %3489 = vmatpush1.msra.mxu0 0.0
      %3490 = vmatprep.subr.mxu0 0.0
      %3491 = vmatpush1.msra.mxu0 0.0
      %3492 = vmatprep.subr.mxu0 0.0
      %3493 = vmatpush1.msra.mxu0 0.0
      %3494 = vmatprep.subr.mxu0 0.0
      %3495 = vmatpush1.msra.mxu0 0.0
      %3496 = vmatprep.subr.mxu0 0.0
      %3497 = vmatpush1.msra.mxu0 0.0
      %3498 = vmatprep.subr.mxu0 0.0
      %3499 = vmatpush1.msra.mxu0 0.0
      %3500 = vmatprep.subr.mxu0 0.0
      %3501 = vmatpush1.msra.mxu0 0.0
      %3502 = vmatprep.subr.mxu0 0.0
      %3503 = vmatpush1.msra.mxu0 0.0
      %3504 = vmatprep.subr.mxu0 0.0
      %3505 = vmatpush1.msra.mxu0 0.0
      %3506 = vmatprep.subr.mxu0 0.0
      %3507 = vmatpush1.msra.mxu0 0.0
      %3508 = vmatprep.subr.mxu0 0.0
      %3509 = vmatpush1.msra.mxu0 0.0
      %3510 = vmatprep.subr.mxu0 0.0
      %3511 = vmatpush1.msra.mxu0 0.0
      %3512 = vmatprep.subr.mxu0 0.0
      %3513 = vmatpush1.msra.mxu0 0.0
      %3514 = vmatprep.subr.mxu0 0.0
      %3515 = vmatpush1.msra.mxu0 0.0
      %3516 = vmatprep.subr.mxu0 0.0
      %3517 = vmatpush1.msra.mxu0 0.0
      %3518 = vmatprep.subr.mxu0 0.0
      %3519 = vmatpush1.msra.mxu0 0.0
      %3520 = vmatprep.subr.mxu0 0.0
      %3521 = vmatpush1.msra.mxu0 0.0
      %3522 = vmatprep.subr.mxu0 0.0
      %3523 = vmatpush1.msra.mxu0 0.0
      %3524 = vmatprep.subr.mxu0 0.0
      %3525 = vmatpush1.msra.mxu0 0.0
      %3526 = vmatprep.subr.mxu0 0.0
      %3527 = vmatpush1.msra.mxu0 0.0
      %3528 = vmatprep.subr.mxu0 0.0
      %3529 = vmatpush1.msra.mxu0 0.0
      %3530 = vmatprep.subr.mxu0 0.0
      %3531 = vmatpush1.msra.mxu0 0.0
      %3532 = vmatprep.subr.mxu0 0.0
      %3533 = vmatpush1.msra.mxu0 0.0
      %3534 = vmatprep.subr.mxu0 0.0
      %3535 = vmatpush1.msra.mxu0 0.0
      %3536 = vmatprep.subr.mxu0 0.0
      %3537 = vmatpush1.msra.mxu0 0.0
      %3538 = vmatprep.subr.mxu0 0.0
      %3539 = vmatpush1.msra.mxu0 0.0
      %3540 = vmatprep.subr.mxu0 0.0
      %3541 = vmatpush1.msra.mxu0 0.0
      %3542 = vmatprep.mubr.f32.mxu0 0.0
      %3543 = vmatmul.mubr.f32.gmra.mrb[0].mxu0 %v3380
      %v3544 = vpop.f32.mrb[0].mxu0
      %v3545 = vadd.f32 0.0, %v3544
      %v3546 = vpop.f32.mrb[0].mxu0
      %3547 = vmatprep.mubr.f32.mxu0 0.0
      %3548 = vmatmul.mubr.f32.gmra.mrb[0].mxu0 %v3383
      %v3549 = vpop.f32.mrb[0].mxu0
      %v3550 = vadd.f32 0.0, %v3549
      %v3551 = vpop.f32.mrb[0].mxu0
      %3552 = vmatprep.mubr.f32.mxu0 0.0
      %3553 = vmatmul.mubr.f32.gmra.mrb[0].mxu0 %v3386
      %v3554 = vpop.f32.mrb[0].mxu0
      %v3555 = vadd.f32 0.0, %v3554
      %v3556 = vpop.f32.mrb[0].mxu0
      %3557 = vmatprep.mubr.f32.mxu0 0.0
      %3558 = vmatmul.mubr.f32.gmra.mrb[0].mxu0 %v3389
      %v3559 = vpop.f32.mrb[0].mxu0
      %v3560 = vadd.f32 0.0, %v3559
      %v3561 = vpop.f32.mrb[0].mxu0
      %3562 = vmatprep.mubr.f32.mxu0 0.0
      %3563 = vmatmul.mubr.f32.gmra.mrb[0].mxu0 %v3392
      %v3564 = vpop.f32.mrb[0].mxu0
      %v3565 = vadd.f32 0.0, %v3564
      %v3566 = vpop.f32.mrb[0].mxu0
      %3567 = vmatprep.mubr.f32.mxu0 0.0
      %3568 = vmatmul.mubr.f32.gmra.mrb[0].mxu0 %v3395
      %v3569 = vpop.f32.mrb[0].mxu0
      %v3570 = vadd.f32 0.0, %v3569
      %v3571 = vpop.f32.mrb[0].mxu0
      %3572 = vmatprep.mubr.f32.mxu0 0.0
      %3573 = vmatmul.mubr.f32.gmra.mrb[0].mxu0 %v3398
      %v3574 = vpop.f32.mrb[0].mxu0
      %v3575 = vadd.f32 0.0, %v3574
      %v3576 = vpop.f32.mrb[0].mxu0
      %3577 = vmatprep.mubr.f32.mxu0 0.0
      %3578 = vmatmul.mubr.f32.gmra.mrb[0].mxu0 %v3401
      %v3579 = vpop.f32.mrb[0].mxu0
      %v3580 = vadd.f32 0.0, %v3579
      %v3581 = vpop.f32.mrb[0].mxu0
      %3582 = vmatprep.mubr.f32.mxu0 0.0
      %3583 = vmatmul.mubr.f32.gmra.mrb[0].mxu0 %v3404
      %v3584 = vpop.f32.mrb[0].mxu0
      %v3585 = vadd.f32 0.0, %v3584
      %v3586 = vpop.f32.mrb[0].mxu0
      %3587 = vmatprep.mubr.f32.mxu0 0.0
      %3588 = vmatmul.mubr.f32.gmra.mrb[0].mxu0 %v3407
      %v3589 = vpop.f32.mrb[0].mxu0
      %v3590 = vadd.f32 0.0, %v3589
      %v3591 = vpop.f32.mrb[0].mxu0
      %3592 = vmatprep.mubr.f32.mxu0 0.0
      %3593 = vmatmul.mubr.f32.gmra.mrb[0].mxu0 %v3410
      %v3594 = vpop.f32.mrb[0].mxu0
      %v3595 = vadd.f32 0.0, %v3594
      %v3596 = vpop.f32.mrb[0].mxu0
      %3597 = vmatprep.mubr.f32.mxu0 0.0
      %3598 = vmatmul.mubr.f32.gmra.mrb[0].mxu0 %v3413
      %v3599 = vpop.f32.mrb[0].mxu0
      %v3600 = vadd.f32 0.0, %v3599
      %v3601 = vpop.f32.mrb[0].mxu0
      %3602 = vmatprep.mubr.f32.mxu0 0.0
      %3603 = vmatmul.mubr.f32.gmra.mrb[0].mxu0 %v3416
      %v3604 = vpop.f32.mrb[0].mxu0
      %v3605 = vadd.f32 0.0, %v3604
      %v3606 = vpop.f32.mrb[0].mxu0
      %3607 = vmatprep.mubr.f32.mxu0 0.0
      %3608 = vmatmul.mubr.f32.gmra.mrb[0].mxu0 %v3419
      %v3609 = vpop.f32.mrb[0].mxu0
      %v3610 = vadd.f32 0.0, %v3609
      %v3611 = vpop.f32.mrb[0].mxu0
      %3612 = vmatprep.mubr.f32.mxu0 0.0
      %3613 = vmatmul.mubr.f32.gmra.mrb[0].mxu0 %v3422
      %v3614 = vpop.f32.mrb[0].mxu0
      %v3615 = vadd.f32 0.0, %v3614
      %v3616 = vpop.f32.mrb[0].mxu0
      %3617 = vmatprep.mubr.f32.mxu0 0.0
      %3618 = vmatmul.mubr.f32.gmra.mrb[0].mxu0 %v3425
      %v3619 = vpop.f32.mrb[0].mxu0
      %v3620 = vadd.f32 0.0, %v3619
      %v3621 = vpop.f32.mrb[0].mxu0
      %3622 = vmatprep.mubr.f32.mxu0 0.0
      %3623 = vmatmul.mubr.f32.gmra.mrb[0].mxu0 %v3428
      %v3624 = vpop.f32.mrb[0].mxu0
      %v3625 = vadd.f32 0.0, %v3624
      %v3626 = vpop.f32.mrb[0].mxu0
      %3627 = vmatprep.mubr.f32.mxu0 0.0
      %3628 = vmatmul.mubr.f32.gmra.mrb[0].mxu0 %v3431
      %v3629 = vpop.f32.mrb[0].mxu0
      %v3630 = vadd.f32 0.0, %v3629
      %v3631 = vpop.f32.mrb[0].mxu0
      %3632 = vmatprep.mubr.f32.mxu0 0.0
      %3633 = vmatmul.mubr.f32.gmra.mrb[0].mxu0 %v3434
      %v3634 = vpop.f32.mrb[0].mxu0
      %v3635 = vadd.f32 0.0, %v3634
      %v3636 = vpop.f32.mrb[0].mxu0
      %3637 = vmatprep.mubr.f32.mxu0 0.0
      %3638 = vmatmul.mubr.f32.gmra.mrb[0].mxu0 %v3437
      %v3639 = vpop.f32.mrb[0].mxu0
      %v3640 = vadd.f32 0.0, %v3639
      %v3641 = vpop.f32.mrb[0].mxu0
      %3642 = vmatprep.mubr.f32.mxu0 0.0
      %3643 = vmatmul.mubr.f32.gmra.mrb[0].mxu0 %v3440
      %v3644 = vpop.f32.mrb[0].mxu0
      %v3645 = vadd.f32 0.0, %v3644
      %v3646 = vpop.f32.mrb[0].mxu0
      %3647 = vmatprep.mubr.f32.mxu0 0.0
      %3648 = vmatmul.mubr.f32.gmra.mrb[0].mxu0 %v3443
      %v3649 = vpop.f32.mrb[0].mxu0
      %v3650 = vadd.f32 0.0, %v3649
      %v3651 = vpop.f32.mrb[0].mxu0
      %3652 = vmatprep.mubr.f32.mxu0 0.0
      %3653 = vmatmul.mubr.f32.gmra.mrb[0].mxu0 %v3446
      %v3654 = vpop.f32.mrb[0].mxu0
      %v3655 = vadd.f32 0.0, %v3654
      %v3656 = vpop.f32.mrb[0].mxu0
      %3657 = vmatprep.mubr.f32.mxu0 0.0
      %3658 = vmatmul.mubr.f32.gmra.mrb[0].mxu0 %v3449
      %v3659 = vpop.f32.mrb[0].mxu0
      %v3660 = vadd.f32 0.0, %v3659
      %v3661 = vpop.f32.mrb[0].mxu0
      %3662 = vmatprep.mubr.f32.mxu0 0.0
      %3663 = vmatmul.mubr.f32.gmra.mrb[0].mxu0 %v3452
      %v3664 = vpop.f32.mrb[0].mxu0
      %v3665 = vadd.f32 0.0, %v3664
      %v3666 = vpop.f32.mrb[0].mxu0
      %3667 = vmatprep.mubr.f32.mxu0 0.0
      %3668 = vmatmul.mubr.f32.gmra.mrb[0].mxu0 %v3455
      %v3669 = vpop.f32.mrb[0].mxu0
      %v3670 = vadd.f32 0.0, %v3669
      %v3671 = vpop.f32.mrb[0].mxu0
      %3672 = vmatprep.mubr.f32.mxu0 0.0
      %3673 = vmatmul.mubr.f32.gmra.mrb[0].mxu0 %v3458
      %v3674 = vpop.f32.mrb[0].mxu0
      %v3675 = vadd.f32 0.0, %v3674
      %v3676 = vpop.f32.mrb[0].mxu0
      %3677 = vmatprep.mubr.f32.mxu0 0.0
      %3678 = vmatmul.mubr.f32.gmra.mrb[0].mxu0 %v3461
      %v3679 = vpop.f32.mrb[0].mxu0
      %v3680 = vadd.f32 0.0, %v3679
      %v3681 = vpop.f32.mrb[0].mxu0
      %3682 = vmatprep.mubr.f32.mxu0 0.0
      %3683 = vmatmul.mubr.f32.gmra.mrb[0].mxu0 %v3464
      %v3684 = vpop.f32.mrb[0].mxu0
      %v3685 = vadd.f32 0.0, %v3684
      %v3686 = vpop.f32.mrb[0].mxu0
      %3687 = vmatprep.mubr.f32.mxu0 0.0
      %3688 = vmatmul.mubr.f32.gmra.mrb[0].mxu0 %v3467
      %v3689 = vpop.f32.mrb[0].mxu0
      %v3690 = vadd.f32 0.0, %v3689
      %v3691 = vpop.f32.mrb[0].mxu0
      %3692 = vmatprep.mubr.f32.mxu0 0.0
      %3693 = vmatmul.mubr.f32.gmra.mrb[0].mxu0 %v3470
      %v3694 = vpop.f32.mrb[0].mxu0
      %v3695 = vadd.f32 0.0, %v3694
      %v3696 = vpop.f32.mrb[0].mxu0
      %3697 = vmatprep.mubr.f32.mxu0 0.0
      %3698 = vmatmul.mubr.f32.gmra.mrb[0].mxu0 %v3473
      %v3699 = vpop.f32.mrb[0].mxu0
      %v3700 = vadd.f32 0.0, %v3699
      %v3701 = vpop.f32.mrb[0].mxu0
      %3702 = vdwg.mxu0
      %v3703 = vld [vmem:[#allocation2] sm:$0xff]
      %v3704 = vld [vmem:[#allocation2 + $0x8] sm:$0xff]
      %v3705 = vld [vmem:[#allocation2 + $0x10] sm:$0xff]
      %v3706 = vld [vmem:[#allocation2 + $0x18] sm:$0xff]
      %v3707 = vld [vmem:[#allocation2 + $0x20] sm:$0xff]
      %v3708 = vld [vmem:[#allocation2 + $0x28] sm:$0xff]
      %v3709 = vld [vmem:[#allocation2 + $0x30] sm:$0xff]
      %v3710 = vld [vmem:[#allocation2 + $0x38] sm:$0xff]
      %v3711 = vld [vmem:[#allocation2 + $0x40] sm:$0xff]
      %v3712 = vld [vmem:[#allocation2 + $0x48] sm:$0xff]
      %v3713 = vld [vmem:[#allocation2 + $0x50] sm:$0xff]
      %v3714 = vld [vmem:[#allocation2 + $0x58] sm:$0xff]
      %v3715 = vld [vmem:[#allocation2 + $0x60] sm:$0xff]
      %v3716 = vld [vmem:[#allocation2 + $0x68] sm:$0xff]
      %v3717 = vld [vmem:[#allocation2 + $0x70] sm:$0xff]
      %v3718 = vld [vmem:[#allocation2 + $0x78] sm:$0xff]
      %v3719 = vld [vmem:[#allocation2 + $0x80] sm:$0xff]
      %v3720 = vld [vmem:[#allocation2 + $0x88] sm:$0xff]
      %v3721 = vld [vmem:[#allocation2 + $0x90] sm:$0xff]
      %v3722 = vld [vmem:[#allocation2 + $0x98] sm:$0xff]
      %v3723 = vld [vmem:[#allocation2 + $0xa0] sm:$0xff]
      %v3724 = vld [vmem:[#allocation2 + $0xa8] sm:$0xff]
      %v3725 = vld [vmem:[#allocation2 + $0xb0] sm:$0xff]
      %v3726 = vld [vmem:[#allocation2 + $0xb8] sm:$0xff]
      %v3727 = vld [vmem:[#allocation2 + $0xc0] sm:$0xff]
      %v3728 = vld [vmem:[#allocation2 + $0xc8] sm:$0xff]
      %v3729 = vld [vmem:[#allocation2 + $0xd0] sm:$0xff]
      %v3730 = vld [vmem:[#allocation2 + $0xd8] sm:$0xff]
      %v3731 = vld [vmem:[#allocation2 + $0xe0] sm:$0xff]
      %v3732 = vld [vmem:[#allocation2 + $0xe8] sm:$0xff]
      %v3733 = vld [vmem:[#allocation2 + $0xf0] sm:$0xff]
      %v3734 = vld [vmem:[#allocation2 + $0xf8] sm:$0xff]
      %v3735 = vadd.f32 %v3703, %v3545
      %v3736 = vadd.f32 %v3704, %v3550
      %v3737 = vadd.f32 %v3705, %v3555
      %v3738 = vadd.f32 %v3706, %v3560
      %v3739 = vadd.f32 %v3707, %v3565
      %v3740 = vadd.f32 %v3708, %v3570
      %v3741 = vadd.f32 %v3709, %v3575
      %v3742 = vadd.f32 %v3710, %v3580
      %v3743 = vadd.f32 %v3711, %v3585
      %v3744 = vadd.f32 %v3712, %v3590
      %v3745 = vadd.f32 %v3713, %v3595
      %v3746 = vadd.f32 %v3714, %v3600
      %v3747 = vadd.f32 %v3715, %v3605
      %v3748 = vadd.f32 %v3716, %v3610
      %v3749 = vadd.f32 %v3717, %v3615
      %v3750 = vadd.f32 %v3718, %v3620
      %v3751 = vadd.f32 %v3719, %v3625
      %v3752 = vadd.f32 %v3720, %v3630
      %v3753 = vadd.f32 %v3721, %v3635
      %v3754 = vadd.f32 %v3722, %v3640
      %v3755 = vadd.f32 %v3723, %v3645
      %v3756 = vadd.f32 %v3724, %v3650
      %v3757 = vadd.f32 %v3725, %v3655
      %v3758 = vadd.f32 %v3726, %v3660
      %v3759 = vadd.f32 %v3727, %v3665
      %v3760 = vadd.f32 %v3728, %v3670
      %v3761 = vadd.f32 %v3729, %v3675
      %v3762 = vadd.f32 %v3730, %v3680
      %v3763 = vadd.f32 %v3731, %v3685
      %v3764 = vadd.f32 %v3732, %v3690
      %v3765 = vadd.f32 %v3733, %v3695
      %v3766 = vadd.f32 %v3734, %v3700
      %3767 = vst [vmem:[#allocation2] sm:$0xff] %v3735
      %3768 = vst [vmem:[#allocation2 + $0x8] sm:$0xff] %v3736
      %3769 = vst [vmem:[#allocation2 + $0x10] sm:$0xff] %v3737
      %3770 = vst [vmem:[#allocation2 + $0x18] sm:$0xff] %v3738
      %3771 = vst [vmem:[#allocation2 + $0x20] sm:$0xff] %v3739
      %3772 = vst [vmem:[#allocation2 + $0x28] sm:$0xff] %v3740
      %3773 = vst [vmem:[#allocation2 + $0x30] sm:$0xff] %v3741
      %3774 = vst [vmem:[#allocation2 + $0x38] sm:$0xff] %v3742
      %3775 = vst [vmem:[#allocation2 + $0x40] sm:$0xff] %v3743
      %3776 = vst [vmem:[#allocation2 + $0x48] sm:$0xff] %v3744
      %3777 = vst [vmem:[#allocation2 + $0x50] sm:$0xff] %v3745
      %3778 = vst [vmem:[#allocation2 + $0x58] sm:$0xff] %v3746
      %3779 = vst [vmem:[#allocation2 + $0x60] sm:$0xff] %v3747
      %3780 = vst [vmem:[#allocation2 + $0x68] sm:$0xff] %v3748
      %3781 = vst [vmem:[#allocation2 + $0x70] sm:$0xff] %v3749
      %3782 = vst [vmem:[#allocation2 + $0x78] sm:$0xff] %v3750
      %3783 = vst [vmem:[#allocation2 + $0x80] sm:$0xff] %v3751
      %3784 = vst [vmem:[#allocation2 + $0x88] sm:$0xff] %v3752
      %3785 = vst [vmem:[#allocation2 + $0x90] sm:$0xff] %v3753
      %3786 = vst [vmem:[#allocation2 + $0x98] sm:$0xff] %v3754
      %3787 = vst [vmem:[#allocation2 + $0xa0] sm:$0xff] %v3755
      %3788 = vst [vmem:[#allocation2 + $0xa8] sm:$0xff] %v3756
      %3789 = vst [vmem:[#allocation2 + $0xb0] sm:$0xff] %v3757
      %3790 = vst [vmem:[#allocation2 + $0xb8] sm:$0xff] %v3758
      %3791 = vst [vmem:[#allocation2 + $0xc0] sm:$0xff] %v3759
      %3792 = vst [vmem:[#allocation2 + $0xc8] sm:$0xff] %v3760
      %3793 = vst [vmem:[#allocation2 + $0xd0] sm:$0xff] %v3761
      %3794 = vst [vmem:[#allocation2 + $0xd8] sm:$0xff] %v3762
      %3795 = vst [vmem:[#allocation2 + $0xe0] sm:$0xff] %v3763
      %3796 = vst [vmem:[#allocation2 + $0xe8] sm:$0xff] %v3764
      %3797 = vst [vmem:[#allocation2 + $0xf0] sm:$0xff] %v3765
      %3798 = vst [vmem:[#allocation2 + $0xf8] sm:$0xff] %v3766
      %v3799 = vld [vmem:[%s2890 + $0x2] sm:$0xff]
      %v3800 = vld [vmem:[%s2890 + $0xa] sm:$0xff]
      %v3801 = vld [vmem:[%s2890 + $0x1a] sm:$0xff]
      %v3802 = vld [vmem:[%s2890 + $0x22] sm:$0xff]
      %v3803 = vld [vmem:[%s2890 + $0x32] sm:$0xff]
      %v3804 = vld [vmem:[%s2890 + $0x3a] sm:$0xff]
      %v3805 = vld [vmem:[%s2890 + $0x4a] sm:$0xff]
      %v3806 = vld [vmem:[%s2890 + $0x52] sm:$0xff]
      %v3807 = vld [vmem:[%s2890 + $0x62] sm:$0xff]
      %v3808 = vld [vmem:[%s2890 + $0x6a] sm:$0xff]
      %v3809 = vld [vmem:[%s2890 + $0x7a] sm:$0xff]
      %v3810 = vld [vmem:[%s2890 + $0x82] sm:$0xff]
      %v3811 = vld [vmem:[%s2890 + $0x92] sm:$0xff]
      %v3812 = vld [vmem:[%s2890 + $0x9a] sm:$0xff]
      %v3813 = vld [vmem:[%s2890 + $0xaa] sm:$0xff]
      %v3814 = vld [vmem:[%s2890 + $0xb2] sm:$0xff]
      %v3815 = vld [vmem:[%s2890 + $0xc2] sm:$0xff]
      %v3816 = vld [vmem:[%s2890 + $0xca] sm:$0xff]
      %v3817 = vld [vmem:[%s2890 + $0xda] sm:$0xff]
      %v3818 = vld [vmem:[%s2890 + $0xe2] sm:$0xff]
      %v3819 = vld [vmem:[%s2890 + $0xf2] sm:$0xff]
      %v3820 = vld [vmem:[%s2890 + $0xfa] sm:$0xff]
      %v3821 = vld [vmem:[%s2890 + $0x10a] sm:$0xff]
      %v3822 = vld [vmem:[%s2890 + $0x112] sm:$0xff]
      %v3823 = vld [vmem:[%s2890 + $0x122] sm:$0xff]
      %v3824 = vld [vmem:[%s2890 + $0x12a] sm:$0xff]
      %v3825 = vld [vmem:[%s2890 + $0x13a] sm:$0xff]
      %v3826 = vld [vmem:[%s2890 + $0x142] sm:$0xff]
      %v3827 = vld [vmem:[%s2890 + $0x152] sm:$0xff]
      %v3828 = vld [vmem:[%s2890 + $0x15a] sm:$0xff]
      %v3829 = vld [vmem:[%s2890 + $0x16a] sm:$0xff]
      %v3830 = vld [vmem:[%s2890 + $0x172] sm:$0xff]
      %s3831 = scalar_lea.vmem %s1, 32
      %v3832 = vld [vmem:[%s3831] sm:$0xf]
      %v3834 = vsel %vm257, %v3799, 0
      %v3837 = vsel %vm257, %v3800, 0
      %v3840 = vsel %vm257, %v3801, 0
      %v3843 = vsel %vm257, %v3802, 0
      %v3846 = vsel %vm257, %v3803, 0
      %v3849 = vsel %vm257, %v3804, 0
      %v3852 = vsel %vm257, %v3805, 0
      %v3855 = vsel %vm257, %v3806, 0
      %v3858 = vsel %vm257, %v3807, 0
      %v3861 = vsel %vm257, %v3808, 0
      %v3864 = vsel %vm257, %v3809, 0
      %v3867 = vsel %vm257, %v3810, 0
      %v3870 = vsel %vm257, %v3811, 0
      %v3873 = vsel %vm257, %v3812, 0
      %v3876 = vsel %vm257, %v3813, 0
      %v3879 = vsel %vm257, %v3814, 0
      %v3882 = vsel %vm257, %v3815, 0
      %v3885 = vsel %vm257, %v3816, 0
      %v3888 = vsel %vm257, %v3817, 0
      %v3891 = vsel %vm257, %v3818, 0
      %v3894 = vsel %vm257, %v3819, 0
      %v3897 = vsel %vm257, %v3820, 0
      %v3900 = vsel %vm257, %v3821, 0
      %v3903 = vsel %vm257, %v3822, 0
      %v3906 = vsel %vm257, %v3823, 0
      %v3909 = vsel %vm257, %v3824, 0
      %v3912 = vsel %vm257, %v3825, 0
      %v3915 = vsel %vm257, %v3826, 0
      %v3918 = vsel %vm257, %v3827, 0
      %v3921 = vsel %vm257, %v3828, 0
      %v3924 = vsel %vm257, %v3829, 0
      %v3927 = vsel %vm257, %v3830, 0
      %v3930 = vsel %vm354, %v3832, 0
      %3932 = vmatprep.subr.mxu0 0.0
      %3933 = vmatpush1.msra.mxu0 %v3930
      %3934 = vmatprep.subr.mxu0 0.0
      %3935 = vmatpush1.msra.mxu0 0.0
      %3936 = vmatprep.subr.mxu0 0.0
      %3937 = vmatpush1.msra.mxu0 0.0
      %3938 = vmatprep.subr.mxu0 0.0
      %3939 = vmatpush1.msra.mxu0 0.0
      %3940 = vmatprep.subr.mxu0 0.0
      %3941 = vmatpush1.msra.mxu0 0.0
      %3942 = vmatprep.subr.mxu0 0.0
      %3943 = vmatpush1.msra.mxu0 0.0
      %3944 = vmatprep.subr.mxu0 0.0
      %3945 = vmatpush1.msra.mxu0 0.0
      %3946 = vmatprep.subr.mxu0 0.0
      %3947 = vmatpush1.msra.mxu0 0.0
      %3948 = vmatprep.subr.mxu0 0.0
      %3949 = vmatpush1.msra.mxu0 0.0
      %3950 = vmatprep.subr.mxu0 0.0
      %3951 = vmatpush1.msra.mxu0 0.0
      %3952 = vmatprep.subr.mxu0 0.0
      %3953 = vmatpush1.msra.mxu0 0.0
      %3954 = vmatprep.subr.mxu0 0.0
      %3955 = vmatpush1.msra.mxu0 0.0
      %3956 = vmatprep.subr.mxu0 0.0
      %3957 = vmatpush1.msra.mxu0 0.0
      %3958 = vmatprep.subr.mxu0 0.0
      %3959 = vmatpush1.msra.mxu0 0.0
      %3960 = vmatprep.subr.mxu0 0.0
      %3961 = vmatpush1.msra.mxu0 0.0
      %3962 = vmatprep.subr.mxu0 0.0
      %3963 = vmatpush1.msra.mxu0 0.0
      %3964 = vmatprep.subr.mxu0 0.0
      %3965 = vmatpush1.msra.mxu0 0.0
      %3966 = vmatprep.subr.mxu0 0.0
      %3967 = vmatpush1.msra.mxu0 0.0
      %3968 = vmatprep.subr.mxu0 0.0
      %3969 = vmatpush1.msra.mxu0 0.0
      %3970 = vmatprep.subr.mxu0 0.0
      %3971 = vmatpush1.msra.mxu0 0.0
      %3972 = vmatprep.subr.mxu0 0.0
      %3973 = vmatpush1.msra.mxu0 0.0
      %3974 = vmatprep.subr.mxu0 0.0
      %3975 = vmatpush1.msra.mxu0 0.0
      %3976 = vmatprep.subr.mxu0 0.0
      %3977 = vmatpush1.msra.mxu0 0.0
      %3978 = vmatprep.subr.mxu0 0.0
      %3979 = vmatpush1.msra.mxu0 0.0
      %3980 = vmatprep.subr.mxu0 0.0
      %3981 = vmatpush1.msra.mxu0 0.0
      %3982 = vmatprep.subr.mxu0 0.0
      %3983 = vmatpush1.msra.mxu0 0.0
      %3984 = vmatprep.subr.mxu0 0.0
      %3985 = vmatpush1.msra.mxu0 0.0
      %3986 = vmatprep.subr.mxu0 0.0
      %3987 = vmatpush1.msra.mxu0 0.0
      %3988 = vmatprep.subr.mxu0 0.0
      %3989 = vmatpush1.msra.mxu0 0.0
      %3990 = vmatprep.subr.mxu0 0.0
      %3991 = vmatpush1.msra.mxu0 0.0
      %3992 = vmatprep.subr.mxu0 0.0
      %3993 = vmatpush1.msra.mxu0 0.0
      %3994 = vmatprep.subr.mxu0 0.0
      %3995 = vmatpush1.msra.mxu0 0.0
      %3996 = vmatprep.mubr.f32.mxu0 0.0
      %3997 = vmatmul.mubr.f32.gmra.mrb[0].mxu0 %v3834
      %v3998 = vpop.f32.mrb[0].mxu0
      %v3999 = vadd.f32 0.0, %v3998
      %v4000 = vpop.f32.mrb[0].mxu0
      %4001 = vmatprep.mubr.f32.mxu0 0.0
      %4002 = vmatmul.mubr.f32.gmra.mrb[0].mxu0 %v3837
      %v4003 = vpop.f32.mrb[0].mxu0
      %v4004 = vadd.f32 0.0, %v4003
      %v4005 = vpop.f32.mrb[0].mxu0
      %4006 = vmatprep.mubr.f32.mxu0 0.0
      %4007 = vmatmul.mubr.f32.gmra.mrb[0].mxu0 %v3840
      %v4008 = vpop.f32.mrb[0].mxu0
      %v4009 = vadd.f32 0.0, %v4008
      %v4010 = vpop.f32.mrb[0].mxu0
      %4011 = vmatprep.mubr.f32.mxu0 0.0
      %4012 = vmatmul.mubr.f32.gmra.mrb[0].mxu0 %v3843
      %v4013 = vpop.f32.mrb[0].mxu0
      %v4014 = vadd.f32 0.0, %v4013
      %v4015 = vpop.f32.mrb[0].mxu0
      %4016 = vmatprep.mubr.f32.mxu0 0.0
      %4017 = vmatmul.mubr.f32.gmra.mrb[0].mxu0 %v3846
      %v4018 = vpop.f32.mrb[0].mxu0
      %v4019 = vadd.f32 0.0, %v4018
      %v4020 = vpop.f32.mrb[0].mxu0
      %4021 = vmatprep.mubr.f32.mxu0 0.0
      %4022 = vmatmul.mubr.f32.gmra.mrb[0].mxu0 %v3849
      %v4023 = vpop.f32.mrb[0].mxu0
      %v4024 = vadd.f32 0.0, %v4023
      %v4025 = vpop.f32.mrb[0].mxu0
      %4026 = vmatprep.mubr.f32.mxu0 0.0
      %4027 = vmatmul.mubr.f32.gmra.mrb[0].mxu0 %v3852
      %v4028 = vpop.f32.mrb[0].mxu0
      %v4029 = vadd.f32 0.0, %v4028
      %v4030 = vpop.f32.mrb[0].mxu0
      %4031 = vmatprep.mubr.f32.mxu0 0.0
      %4032 = vmatmul.mubr.f32.gmra.mrb[0].mxu0 %v3855
      %v4033 = vpop.f32.mrb[0].mxu0
      %v4034 = vadd.f32 0.0, %v4033
      %v4035 = vpop.f32.mrb[0].mxu0
      %4036 = vmatprep.mubr.f32.mxu0 0.0
      %4037 = vmatmul.mubr.f32.gmra.mrb[0].mxu0 %v3858
      %v4038 = vpop.f32.mrb[0].mxu0
      %v4039 = vadd.f32 0.0, %v4038
      %v4040 = vpop.f32.mrb[0].mxu0
      %4041 = vmatprep.mubr.f32.mxu0 0.0
      %4042 = vmatmul.mubr.f32.gmra.mrb[0].mxu0 %v3861
      %v4043 = vpop.f32.mrb[0].mxu0
      %v4044 = vadd.f32 0.0, %v4043
      %v4045 = vpop.f32.mrb[0].mxu0
      %4046 = vmatprep.mubr.f32.mxu0 0.0
      %4047 = vmatmul.mubr.f32.gmra.mrb[0].mxu0 %v3864
      %v4048 = vpop.f32.mrb[0].mxu0
      %v4049 = vadd.f32 0.0, %v4048
      %v4050 = vpop.f32.mrb[0].mxu0
      %4051 = vmatprep.mubr.f32.mxu0 0.0
      %4052 = vmatmul.mubr.f32.gmra.mrb[0].mxu0 %v3867
      %v4053 = vpop.f32.mrb[0].mxu0
      %v4054 = vadd.f32 0.0, %v4053
      %v4055 = vpop.f32.mrb[0].mxu0
      %4056 = vmatprep.mubr.f32.mxu0 0.0
      %4057 = vmatmul.mubr.f32.gmra.mrb[0].mxu0 %v3870
      %v4058 = vpop.f32.mrb[0].mxu0
      %v4059 = vadd.f32 0.0, %v4058
      %v4060 = vpop.f32.mrb[0].mxu0
      %4061 = vmatprep.mubr.f32.mxu0 0.0
      %4062 = vmatmul.mubr.f32.gmra.mrb[0].mxu0 %v3873
      %v4063 = vpop.f32.mrb[0].mxu0
      %v4064 = vadd.f32 0.0, %v4063
      %v4065 = vpop.f32.mrb[0].mxu0
      %4066 = vmatprep.mubr.f32.mxu0 0.0
      %4067 = vmatmul.mubr.f32.gmra.mrb[0].mxu0 %v3876
      %v4068 = vpop.f32.mrb[0].mxu0
      %v4069 = vadd.f32 0.0, %v4068
      %v4070 = vpop.f32.mrb[0].mxu0
      %4071 = vmatprep.mubr.f32.mxu0 0.0
      %4072 = vmatmul.mubr.f32.gmra.mrb[0].mxu0 %v3879
      %v4073 = vpop.f32.mrb[0].mxu0
      %v4074 = vadd.f32 0.0, %v4073
      %v4075 = vpop.f32.mrb[0].mxu0
      %4076 = vmatprep.mubr.f32.mxu0 0.0
      %4077 = vmatmul.mubr.f32.gmra.mrb[0].mxu0 %v3882
      %v4078 = vpop.f32.mrb[0].mxu0
      %v4079 = vadd.f32 0.0, %v4078
      %v4080 = vpop.f32.mrb[0].mxu0
      %4081 = vmatprep.mubr.f32.mxu0 0.0
      %4082 = vmatmul.mubr.f32.gmra.mrb[0].mxu0 %v3885
      %v4083 = vpop.f32.mrb[0].mxu0
      %v4084 = vadd.f32 0.0, %v4083
      %v4085 = vpop.f32.mrb[0].mxu0
      %4086 = vmatprep.mubr.f32.mxu0 0.0
      %4087 = vmatmul.mubr.f32.gmra.mrb[0].mxu0 %v3888
      %v4088 = vpop.f32.mrb[0].mxu0
      %v4089 = vadd.f32 0.0, %v4088
      %v4090 = vpop.f32.mrb[0].mxu0
      %4091 = vmatprep.mubr.f32.mxu0 0.0
      %4092 = vmatmul.mubr.f32.gmra.mrb[0].mxu0 %v3891
      %v4093 = vpop.f32.mrb[0].mxu0
      %v4094 = vadd.f32 0.0, %v4093
      %v4095 = vpop.f32.mrb[0].mxu0
      %4096 = vmatprep.mubr.f32.mxu0 0.0
      %4097 = vmatmul.mubr.f32.gmra.mrb[0].mxu0 %v3894
      %v4098 = vpop.f32.mrb[0].mxu0
      %v4099 = vadd.f32 0.0, %v4098
      %v4100 = vpop.f32.mrb[0].mxu0
      %4101 = vmatprep.mubr.f32.mxu0 0.0
      %4102 = vmatmul.mubr.f32.gmra.mrb[0].mxu0 %v3897
      %v4103 = vpop.f32.mrb[0].mxu0
      %v4104 = vadd.f32 0.0, %v4103
      %v4105 = vpop.f32.mrb[0].mxu0
      %4106 = vmatprep.mubr.f32.mxu0 0.0
      %4107 = vmatmul.mubr.f32.gmra.mrb[0].mxu0 %v3900
      %v4108 = vpop.f32.mrb[0].mxu0
      %v4109 = vadd.f32 0.0, %v4108
      %v4110 = vpop.f32.mrb[0].mxu0
      %4111 = vmatprep.mubr.f32.mxu0 0.0
      %4112 = vmatmul.mubr.f32.gmra.mrb[0].mxu0 %v3903
      %v4113 = vpop.f32.mrb[0].mxu0
      %v4114 = vadd.f32 0.0, %v4113
      %v4115 = vpop.f32.mrb[0].mxu0
      %4116 = vmatprep.mubr.f32.mxu0 0.0
      %4117 = vmatmul.mubr.f32.gmra.mrb[0].mxu0 %v3906
      %v4118 = vpop.f32.mrb[0].mxu0
      %v4119 = vadd.f32 0.0, %v4118
      %v4120 = vpop.f32.mrb[0].mxu0
      %4121 = vmatprep.mubr.f32.mxu0 0.0
      %4122 = vmatmul.mubr.f32.gmra.mrb[0].mxu0 %v3909
      %v4123 = vpop.f32.mrb[0].mxu0
      %v4124 = vadd.f32 0.0, %v4123
      %v4125 = vpop.f32.mrb[0].mxu0
      %4126 = vmatprep.mubr.f32.mxu0 0.0
      %4127 = vmatmul.mubr.f32.gmra.mrb[0].mxu0 %v3912
      %v4128 = vpop.f32.mrb[0].mxu0
      %v4129 = vadd.f32 0.0, %v4128
      %v4130 = vpop.f32.mrb[0].mxu0
      %4131 = vmatprep.mubr.f32.mxu0 0.0
      %4132 = vmatmul.mubr.f32.gmra.mrb[0].mxu0 %v3915
      %v4133 = vpop.f32.mrb[0].mxu0
      %v4134 = vadd.f32 0.0, %v4133
      %v4135 = vpop.f32.mrb[0].mxu0
      %4136 = vmatprep.mubr.f32.mxu0 0.0
      %4137 = vmatmul.mubr.f32.gmra.mrb[0].mxu0 %v3918
      %v4138 = vpop.f32.mrb[0].mxu0
      %v4139 = vadd.f32 0.0, %v4138
      %v4140 = vpop.f32.mrb[0].mxu0
      %4141 = vmatprep.mubr.f32.mxu0 0.0
      %4142 = vmatmul.mubr.f32.gmra.mrb[0].mxu0 %v3921
      %v4143 = vpop.f32.mrb[0].mxu0
      %v4144 = vadd.f32 0.0, %v4143
      %v4145 = vpop.f32.mrb[0].mxu0
      %4146 = vmatprep.mubr.f32.mxu0 0.0
      %4147 = vmatmul.mubr.f32.gmra.mrb[0].mxu0 %v3924
      %v4148 = vpop.f32.mrb[0].mxu0
      %v4149 = vadd.f32 0.0, %v4148
      %v4150 = vpop.f32.mrb[0].mxu0
      %4151 = vmatprep.mubr.f32.mxu0 0.0
      %4152 = vmatmul.mubr.f32.gmra.mrb[0].mxu0 %v3927
      %v4153 = vpop.f32.mrb[0].mxu0
      %v4154 = vadd.f32 0.0, %v4153
      %v4155 = vpop.f32.mrb[0].mxu0
      %4156 = vdwg.mxu0
      %v4157 = vld [vmem:[#allocation2] sm:$0xff]
      %v4158 = vld [vmem:[#allocation2 + $0x8] sm:$0xff]
      %v4159 = vld [vmem:[#allocation2 + $0x10] sm:$0xff]
      %v4160 = vld [vmem:[#allocation2 + $0x18] sm:$0xff]
      %v4161 = vld [vmem:[#allocation2 + $0x20] sm:$0xff]
      %v4162 = vld [vmem:[#allocation2 + $0x28] sm:$0xff]
      %v4163 = vld [vmem:[#allocation2 + $0x30] sm:$0xff]
      %v4164 = vld [vmem:[#allocation2 + $0x38] sm:$0xff]
      %v4165 = vld [vmem:[#allocation2 + $0x40] sm:$0xff]
      %v4166 = vld [vmem:[#allocation2 + $0x48] sm:$0xff]
      %v4167 = vld [vmem:[#allocation2 + $0x50] sm:$0xff]
      %v4168 = vld [vmem:[#allocation2 + $0x58] sm:$0xff]
      %v4169 = vld [vmem:[#allocation2 + $0x60] sm:$0xff]
      %v4170 = vld [vmem:[#allocation2 + $0x68] sm:$0xff]
      %v4171 = vld [vmem:[#allocation2 + $0x70] sm:$0xff]
      %v4172 = vld [vmem:[#allocation2 + $0x78] sm:$0xff]
      %v4173 = vld [vmem:[#allocation2 + $0x80] sm:$0xff]
      %v4174 = vld [vmem:[#allocation2 + $0x88] sm:$0xff]
      %v4175 = vld [vmem:[#allocation2 + $0x90] sm:$0xff]
      %v4176 = vld [vmem:[#allocation2 + $0x98] sm:$0xff]
      %v4177 = vld [vmem:[#allocation2 + $0xa0] sm:$0xff]
      %v4178 = vld [vmem:[#allocation2 + $0xa8] sm:$0xff]
      %v4179 = vld [vmem:[#allocation2 + $0xb0] sm:$0xff]
      %v4180 = vld [vmem:[#allocation2 + $0xb8] sm:$0xff]
      %v4181 = vld [vmem:[#allocation2 + $0xc0] sm:$0xff]
      %v4182 = vld [vmem:[#allocation2 + $0xc8] sm:$0xff]
      %v4183 = vld [vmem:[#allocation2 + $0xd0] sm:$0xff]
      %v4184 = vld [vmem:[#allocation2 + $0xd8] sm:$0xff]
      %v4185 = vld [vmem:[#allocation2 + $0xe0] sm:$0xff]
      %v4186 = vld [vmem:[#allocation2 + $0xe8] sm:$0xff]
      %v4187 = vld [vmem:[#allocation2 + $0xf0] sm:$0xff]
      %v4188 = vld [vmem:[#allocation2 + $0xf8] sm:$0xff]
      %v4189 = vadd.f32 %v4157, %v3999
      %v4190 = vadd.f32 %v4158, %v4004
      %v4191 = vadd.f32 %v4159, %v4009
      %v4192 = vadd.f32 %v4160, %v4014
      %v4193 = vadd.f32 %v4161, %v4019
      %v4194 = vadd.f32 %v4162, %v4024
      %v4195 = vadd.f32 %v4163, %v4029
      %v4196 = vadd.f32 %v4164, %v4034
      %v4197 = vadd.f32 %v4165, %v4039
      %v4198 = vadd.f32 %v4166, %v4044
      %v4199 = vadd.f32 %v4167, %v4049
      %v4200 = vadd.f32 %v4168, %v4054
      %v4201 = vadd.f32 %v4169, %v4059
      %v4202 = vadd.f32 %v4170, %v4064
      %v4203 = vadd.f32 %v4171, %v4069
      %v4204 = vadd.f32 %v4172, %v4074
      %v4205 = vadd.f32 %v4173, %v4079
      %v4206 = vadd.f32 %v4174, %v4084
      %v4207 = vadd.f32 %v4175, %v4089
      %v4208 = vadd.f32 %v4176, %v4094
      %v4209 = vadd.f32 %v4177, %v4099
      %v4210 = vadd.f32 %v4178, %v4104
      %v4211 = vadd.f32 %v4179, %v4109
      %v4212 = vadd.f32 %v4180, %v4114
      %v4213 = vadd.f32 %v4181, %v4119
      %v4214 = vadd.f32 %v4182, %v4124
      %v4215 = vadd.f32 %v4183, %v4129
      %v4216 = vadd.f32 %v4184, %v4134
      %v4217 = vadd.f32 %v4185, %v4139
      %v4218 = vadd.f32 %v4186, %v4144
      %v4219 = vadd.f32 %v4187, %v4149
      %v4220 = vadd.f32 %v4188, %v4154
      %4221 = vst [vmem:[#allocation2] sm:$0xff] %v4189
      %4222 = vst [vmem:[#allocation2 + $0x8] sm:$0xff] %v4190
      %4223 = vst [vmem:[#allocation2 + $0x10] sm:$0xff] %v4191
      %4224 = vst [vmem:[#allocation2 + $0x18] sm:$0xff] %v4192
      %4225 = vst [vmem:[#allocation2 + $0x20] sm:$0xff] %v4193
      %4226 = vst [vmem:[#allocation2 + $0x28] sm:$0xff] %v4194
      %4227 = vst [vmem:[#allocation2 + $0x30] sm:$0xff] %v4195
      %4228 = vst [vmem:[#allocation2 + $0x38] sm:$0xff] %v4196
      %4229 = vst [vmem:[#allocation2 + $0x40] sm:$0xff] %v4197
      %4230 = vst [vmem:[#allocation2 + $0x48] sm:$0xff] %v4198
      %4231 = vst [vmem:[#allocation2 + $0x50] sm:$0xff] %v4199
      %4232 = vst [vmem:[#allocation2 + $0x58] sm:$0xff] %v4200
      %4233 = vst [vmem:[#allocation2 + $0x60] sm:$0xff] %v4201
      %4234 = vst [vmem:[#allocation2 + $0x68] sm:$0xff] %v4202
      %4235 = vst [vmem:[#allocation2 + $0x70] sm:$0xff] %v4203
      %4236 = vst [vmem:[#allocation2 + $0x78] sm:$0xff] %v4204
      %4237 = vst [vmem:[#allocation2 + $0x80] sm:$0xff] %v4205
      %4238 = vst [vmem:[#allocation2 + $0x88] sm:$0xff] %v4206
      %4239 = vst [vmem:[#allocation2 + $0x90] sm:$0xff] %v4207
      %4240 = vst [vmem:[#allocation2 + $0x98] sm:$0xff] %v4208
      %4241 = vst [vmem:[#allocation2 + $0xa0] sm:$0xff] %v4209
      %4242 = vst [vmem:[#allocation2 + $0xa8] sm:$0xff] %v4210
      %4243 = vst [vmem:[#allocation2 + $0xb0] sm:$0xff] %v4211
      %4244 = vst [vmem:[#allocation2 + $0xb8] sm:$0xff] %v4212
      %4245 = vst [vmem:[#allocation2 + $0xc0] sm:$0xff] %v4213
      %4246 = vst [vmem:[#allocation2 + $0xc8] sm:$0xff] %v4214
      %4247 = vst [vmem:[#allocation2 + $0xd0] sm:$0xff] %v4215
      %4248 = vst [vmem:[#allocation2 + $0xd8] sm:$0xff] %v4216
      %4249 = vst [vmem:[#allocation2 + $0xe0] sm:$0xff] %v4217
      %4250 = vst [vmem:[#allocation2 + $0xe8] sm:$0xff] %v4218
      %4251 = vst [vmem:[#allocation2 + $0xf0] sm:$0xff] %v4219
      %4252 = vst [vmem:[#allocation2 + $0xf8] sm:$0xff] %v4220
      %v4253 = vld [vmem:[%s2] sm:$0x1]
      %v4254 = vld [vmem:[%s3] sm:$0x1]
      %v4255 = vld [vmem:[#allocation2] sm:$0xff]
      %v4256 = vld [vmem:[#allocation2 + $0x8] sm:$0xff]
      %v4257 = vld [vmem:[#allocation2 + $0x10] sm:$0xff]
      %v4258 = vld [vmem:[#allocation2 + $0x18] sm:$0xff]
      %v4259 = vld [vmem:[#allocation2 + $0x20] sm:$0xff]
      %v4260 = vld [vmem:[#allocation2 + $0x28] sm:$0xff]
      %v4261 = vld [vmem:[#allocation2 + $0x30] sm:$0xff]
      %v4262 = vld [vmem:[#allocation2 + $0x38] sm:$0xff]
      %v4263 = vld [vmem:[#allocation2 + $0x40] sm:$0xff]
      %v4264 = vld [vmem:[#allocation2 + $0x48] sm:$0xff]
      %v4265 = vld [vmem:[#allocation2 + $0x50] sm:$0xff]
      %v4266 = vld [vmem:[#allocation2 + $0x58] sm:$0xff]
      %v4267 = vld [vmem:[#allocation2 + $0x60] sm:$0xff]
      %v4268 = vld [vmem:[#allocation2 + $0x68] sm:$0xff]
      %v4269 = vld [vmem:[#allocation2 + $0x70] sm:$0xff]
      %v4270 = vld [vmem:[#allocation2 + $0x78] sm:$0xff]
      %v4271 = vld [vmem:[#allocation2 + $0x80] sm:$0xff]
      %v4272 = vld [vmem:[#allocation2 + $0x88] sm:$0xff]
      %v4273 = vld [vmem:[#allocation2 + $0x90] sm:$0xff]
      %v4274 = vld [vmem:[#allocation2 + $0x98] sm:$0xff]
      %v4275 = vld [vmem:[#allocation2 + $0xa0] sm:$0xff]
      %v4276 = vld [vmem:[#allocation2 + $0xa8] sm:$0xff]
      %v4277 = vld [vmem:[#allocation2 + $0xb0] sm:$0xff]
      %v4278 = vld [vmem:[#allocation2 + $0xb8] sm:$0xff]
      %v4279 = vld [vmem:[#allocation2 + $0xc0] sm:$0xff]
      %v4280 = vld [vmem:[#allocation2 + $0xc8] sm:$0xff]
      %v4281 = vld [vmem:[#allocation2 + $0xd0] sm:$0xff]
      %v4282 = vld [vmem:[#allocation2 + $0xd8] sm:$0xff]
      %v4283 = vld [vmem:[#allocation2 + $0xe0] sm:$0xff]
      %v4284 = vld [vmem:[#allocation2 + $0xe8] sm:$0xff]
      %v4285 = vld [vmem:[#allocation2 + $0xf0] sm:$0xff]
      %v4286 = vld [vmem:[#allocation2 + $0xf8] sm:$0xff]
      %v4288 = vlaneseq
      %v4289 = vshrl.u32 %v4288, 7
      %v4290 = vsub.s32 0, %v4289
      %v4291 = vrot.slane %v4253, %v4290
      %v4293 = vmul.f32 %v4255, %v4291
      %v4294 = vmul.f32 %v4256, %v4291
      %v4295 = vmul.f32 %v4257, %v4291
      %v4296 = vmul.f32 %v4258, %v4291
      %v4297 = vmul.f32 %v4259, %v4291
      %v4298 = vmul.f32 %v4260, %v4291
      %v4299 = vmul.f32 %v4261, %v4291
      %v4300 = vmul.f32 %v4262, %v4291
      %v4301 = vmul.f32 %v4263, %v4291
      %v4302 = vmul.f32 %v4264, %v4291
      %v4303 = vmul.f32 %v4265, %v4291
      %v4304 = vmul.f32 %v4266, %v4291
      %v4305 = vmul.f32 %v4267, %v4291
      %v4306 = vmul.f32 %v4268, %v4291
      %v4307 = vmul.f32 %v4269, %v4291
      %v4308 = vmul.f32 %v4270, %v4291
      %v4309 = vmul.f32 %v4271, %v4291
      %v4310 = vmul.f32 %v4272, %v4291
      %v4311 = vmul.f32 %v4273, %v4291
      %v4312 = vmul.f32 %v4274, %v4291
      %v4313 = vmul.f32 %v4275, %v4291
      %v4314 = vmul.f32 %v4276, %v4291
      %v4315 = vmul.f32 %v4277, %v4291
      %v4316 = vmul.f32 %v4278, %v4291
      %v4317 = vmul.f32 %v4279, %v4291
      %v4318 = vmul.f32 %v4280, %v4291
      %v4319 = vmul.f32 %v4281, %v4291
      %v4320 = vmul.f32 %v4282, %v4291
      %v4321 = vmul.f32 %v4283, %v4291
      %v4322 = vmul.f32 %v4284, %v4291
      %v4323 = vmul.f32 %v4285, %v4291
      %v4324 = vmul.f32 %v4286, %v4291
      %v4326 = vlaneseq
      %v4327 = vshrl.u32 %v4326, 7
      %v4328 = vsub.s32 0, %v4327
      %v4329 = vrot.slane %v4254, %v4328
      %v4331 = vadd.f32 %v4293, %v4329
      %v4332 = vadd.f32 %v4294, %v4329
      %v4333 = vadd.f32 %v4295, %v4329
      %v4334 = vadd.f32 %v4296, %v4329
      %v4335 = vadd.f32 %v4297, %v4329
      %v4336 = vadd.f32 %v4298, %v4329
      %v4337 = vadd.f32 %v4299, %v4329
      %v4338 = vadd.f32 %v4300, %v4329
      %v4339 = vadd.f32 %v4301, %v4329
      %v4340 = vadd.f32 %v4302, %v4329
      %v4341 = vadd.f32 %v4303, %v4329
      %v4342 = vadd.f32 %v4304, %v4329
      %v4343 = vadd.f32 %v4305, %v4329
      %v4344 = vadd.f32 %v4306, %v4329
      %v4345 = vadd.f32 %v4307, %v4329
      %v4346 = vadd.f32 %v4308, %v4329
      %v4347 = vadd.f32 %v4309, %v4329
      %v4348 = vadd.f32 %v4310, %v4329
      %v4349 = vadd.f32 %v4311, %v4329
      %v4350 = vadd.f32 %v4312, %v4329
      %v4351 = vadd.f32 %v4313, %v4329
      %v4352 = vadd.f32 %v4314, %v4329
      %v4353 = vadd.f32 %v4315, %v4329
      %v4354 = vadd.f32 %v4316, %v4329
      %v4355 = vadd.f32 %v4317, %v4329
      %v4356 = vadd.f32 %v4318, %v4329
      %v4357 = vadd.f32 %v4319, %v4329
      %v4358 = vadd.f32 %v4320, %v4329
      %v4359 = vadd.f32 %v4321, %v4329
      %v4360 = vadd.f32 %v4322, %v4329
      %v4361 = vadd.f32 %v4323, %v4329
      %v4362 = vadd.f32 %v4324, %v4329
      %v4363 = vmax.f32 %v4331, 0.0
      %v4364 = vmax.f32 %v4332, 0.0
      %v4365 = vmax.f32 %v4333, 0.0
      %v4366 = vmax.f32 %v4334, 0.0
      %v4367 = vmax.f32 %v4335, 0.0
      %v4368 = vmax.f32 %v4336, 0.0
      %v4369 = vmax.f32 %v4337, 0.0
      %v4370 = vmax.f32 %v4338, 0.0
      %v4371 = vmax.f32 %v4339, 0.0
      %v4372 = vmax.f32 %v4340, 0.0
      %v4373 = vmax.f32 %v4341, 0.0
      %v4374 = vmax.f32 %v4342, 0.0
      %v4375 = vmax.f32 %v4343, 0.0
      %v4376 = vmax.f32 %v4344, 0.0
      %v4377 = vmax.f32 %v4345, 0.0
      %v4378 = vmax.f32 %v4346, 0.0
      %v4379 = vmax.f32 %v4347, 0.0
      %v4380 = vmax.f32 %v4348, 0.0
      %v4381 = vmax.f32 %v4349, 0.0
      %v4382 = vmax.f32 %v4350, 0.0
      %v4383 = vmax.f32 %v4351, 0.0
      %v4384 = vmax.f32 %v4352, 0.0
      %v4385 = vmax.f32 %v4353, 0.0
      %v4386 = vmax.f32 %v4354, 0.0
      %v4387 = vmax.f32 %v4355, 0.0
      %v4388 = vmax.f32 %v4356, 0.0
      %v4389 = vmax.f32 %v4357, 0.0
      %v4390 = vmax.f32 %v4358, 0.0
      %v4391 = vmax.f32 %v4359, 0.0
      %v4392 = vmax.f32 %v4360, 0.0
      %v4393 = vmax.f32 %v4361, 0.0
      %v4394 = vmax.f32 %v4362, 0.0
      %4395 = vst [vmem:[%s219] sm:$0xff] %v4363
      %4396 = vst [vmem:[%s219 + $0x8] sm:$0xff] %v4364
      %4397 = vst [vmem:[%s219 + $0x10] sm:$0xff] %v4365
      %4398 = vst [vmem:[%s219 + $0x18] sm:$0xff] %v4366
      %4399 = vst [vmem:[%s219 + $0x20] sm:$0xff] %v4367
      %4400 = vst [vmem:[%s219 + $0x28] sm:$0xff] %v4368
      %4401 = vst [vmem:[%s219 + $0x30] sm:$0xff] %v4369
      %4402 = vst [vmem:[%s219 + $0x38] sm:$0xff] %v4370
      %4403 = vst [vmem:[%s219 + $0x40] sm:$0xff] %v4371
      %4404 = vst [vmem:[%s219 + $0x48] sm:$0xff] %v4372
      %4405 = vst [vmem:[%s219 + $0x50] sm:$0xff] %v4373
      %4406 = vst [vmem:[%s219 + $0x58] sm:$0xff] %v4374
      %4407 = vst [vmem:[%s219 + $0x60] sm:$0xff] %v4375
      %4408 = vst [vmem:[%s219 + $0x68] sm:$0xff] %v4376
      %4409 = vst [vmem:[%s219 + $0x70] sm:$0xff] %v4377
      %4410 = vst [vmem:[%s219 + $0x78] sm:$0xff] %v4378
      %4411 = vst [vmem:[%s219 + $0x80] sm:$0xff] %v4379
      %4412 = vst [vmem:[%s219 + $0x88] sm:$0xff] %v4380
      %4413 = vst [vmem:[%s219 + $0x90] sm:$0xff] %v4381
      %4414 = vst [vmem:[%s219 + $0x98] sm:$0xff] %v4382
      %4415 = vst [vmem:[%s219 + $0xa0] sm:$0xff] %v4383
      %4416 = vst [vmem:[%s219 + $0xa8] sm:$0xff] %v4384
      %4417 = vst [vmem:[%s219 + $0xb0] sm:$0xff] %v4385
      %4418 = vst [vmem:[%s219 + $0xb8] sm:$0xff] %v4386
      %4419 = vst [vmem:[%s219 + $0xc0] sm:$0xff] %v4387
      %4420 = vst [vmem:[%s219 + $0xc8] sm:$0xff] %v4388
      %4421 = vst [vmem:[%s219 + $0xd0] sm:$0xff] %v4389
      %4422 = vst [vmem:[%s219 + $0xd8] sm:$0xff] %v4390
      %4423 = vst [vmem:[%s219 + $0xe0] sm:$0xff] %v4391
      %4424 = vst [vmem:[%s219 + $0xe8] sm:$0xff] %v4392
      %4425 = vst [vmem:[%s219 + $0xf0] sm:$0xff] %v4393
      %4426 = vst [vmem:[%s219 + $0xf8] sm:$0xff] %v4394
      %s4427 = smul.u32 32, %s20
      %p4428 = scmp.lt.s32.totalorder %s19, 1
      %s4429 = scalar_select %p4428, %s19, 1
      %p4430 = scmp.lt.s32.totalorder %s4427, 31
      %s4431 = scalar_select %p4430, %s4427, 31
      %s4432 = smul.addr %s4429, 32
      %s4433 = sadd.s32 %s4431, %s4432
      %s4434 = smul.addr %s4433, 8
      %s4435 = scalar_lea.vmem %s4, %s4434
      // Predicated region
      $region37: #{up_conv_forward.3} parent=35 // pred_check
        %p4436 = pneg %p136
      $region38: #{up_conv_forward.3} parent=35 // pred_check_branch
        %4438 = sbr.rel (%p4436) target = $region40
      $region39: #{up_conv_forward.3} parent=35 // pred_region
        %s4439 = smul.u32 32, %s20
      $region40: #{up_conv_forward.3} parent=35 // pred_fallthru
        _
    $region36: #{up_conv_forward.3} parent=5 // pred_fallthru
      _
    %p4440 = scmp.le.s32.totalorder 2, %s10
    // Predicated region
    $region41: #{up_conv_forward.3} parent=5 // pred_check
      %p4441 = pneg %p4440
    $region42: #{up_conv_forward.3} parent=5 // pred_check_branch
      %4443 = sbr.rel (%p4441) target = $region44
    $region43: #{up_conv_forward.3} parent=5 // pred_region
      %s4444 = ssub.s32 %s10, 2
      // Predicated region
      $region45: #{up_conv_forward.3} parent=43 // pred_check
        %p4445 = pneg %p142
      $region46: #{up_conv_forward.3} parent=43 // pred_check_branch
        %4447 = sbr.rel (%p4445) target = $region48
      $region47: #{up_conv_forward.3} parent=43 // pred_region
        %s4448 = smul.u32 32, %s22
        %p4449 = scmp.lt.s32.totalorder %s21, 1
        %s4450 = scalar_select %p4449, %s21, 1
        %p4451 = scmp.lt.s32.totalorder %s4448, 31
        %s4452 = scalar_select %p4451, %s4448, 31
        %s4453 = smul.addr %s4450, 32
        %s4454 = sadd.s32 %s4452, %s4453
        %s4455 = smul.addr %s4454, 8
        %s4456 = scalar_lea.vmem %s4, %s4455
      $region48: #{up_conv_forward.3} parent=43 // pred_fallthru
        _
    $region44: #{up_conv_forward.3} parent=5 // pred_fallthru
      _
  $region6: #{up_conv_forward.3} parent=0 // loop_footer
    %s14 = sadd.s32 1, %s10
  $region7: #{up_conv_forward.3} parent=0 // loop_footer_branch
    %9 = sbr.rel target = $region3
  $region8: #{up_conv_forward.3} parent=0 // loop_exit
    _

</llo_original>
